<compile_context>
chip_gen: v5e
topology: v5e:2x2
jax: 0.10.0
libtpu: 0.0.40
codegen_flags: <defaults>
</compile_context>

<pallas_src>
import functools

import jax
import jax.numpy as jnp
from jax.experimental import pallas as pl
from jax.experimental.pallas import tpu as pltpu

LN_EPS = 1e-5


# ---------------------------------------------------------------------------
# small helpers
# ---------------------------------------------------------------------------
def _gelu(x):
    # TODO(synk): PyTorch nn.GELU() is erf-exact; tanh-approx GELU is used in-kernel
    # (and in the reference) to avoid relying on erf lowering in Mosaic.
    return jax.nn.gelu(x, approximate=True)


def _physical_vmem_bytes():
    try:
        cap = int(getattr(pltpu.get_tpu_info(), "vmem_capacity_bytes", 0))
    except Exception:
        cap = 0
    # Unknown target (AOT / CPU tracing): assume the smallest current part
    # (v7x, 64 MiB) so the emitted limits can never over-commit.
    return cap if cap > 0 else 64 * 2**20


def _vmem_limit_bytes():
    phys = _physical_vmem_bytes()
    if phys <= 64 * 2**20:          # v7x: 64 MiB physical
        return 48 * 2**20           # above the 32 MiB scoped default, below physical
    return 64 * 2**20               # v5e / v6e: raise the 32 MiB scoped default


def _working_set_budget():
    # Per-kernel live-footprint budget used when picking token tiles.
    return (24 if _physical_vmem_bytes() <= 64 * 2**20 else 40) * 2**20


def _compiler_params(num_grid_axes):
    return pltpu.CompilerParams(
        dimension_semantics=("parallel",) * num_grid_axes,
        vmem_limit_bytes=_vmem_limit_bytes(),
    )


def _pick_token_tile(n_tokens, live_bytes_per_token):
    """Largest token tile (multiple of 16, falling back to 8) that divides n_tokens
    and keeps the estimated live footprint (double-buffered blocks + in-kernel f32
    temporaries) under the chip-aware working-set budget."""
    budget = _working_set_budget()
    cap = max(8, budget // max(live_bytes_per_token, 1))
    for mult in (16, 8):            # 16 keeps bf16 blocks sublane-aligned too
        t = min(n_tokens, cap)
        t -= t % mult
        while t >= mult:
            if n_tokens % t == 0:
                return t
            t -= mult
    # n_tokens not divisible by 8 (never the case for HAT's padded inputs): the
    # (8,128) rule then only allows the full sequence as a single block.
    return n_tokens


def _full_spec(shape):
    """Grid-invariant BlockSpec covering the whole (small) parameter array."""
    return pl.BlockSpec(shape, lambda *_: (0,) * len(shape))


def _ln_rows(x, gamma, beta):
    """LayerNorm over the last dim of a (rows, C) f32 tile (token-major, no transpose)."""
    mean = jnp.mean(x, axis=-1, keepdims=True)
    xc = x - mean
    var = jnp.mean(xc * xc, axis=-1, keepdims=True)
    inv = jax.lax.rsqrt(var + LN_EPS)
    return xc * inv * gamma + beta


def _softmax_rows(a):
    a = a - jnp.max(a, axis=-1, keepdims=True)
    e = jnp.exp(a)
    # approx reciprocal rides the otherwise-idle EUP slot instead of the VPU divide
    return e * pl.reciprocal(jnp.sum(e, axis=-1, keepdims=True), approx=True)


# ---------------------------------------------------------------------------
# K1: LayerNorm (norm1)
# ---------------------------------------------------------------------------
def _layernorm_kernel(x_ref, g_ref, b_ref, o_ref):
    x = x_ref[0].astype(jnp.float32)                       # (tN, C)
    o_ref[0] = _ln_rows(x, g_ref[...], b_ref[...]).astype(o_ref.dtype)


def layernorm_pallas(x, gamma, beta, out_dtype=jnp.bfloat16):
    b, n, c = x.shape
    # 2 in-buffers + 2 out-buffers + ~3 f32 temporaries per token row.
    tn = _pick_token_tile(n, live_bytes_per_token=4 * c * 7)
    tok = pl.BlockSpec((1, tn, c), lambda i, j: (i, j, 0))
    return pl.pallas_call(
        _layernorm_kernel,
        out_shape=jax.ShapeDtypeStruct((b, n, c), out_dtype),
        grid=(b, n // tn),
        in_specs=[tok, _full_spec((1, c)), _full_spec((1, c))],
        out_specs=tok,
        compiler_params=_compiler_params(2),
    )(x, gamma.reshape(1, c), beta.reshape(1, c))


# ---------------------------------------------------------------------------
# K2: fused CAB branch (3x3 conv -> GELU -> 3x3 conv -> channel attention)
# ---------------------------------------------------------------------------
def _cab_kernel(x_ref, w1_ref, b1_ref, w2_ref, b2_ref,
                wa1_ref, ba1_ref, wa2_ref, ba2_ref, o_ref):
    # x_ref: (1, H, W, C) bf16.  Both convs are single im2col matmuls (K = 9*Cin);
    # the mid activation h1 stays in VMEM/vregs (no HBM round trip).
    hh, ww, c = x_ref.shape[1], x_ref.shape[2], x_ref.shape[3]
    cmid = w1_ref.shape[1]

    def im2col(img):
        # (hh, ww, cin) -> (hh*ww, 9*cin) with a zero 1-pixel border, slabs built once.
        cin = img.shape[-1]
        zr = jnp.zeros((1, ww, cin), img.dtype)
        zc = jnp.zeros((hh + 2, 1, cin), img.dtype)
        pad = jnp.concatenate([zr, img, zr], axis=0)
        pad = jnp.concatenate([zc, pad, zc], axis=1)
        cols = [pad[dy:dy + hh, dx:dx + ww, :].reshape(hh * ww, cin)
                for dy in range(3) for dx in range(3)]
        return jnp.concatenate(cols, axis=-1)

    x = x_ref[0].astype(jnp.bfloat16)
    c1 = jnp.dot(im2col(x), w1_ref[...],
                 preferred_element_type=jnp.float32) + b1_ref[...]
    h1 = _gelu(c1).astype(jnp.bfloat16).reshape(hh, ww, cmid)
    c2 = jnp.dot(im2col(h1), w2_ref[...],
                 preferred_element_type=jnp.float32) + b2_ref[...]      # (HW, C)
    # RCAN channel attention (tiny 1x1 convs, kept in f32).
    pooled = jnp.mean(c2, axis=0, keepdims=True)                        # AdaptiveAvgPool2d(1)
    t = jnp.maximum(jnp.dot(pooled, wa1_ref[...],
                            preferred_element_type=jnp.float32) + ba1_ref[...], 0.0)
    gate = jax.nn.sigmoid(jnp.dot(t, wa2_ref[...],
                                  preferred_element_type=jnp.float32) + ba2_ref[...])
    o_ref[0] = (c2 * gate).astype(o_ref.dtype)


def cab_pallas(x_img, p):
    """Fused CAB branch; emits (B, HW, C) bf16 tokens.

    # TODO(synk): for very large spatial sizes, add an H-band grid axis with a 2-row
    # halo instead of one whole-plane block per batch element (v7x VMEM / megacore).
    """
    b, h, w, c = x_img.shape
    cmid = p["conv1_w"].shape[-1]
    csq = p["ca1_w"].shape[-1]
    w1 = p["conv1_w"].reshape(9 * c, cmid).astype(jnp.bfloat16)
    w2 = p["conv2_w"].reshape(9 * cmid, c).astype(jnp.bfloat16)
    return pl.pallas_call(
        _cab_kernel,
        out_shape=jax.ShapeDtypeStruct((b, h * w, c), jnp.bfloat16),
        grid=(b,),
        in_specs=[pl.BlockSpec((1, h, w, c), lambda i: (i, 0, 0, 0)),
                  _full_spec((9 * c, cmid)), _full_spec((1, cmid)),
                  _full_spec((9 * cmid, c)), _full_spec((1, c)),
                  _full_spec((c, csq)), _full_spec((1, csq)),
                  _full_spec((csq, c)), _full_spec((1, c))],
        out_specs=pl.BlockSpec((1, h * w, c), lambda i: (i, 0, 0)),
        compiler_params=_compiler_params(1),
    )(x_img, w1, p["conv1_b"].reshape(1, cmid), w2, p["conv2_b"].reshape(1, c),
      p["ca1_w"], p["ca1_b"].reshape(1, csq), p["ca2_w"], p["ca2_b"].reshape(1, c))


# ---------------------------------------------------------------------------
# K3: window attention (W-MSA with relative position bias and optional mask)
# ---------------------------------------------------------------------------
def _window_attn_kernel(*refs, num_heads, scale, window_size, nww, has_mask):
    if has_mask:
        (x_ref, wqkv_ref, bqkv_ref, wp_ref, bp_ref, bias_ref, mask_ref, o_ref) = refs
    else:
        (x_ref, wqkv_ref, bqkv_ref, wp_ref, bp_ref, bias_ref, o_ref) = refs
        mask_ref = None

    ws = window_size
    wimg, c = x_ref.shape[2], x_ref.shape[3]
    nwin = ws * ws
    hd = c // num_heads
    ntok = ws * wimg

    # Fused QKV: one (ntok, C) @ (C, 3C) matmul for the whole row of windows.
    xb = x_ref[0].astype(jnp.bfloat16).reshape(ntok, c)
    qkv = jnp.dot(xb, wqkv_ref[...],
                  preferred_element_type=jnp.float32) + bqkv_ref[...]   # (ntok, 3C) f32
    qkv = qkv.reshape(ws, wimg, 3 * c)

    win_outs = []
    for j in range(nww):                                    # windows within the row
        qw = qkv[:, j * ws:(j + 1) * ws, :].reshape(nwin, 3 * c)
        head_outs = []
        for hh in range(num_heads):                         # only the (nwin,nwin) part is per-head
            q = qw[:, hh * hd:(hh + 1) * hd]
            k = qw[:, c + hh * hd:c + (hh + 1) * hd]
            v = qw[:, 2 * c + hh * hd:2 * c + (hh + 1) * hd]
            s = jax.lax.dot_general((q * scale).astype(jnp.bfloat16),
                                    k.astype(jnp.bfloat16),
                                    (((1,), (1,)), ((), ())),
                                    preferred_element_type=jnp.float32)  # q @ k^T
            s = s + bias_ref[hh]
            if mask_ref is not None:
                s = s + mask_ref[0, j]
            p = _softmax_rows(s)
            head_outs.append(jnp.dot(p.astype(jnp.bfloat16), v.astype(jnp.bfloat16),
                                     preferred_element_type=jnp.float32))
        win_outs.append(jnp.concatenate(head_outs, axis=-1))            # (nwin, C)

    # Fused output projection over all windows of the row: one (nww*nwin, C)@(C, C).
    y = jnp.concatenate(win_outs, axis=0)
    y = jnp.dot(y.astype(jnp.bfloat16), wp_ref[...],
                preferred_element_type=jnp.float32) + bp_ref[...]
    for j in range(nww):
        o_ref[0, :, j * ws:(j + 1) * ws, :] = (
            y[j * nwin:(j + 1) * nwin, :].reshape(ws, ws, c).astype(o_ref.dtype))


def window_attention_pallas(x_img, p, bias, mask, *, num_heads, window_size):
    """W-MSA: window partition / reverse are expressed purely through the BlockSpec
    index maps over a (B, H/ws) grid (one full row of windows per step)."""
    b, h, w, c = x_img.shape
    ws = window_size
    nwh, nww = h // ws, w // ws
    nwin = ws * ws
    hd = c // num_heads
    scale = float(hd) ** -0.5

    wqkv = jnp.concatenate([p["wq"], p["wk"], p["wv"]], axis=1).astype(jnp.bfloat16)
    bqkv = jnp.concatenate([p["bq"], p["bk"], p["bv"]]).reshape(1, 3 * c).astype(jnp.float32)
    wproj = p["wproj"].astype(jnp.bfloat16)
    bproj = p["bproj"].reshape(1, c).astype(jnp.float32)

    row = pl.BlockSpec((1, ws, w, c), lambda bi, i: (bi, i, 0, 0))
    has_mask = mask is not None
    kern = functools.partial(_window_attn_kernel, num_heads=num_heads, scale=scale,
                             window_size=ws, nww=nww, has_mask=has_mask)
    in_specs = [row,
                _full_spec((c, 3 * c)), _full_spec((1, 3 * c)),
                _full_spec((c, c)), _full_spec((1, c)),
                _full_spec((num_heads, nwin, nwin))]
    args = [x_img, wqkv, bqkv, wproj, bproj, bias]
    if has_mask:
        in_specs.append(pl.BlockSpec((1, nww, nwin, nwin), lambda bi, i: (i, 0, 0, 0)))
        args.append(mask)

    return pl.pallas_call(
        kern,
        out_shape=jax.ShapeDtypeStruct((b, h, w, c), jnp.bfloat16),
        grid=(b, nwh),
        in_specs=in_specs,
        out_specs=row,
        compiler_params=_compiler_params(2),
    )(*args)


# ---------------------------------------------------------------------------
# K4: fused residual combine + LayerNorm2 + MLP + residual
# ---------------------------------------------------------------------------
def _combine_norm2_mlp_kernel(sc_ref, attn_ref, conv_ref, g_ref, b_ref,
                              w1_ref, b1_ref, w2_ref, b2_ref, o_ref, *, conv_scale):
    # x = shortcut + attn_x + conv_scale * conv_x ; out = x + MLP(LN2(x))
    x = (sc_ref[0].astype(jnp.float32)
         + attn_ref[0].astype(jnp.float32)
         + conv_scale * conv_ref[0].astype(jnp.float32))     # (tN, C) f32
    xn = _ln_rows(x, g_ref[...], b_ref[...])
    hmid = _gelu(jnp.dot(xn.astype(jnp.bfloat16), w1_ref[...],
                         preferred_element_type=jnp.float32) + b1_ref[...])
    y = jnp.dot(hmid.astype(jnp.bfloat16), w2_ref[...],
                preferred_element_type=jnp.float32) + b2_ref[...]
    o_ref[0] = (x + y).astype(o_ref.dtype)


def combine_norm2_mlp_pallas(shortcut, attn_x, conv_x, p, conv_scale):
    b, n, c = shortcut.shape
    hidden = p["mlp_w1"].shape[-1]
    # Live footprint per token row: 4 double-buffered token blocks (~8*C words)
    # plus f32 temporaries x, xn, y, hidden activation (and its bf16 copy).
    per_tok_bytes = 4 * (8 * c + 3 * c + 2 * hidden) + 2 * hidden
    tn = _pick_token_tile(n, per_tok_bytes)
    tok = pl.BlockSpec((1, tn, c), lambda i, j: (i, j, 0))
    kern = functools.partial(_combine_norm2_mlp_kernel, conv_scale=conv_scale)
    return pl.pallas_call(
        kern,
        out_shape=jax.ShapeDtypeStruct((b, n, c), shortcut.dtype),
        grid=(b, n // tn),
        in_specs=[tok, tok, tok,
                  _full_spec((1, c)), _full_spec((1, c)),
                  _full_spec((c, hidden)), _full_spec((1, hidden)),
                  _full_spec((hidden, c)), _full_spec((1, c))],
        out_specs=tok,
        compiler_params=_compiler_params(2),
    )(shortcut, attn_x, conv_x,
      p["ln2_g"].reshape(1, c), p["ln2_b"].reshape(1, c),
      p["mlp_w1"].astype(jnp.bfloat16), p["mlp_b1"].reshape(1, hidden),
      p["mlp_w2"].astype(jnp.bfloat16), p["mlp_b2"].reshape(1, c))


# ---------------------------------------------------------------------------
# full HAB forward (wrapper around the 4 Pallas kernels)
# ---------------------------------------------------------------------------
def _relative_position_index(ws):
    coords = jnp.stack(jnp.meshgrid(jnp.arange(ws), jnp.arange(ws), indexing="ij"))
    cf = coords.reshape(2, -1)                               # (2, ws*ws)
    rel = cf[:, :, None] - cf[:, None, :]                    # (2, N, N)
    return (rel[0] + ws - 1) * (2 * ws - 1) + (rel[1] + ws - 1)


def hab_forward(x, x_size, params, *, num_heads, window_size, shift_size,
                conv_scale, attn_mask=None):
    """HAB forward.  Eval-mode semantics.

    # TODO(synk): Dropout / DropPath are training-time identities here and are not
    # implemented as kernels.
    """
    h, w = x_size
    b, n, c = x.shape
    assert n == h * w and c % num_heads == 0
    if min(h, w) <= window_size:          # same adjustment as HAB.__init__
        shift_size = 0
        window_size = min(h, w)
    ws = window_size
    assert h % ws == 0 and w % ws == 0, "HAT pads inputs so windows divide evenly"
    nwh, nww, nwin = h // ws, w // ws, ws * ws

    shortcut = x
    xn = layernorm_pallas(x, params["ln1_g"], params["ln1_b"])      # norm1, bf16 out
    x_img = xn.reshape(b, h, w, c)

    conv_x = cab_pallas(x_img, params)                              # fused CAB branch

    # Relative position bias: parameter-side gather, done once in XLA.
    rpi = _relative_position_index(ws)
    bias = params["rpb_table"][rpi.reshape(-1)]
    bias = bias.reshape(nwin, nwin, num_heads).transpose(2, 0, 1).astype(jnp.float32)

    if shift_size > 0:
        shifted = jnp.roll(x_img, (-shift_size, -shift_size), axis=(1, 2))
        mask = attn_mask.reshape(nwh, nww, nwin, nwin).astype(jnp.float32)
    else:
        shifted = x_img
        mask = None         # maskless kernel variant -> no zero-mask HBM traffic
    # TODO(synk): for shifted blocks, fold the roll/unroll into the window kernel via
    # manual DMA gather (pl.ANY + make_async_copy) to save two activation HBM passes.

    attn_img = window_attention_pallas(shifted, params, bias, mask,
                                       num_heads=num_heads, window_size=ws)
    if shift_size > 0:
        attn_img = jnp.roll(attn_img, (shift_size, shift_size), axis=(1, 2))
    attn_x = attn_img.reshape(b, n, c)

    return combine_norm2_mlp_pallas(shortcut, attn_x, conv_x, params, conv_scale)


# ---------------------------------------------------------------------------
# pure-JAX reference (mirrors the PyTorch module in f32, same tanh-GELU)
# ---------------------------------------------------------------------------
def hab_reference(x, x_size, p, *, num_heads, window_size, shift_size,
                  conv_scale, attn_mask=None):
    hp = jax.lax.Precision.HIGHEST
    h, w = x_size
    b, n, c = x.shape
    if min(h, w) <= window_size:
        shift_size = 0
        window_size = min(h, w)
    ws = window_size
    nwin = ws * ws

    def layer_norm(v, g, bta):
        vf = v.astype(jnp.float32)
        mu = vf.mean(-1, keepdims=True)
        var = ((vf - mu) ** 2).mean(-1, keepdims=True)
        return (vf - mu) / jnp.sqrt(var + LN_EPS) * g + bta

    shortcut = x
    xn = layer_norm(x, p["ln1_g"], p["ln1_b"])
    x_img = xn.reshape(b, h, w, c)

    # CAB branch (NHWC convs == PyTorch NCHW convs on permuted data)
    y1 = jax.lax.conv_general_dilated(x_img, p["conv1_w"], (1, 1), ((1, 1), (1, 1)),
                                      dimension_numbers=("NHWC", "HWIO", "NHWC"),
                                      precision=hp) + p["conv1_b"]
    y1 = _gelu(y1)
    y2 = jax.lax.conv_general_dilated(y1, p["conv2_w"], (1, 1), ((1, 1), (1, 1)),
                                      dimension_numbers=("NHWC", "HWIO", "NHWC"),
                                      precision=hp) + p["conv2_b"]
    pooled = y2.mean(axis=(1, 2))
    t = jnp.maximum(jnp.dot(pooled, p["ca1_w"], precision=hp) + p["ca1_b"], 0.0)
    s = jax.nn.sigmoid(jnp.dot(t, p["ca2_w"], precision=hp) + p["ca2_b"])
    conv_x = (y2 * s[:, None, None, :]).reshape(b, n, c)

    # attention branch
    shifted = jnp.roll(x_img, (-shift_size, -shift_size), axis=(1, 2)) if shift_size > 0 else x_img
    xw = shifted.reshape(b, h // ws, ws, w // ws, ws, c)
    xw = xw.transpose(0, 1, 3, 2, 4, 5).reshape(-1, nwin, c)

    hd = c // num_heads
    scale = float(hd) ** -0.5
    q = (jnp.dot(xw, p["wq"], precision=hp) + p["bq"]).reshape(-1, nwin, num_heads, hd).transpose(0, 2, 1, 3)
    k = (jnp.dot(xw, p["wk"], precision=hp) + p["bk"]).reshape(-1, nwin, num_heads, hd).transpose(0, 2, 1, 3)
    v = (jnp.dot(xw, p["wv"], precision=hp) + p["bv"]).reshape(-1, nwin, num_heads, hd).transpose(0, 2, 1, 3)
    attn = jnp.einsum("bhqd,bhkd->bhqk", q * scale, k, precision=hp)
    rpi = _relative_position_index(ws)
    bias = p["rpb_table"][rpi.reshape(-1)].reshape(nwin, nwin, num_heads).transpose(2, 0, 1)
    attn = attn + bias[None]
    if shift_size > 0 and attn_mask is not None:
        nw = attn_mask.shape[0]
        attn = attn.reshape(-1, nw, num_heads, nwin, nwin) + attn_mask[None, :, None]
        attn = attn.reshape(-1, num_heads, nwin, nwin)
    attn = jax.nn.softmax(attn, axis=-1)
    out = jnp.einsum("bhqk,bhkd->bhqd", attn, v, precision=hp)
    out = out.transpose(0, 2, 1, 3).reshape(-1, nwin, c)
    out = jnp.dot(out, p["wproj"], precision=hp) + p["bproj"]
    out = out.reshape(b, h // ws, w // ws, ws, ws, c).transpose(0, 1, 3, 2, 4, 5).reshape(b, h, w, c)
    if shift_size > 0:
        out = jnp.roll(out, (shift_size, shift_size), axis=(1, 2))
    attn_x = out.reshape(b, n, c)

    x1 = shortcut + attn_x + conv_scale * conv_x
    x2 = layer_norm(x1, p["ln2_g"], p["ln2_b"])
    m = _gelu(jnp.dot(x2, p["mlp_w1"], precision=hp) + p["mlp_b1"])
    m = jnp.dot(m, p["mlp_w2"], precision=hp) + p["mlp_b2"]
    return (x1 + m).astype(x.dtype)


# ---------------------------------------------------------------------------
# main
# ---------------------------------------------------------------------------
if __name__ == "__main__":
    B, H, W = 2, 16, 16
    DIM = 32
    NUM_HEADS = 2
    WINDOW_SIZE = 8
    SHIFT_SIZE = 0
    COMPRESS_RATIO = 2            # Cmid = 16
    SQUEEZE_FACTOR = 8            # Csq  = 4
    CONV_SCALE = 0.01
    MLP_RATIO = 4.0

    N = H * W
    CMID = DIM // COMPRESS_RATIO
    CSQ = DIM // SQUEEZE_FACTOR
    HIDDEN = int(DIM * MLP_RATIO)

    key = jax.random.PRNGKey(0)
    keys = jax.random.split(key, 26)

    def nrm(k, shape, scale=0.05):
        return scale * jax.random.normal(k, shape, dtype=jnp.float32)

    params = {
        "ln1_g": 1.0 + 0.1 * jax.random.normal(keys[0], (DIM,), jnp.float32),
        "ln1_b": 0.1 * jax.random.normal(keys[1], (DIM,), jnp.float32),
        "ln2_g": 1.0 + 0.1 * jax.random.normal(keys[2], (DIM,), jnp.float32),
        "ln2_b": 0.1 * jax.random.normal(keys[3], (DIM,), jnp.float32),
        "wq": nrm(keys[4], (DIM, DIM)), "bq": nrm(keys[5], (DIM,), 0.02),
        "wk": nrm(keys[6], (DIM, DIM)), "bk": nrm(keys[7], (DIM,), 0.02),
        "wv": nrm(keys[8], (DIM, DIM)), "bv": nrm(keys[9], (DIM,), 0.02),
        "wproj": nrm(keys[10], (DIM, DIM)), "bproj": nrm(keys[11], (DIM,), 0.02),
        "rpb_table": 0.02 * jax.random.normal(
            keys[12], ((2 * WINDOW_SIZE - 1) ** 2, NUM_HEADS), jnp.float32),
        "conv1_w": nrm(keys[13], (3, 3, DIM, CMID)), "conv1_b": nrm(keys[14], (CMID,), 0.02),
        "conv2_w": nrm(keys[15], (3, 3, CMID, DIM)), "conv2_b": nrm(keys[16], (DIM,), 0.02),
        "ca1_w": nrm(keys[17], (DIM, CSQ)), "ca1_b": nrm(keys[18], (CSQ,), 0.02),
        "ca2_w": nrm(keys[19], (CSQ, DIM)), "ca2_b": nrm(keys[20], (DIM,), 0.02),
        "mlp_w1": nrm(keys[21], (DIM, HIDDEN)), "mlp_b1": nrm(keys[22], (HIDDEN,), 0.02),
        "mlp_w2": nrm(keys[23], (HIDDEN, DIM)), "mlp_b2": nrm(keys[24], (DIM,), 0.02),
    }
    x = jax.random.normal(keys[25], (B, N, DIM), dtype=jnp.float32)

    fwd = jax.jit(
        functools.partial(hab_forward, num_heads=NUM_HEADS, window_size=WINDOW_SIZE,
                          shift_size=SHIFT_SIZE, conv_scale=CONV_SCALE),
        static_argnums=(1,))
    out = fwd(x, (H, W), params)
    out = jax.block_until_ready(out)
    assert out.shape == (B, N, DIM), out.shape

    ref = hab_reference(x, (H, W), params, num_heads=NUM_HEADS,
                        window_size=WINDOW_SIZE, shift_size=SHIFT_SIZE,
                        conv_scale=CONV_SCALE)
    # bf16 MXU operands (vs the f32 HIGHEST-precision reference) dominate the error.
    err = float(jnp.max(jnp.abs(out - ref)))
    assert err < 5e-2, f"max abs diff vs reference: {err}"

    print("KERNEL_OK")
</pallas_src>

<mosaic_0001>
module attributes {stable_mosaic.version = 11 : i64} {
  func.func @_layernorm_kernel(%arg0: i32, %arg1: i32, %arg2: memref<1x256x32xf32, #tpu.memory_space<vmem>>, %arg3: memref<1x32xf32, #tpu.memory_space<vmem>>, %arg4: memref<1x32xf32, #tpu.memory_space<vmem>>, %arg5: memref<1x256x32xbf16, #tpu.memory_space<vmem>>) attributes {dimension_semantics = [#tpu.dimension_semantics<parallel>, #tpu.dimension_semantics<parallel>], iteration_bounds = array<i64: 2, 1>, scalar_prefetch = 0 : i64, scratch_operands = 0 : i64, tpu.core_type = #tpu.core_type<tc>, window_params = [{transform_indices = @transform_0, window_bounds = array<i64: 1, 256, 32>}, {pipeline_mode = #tpu.pipeline_mode<synchronous>, transform_indices = @transform_1, window_bounds = array<i64: 1, 32>}, {pipeline_mode = #tpu.pipeline_mode<synchronous>, transform_indices = @transform_2, window_bounds = array<i64: 1, 32>}, {transform_indices = @transform_3, window_bounds = array<i64: 1, 256, 32>}]} {
    %c0 = arith.constant 0 : index
    %c0_0 = arith.constant 0 : index
    %c0_1 = arith.constant 0 : index
    %0 = vector.load %arg2[%c0, %c0_0, %c0_1] : memref<1x256x32xf32, #tpu.memory_space<vmem>>, vector<1x256x32xf32>
    %1 = vector.shape_cast %0 : vector<1x256x32xf32> to vector<256x32xf32>
    %c0_2 = arith.constant 0 : index
    %c0_3 = arith.constant 0 : index
    %2 = vector.load %arg3[%c0_2, %c0_3] : memref<1x32xf32, #tpu.memory_space<vmem>>, vector<1x32xf32>
    %c0_4 = arith.constant 0 : index
    %c0_5 = arith.constant 0 : index
    %3 = vector.load %arg4[%c0_4, %c0_5] : memref<1x32xf32, #tpu.memory_space<vmem>>, vector<1x32xf32>
    %cst = arith.constant dense<0.000000e+00> : vector<256xf32>
    %4 = vector.multi_reduction <add>, %1, %cst [1] : vector<256x32xf32> to vector<256xf32>
    %5 = vector.shape_cast %4 : vector<256xf32> to vector<256x1xf32>
    %cst_6 = arith.constant 3.200000e+01 : f32
    %6 = vector.broadcast %cst_6 : f32 to vector<256x1xf32>
    %7 = arith.divf %5, %6 : vector<256x1xf32>
    %8 = vector.broadcast %7 : vector<256x1xf32> to vector<256x32xf32>
    %9 = arith.subf %1, %8 : vector<256x32xf32>
    %10 = arith.mulf %9, %9 : vector<256x32xf32>
    %cst_7 = arith.constant dense<0.000000e+00> : vector<256xf32>
    %11 = vector.multi_reduction <add>, %10, %cst_7 [1] : vector<256x32xf32> to vector<256xf32>
    %12 = vector.shape_cast %11 : vector<256xf32> to vector<256x1xf32>
    %cst_8 = arith.constant 3.200000e+01 : f32
    %13 = vector.broadcast %cst_8 : f32 to vector<256x1xf32>
    %14 = arith.divf %12, %13 : vector<256x1xf32>
    %cst_9 = arith.constant 9.99999974E-6 : f32
    %15 = vector.broadcast %cst_9 : f32 to vector<256x1xf32>
    %16 = arith.addf %14, %15 : vector<256x1xf32>
    %17 = math.rsqrt %16 : vector<256x1xf32>
    %18 = vector.broadcast %17 : vector<256x1xf32> to vector<256x32xf32>
    %19 = arith.mulf %9, %18 : vector<256x32xf32>
    %20 = vector.broadcast %2 : vector<1x32xf32> to vector<256x32xf32>
    %21 = arith.mulf %19, %20 : vector<256x32xf32>
    %22 = vector.broadcast %3 : vector<1x32xf32> to vector<256x32xf32>
    %23 = arith.addf %21, %22 : vector<256x32xf32>
    %24 = arith.truncf %23 : vector<256x32xf32> to vector<256x32xbf16>
    %c0_10 = arith.constant 0 : index
    %c0_11 = arith.constant 0 : index
    %c0_12 = arith.constant 0 : index
    %25 = vector.load %arg5[%c0_10, %c0_11, %c0_12] : memref<1x256x32xbf16, #tpu.memory_space<vmem>>, vector<1x256x32xbf16>
    %26 = vector.shape_cast %25 : vector<1x256x32xbf16> to vector<256x32xbf16>
    %27 = vector.shape_cast %24 : vector<256x32xbf16> to vector<1x256x32xbf16>
    tpu.vector_store %arg5[%c0_10, %c0_11, %c0_12], %27 {strides = array<i32>} : memref<1x256x32xbf16, #tpu.memory_space<vmem>>, vector<1x256x32xbf16>,
    return
  }
  func.func @transform_0(%arg0: i32, %arg1: i32) -> (i32, i32, i32) {
    %c0_i32 = arith.constant 0 : i32
    %c0_i32_0 = arith.constant 0 : i32
    return %arg0, %arg1, %c0_i32 : i32, i32, i32
  }
  func.func @transform_1(%arg0: i32, %arg1: i32) -> (i32, i32) {
    %c0_i32 = arith.constant 0 : i32
    %c0_i32_0 = arith.constant 0 : i32
    %c0_i32_1 = arith.constant 0 : i32
    return %c0_i32, %c0_i32_0 : i32, i32
  }
  func.func @transform_2(%arg0: i32, %arg1: i32) -> (i32, i32) {
    %c0_i32 = arith.constant 0 : i32
    %c0_i32_0 = arith.constant 0 : i32
    %c0_i32_1 = arith.constant 0 : i32
    return %c0_i32, %c0_i32_0 : i32, i32
  }
  func.func @transform_3(%arg0: i32, %arg1: i32) -> (i32, i32, i32) {
    %c0_i32 = arith.constant 0 : i32
    %c0_i32_0 = arith.constant 0 : i32
    return %arg0, %arg1, %c0_i32 : i32, i32, i32
  }
}

module attributes {stable_mosaic.version = 11 : i64} {
  func.func @_window_attn_kernel(%arg0: i32, %arg1: i32, %arg2: memref<1x8x16x32xbf16, #tpu.memory_space<vmem>>, %arg3: memref<32x96xbf16, #tpu.memory_space<vmem>>, %arg4: memref<1x96xf32, #tpu.memory_space<vmem>>, %arg5: memref<32x32xbf16, #tpu.memory_space<vmem>>, %arg6: memref<1x32xf32, #tpu.memory_space<vmem>>, %arg7: memref<2x64x64xf32, #tpu.memory_space<vmem>>, %arg8: memref<1x8x16x32xbf16, #tpu.memory_space<vmem>>) attributes {dimension_semantics = [#tpu.dimension_semantics<parallel>, #tpu.dimension_semantics<parallel>], iteration_bounds = array<i64: 2, 2>, scalar_prefetch = 0 : i64, scratch_operands = 0 : i64, tpu.core_type = #tpu.core_type<tc>, window_params = [{transform_indices = @transform_0, window_bounds = array<i64: 1, 8, 16, 32>}, {pipeline_mode = #tpu.pipeline_mode<synchronous>, transform_indices = @transform_1, window_bounds = array<i64: 32, 96>}, {pipeline_mode = #tpu.pipeline_mode<synchronous>, transform_indices = @transform_2, window_bounds = array<i64: 1, 96>}, {pipeline_mode = #tpu.pipeline_mode<synchronous>, transform_indices = @transform_3, window_bounds = array<i64: 32, 32>}, {pipeline_mode = #tpu.pipeline_mode<synchronous>, transform_indices = @transform_4, window_bounds = array<i64: 1, 32>}, {pipeline_mode = #tpu.pipeline_mode<synchronous>, transform_indices = @transform_5, window_bounds = array<i64: 2, 64, 64>}, {transform_indices = @transform_6, window_bounds = array<i64: 1, 8, 16, 32>}]} {
    %c0 = arith.constant 0 : index
    %c0_0 = arith.constant 0 : index
    %c0_1 = arith.constant 0 : index
    %c0_2 = arith.constant 0 : index
    %0 = vector.load %arg2[%c0, %c0_0, %c0_1, %c0_2] : memref<1x8x16x32xbf16, #tpu.memory_space<vmem>>, vector<1x8x16x32xbf16>
    %1 = vector.shape_cast %0 : vector<1x8x16x32xbf16> to vector<8x16x32xbf16>
    %2 = vector.shape_cast %1 : vector<8x16x32xbf16> to vector<128x32xbf16>
    %c0_3 = arith.constant 0 : index
    %c0_4 = arith.constant 0 : index
    %3 = vector.load %arg3[%c0_3, %c0_4] : memref<32x96xbf16, #tpu.memory_space<vmem>>, vector<32x96xbf16>
    %cst = arith.constant dense<0.000000e+00> : vector<128x96xf32>
    %4 = tpu.matmul %2, %3, %cst {dimension_numbers = #tpu.dot_dimension_numbers<[1], [0], [0], [1], [0, 0, 1, 1], [], []>} : vector<128x32xbf16>, vector<32x96xbf16>, vector<128x96xf32> -> vector<128x96xf32>
    %c0_5 = arith.constant 0 : index
    %c0_6 = arith.constant 0 : index
    %5 = vector.load %arg4[%c0_5, %c0_6] : memref<1x96xf32, #tpu.memory_space<vmem>>, vector<1x96xf32>
    %6 = vector.broadcast %5 : vector<1x96xf32> to vector<128x96xf32>
    %7 = arith.addf %4, %6 : vector<128x96xf32>
    %8 = vector.shape_cast %7 : vector<128x96xf32> to vector<8x16x96xf32>
    %9 = vector.extract_strided_slice %8 {offsets = [0, 0, 0], sizes = [8, 8, 96], strides = [1, 1, 1]} : vector<8x16x96xf32> to vector<8x8x96xf32>
    %10 = vector.shape_cast %9 : vector<8x8x96xf32> to vector<64x96xf32>
    %11 = vector.extract_strided_slice %10 {offsets = [0, 0], sizes = [64, 16], strides = [1, 1]} : vector<64x96xf32> to vector<64x16xf32>
    %12 = vector.extract_strided_slice %10 {offsets = [0, 32], sizes = [64, 16], strides = [1, 1]} : vector<64x96xf32> to vector<64x16xf32>
    %13 = vector.extract_strided_slice %10 {offsets = [0, 64], sizes = [64, 16], strides = [1, 1]} : vector<64x96xf32> to vector<64x16xf32>
    %cst_7 = arith.constant 2.500000e-01 : f32
    %14 = vector.broadcast %cst_7 : f32 to vector<64x16xf32>
    %15 = arith.mulf %11, %14 : vector<64x16xf32>
    %16 = arith.truncf %15 : vector<64x16xf32> to vector<64x16xbf16>
    %17 = arith.truncf %12 : vector<64x16xf32> to vector<64x16xbf16>
    %cst_8 = arith.constant dense<0.000000e+00> : vector<64x64xf32>
    %18 = tpu.matmul %16, %17, %cst_8 {dimension_numbers = #tpu.dot_dimension_numbers<[1], [1], [0], [0], [0, 0, 1, 0], [], []>} : vector<64x16xbf16>, vector<64x16xbf16>, vector<64x64xf32> -> vector<64x64xf32>
    %c0_9 = arith.constant 0 : index
    %c0_10 = arith.constant 0 : index
    %c0_11 = arith.constant 0 : index
    %19 = vector.load %arg7[%c0_9, %c0_10, %c0_11] : memref<2x64x64xf32, #tpu.memory_space<vmem>>, vector<1x64x64xf32>
    %20 = vector.shape_cast %19 : vector<1x64x64xf32> to vector<64x64xf32>
    %21 = arith.addf %18, %20 : vector<64x64xf32>
    %cst_12 = arith.constant dense<0xFF800000> : vector<64xf32>
    %22 = vector.multi_reduction <maximumf>, %21, %cst_12 [1] : vector<64x64xf32> to vector<64xf32>
    %23 = vector.shape_cast %22 : vector<64xf32> to vector<64x1xf32>
    %24 = vector.broadcast %23 : vector<64x1xf32> to vector<64x64xf32>
    %25 = arith.subf %21, %24 : vector<64x64xf32>
    %26 = math.exp %25 : vector<64x64xf32>
    %cst_13 = arith.constant dense<0.000000e+00> : vector<64xf32>
    %27 = vector.multi_reduction <add>, %26, %cst_13 [1] : vector<64x64xf32> to vector<64xf32>
    %28 = vector.shape_cast %27 : vector<64xf32> to vector<64x1xf32>
    %29 = tpu.reciprocal %28 {approx = true} : vector<64x1xf32> -> vector<64x1xf32>
    %30 = vector.broadcast %29 : vector<64x1xf32> to vector<64x64xf32>
    %31 = arith.mulf %26, %30 : vector<64x64xf32>
    %32 = arith.truncf %31 : vector<64x64xf32> to vector<64x64xbf16>
    %33 = arith.truncf %13 : vector<64x16xf32> to vector<64x16xbf16>
    %cst_14 = arith.constant dense<0.000000e+00> : vector<64x16xf32>
    %34 = tpu.matmul %32, %33, %cst_14 {dimension_numbers = #tpu.dot_dimension_numbers<[1], [0], [0], [1], [0, 0, 1, 1], [], []>} : vector<64x64xbf16>, vector<64x16xbf16>, vector<64x16xf32> -> vector<64x16xf32>
    %35 = vector.extract_strided_slice %10 {offsets = [0, 16], sizes = [64, 16], strides = [1, 1]} : vector<64x96xf32> to vector<64x16xf32>
    %36 = vector.extract_strided_slice %10 {offsets = [0, 48], sizes = [64, 16], strides = [1, 1]} : vector<64x96xf32> to vector<64x16xf32>
    %37 = vector.extract_strided_slice %10 {offsets = [0, 80], sizes = [64, 16], strides = [1, 1]} : vector<64x96xf32> to vector<64x16xf32>
    %cst_15 = arith.constant 2.500000e-01 : f32
    %38 = vector.broadcast %cst_15 : f32 to vector<64x16xf32>
    %39 = arith.mulf %35, %38 : vector<64x16xf32>
    %40 = arith.truncf %39 : vector<64x16xf32> to vector<64x16xbf16>
    %41 = arith.truncf %36 : vector<64x16xf32> to vector<64x16xbf16>
    %cst_16 = arith.constant dense<0.000000e+00> : vector<64x64xf32>
    %42 = tpu.matmul %40, %41, %cst_16 {dimension_numbers = #tpu.dot_dimension_numbers<[1], [1], [0], [0], [0, 0, 1, 0], [], []>} : vector<64x16xbf16>, vector<64x16xbf16>, vector<64x64xf32> -> vector<64x64xf32>
    %c1 = arith.constant 1 : index
    %c0_17 = arith.constant 0 : index
    %c0_18 = arith.constant 0 : index
    %43 = vector.load %arg7[%c1, %c0_17, %c0_18] : memref<2x64x64xf32, #tpu.memory_space<vmem>>, vector<1x64x64xf32>
    %44 = vector.shape_cast %43 : vector<1x64x64xf32> to vector<64x64xf32>
    %45 = arith.addf %42, %44 : vector<64x64xf32>
    %cst_19 = arith.constant dense<0xFF800000> : vector<64xf32>
    %46 = vector.multi_reduction <maximumf>, %45, %cst_19 [1] : vector<64x64xf32> to vector<64xf32>
    %47 = vector.shape_cast %46 : vector<64xf32> to vector<64x1xf32>
    %48 = vector.broadcast %47 : vector<64x1xf32> to vector<64x64xf32>
    %49 = arith.subf %45, %48 : vector<64x64xf32>
    %50 = math.exp %49 : vector<64x64xf32>
    %cst_20 = arith.constant dense<0.000000e+00> : vector<64xf32>
    %51 = vector.multi_reduction <add>, %50, %cst_20 [1] : vector<64x64xf32> to vector<64xf32>
    %52 = vector.shape_cast %51 : vector<64xf32> to vector<64x1xf32>
    %53 = tpu.reciprocal %52 {approx = true} : vector<64x1xf32> -> vector<64x1xf32>
    %54 = vector.broadcast %53 : vector<64x1xf32> to vector<64x64xf32>
    %55 = arith.mulf %50, %54 : vector<64x64xf32>
    %56 = arith.truncf %55 : vector<64x64xf32> to vector<64x64xbf16>
    %57 = arith.truncf %37 : vector<64x16xf32> to vector<64x16xbf16>
    %cst_21 = arith.constant dense<0.000000e+00> : vector<64x16xf32>
    %58 = tpu.matmul %56, %57, %cst_21 {dimension_numbers = #tpu.dot_dimension_numbers<[1], [0], [0], [1], [0, 0, 1, 1], [], []>} : vector<64x64xbf16>, vector<64x16xbf16>, vector<64x16xf32> -> vector<64x16xf32>
    %59 = tpu.concatenate %34, %58 in 1 : vector<64x16xf32>, vector<64x16xf32> -> vector<64x32xf32>
    %60 = vector.extract_strided_slice %8 {offsets = [0, 8, 0], sizes = [8, 8, 96], strides = [1, 1, 1]} : vector<8x16x96xf32> to vector<8x8x96xf32>
    %61 = vector.shape_cast %60 : vector<8x8x96xf32> to vector<64x96xf32>
    %62 = vector.extract_strided_slice %61 {offsets = [0, 0], sizes = [64, 16], strides = [1, 1]} : vector<64x96xf32> to vector<64x16xf32>
    %63 = vector.extract_strided_slice %61 {offsets = [0, 32], sizes = [64, 16], strides = [1, 1]} : vector<64x96xf32> to vector<64x16xf32>
    %64 = vector.extract_strided_slice %61 {offsets = [0, 64], sizes = [64, 16], strides = [1, 1]} : vector<64x96xf32> to vector<64x16xf32>
    %cst_22 = arith.constant 2.500000e-01 : f32
    %65 = vector.broadcast %cst_22 : f32 to vector<64x16xf32>
    %66 = arith.mulf %62, %65 : vector<64x16xf32>
    %67 = arith.truncf %66 : vector<64x16xf32> to vector<64x16xbf16>
    %68 = arith.truncf %63 : vector<64x16xf32> to vector<64x16xbf16>
    %cst_23 = arith.constant dense<0.000000e+00> : vector<64x64xf32>
    %69 = tpu.matmul %67, %68, %cst_23 {dimension_numbers = #tpu.dot_dimension_numbers<[1], [1], [0], [0], [0, 0, 1, 0], [], []>} : vector<64x16xbf16>, vector<64x16xbf16>, vector<64x64xf32> -> vector<64x64xf32>
    %c0_24 = arith.constant 0 : index
    %c0_25 = arith.constant 0 : index
    %c0_26 = arith.constant 0 : index
    %70 = vector.load %arg7[%c0_24, %c0_25, %c0_26] : memref<2x64x64xf32, #tpu.memory_space<vmem>>, vector<1x64x64xf32>
    %71 = vector.shape_cast %70 : vector<1x64x64xf32> to vector<64x64xf32>
    %72 = arith.addf %69, %71 : vector<64x64xf32>
    %cst_27 = arith.constant dense<0xFF800000> : vector<64xf32>
    %73 = vector.multi_reduction <maximumf>, %72, %cst_27 [1] : vector<64x64xf32> to vector<64xf32>
    %74 = vector.shape_cast %73 : vector<64xf32> to vector<64x1xf32>
    %75 = vector.broadcast %74 : vector<64x1xf32> to vector<64x64xf32>
    %76 = arith.subf %72, %75 : vector<64x64xf32>
    %77 = math.exp %76 : vector<64x64xf32>
    %cst_28 = arith.constant dense<0.000000e+00> : vector<64xf32>
    %78 = vector.multi_reduction <add>, %77, %cst_28 [1] : vector<64x64xf32> to vector<64xf32>
    %79 = vector.shape_cast %78 : vector<64xf32> to vector<64x1xf32>
    %80 = tpu.reciprocal %79 {approx = true} : vector<64x1xf32> -> vector<64x1xf32>
    %81 = vector.broadcast %80 : vector<64x1xf32> to vector<64x64xf32>
    %82 = arith.mulf %77, %81 : vector<64x64xf32>
    %83 = arith.truncf %82 : vector<64x64xf32> to vector<64x64xbf16>
    %84 = arith.truncf %64 : vector<64x16xf32> to vector<64x16xbf16>
    %cst_29 = arith.constant dense<0.000000e+00> : vector<64x16xf32>
    %85 = tpu.matmul %83, %84, %cst_29 {dimension_numbers = #tpu.dot_dimension_numbers<[1], [0], [0], [1], [0, 0, 1, 1], [], []>} : vector<64x64xbf16>, vector<64x16xbf16>, vector<64x16xf32> -> vector<64x16xf32>
    %86 = vector.extract_strided_slice %61 {offsets = [0, 16], sizes = [64, 16], strides = [1, 1]} : vector<64x96xf32> to vector<64x16xf32>
    %87 = vector.extract_strided_slice %61 {offsets = [0, 48], sizes = [64, 16], strides = [1, 1]} : vector<64x96xf32> to vector<64x16xf32>
    %88 = vector.extract_strided_slice %61 {offsets = [0, 80], sizes = [64, 16], strides = [1, 1]} : vector<64x96xf32> to vector<64x16xf32>
    %cst_30 = arith.constant 2.500000e-01 : f32
    %89 = vector.broadcast %cst_30 : f32 to vector<64x16xf32>
    %90 = arith.mulf %86, %89 : vector<64x16xf32>
    %91 = arith.truncf %90 : vector<64x16xf32> to vector<64x16xbf16>
    %92 = arith.truncf %87 : vector<64x16xf32> to vector<64x16xbf16>
    %cst_31 = arith.constant dense<0.000000e+00> : vector<64x64xf32>
    %93 = tpu.matmul %91, %92, %cst_31 {dimension_numbers = #tpu.dot_dimension_numbers<[1], [1], [0], [0], [0, 0, 1, 0], [], []>} : vector<64x16xbf16>, vector<64x16xbf16>, vector<64x64xf32> -> vector<64x64xf32>
    %c1_32 = arith.constant 1 : index
    %c0_33 = arith.constant 0 : index
    %c0_34 = arith.constant 0 : index
    %94 = vector.load %arg7[%c1_32, %c0_33, %c0_34] : memref<2x64x64xf32, #tpu.memory_space<vmem>>, vector<1x64x64xf32>
    %95 = vector.shape_cast %94 : vector<1x64x64xf32> to vector<64x64xf32>
    %96 = arith.addf %93, %95 : vector<64x64xf32>
    %cst_35 = arith.constant dense<0xFF800000> : vector<64xf32>
    %97 = vector.multi_reduction <maximumf>, %96, %cst_35 [1] : vector<64x64xf32> to vector<64xf32>
    %98 = vector.shape_cast %97 : vector<64xf32> to vector<64x1xf32>
    %99 = vector.broadcast %98 : vector<64x1xf32> to vector<64x64xf32>
    %100 = arith.subf %96, %99 : vector<64x64xf32>
    %101 = math.exp %100 : vector<64x64xf32>
    %cst_36 = arith.constant dense<0.000000e+00> : vector<64xf32>
    %102 = vector.multi_reduction <add>, %101, %cst_36 [1] : vector<64x64xf32> to vector<64xf32>
    %103 = vector.shape_cast %102 : vector<64xf32> to vector<64x1xf32>
    %104 = tpu.reciprocal %103 {approx = true} : vector<64x1xf32> -> vector<64x1xf32>
    %105 = vector.broadcast %104 : vector<64x1xf32> to vector<64x64xf32>
    %106 = arith.mulf %101, %105 : vector<64x64xf32>
    %107 = arith.truncf %106 : vector<64x64xf32> to vector<64x64xbf16>
    %108 = arith.truncf %88 : vector<64x16xf32> to vector<64x16xbf16>
    %cst_37 = arith.constant dense<0.000000e+00> : vector<64x16xf32>
    %109 = tpu.matmul %107, %108, %cst_37 {dimension_numbers = #tpu.dot_dimension_numbers<[1], [0], [0], [1], [0, 0, 1, 1], [], []>} : vector<64x64xbf16>, vector<64x16xbf16>, vector<64x16xf32> -> vector<64x16xf32>
    %110 = tpu.concatenate %85, %109 in 1 : vector<64x16xf32>, vector<64x16xf32> -> vector<64x32xf32>
    %111 = tpu.concatenate %59, %110 in 0 : vector<64x32xf32>, vector<64x32xf32> -> vector<128x32xf32>
    %112 = arith.truncf %111 : vector<128x32xf32> to vector<128x32xbf16>
    %c0_38 = arith.constant 0 : index
    %c0_39 = arith.constant 0 : index
    %113 = vector.load %arg5[%c0_38, %c0_39] : memref<32x32xbf16, #tpu.memory_space<vmem>>, vector<32x32xbf16>
    %cst_40 = arith.constant dense<0.000000e+00> : vector<128x32xf32>
    %114 = tpu.matmul %112, %113, %cst_40 {dimension_numbers = #tpu.dot_dimension_numbers<[1], [0], [0], [1], [0, 0, 1, 1], [], []>} : vector<128x32xbf16>, vector<32x32xbf16>, vector<128x32xf32> -> vector<128x32xf32>
    %c0_41 = arith.constant 0 : index
    %c0_42 = arith.constant 0 : index
    %115 = vector.load %arg6[%c0_41, %c0_42] : memref<1x32xf32, #tpu.memory_space<vmem>>, vector<1x32xf32>
    %116 = vector.broadcast %115 : vector<1x32xf32> to vector<128x32xf32>
    %117 = arith.addf %114, %116 : vector<128x32xf32>
    %118 = vector.extract_strided_slice %117 {offsets = [0, 0], sizes = [64, 32], strides = [1, 1]} : vector<128x32xf32> to vector<64x32xf32>
    %119 = vector.shape_cast %118 : vector<64x32xf32> to vector<8x8x32xf32>
    %120 = arith.truncf %119 : vector<8x8x32xf32> to vector<8x8x32xbf16>
    %c0_43 = arith.constant 0 : index
    %c0_44 = arith.constant 0 : index
    %c0_45 = arith.constant 0 : index
    %c0_46 = arith.constant 0 : index
    %121 = vector.load %arg8[%c0_43, %c0_44, %c0_45, %c0_46] : memref<1x8x16x32xbf16, #tpu.memory_space<vmem>>, vector<1x8x8x32xbf16>
    %122 = vector.shape_cast %121 : vector<1x8x8x32xbf16> to vector<8x8x32xbf16>
    %123 = vector.shape_cast %120 : vector<8x8x32xbf16> to vector<1x8x8x32xbf16>
    tpu.vector_store %arg8[%c0_43, %c0_44, %c0_45, %c0_46], %123 {strides = array<i32>} : memref<1x8x16x32xbf16, #tpu.memory_space<vmem>>, vector<1x8x8x32xbf16>,
    %124 = vector.extract_strided_slice %117 {offsets = [64, 0], sizes = [64, 32], strides = [1, 1]} : vector<128x32xf32> to vector<64x32xf32>
    %125 = vector.shape_cast %124 : vector<64x32xf32> to vector<8x8x32xf32>
    %126 = arith.truncf %125 : vector<8x8x32xf32> to vector<8x8x32xbf16>
    %c0_47 = arith.constant 0 : index
    %c0_48 = arith.constant 0 : index
    %c8 = arith.constant 8 : index
    %c0_49 = arith.constant 0 : index
    %127 = vector.load %arg8[%c0_47, %c0_48, %c8, %c0_49] : memref<1x8x16x32xbf16, #tpu.memory_space<vmem>>, vector<1x8x8x32xbf16>
    %128 = vector.shape_cast %127 : vector<1x8x8x32xbf16> to vector<8x8x32xbf16>
    %129 = vector.shape_cast %126 : vector<8x8x32xbf16> to vector<1x8x8x32xbf16>
    tpu.vector_store %arg8[%c0_47, %c0_48, %c8, %c0_49], %129 {strides = array<i32>} : memref<1x8x16x32xbf16, #tpu.memory_space<vmem>>, vector<1x8x8x32xbf16>,
    return
  }
  func.func @transform_0(%arg0: i32, %arg1: i32) -> (i32, i32, i32, i32) {
    %c0_i32 = arith.constant 0 : i32
    %c0_i32_0 = arith.constant 0 : i32
    %c0_i32_1 = arith.constant 0 : i32
    return %arg0, %arg1, %c0_i32, %c0_i32_0 : i32, i32, i32, i32
  }
  func.func @transform_1(%arg0: i32, %arg1: i32) -> (i32, i32) {
    %c0_i32 = arith.constant 0 : i32
    %c0_i32_0 = arith.constant 0 : i32
    %c0_i32_1 = arith.constant 0 : i32
    return %c0_i32, %c0_i32_0 : i32, i32
  }
  func.func @transform_2(%arg0: i32, %arg1: i32) -> (i32, i32) {
    %c0_i32 = arith.constant 0 : i32
    %c0_i32_0 = arith.constant 0 : i32
    %c0_i32_1 = arith.constant 0 : i32
    return %c0_i32, %c0_i32_0 : i32, i32
  }
  func.func @transform_3(%arg0: i32, %arg1: i32) -> (i32, i32) {
    %c0_i32 = arith.constant 0 : i32
    %c0_i32_0 = arith.constant 0 : i32
    %c0_i32_1 = arith.constant 0 : i32
    return %c0_i32, %c0_i32_0 : i32, i32
  }
  func.func @transform_4(%arg0: i32, %arg1: i32) -> (i32, i32) {
    %c0_i32 = arith.constant 0 : i32
    %c0_i32_0 = arith.constant 0 : i32
    %c0_i32_1 = arith.constant 0 : i32
    return %c0_i32, %c0_i32_0 : i32, i32
  }
  func.func @transform_5(%arg0: i32, %arg1: i32) -> (i32, i32, i32) {
    %c0_i32 = arith.constant 0 : i32
    %c0_i32_0 = arith.constant 0 : i32
    %c0_i32_1 = arith.constant 0 : i32
    %c0_i32_2 = arith.constant 0 : i32
    return %c0_i32, %c0_i32_0, %c0_i32_1 : i32, i32, i32
  }
  func.func @transform_6(%arg0: i32, %arg1: i32) -> (i32, i32, i32, i32) {
    %c0_i32 = arith.constant 0 : i32
    %c0_i32_0 = arith.constant 0 : i32
    %c0_i32_1 = arith.constant 0 : i32
    return %arg0, %arg1, %c0_i32, %c0_i32_0 : i32, i32, i32, i32
  }
}

module attributes {stable_mosaic.version = 11 : i64} {
  func.func @_cab_kernel(%arg0: i32, %arg1: memref<1x16x16x32xbf16, #tpu.memory_space<vmem>>, %arg2: memref<288x16xbf16, #tpu.memory_space<vmem>>, %arg3: memref<1x16xf32, #tpu.memory_space<vmem>>, %arg4: memref<144x32xbf16, #tpu.memory_space<vmem>>, %arg5: memref<1x32xf32, #tpu.memory_space<vmem>>, %arg6: memref<32x4xf32, #tpu.memory_space<vmem>>, %arg7: memref<1x4xf32, #tpu.memory_space<vmem>>, %arg8: memref<4x32xf32, #tpu.memory_space<vmem>>, %arg9: memref<1x32xf32, #tpu.memory_space<vmem>>, %arg10: memref<1x256x32xbf16, #tpu.memory_space<vmem>>) attributes {dimension_semantics = [#tpu.dimension_semantics<parallel>], iteration_bounds = array<i64: 2>, scalar_prefetch = 0 : i64, scratch_operands = 0 : i64, tpu.core_type = #tpu.core_type<tc>, window_params = [{transform_indices = @transform_0, window_bounds = array<i64: 1, 16, 16, 32>}, {pipeline_mode = #tpu.pipeline_mode<synchronous>, transform_indices = @transform_1, window_bounds = array<i64: 288, 16>}, {pipeline_mode = #tpu.pipeline_mode<synchronous>, transform_indices = @transform_2, window_bounds = array<i64: 1, 16>}, {pipeline_mode = #tpu.pipeline_mode<synchronous>, transform_indices = @transform_3, window_bounds = array<i64: 144, 32>}, {pipeline_mode = #tpu.pipeline_mode<synchronous>, transform_indices = @transform_4, window_bounds = array<i64: 1, 32>}, {pipeline_mode = #tpu.pipeline_mode<synchronous>, transform_indices = @transform_5, window_bounds = array<i64: 32, 4>}, {pipeline_mode = #tpu.pipeline_mode<synchronous>, transform_indices = @transform_6, window_bounds = array<i64: 1, 4>}, {pipeline_mode = #tpu.pipeline_mode<synchronous>, transform_indices = @transform_7, window_bounds = array<i64: 4, 32>}, {pipeline_mode = #tpu.pipeline_mode<synchronous>, transform_indices = @transform_8, window_bounds = array<i64: 1, 32>}, {transform_indices = @transform_9, window_bounds = array<i64: 1, 256, 32>}]} {
    %c0 = arith.constant 0 : index
    %c0_0 = arith.constant 0 : index
    %c0_1 = arith.constant 0 : index
    %c0_2 = arith.constant 0 : index
    %0 = vector.load %arg1[%c0, %c0_0, %c0_1, %c0_2] : memref<1x16x16x32xbf16, #tpu.memory_space<vmem>>, vector<1x16x16x32xbf16>
    %1 = vector.shape_cast %0 : vector<1x16x16x32xbf16> to vector<16x16x32xbf16>
    %cst = arith.constant 0.000000e+00 : bf16
    %2 = vector.broadcast %cst : bf16 to vector<1x16x32xbf16>
    %cst_3 = arith.constant 0.000000e+00 : bf16
    %3 = vector.broadcast %cst_3 : bf16 to vector<18x1x32xbf16>
    %4 = tpu.concatenate %2, %1, %2 in 0 : vector<1x16x32xbf16>, vector<16x16x32xbf16>, vector<1x16x32xbf16> -> vector<18x16x32xbf16>
    %5 = tpu.concatenate %3, %4, %3 in 1 : vector<18x1x32xbf16>, vector<18x16x32xbf16>, vector<18x1x32xbf16> -> vector<18x18x32xbf16>
    %6 = vector.extract_strided_slice %5 {offsets = [0, 0, 0], sizes = [16, 16, 32], strides = [1, 1, 1]} : vector<18x18x32xbf16> to vector<16x16x32xbf16>
    %7 = vector.shape_cast %6 : vector<16x16x32xbf16> to vector<256x32xbf16>
    %8 = vector.extract_strided_slice %5 {offsets = [0, 1, 0], sizes = [16, 16, 32], strides = [1, 1, 1]} : vector<18x18x32xbf16> to vector<16x16x32xbf16>
    %9 = vector.shape_cast %8 : vector<16x16x32xbf16> to vector<256x32xbf16>
    %10 = vector.extract_strided_slice %5 {offsets = [0, 2, 0], sizes = [16, 16, 32], strides = [1, 1, 1]} : vector<18x18x32xbf16> to vector<16x16x32xbf16>
    %11 = vector.shape_cast %10 : vector<16x16x32xbf16> to vector<256x32xbf16>
    %12 = vector.extract_strided_slice %5 {offsets = [1, 0, 0], sizes = [16, 16, 32], strides = [1, 1, 1]} : vector<18x18x32xbf16> to vector<16x16x32xbf16>
    %13 = vector.shape_cast %12 : vector<16x16x32xbf16> to vector<256x32xbf16>
    %14 = vector.extract_strided_slice %5 {offsets = [1, 1, 0], sizes = [16, 16, 32], strides = [1, 1, 1]} : vector<18x18x32xbf16> to vector<16x16x32xbf16>
    %15 = vector.shape_cast %14 : vector<16x16x32xbf16> to vector<256x32xbf16>
    %16 = vector.extract_strided_slice %5 {offsets = [1, 2, 0], sizes = [16, 16, 32], strides = [1, 1, 1]} : vector<18x18x32xbf16> to vector<16x16x32xbf16>
    %17 = vector.shape_cast %16 : vector<16x16x32xbf16> to vector<256x32xbf16>
    %18 = vector.extract_strided_slice %5 {offsets = [2, 0, 0], sizes = [16, 16, 32], strides = [1, 1, 1]} : vector<18x18x32xbf16> to vector<16x16x32xbf16>
    %19 = vector.shape_cast %18 : vector<16x16x32xbf16> to vector<256x32xbf16>
    %20 = vector.extract_strided_slice %5 {offsets = [2, 1, 0], sizes = [16, 16, 32], strides = [1, 1, 1]} : vector<18x18x32xbf16> to vector<16x16x32xbf16>
    %21 = vector.shape_cast %20 : vector<16x16x32xbf16> to vector<256x32xbf16>
    %22 = vector.extract_strided_slice %5 {offsets = [2, 2, 0], sizes = [16, 16, 32], strides = [1, 1, 1]} : vector<18x18x32xbf16> to vector<16x16x32xbf16>
    %23 = vector.shape_cast %22 : vector<16x16x32xbf16> to vector<256x32xbf16>
    %24 = tpu.concatenate %7, %9, %11, %13, %15, %17, %19, %21, %23 in 1 : vector<256x32xbf16>, vector<256x32xbf16>, vector<256x32xbf16>, vector<256x32xbf16>, vector<256x32xbf16>, vector<256x32xbf16>, vector<256x32xbf16>, vector<256x32xbf16>, vector<256x32xbf16> -> vector<256x288xbf16>
    %c0_4 = arith.constant 0 : index
    %c0_5 = arith.constant 0 : index
    %25 = vector.load %arg2[%c0_4, %c0_5] : memref<288x16xbf16, #tpu.memory_space<vmem>>, vector<288x16xbf16>
    %cst_6 = arith.constant dense<0.000000e+00> : vector<256x16xf32>
    %26 = tpu.matmul %24, %25, %cst_6 {dimension_numbers = #tpu.dot_dimension_numbers<[1], [0], [0], [1], [0, 0, 1, 1], [], []>} : vector<256x288xbf16>, vector<288x16xbf16>, vector<256x16xf32> -> vector<256x16xf32>
    %c0_7 = arith.constant 0 : index
    %c0_8 = arith.constant 0 : index
    %27 = vector.load %arg3[%c0_7, %c0_8] : memref<1x16xf32, #tpu.memory_space<vmem>>, vector<1x16xf32>
    %28 = vector.broadcast %27 : vector<1x16xf32> to vector<256x16xf32>
    %29 = arith.addf %26, %28 : vector<256x16xf32>
    %30 = arith.mulf %29, %29 : vector<256x16xf32>
    %31 = arith.mulf %29, %30 : vector<256x16xf32>
    %cst_9 = arith.constant 4.471500e-02 : f32
    %32 = vector.broadcast %cst_9 : f32 to vector<256x16xf32>
    %33 = arith.mulf %32, %31 : vector<256x16xf32>
    %34 = arith.addf %29, %33 : vector<256x16xf32>
    %cst_10 = arith.constant 0.797884583 : f32
    %35 = vector.broadcast %cst_10 : f32 to vector<256x16xf32>
    %36 = arith.mulf %35, %34 : vector<256x16xf32>
    %37 = math.tanh %36 : vector<256x16xf32>
    %cst_11 = arith.constant 1.000000e+00 : f32
    %38 = vector.broadcast %cst_11 : f32 to vector<256x16xf32>
    %39 = arith.addf %38, %37 : vector<256x16xf32>
    %cst_12 = arith.constant 5.000000e-01 : f32
    %40 = vector.broadcast %cst_12 : f32 to vector<256x16xf32>
    %41 = arith.mulf %40, %39 : vector<256x16xf32>
    %42 = arith.mulf %29, %41 : vector<256x16xf32>
    %43 = arith.truncf %42 : vector<256x16xf32> to vector<256x16xbf16>
    %44 = vector.shape_cast %43 : vector<256x16xbf16> to vector<16x16x16xbf16>
    %cst_13 = arith.constant 0.000000e+00 : bf16
    %45 = vector.broadcast %cst_13 : bf16 to vector<1x16x16xbf16>
    %cst_14 = arith.constant 0.000000e+00 : bf16
    %46 = vector.broadcast %cst_14 : bf16 to vector<18x1x16xbf16>
    %47 = tpu.concatenate %45, %44, %45 in 0 : vector<1x16x16xbf16>, vector<16x16x16xbf16>, vector<1x16x16xbf16> -> vector<18x16x16xbf16>
    %48 = tpu.concatenate %46, %47, %46 in 1 : vector<18x1x16xbf16>, vector<18x16x16xbf16>, vector<18x1x16xbf16> -> vector<18x18x16xbf16>
    %49 = vector.extract_strided_slice %48 {offsets = [0, 0, 0], sizes = [16, 16, 16], strides = [1, 1, 1]} : vector<18x18x16xbf16> to vector<16x16x16xbf16>
    %50 = vector.shape_cast %49 : vector<16x16x16xbf16> to vector<256x16xbf16>
    %51 = vector.extract_strided_slice %48 {offsets = [0, 1, 0], sizes = [16, 16, 16], strides = [1, 1, 1]} : vector<18x18x16xbf16> to vector<16x16x16xbf16>
    %52 = vector.shape_cast %51 : vector<16x16x16xbf16> to vector<256x16xbf16>
    %53 = vector.extract_strided_slice %48 {offsets = [0, 2, 0], sizes = [16, 16, 16], strides = [1, 1, 1]} : vector<18x18x16xbf16> to vector<16x16x16xbf16>
    %54 = vector.shape_cast %53 : vector<16x16x16xbf16> to vector<256x16xbf16>
    %55 = vector.extract_strided_slice %48 {offsets = [1, 0, 0], sizes = [16, 16, 16], strides = [1, 1, 1]} : vector<18x18x16xbf16> to vector<16x16x16xbf16>
    %56 = vector.shape_cast %55 : vector<16x16x16xbf16> to vector<256x16xbf16>
    %57 = vector.extract_strided_slice %48 {offsets = [1, 1, 0], sizes = [16, 16, 16], strides = [1, 1, 1]} : vector<18x18x16xbf16> to vector<16x16x16xbf16>
    %58 = vector.shape_cast %57 : vector<16x16x16xbf16> to vector<256x16xbf16>
    %59 = vector.extract_strided_slice %48 {offsets = [1, 2, 0], sizes = [16, 16, 16], strides = [1, 1, 1]} : vector<18x18x16xbf16> to vector<16x16x16xbf16>
    %60 = vector.shape_cast %59 : vector<16x16x16xbf16> to vector<256x16xbf16>
    %61 = vector.extract_strided_slice %48 {offsets = [2, 0, 0], sizes = [16, 16, 16], strides = [1, 1, 1]} : vector<18x18x16xbf16> to vector<16x16x16xbf16>
    %62 = vector.shape_cast %61 : vector<16x16x16xbf16> to vector<256x16xbf16>
    %63 = vector.extract_strided_slice %48 {offsets = [2, 1, 0], sizes = [16, 16, 16], strides = [1, 1, 1]} : vector<18x18x16xbf16> to vector<16x16x16xbf16>
    %64 = vector.shape_cast %63 : vector<16x16x16xbf16> to vector<256x16xbf16>
    %65 = vector.extract_strided_slice %48 {offsets = [2, 2, 0], sizes = [16, 16, 16], strides = [1, 1, 1]} : vector<18x18x16xbf16> to vector<16x16x16xbf16>
    %66 = vector.shape_cast %65 : vector<16x16x16xbf16> to vector<256x16xbf16>
    %67 = tpu.concatenate %50, %52, %54, %56, %58, %60, %62, %64, %66 in 1 : vector<256x16xbf16>, vector<256x16xbf16>, vector<256x16xbf16>, vector<256x16xbf16>, vector<256x16xbf16>, vector<256x16xbf16>, vector<256x16xbf16>, vector<256x16xbf16>, vector<256x16xbf16> -> vector<256x144xbf16>
    %c0_15 = arith.constant 0 : index
    %c0_16 = arith.constant 0 : index
    %68 = vector.load %arg4[%c0_15, %c0_16] : memref<144x32xbf16, #tpu.memory_space<vmem>>, vector<144x32xbf16>
    %cst_17 = arith.constant dense<0.000000e+00> : vector<256x32xf32>
    %69 = tpu.matmul %67, %68, %cst_17 {dimension_numbers = #tpu.dot_dimension_numbers<[1], [0], [0], [1], [0, 0, 1, 1], [], []>} : vector<256x144xbf16>, vector<144x32xbf16>, vector<256x32xf32> -> vector<256x32xf32>
    %c0_18 = arith.constant 0 : index
    %c0_19 = arith.constant 0 : index
    %70 = vector.load %arg5[%c0_18, %c0_19] : memref<1x32xf32, #tpu.memory_space<vmem>>, vector<1x32xf32>
    %71 = vector.broadcast %70 : vector<1x32xf32> to vector<256x32xf32>
    %72 = arith.addf %69, %71 : vector<256x32xf32>
    %cst_20 = arith.constant dense<0.000000e+00> : vector<32xf32>
    %73 = vector.multi_reduction <add>, %72, %cst_20 [0] : vector<256x32xf32> to vector<32xf32>
    %74 = vector.shape_cast %73 : vector<32xf32> to vector<1x32xf32>
    %cst_21 = arith.constant 2.560000e+02 : f32
    %75 = vector.broadcast %cst_21 : f32 to vector<1x32xf32>
    %76 = arith.divf %74, %75 : vector<1x32xf32>
    %c0_22 = arith.constant 0 : index
    %c0_23 = arith.constant 0 : index
    %77 = vector.load %arg6[%c0_22, %c0_23] : memref<32x4xf32, #tpu.memory_space<vmem>>, vector<32x4xf32>
    %cst_24 = arith.constant dense<0.000000e+00> : vector<1x4xf32>
    %78 = tpu.matmul %76, %77, %cst_24 {dimension_numbers = #tpu.dot_dimension_numbers<[1], [0], [0], [1], [0, 0, 1, 1], [], []>} : vector<1x32xf32>, vector<32x4xf32>, vector<1x4xf32> -> vector<1x4xf32>
    %c0_25 = arith.constant 0 : index
    %c0_26 = arith.constant 0 : index
    %79 = vector.load %arg7[%c0_25, %c0_26] : memref<1x4xf32, #tpu.memory_space<vmem>>, vector<1x4xf32>
    %80 = arith.addf %78, %79 : vector<1x4xf32>
    %cst_27 = arith.constant 0.000000e+00 : f32
    %81 = vector.broadcast %cst_27 : f32 to vector<1x4xf32>
    %82 = arith.maximumf %80, %81 : vector<1x4xf32>
    %c0_28 = arith.constant 0 : index
    %c0_29 = arith.constant 0 : index
    %83 = vector.load %arg8[%c0_28, %c0_29] : memref<4x32xf32, #tpu.memory_space<vmem>>, vector<4x32xf32>
    %cst_30 = arith.constant dense<0.000000e+00> : vector<1x32xf32>
    %84 = tpu.matmul %82, %83, %cst_30 {dimension_numbers = #tpu.dot_dimension_numbers<[1], [0], [0], [1], [0, 0, 1, 1], [], []>} : vector<1x4xf32>, vector<4x32xf32>, vector<1x32xf32> -> vector<1x32xf32>
    %c0_31 = arith.constant 0 : index
    %c0_32 = arith.constant 0 : index
    %85 = vector.load %arg9[%c0_31, %c0_32] : memref<1x32xf32, #tpu.memory_space<vmem>>, vector<1x32xf32>
    %86 = arith.addf %84, %85 : vector<1x32xf32>
    %87 = arith.negf %86 : vector<1x32xf32>
    %88 = math.exp %87 : vector<1x32xf32>
    %cst_33 = arith.constant 1.000000e+00 : f32
    %89 = vector.broadcast %cst_33 : f32 to vector<1x32xf32>
    %90 = arith.addf %89, %88 : vector<1x32xf32>
    %91 = arith.divf %89, %90 : vector<1x32xf32>
    %92 = vector.broadcast %91 : vector<1x32xf32> to vector<256x32xf32>
    %93 = arith.mulf %72, %92 : vector<256x32xf32>
    %94 = arith.truncf %93 : vector<256x32xf32> to vector<256x32xbf16>
    %c0_34 = arith.constant 0 : index
    %c0_35 = arith.constant 0 : index
    %c0_36 = arith.constant 0 : index
    %95 = vector.load %arg10[%c0_34, %c0_35, %c0_36] : memref<1x256x32xbf16, #tpu.memory_space<vmem>>, vector<1x256x32xbf16>
    %96 = vector.shape_cast %95 : vector<1x256x32xbf16> to vector<256x32xbf16>
    %97 = vector.shape_cast %94 : vector<256x32xbf16> to vector<1x256x32xbf16>
    tpu.vector_store %arg10[%c0_34, %c0_35, %c0_36], %97 {strides = array<i32>} : memref<1x256x32xbf16, #tpu.memory_space<vmem>>, vector<1x256x32xbf16>,
    return
  }
  func.func @transform_0(%arg0: i32) -> (i32, i32, i32, i32) {
    %c0_i32 = arith.constant 0 : i32
    %c0_i32_0 = arith.constant 0 : i32
    %c0_i32_1 = arith.constant 0 : i32
    %c0_i32_2 = arith.constant 0 : i32
    return %arg0, %c0_i32, %c0_i32_0, %c0_i32_1 : i32, i32, i32, i32
  }
  func.func @transform_1(%arg0: i32) -> (i32, i32) {
    %c0_i32 = arith.constant 0 : i32
    %c0_i32_0 = arith.constant 0 : i32
    %c0_i32_1 = arith.constant 0 : i32
    return %c0_i32, %c0_i32_0 : i32, i32
  }
  func.func @transform_2(%arg0: i32) -> (i32, i32) {
    %c0_i32 = arith.constant 0 : i32
    %c0_i32_0 = arith.constant 0 : i32
    %c0_i32_1 = arith.constant 0 : i32
    return %c0_i32, %c0_i32_0 : i32, i32
  }
  func.func @transform_3(%arg0: i32) -> (i32, i32) {
    %c0_i32 = arith.constant 0 : i32
    %c0_i32_0 = arith.constant 0 : i32
    %c0_i32_1 = arith.constant 0 : i32
    return %c0_i32, %c0_i32_0 : i32, i32
  }
  func.func @transform_4(%arg0: i32) -> (i32, i32) {
    %c0_i32 = arith.constant 0 : i32
    %c0_i32_0 = arith.constant 0 : i32
    %c0_i32_1 = arith.constant 0 : i32
    return %c0_i32, %c0_i32_0 : i32, i32
  }
  func.func @transform_5(%arg0: i32) -> (i32, i32) {
    %c0_i32 = arith.constant 0 : i32
    %c0_i32_0 = arith.constant 0 : i32
    %c0_i32_1 = arith.constant 0 : i32
    return %c0_i32, %c0_i32_0 : i32, i32
  }
  func.func @transform_6(%arg0: i32) -> (i32, i32) {
    %c0_i32 = arith.constant 0 : i32
    %c0_i32_0 = arith.constant 0 : i32
    %c0_i32_1 = arith.constant 0 : i32
    return %c0_i32, %c0_i32_0 : i32, i32
  }
  func.func @transform_7(%arg0: i32) -> (i32, i32) {
    %c0_i32 = arith.constant 0 : i32
    %c0_i32_0 = arith.constant 0 : i32
    %c0_i32_1 = arith.constant 0 : i32
    return %c0_i32, %c0_i32_0 : i32, i32
  }
  func.func @transform_8(%arg0: i32) -> (i32, i32) {
    %c0_i32 = arith.constant 0 : i32
    %c0_i32_0 = arith.constant 0 : i32
    %c0_i32_1 = arith.constant 0 : i32
    return %c0_i32, %c0_i32_0 : i32, i32
  }
  func.func @transform_9(%arg0: i32) -> (i32, i32, i32) {
    %c0_i32 = arith.constant 0 : i32
    %c0_i32_0 = arith.constant 0 : i32
    %c0_i32_1 = arith.constant 0 : i32
    return %arg0, %c0_i32, %c0_i32_0 : i32, i32, i32
  }
}

module attributes {stable_mosaic.version = 11 : i64} {
  func.func @_combine_norm2_mlp_kernel(%arg0: i32, %arg1: i32, %arg2: memref<1x256x32xf32, #tpu.memory_space<vmem>>, %arg3: memref<1x256x32xbf16, #tpu.memory_space<vmem>>, %arg4: memref<1x256x32xbf16, #tpu.memory_space<vmem>>, %arg5: memref<1x32xf32, #tpu.memory_space<vmem>>, %arg6: memref<1x32xf32, #tpu.memory_space<vmem>>, %arg7: memref<32x128xbf16, #tpu.memory_space<vmem>>, %arg8: memref<1x128xf32, #tpu.memory_space<vmem>>, %arg9: memref<128x32xbf16, #tpu.memory_space<vmem>>, %arg10: memref<1x32xf32, #tpu.memory_space<vmem>>, %arg11: memref<1x256x32xf32, #tpu.memory_space<vmem>>) attributes {dimension_semantics = [#tpu.dimension_semantics<parallel>, #tpu.dimension_semantics<parallel>], iteration_bounds = array<i64: 2, 1>, scalar_prefetch = 0 : i64, scratch_operands = 0 : i64, tpu.core_type = #tpu.core_type<tc>, window_params = [{transform_indices = @transform_0, window_bounds = array<i64: 1, 256, 32>}, {transform_indices = @transform_1, window_bounds = array<i64: 1, 256, 32>}, {transform_indices = @transform_2, window_bounds = array<i64: 1, 256, 32>}, {pipeline_mode = #tpu.pipeline_mode<synchronous>, transform_indices = @transform_3, window_bounds = array<i64: 1, 32>}, {pipeline_mode = #tpu.pipeline_mode<synchronous>, transform_indices = @transform_4, window_bounds = array<i64: 1, 32>}, {pipeline_mode = #tpu.pipeline_mode<synchronous>, transform_indices = @transform_5, window_bounds = array<i64: 32, 128>}, {pipeline_mode = #tpu.pipeline_mode<synchronous>, transform_indices = @transform_6, window_bounds = array<i64: 1, 128>}, {pipeline_mode = #tpu.pipeline_mode<synchronous>, transform_indices = @transform_7, window_bounds = array<i64: 128, 32>}, {pipeline_mode = #tpu.pipeline_mode<synchronous>, transform_indices = @transform_8, window_bounds = array<i64: 1, 32>}, {transform_indices = @transform_9, window_bounds = array<i64: 1, 256, 32>}]} {
    %c0 = arith.constant 0 : index
    %c0_0 = arith.constant 0 : index
    %c0_1 = arith.constant 0 : index
    %0 = vector.load %arg2[%c0, %c0_0, %c0_1] : memref<1x256x32xf32, #tpu.memory_space<vmem>>, vector<1x256x32xf32>
    %1 = vector.shape_cast %0 : vector<1x256x32xf32> to vector<256x32xf32>
    %c0_2 = arith.constant 0 : index
    %c0_3 = arith.constant 0 : index
    %c0_4 = arith.constant 0 : index
    %2 = vector.load %arg3[%c0_2, %c0_3, %c0_4] : memref<1x256x32xbf16, #tpu.memory_space<vmem>>, vector<1x256x32xbf16>
    %3 = vector.shape_cast %2 : vector<1x256x32xbf16> to vector<256x32xbf16>
    %4 = arith.extf %3 : vector<256x32xbf16> to vector<256x32xf32>
    %5 = arith.addf %1, %4 : vector<256x32xf32>
    %c0_5 = arith.constant 0 : index
    %c0_6 = arith.constant 0 : index
    %c0_7 = arith.constant 0 : index
    %6 = vector.load %arg4[%c0_5, %c0_6, %c0_7] : memref<1x256x32xbf16, #tpu.memory_space<vmem>>, vector<1x256x32xbf16>
    %7 = vector.shape_cast %6 : vector<1x256x32xbf16> to vector<256x32xbf16>
    %8 = arith.extf %7 : vector<256x32xbf16> to vector<256x32xf32>
    %cst = arith.constant 0.00999999977 : f32
    %9 = vector.broadcast %cst : f32 to vector<256x32xf32>
    %10 = arith.mulf %9, %8 : vector<256x32xf32>
    %11 = arith.addf %5, %10 : vector<256x32xf32>
    %c0_8 = arith.constant 0 : index
    %c0_9 = arith.constant 0 : index
    %12 = vector.load %arg5[%c0_8, %c0_9] : memref<1x32xf32, #tpu.memory_space<vmem>>, vector<1x32xf32>
    %c0_10 = arith.constant 0 : index
    %c0_11 = arith.constant 0 : index
    %13 = vector.load %arg6[%c0_10, %c0_11] : memref<1x32xf32, #tpu.memory_space<vmem>>, vector<1x32xf32>
    %cst_12 = arith.constant dense<0.000000e+00> : vector<256xf32>
    %14 = vector.multi_reduction <add>, %11, %cst_12 [1] : vector<256x32xf32> to vector<256xf32>
    %15 = vector.shape_cast %14 : vector<256xf32> to vector<256x1xf32>
    %cst_13 = arith.constant 3.200000e+01 : f32
    %16 = vector.broadcast %cst_13 : f32 to vector<256x1xf32>
    %17 = arith.divf %15, %16 : vector<256x1xf32>
    %18 = vector.broadcast %17 : vector<256x1xf32> to vector<256x32xf32>
    %19 = arith.subf %11, %18 : vector<256x32xf32>
    %20 = arith.mulf %19, %19 : vector<256x32xf32>
    %cst_14 = arith.constant dense<0.000000e+00> : vector<256xf32>
    %21 = vector.multi_reduction <add>, %20, %cst_14 [1] : vector<256x32xf32> to vector<256xf32>
    %22 = vector.shape_cast %21 : vector<256xf32> to vector<256x1xf32>
    %cst_15 = arith.constant 3.200000e+01 : f32
    %23 = vector.broadcast %cst_15 : f32 to vector<256x1xf32>
    %24 = arith.divf %22, %23 : vector<256x1xf32>
    %cst_16 = arith.constant 9.99999974E-6 : f32
    %25 = vector.broadcast %cst_16 : f32 to vector<256x1xf32>
    %26 = arith.addf %24, %25 : vector<256x1xf32>
    %27 = math.rsqrt %26 : vector<256x1xf32>
    %28 = vector.broadcast %27 : vector<256x1xf32> to vector<256x32xf32>
    %29 = arith.mulf %19, %28 : vector<256x32xf32>
    %30 = vector.broadcast %12 : vector<1x32xf32> to vector<256x32xf32>
    %31 = arith.mulf %29, %30 : vector<256x32xf32>
    %32 = vector.broadcast %13 : vector<1x32xf32> to vector<256x32xf32>
    %33 = arith.addf %31, %32 : vector<256x32xf32>
    %34 = arith.truncf %33 : vector<256x32xf32> to vector<256x32xbf16>
    %c0_17 = arith.constant 0 : index
    %c0_18 = arith.constant 0 : index
    %35 = vector.load %arg7[%c0_17, %c0_18] : memref<32x128xbf16, #tpu.memory_space<vmem>>, vector<32x128xbf16>
    %cst_19 = arith.constant dense<0.000000e+00> : vector<256x128xf32>
    %36 = tpu.matmul %34, %35, %cst_19 {dimension_numbers = #tpu.dot_dimension_numbers<[1], [0], [0], [1], [0, 0, 1, 1], [], []>} : vector<256x32xbf16>, vector<32x128xbf16>, vector<256x128xf32> -> vector<256x128xf32>
    %c0_20 = arith.constant 0 : index
    %c0_21 = arith.constant 0 : index
    %37 = vector.load %arg8[%c0_20, %c0_21] : memref<1x128xf32, #tpu.memory_space<vmem>>, vector<1x128xf32>
    %38 = vector.broadcast %37 : vector<1x128xf32> to vector<256x128xf32>
    %39 = arith.addf %36, %38 : vector<256x128xf32>
    %40 = arith.mulf %39, %39 : vector<256x128xf32>
    %41 = arith.mulf %39, %40 : vector<256x128xf32>
    %cst_22 = arith.constant 4.471500e-02 : f32
    %42 = vector.broadcast %cst_22 : f32 to vector<256x128xf32>
    %43 = arith.mulf %42, %41 : vector<256x128xf32>
    %44 = arith.addf %39, %43 : vector<256x128xf32>
    %cst_23 = arith.constant 0.797884583 : f32
    %45 = vector.broadcast %cst_23 : f32 to vector<256x128xf32>
    %46 = arith.mulf %45, %44 : vector<256x128xf32>
    %47 = math.tanh %46 : vector<256x128xf32>
    %cst_24 = arith.constant 1.000000e+00 : f32
    %48 = vector.broadcast %cst_24 : f32 to vector<256x128xf32>
    %49 = arith.addf %48, %47 : vector<256x128xf32>
    %cst_25 = arith.constant 5.000000e-01 : f32
    %50 = vector.broadcast %cst_25 : f32 to vector<256x128xf32>
    %51 = arith.mulf %50, %49 : vector<256x128xf32>
    %52 = arith.mulf %39, %51 : vector<256x128xf32>
    %53 = arith.truncf %52 : vector<256x128xf32> to vector<256x128xbf16>
    %c0_26 = arith.constant 0 : index
    %c0_27 = arith.constant 0 : index
    %54 = vector.load %arg9[%c0_26, %c0_27] : memref<128x32xbf16, #tpu.memory_space<vmem>>, vector<128x32xbf16>
    %cst_28 = arith.constant dense<0.000000e+00> : vector<256x32xf32>
    %55 = tpu.matmul %53, %54, %cst_28 {dimension_numbers = #tpu.dot_dimension_numbers<[1], [0], [0], [1], [0, 0, 1, 1], [], []>} : vector<256x128xbf16>, vector<128x32xbf16>, vector<256x32xf32> -> vector<256x32xf32>
    %c0_29 = arith.constant 0 : index
    %c0_30 = arith.constant 0 : index
    %56 = vector.load %arg10[%c0_29, %c0_30] : memref<1x32xf32, #tpu.memory_space<vmem>>, vector<1x32xf32>
    %57 = vector.broadcast %56 : vector<1x32xf32> to vector<256x32xf32>
    %58 = arith.addf %55, %57 : vector<256x32xf32>
    %59 = arith.addf %11, %58 : vector<256x32xf32>
    %c0_31 = arith.constant 0 : index
    %c0_32 = arith.constant 0 : index
    %c0_33 = arith.constant 0 : index
    %60 = vector.load %arg11[%c0_31, %c0_32, %c0_33] : memref<1x256x32xf32, #tpu.memory_space<vmem>>, vector<1x256x32xf32>
    %61 = vector.shape_cast %60 : vector<1x256x32xf32> to vector<256x32xf32>
    %62 = vector.shape_cast %59 : vector<256x32xf32> to vector<1x256x32xf32>
    tpu.vector_store %arg11[%c0_31, %c0_32, %c0_33], %62 {strides = array<i32>} : memref<1x256x32xf32, #tpu.memory_space<vmem>>, vector<1x256x32xf32>,
    return
  }
  func.func @transform_0(%arg0: i32, %arg1: i32) -> (i32, i32, i32) {
    %c0_i32 = arith.constant 0 : i32
    %c0_i32_0 = arith.constant 0 : i32
    return %arg0, %arg1, %c0_i32 : i32, i32, i32
  }
  func.func @transform_1(%arg0: i32, %arg1: i32) -> (i32, i32, i32) {
    %c0_i32 = arith.constant 0 : i32
    %c0_i32_0 = arith.constant 0 : i32
    return %arg0, %arg1, %c0_i32 : i32, i32, i32
  }
  func.func @transform_2(%arg0: i32, %arg1: i32) -> (i32, i32, i32) {
    %c0_i32 = arith.constant 0 : i32
    %c0_i32_0 = arith.constant 0 : i32
    return %arg0, %arg1, %c0_i32 : i32, i32, i32
  }
  func.func @transform_3(%arg0: i32, %arg1: i32) -> (i32, i32) {
    %c0_i32 = arith.constant 0 : i32
    %c0_i32_0 = arith.constant 0 : i32
    %c0_i32_1 = arith.constant 0 : i32
    return %c0_i32, %c0_i32_0 : i32, i32
  }
  func.func @transform_4(%arg0: i32, %arg1: i32) -> (i32, i32) {
    %c0_i32 = arith.constant 0 : i32
    %c0_i32_0 = arith.constant 0 : i32
    %c0_i32_1 = arith.constant 0 : i32
    return %c0_i32, %c0_i32_0 : i32, i32
  }
  func.func @transform_5(%arg0: i32, %arg1: i32) -> (i32, i32) {
    %c0_i32 = arith.constant 0 : i32
    %c0_i32_0 = arith.constant 0 : i32
    %c0_i32_1 = arith.constant 0 : i32
    return %c0_i32, %c0_i32_0 : i32, i32
  }
  func.func @transform_6(%arg0: i32, %arg1: i32) -> (i32, i32) {
    %c0_i32 = arith.constant 0 : i32
    %c0_i32_0 = arith.constant 0 : i32
    %c0_i32_1 = arith.constant 0 : i32
    return %c0_i32, %c0_i32_0 : i32, i32
  }
  func.func @transform_7(%arg0: i32, %arg1: i32) -> (i32, i32) {
    %c0_i32 = arith.constant 0 : i32
    %c0_i32_0 = arith.constant 0 : i32
    %c0_i32_1 = arith.constant 0 : i32
    return %c0_i32, %c0_i32_0 : i32, i32
  }
  func.func @transform_8(%arg0: i32, %arg1: i32) -> (i32, i32) {
    %c0_i32 = arith.constant 0 : i32
    %c0_i32_0 = arith.constant 0 : i32
    %c0_i32_1 = arith.constant 0 : i32
    return %c0_i32, %c0_i32_0 : i32, i32
  }
  func.func @transform_9(%arg0: i32, %arg1: i32) -> (i32, i32, i32) {
    %c0_i32 = arith.constant 0 : i32
    %c0_i32_0 = arith.constant 0 : i32
    return %arg0, %arg1, %c0_i32 : i32, i32, i32
  }
}

</mosaic_0001>

<llo_original>
// kernel: sub.10
$region0: #{sub.10}
  %s0 = inlined_call_operand.vmem [shape: s32[2,8,8], index: 0, kind: input, shape index: {}]
  %s1 = inlined_call_operand.vmem [shape: s32[2,64], index: 1, kind: output, shape index: {}]
  $region1: #{sub.10} parent=0
    #allocation0 [shape = 'u8[4096]{0}', space=vmem, size = 0x1000, scoped, tag = 'scoped mem for output reshape']
    %s2 = smov 3
    %v3 = vld [vmem:[%s0] ss:$8 sm:%s2]
    %vm4 = vcmask 64512
    %5 = vst.msk [vmem:[#allocation0] sm:$0x3] %vm4, %v3
    %s6 = scalar_lea.vmem %s0, 7
    %s7 = smov 3
    %v8 = vld [vmem:[%s6] ss:$8 sm:%s7]
    %9 = vrot.lane.b32.xlu0 %v8, 56
    %v10 = vpop.permute.xlu0 %9
    %vm11 = vcmask 523712
    %12 = vst.msk [vmem:[#allocation0] sm:$0x3] %vm11, %v10
    %s13 = scalar_lea.vmem %s0, 6
    %s14 = smov 3
    %v15 = vld [vmem:[%s13] ss:$8 sm:%s14]
    %16 = vrot.lane.b32.xlu0 %v15, 48
    %v17 = vpop.permute.xlu0 %16
    %vm18 = vcmask 458112
    %19 = vst.msk [vmem:[#allocation0] sm:$0x3] %vm18, %v17
    %s20 = scalar_lea.vmem %s0, 5
    %s21 = smov 3
    %v22 = vld [vmem:[%s20] ss:$8 sm:%s21]
    %23 = vrot.lane.b32.xlu0 %v22, 40
    %v24 = vpop.permute.xlu0 %23
    %vm25 = vcmask 392512
    %26 = vst.msk [vmem:[#allocation0] sm:$0x3] %vm25, %v24
    %s27 = scalar_lea.vmem %s0, 4
    %s28 = smov 3
    %v29 = vld [vmem:[%s27] ss:$8 sm:%s28]
    %30 = vrot.lane.b32.xlu0 %v29, 32
    %v31 = vpop.permute.xlu0 %30
    %vm32 = vcmask 326912
    %33 = vst.msk [vmem:[#allocation0] sm:$0x3] %vm32, %v31
    %s34 = scalar_lea.vmem %s0, 3
    %s35 = smov 3
    %v36 = vld [vmem:[%s34] ss:$8 sm:%s35]
    %37 = vrot.lane.b32.xlu0 %v36, 24
    %v38 = vpop.permute.xlu0 %37
    %vm39 = vcmask 261312
    %40 = vst.msk [vmem:[#allocation0] sm:$0x3] %vm39, %v38
    %s41 = scalar_lea.vmem %s0, 2
    %s42 = smov 3
    %v43 = vld [vmem:[%s41] ss:$8 sm:%s42]
    %44 = vrot.lane.b32.xlu0 %v43, 16
    %v45 = vpop.permute.xlu0 %44
    %vm46 = vcmask 195712
    %47 = vst.msk [vmem:[#allocation0] sm:$0x3] %vm46, %v45
    %s48 = scalar_lea.vmem %s0, 1
    %s49 = smov 3
    %v50 = vld [vmem:[%s48] ss:$8 sm:%s49]
    %51 = vrot.lane.b32.xlu0 %v50, 8
    %v52 = vpop.permute.xlu0 %51
    %vm53 = vcmask 130112
    %54 = vst.msk [vmem:[#allocation0] sm:$0x3] %vm53, %v52
    %s56 = ssub.s32 4, 1
    %v57 = vld [vmem:[#allocation0] sm:%s56]
    %s59 = ssub.s32 4, 1
    %60 = vst [vmem:[%s1] sm:%s59] %v57

// kernel: hab_forward.4
$region0: #{hab_forward.4}
  #allocation0 [shape = 'u32[]', space=smem, size = 0x4, offset = 0x4, fixed_abs, tag = 'smem constant byte address 0x4 - core index']
  #allocation1 [shape = 'u32[72,128]{1,0:T(1,128)}', space=vmem, size = 0x9000, scoped, tag = 'internal scratch']
  %s0 = inlined_call_operand.vmem [shape: f32[2,256,32], index: 0, kind: input, shape index: {}]
  %s1 = inlined_call_operand.hbm [shape: f32[1,32], index: 1, kind: input, shape index: {}]
  %s2 = inlined_call_operand.hbm [shape: f32[1,32], index: 2, kind: input, shape index: {}]
  %s3 = inlined_call_operand.vmem [shape: bf16[2,256,32], index: 3, kind: output, shape index: {}]
  %s4 = sld [smem:[#allocation0]]
  $region53: #{hab_forward.4} parent=0
    _
  %s6 = ssub.s32 1, %s4
  %s7 = scalar_select 0, %s6, %s4
  $region1: #{hab_forward.4} parent=0
    #allocation2 [shape = 'u8[512]{0}', space=vmem, size = 0x400, scoped, tag = 'input window, operand 1, single buffered']
    #allocation3 [shape = 's32[2]{0}', space=sflag, size = 0x8, scoped, tag = 'scoped memory for hab_forward.4']
    #allocation4 [shape = 'u8[512]{0}', space=vmem, size = 0x400, scoped, tag = 'input window, operand 2, single buffered']
    #allocation5 [shape = 's32[1]{0}', space=sflag, size = 0x4, scoped, tag = 'scoped memory for hab_forward.4']
    %8 = vsyncpa [#allocation3], 0
    %9 = vsyncpa [#allocation5], 0
    loop: start=0, step=1, limit=4
    $region2: #{hab_forward.4} parent=1 // loop_pre_header
      _
    $region3: #{hab_forward.4} parent=1 // loop_header
      %s11 = sphi 0, %s15
      %p12 = scmp.ge.s32.totalorder %s11, 4
      %s18 = sphi 0, %s30
      %s19 = sphi 0, %s26
      %s20 = sphi 0, %s18
      %s21 = sphi 0, %s19
      %s22 = sphi 0, %s20
      %s23 = sphi 0, %s21
      %s35 = sphi 0, %s37
      %s38 = sphi 0, %s35
      %s39 = sphi 0, %s38
      %s55 = sphi 0, %s39
      %s59 = sphi 0, %s59
      %s61 = sphi 0, %s59
      %s62 = sphi 0, %s61
      %s76 = sphi 0, %s62
      %s80 = sphi 0, %s80
      %s82 = sphi 0, %s80
      %s83 = sphi 0, %s82
      %s97 = sphi 0, %s83
      %s105 = sphi 0, %s107
      %s108 = sphi 0, %s105
      %s109 = sphi 0, %s108
      %s125 = sphi 0, %s109
    $region4: #{hab_forward.4} parent=1 // loop_header_branch
      %14 = sbr.rel (%p12) target = $region8
    $region5: #{hab_forward.4} parent=1 // loop_body
      %s16 = ssub.s32 %s11, 1
      %s17 = ssub.s32 %s11, 2
      %s24 = sadd.s32 1, %s19
      %p25 = scmp.ge.s32.totalorder %s24, 1
      %s26 = scalar_select %p25, 0, %s24
      %s27 = sadd.s32 1, %s18
      %s28 = scalar_select %p25, %s27, %s18
      %p29 = scmp.ge.s32.totalorder %s28, 2
      %s30 = scalar_select %p29, 0, %s28
      %s31 = ssub.s32 %s18, %s30
      %s32 = ssub.s32 %s19, %s26
      %s33 = sor.u32 %s31, %s32
      %p34 = scmp.eq.s32.totalorder %s33, 0
      %s36 = sadd.s32 %s35, 1
      %s37 = scalar_select %p34, %s35, %s36
      %p40 = pneg %p34
      %p41 = scmp.eq.s32.totalorder %s11, 1
      %p42 = por %p40, %p41
      %p43 = scmp.ne.s32.totalorder %s35, %s38
      %p44 = scmp.eq.s32.totalorder %s11, 0
      %p45 = por %p43, %p44
      %p46 = scmp.ne.s32.totalorder %s35, %s38
      %p47 = scmp.eq.s32.totalorder %s16, 1
      %p48 = por %p46, %p47
      %p49 = scmp.ne.s32.totalorder %s38, %s39
      %p50 = scmp.eq.s32.totalorder %s16, 0
      %p51 = por %p49, %p50
      %p52 = scmp.ne.s32.totalorder %s38, %s39
      %p53 = scmp.eq.s32.totalorder %s17, 1
      %p54 = por %p52, %p53
      %p56 = scmp.ne.s32.totalorder %s39, %s55
      %p57 = scmp.eq.s32.totalorder %s17, 0
      %p58 = por %p56, %p57
      %s60 = sadd.s32 %s59, 1
      %p63 = scmp.eq.s32.totalorder %s11, 1
      %p64 = scmp.ne.s32.totalorder %s59, %s61
      %p65 = scmp.eq.s32.totalorder %s11, 0
      %p66 = por %p64, %p65
      %p67 = scmp.ne.s32.totalorder %s59, %s61
      %p68 = scmp.eq.s32.totalorder %s16, 1
      %p69 = por %p67, %p68
      %p70 = scmp.ne.s32.totalorder %s61, %s62
      %p71 = scmp.eq.s32.totalorder %s16, 0
      %p72 = por %p70, %p71
      %p73 = scmp.ne.s32.totalorder %s61, %s62
      %p74 = scmp.eq.s32.totalorder %s17, 1
      %p75 = por %p73, %p74
      %p77 = scmp.ne.s32.totalorder %s62, %s76
      %p78 = scmp.eq.s32.totalorder %s17, 0
      %p79 = por %p77, %p78
      %s81 = sadd.s32 %s80, 1
      %p84 = scmp.eq.s32.totalorder %s11, 1
      %p85 = scmp.ne.s32.totalorder %s80, %s82
      %p86 = scmp.eq.s32.totalorder %s11, 0
      %p87 = por %p85, %p86
      %p88 = scmp.ne.s32.totalorder %s80, %s82
      %p89 = scmp.eq.s32.totalorder %s16, 1
      %p90 = por %p88, %p89
      %p91 = scmp.ne.s32.totalorder %s82, %s83
      %p92 = scmp.eq.s32.totalorder %s16, 0
      %p93 = por %p91, %p92
      %p94 = scmp.ne.s32.totalorder %s82, %s83
      %p95 = scmp.eq.s32.totalorder %s17, 1
      %p96 = por %p94, %p95
      %p98 = scmp.ne.s32.totalorder %s83, %s97
      %p99 = scmp.eq.s32.totalorder %s17, 0
      %p100 = por %p98, %p99
      %s101 = ssub.s32 %s18, %s30
      %s102 = ssub.s32 %s19, %s26
      %s103 = sor.u32 %s101, %s102
      %p104 = scmp.eq.s32.totalorder %s103, 0
      %s106 = sadd.s32 %s105, 1
      %s107 = scalar_select %p104, %s105, %s106
      %p110 = pneg %p104
      %p111 = scmp.eq.s32.totalorder %s11, 1
      %p112 = por %p110, %p111
      %p113 = scmp.ne.s32.totalorder %s105, %s108
      %p114 = scmp.eq.s32.totalorder %s11, 0
      %p115 = por %p113, %p114
      %p116 = scmp.ne.s32.totalorder %s105, %s108
      %p117 = scmp.eq.s32.totalorder %s16, 1
      %p118 = por %p116, %p117
      %p119 = scmp.ne.s32.totalorder %s108, %s109
      %p120 = scmp.eq.s32.totalorder %s16, 0
      %p121 = por %p119, %p120
      %p122 = scmp.ne.s32.totalorder %s108, %s109
      %p123 = scmp.eq.s32.totalorder %s17, 1
      %p124 = por %p122, %p123
      %p126 = scmp.ne.s32.totalorder %s109, %s125
      %p127 = scmp.eq.s32.totalorder %s17, 0
      %p128 = por %p126, %p127
      %p129 = scmp.le.s32.totalorder 1, %s11
      %p130 = scmp.lt.s32.totalorder %s11, 3
      %p131 = pnand %p129, %p130
      %p132 = pneg %p131
      // Predicated region
      $region9: #{hab_forward.4} parent=5 // pred_check
        _
      $region10: #{hab_forward.4} parent=5 // pred_check_branch
        %134 = sbr.rel (%p131) target = $region12
      $region11: #{hab_forward.4} parent=5 // pred_region
        %s135 = ssub.s32 %s11, 1
        // Predicated region
        $region13: #{hab_forward.4} parent=11 // pred_check
          %p136 = pneg %p72
        $region14: #{hab_forward.4} parent=11 // pred_check_branch
          %138 = sbr.rel (%p136) target = $region16
        $region15: #{hab_forward.4} parent=11 // pred_region
          %140 = vsyncadd [#allocation3], 0
          %s142 = sshll.u32 %s1, 4
          %s143 = int_to_ptr.hbm [resolvable:$true] %s142
          %s144 = sshll.u32 [#allocation2], 4
          %s145 = int_to_ptr.vmem [resolvable:$true] %s144
          %147 = dma.hbm_to_vmem [thread:$0]  %s143, 16, %s145, [#allocation3]
        $region16: #{hab_forward.4} parent=11 // pred_fallthru
          _
        // Predicated region
        $region17: #{hab_forward.4} parent=11 // pred_check
          %p148 = pneg %p93
        $region18: #{hab_forward.4} parent=11 // pred_check_branch
          %150 = sbr.rel (%p148) target = $region20
        $region19: #{hab_forward.4} parent=11 // pred_region
          %152 = vsyncadd [#allocation5], 0
          %s154 = sshll.u32 %s2, 4
          %s155 = int_to_ptr.hbm [resolvable:$true] %s154
          %s156 = sshll.u32 [#allocation4], 4
          %s157 = int_to_ptr.vmem [resolvable:$true] %s156
          %159 = dma.hbm_to_vmem [thread:$0]  %s155, 16, %s157, [#allocation5]
        $region20: #{hab_forward.4} parent=11 // pred_fallthru
          _
      $region12: #{hab_forward.4} parent=5 // pred_fallthru
        _
      %p160 = scmp.lt.s32.totalorder %s11, 2
      // Predicated region
      $region21: #{hab_forward.4} parent=5 // pred_check
        %p161 = pneg %p160
      $region22: #{hab_forward.4} parent=5 // pred_check_branch
        %163 = sbr.rel (%p161) target = $region24
      $region23: #{hab_forward.4} parent=5 // pred_region
        // Predicated region
        $region25: #{hab_forward.4} parent=23 // pred_check
          %p164 = pneg %p45
        $region26: #{hab_forward.4} parent=23 // pred_check_branch
          %166 = sbr.rel (%p164) target = $region28
        $region27: #{hab_forward.4} parent=23 // pred_region
          %s167 = smul.u32 32, %s19
          %p168 = scmp.lt.s32.totalorder %s18, 1
          %s169 = scalar_select %p168, %s18, 1
          %p170 = scmp.lt.s32.totalorder %s167, 31
          %s171 = scalar_select %p170, %s167, 31
          %s172 = smul.addr %s169, 32
          %s173 = sadd.s32 %s171, %s172
          %s174 = smul.addr %s173, 8
          %s175 = scalar_lea.vmem %s0, %s174
          %s176 = smul.u32 32, %s19
        $region28: #{hab_forward.4} parent=23 // pred_fallthru
          _
      $region24: #{hab_forward.4} parent=5 // pred_fallthru
        _
      %p177 = scmp.le.s32.totalorder 1, %s11
      %p178 = scmp.lt.s32.totalorder %s11, 3
      %p179 = pnand %p177, %p178
      %p180 = pneg %p179
      // Predicated region
      $region29: #{hab_forward.4} parent=5 // pred_check
        _
      $region30: #{hab_forward.4} parent=5 // pred_check_branch
        %182 = sbr.rel (%p179) target = $region32
      $region31: #{hab_forward.4} parent=5 // pred_region
        %s183 = ssub.s32 %s11, 1
        // Predicated region
        $region33: #{hab_forward.4} parent=31 // pred_check
          %p184 = pneg %p72
        $region34: #{hab_forward.4} parent=31 // pred_check_branch
          %186 = sbr.rel (%p184) target = $region36
        $region35: #{hab_forward.4} parent=31 // pred_region
          %188 = dma.done [#allocation3], 16
        $region36: #{hab_forward.4} parent=31 // pred_fallthru
          _
        // Predicated region
        $region37: #{hab_forward.4} parent=31 // pred_check
          %p189 = pneg %p93
        $region38: #{hab_forward.4} parent=31 // pred_check_branch
          %191 = sbr.rel (%p189) target = $region40
        $region39: #{hab_forward.4} parent=31 // pred_region
          %193 = dma.done [#allocation5], 16
        $region40: #{hab_forward.4} parent=31 // pred_fallthru
          _
        %s194 = smul.u32 32, %s21
        %p195 = scmp.lt.s32.totalorder %s20, 1
        %s196 = scalar_select %p195, %s20, 1
        %p197 = scmp.lt.s32.totalorder %s194, 31
        %s198 = scalar_select %p197, %s194, 31
        %s199 = smul.addr %s196, 32
        %s200 = sadd.s32 %s198, %s199
        %s201 = smul.addr %s200, 8
        %s202 = scalar_lea.vmem %s0, %s201
        %p203 = pneg %p51
        %p204 = pneg %p48
        %p205 = pneg %p72
        %p206 = pneg %p69
        %p207 = pneg %p93
        %p208 = pneg %p90
        %p209 = pneg %p121
        %p210 = pneg %p118
        %s211 = smul.u32 32, %s21
        %p212 = scmp.lt.s32.totalorder %s20, 1
        %s213 = scalar_select %p212, %s20, 1
        %p214 = scmp.lt.s32.totalorder %s211, 31
        %s215 = scalar_select %p214, %s211, 31
        %s216 = smul.addr %s213, 32
        %s217 = sadd.s32 %s215, %s216
        %s218 = smul.addr %s217, 4
        %s219 = scalar_lea.vmem %s3, %s218
        %s220 = smul.u32 32, %s21
        %p221 = scmp.lt.s32.totalorder %s20, 1
        %s222 = scalar_select %p221, %s20, 1
        %p223 = scmp.lt.s32.totalorder %s220, 31
        %s224 = scalar_select %p223, %s220, 31
        %s225 = smul.addr %s222, 32
        %s226 = sadd.s32 %s224, %s225
        %s227 = smul.addr %s226, 8
        %s228 = scalar_lea.vmem %s0, %s227
        %s229 = smul.u32 32, %s21
        %s230 = smul.u32 32, %s21
        %p231 = scmp.lt.s32.totalorder %s20, 1
        %s232 = scalar_select %p231, %s20, 1
        %p233 = scmp.lt.s32.totalorder %s230, 31
        %s234 = scalar_select %p233, %s230, 31
        %s235 = smul.addr %s232, 32
        %s236 = sadd.s32 %s234, %s235
        %s237 = smul.addr %s236, 4
        %s238 = scalar_lea.vmem %s3, %s237
        %s239 = smul.u32 32, %s21
        %v240 = vld [vmem:[%s228] sm:$0xff]
        %v241 = vld [vmem:[%s228 + $0x8] sm:$0xff]
        %v242 = vld [vmem:[%s228 + $0x10] sm:$0xff]
        %v243 = vld [vmem:[%s228 + $0x18] sm:$0xff]
        %v244 = vld [vmem:[%s228 + $0x20] sm:$0xff]
        %v245 = vld [vmem:[%s228 + $0x28] sm:$0xff]
        %v246 = vld [vmem:[%s228 + $0x30] sm:$0xff]
        %v247 = vld [vmem:[%s228 + $0x38] sm:$0xff]
        %v248 = vld [vmem:[%s228 + $0x40] sm:$0xff]
        %v249 = vld [vmem:[%s228 + $0x48] sm:$0xff]
        %v250 = vld [vmem:[%s228 + $0x50] sm:$0xff]
        %v251 = vld [vmem:[%s228 + $0x58] sm:$0xff]
        %v252 = vld [vmem:[%s228 + $0x60] sm:$0xff]
        %v253 = vld [vmem:[%s228 + $0x68] sm:$0xff]
        %v254 = vld [vmem:[%s228 + $0x70] sm:$0xff]
        %v255 = vld [vmem:[%s228 + $0x78] sm:$0xff]
        %v256 = vld [vmem:[%s228 + $0x80] sm:$0xff]
        %v257 = vld [vmem:[%s228 + $0x88] sm:$0xff]
        %v258 = vld [vmem:[%s228 + $0x90] sm:$0xff]
        %v259 = vld [vmem:[%s228 + $0x98] sm:$0xff]
        %v260 = vld [vmem:[%s228 + $0xa0] sm:$0xff]
        %v261 = vld [vmem:[%s228 + $0xa8] sm:$0xff]
        %v262 = vld [vmem:[%s228 + $0xb0] sm:$0xff]
        %v263 = vld [vmem:[%s228 + $0xb8] sm:$0xff]
        %v264 = vld [vmem:[%s228 + $0xc0] sm:$0xff]
        %v265 = vld [vmem:[%s228 + $0xc8] sm:$0xff]
        %v266 = vld [vmem:[%s228 + $0xd0] sm:$0xff]
        %v267 = vld [vmem:[%s228 + $0xd8] sm:$0xff]
        %v268 = vld [vmem:[%s228 + $0xe0] sm:$0xff]
        %v269 = vld [vmem:[%s228 + $0xe8] sm:$0xff]
        %v270 = vld [vmem:[%s228 + $0xf0] sm:$0xff]
        %v271 = vld [vmem:[%s228 + $0xf8] sm:$0xff]
        %v272 = vld [vmem:[#allocation2] sm:$0x1]
        %v273 = vld [vmem:[#allocation4] sm:$0x1]
        %vm274 = vcmask 261120
        %v275 = vsel %vm274, %v240, 0.0
        %276 = vadd.xlane.f32.xlu0 %v275
        %v277 = vpop.xlane.xlu0 %276
        %v278 = vsel %vm274, %v241, 0.0
        %279 = vadd.xlane.f32.xlu0 %v278
        %v280 = vpop.xlane.xlu0 %279
        %v281 = vsel %vm274, %v242, 0.0
        %282 = vadd.xlane.f32.xlu0 %v281
        %v283 = vpop.xlane.xlu0 %282
        %v284 = vsel %vm274, %v243, 0.0
        %285 = vadd.xlane.f32.xlu0 %v284
        %v286 = vpop.xlane.xlu0 %285
        %v287 = vsel %vm274, %v244, 0.0
        %288 = vadd.xlane.f32.xlu0 %v287
        %v289 = vpop.xlane.xlu0 %288
        %v290 = vsel %vm274, %v245, 0.0
        %291 = vadd.xlane.f32.xlu0 %v290
        %v292 = vpop.xlane.xlu0 %291
        %v293 = vsel %vm274, %v246, 0.0
        %294 = vadd.xlane.f32.xlu0 %v293
        %v295 = vpop.xlane.xlu0 %294
        %v296 = vsel %vm274, %v247, 0.0
        %297 = vadd.xlane.f32.xlu0 %v296
        %v298 = vpop.xlane.xlu0 %297
        %v299 = vsel %vm274, %v248, 0.0
        %300 = vadd.xlane.f32.xlu0 %v299
        %v301 = vpop.xlane.xlu0 %300
        %v302 = vsel %vm274, %v249, 0.0
        %303 = vadd.xlane.f32.xlu0 %v302
        %v304 = vpop.xlane.xlu0 %303
        %v305 = vsel %vm274, %v250, 0.0
        %306 = vadd.xlane.f32.xlu0 %v305
        %v307 = vpop.xlane.xlu0 %306
        %v308 = vsel %vm274, %v251, 0.0
        %309 = vadd.xlane.f32.xlu0 %v308
        %v310 = vpop.xlane.xlu0 %309
        %v311 = vsel %vm274, %v252, 0.0
        %312 = vadd.xlane.f32.xlu0 %v311
        %v313 = vpop.xlane.xlu0 %312
        %v314 = vsel %vm274, %v253, 0.0
        %315 = vadd.xlane.f32.xlu0 %v314
        %v316 = vpop.xlane.xlu0 %315
        %v317 = vsel %vm274, %v254, 0.0
        %318 = vadd.xlane.f32.xlu0 %v317
        %v319 = vpop.xlane.xlu0 %318
        %v320 = vsel %vm274, %v255, 0.0
        %321 = vadd.xlane.f32.xlu0 %v320
        %v322 = vpop.xlane.xlu0 %321
        %v323 = vsel %vm274, %v256, 0.0
        %324 = vadd.xlane.f32.xlu0 %v323
        %v325 = vpop.xlane.xlu0 %324
        %v326 = vsel %vm274, %v257, 0.0
        %327 = vadd.xlane.f32.xlu0 %v326
        %v328 = vpop.xlane.xlu0 %327
        %v329 = vsel %vm274, %v258, 0.0
        %330 = vadd.xlane.f32.xlu0 %v329
        %v331 = vpop.xlane.xlu0 %330
        %v332 = vsel %vm274, %v259, 0.0
        %333 = vadd.xlane.f32.xlu0 %v332
        %v334 = vpop.xlane.xlu0 %333
        %v335 = vsel %vm274, %v260, 0.0
        %336 = vadd.xlane.f32.xlu0 %v335
        %v337 = vpop.xlane.xlu0 %336
        %v338 = vsel %vm274, %v261, 0.0
        %339 = vadd.xlane.f32.xlu0 %v338
        %v340 = vpop.xlane.xlu0 %339
        %v341 = vsel %vm274, %v262, 0.0
        %342 = vadd.xlane.f32.xlu0 %v341
        %v343 = vpop.xlane.xlu0 %342
        %v344 = vsel %vm274, %v263, 0.0
        %345 = vadd.xlane.f32.xlu0 %v344
        %v346 = vpop.xlane.xlu0 %345
        %v347 = vsel %vm274, %v264, 0.0
        %348 = vadd.xlane.f32.xlu0 %v347
        %v349 = vpop.xlane.xlu0 %348
        %v350 = vsel %vm274, %v265, 0.0
        %351 = vadd.xlane.f32.xlu0 %v350
        %v352 = vpop.xlane.xlu0 %351
        %v353 = vsel %vm274, %v266, 0.0
        %354 = vadd.xlane.f32.xlu0 %v353
        %v355 = vpop.xlane.xlu0 %354
        %v356 = vsel %vm274, %v267, 0.0
        %357 = vadd.xlane.f32.xlu0 %v356
        %v358 = vpop.xlane.xlu0 %357
        %v359 = vsel %vm274, %v268, 0.0
        %360 = vadd.xlane.f32.xlu0 %v359
        %v361 = vpop.xlane.xlu0 %360
        %v362 = vsel %vm274, %v269, 0.0
        %363 = vadd.xlane.f32.xlu0 %v362
        %v364 = vpop.xlane.xlu0 %363
        %v365 = vsel %vm274, %v270, 0.0
        %366 = vadd.xlane.f32.xlu0 %v365
        %v367 = vpop.xlane.xlu0 %366
        %v368 = vsel %vm274, %v271, 0.0
        %369 = vadd.xlane.f32.xlu0 %v368
        %v370 = vpop.xlane.xlu0 %369
        %v371 = vrcp.pop 32.0
        %v372 = vmul.f32 32.0, %v371
        %v373 = vsub.f32 1.0, %v372
        %v374 = vmul.f32 %v371, %v373
        %v375 = vadd.f32 %v371, %v374
        %vm376 = vweird.f32 %v371
        %v377 = vsel %vm376, %v371, %v375
        %v378 = vmul.f32 %v277, %v377
        %v379 = vmul.f32 %v280, %v377
        %v380 = vmul.f32 %v283, %v377
        %v381 = vmul.f32 %v286, %v377
        %v382 = vmul.f32 %v289, %v377
        %v383 = vmul.f32 %v292, %v377
        %v384 = vmul.f32 %v295, %v377
        %v385 = vmul.f32 %v298, %v377
        %v386 = vmul.f32 %v301, %v377
        %v387 = vmul.f32 %v304, %v377
        %v388 = vmul.f32 %v307, %v377
        %v389 = vmul.f32 %v310, %v377
        %v390 = vmul.f32 %v313, %v377
        %v391 = vmul.f32 %v316, %v377
        %v392 = vmul.f32 %v319, %v377
        %v393 = vmul.f32 %v322, %v377
        %v394 = vmul.f32 %v325, %v377
        %v395 = vmul.f32 %v328, %v377
        %v396 = vmul.f32 %v331, %v377
        %v397 = vmul.f32 %v334, %v377
        %v398 = vmul.f32 %v337, %v377
        %v399 = vmul.f32 %v340, %v377
        %v400 = vmul.f32 %v343, %v377
        %v401 = vmul.f32 %v346, %v377
        %v402 = vmul.f32 %v349, %v377
        %v403 = vmul.f32 %v352, %v377
        %v404 = vmul.f32 %v355, %v377
        %v405 = vmul.f32 %v358, %v377
        %v406 = vmul.f32 %v361, %v377
        %v407 = vmul.f32 %v364, %v377
        %v408 = vmul.f32 %v367, %v377
        %v409 = vmul.f32 %v370, %v377
        %v410 = vsub.f32 %v240, %v378
        %v411 = vsub.f32 %v241, %v379
        %v412 = vsub.f32 %v242, %v380
        %v413 = vsub.f32 %v243, %v381
        %v414 = vsub.f32 %v244, %v382
        %v415 = vsub.f32 %v245, %v383
        %v416 = vsub.f32 %v246, %v384
        %v417 = vsub.f32 %v247, %v385
        %v418 = vsub.f32 %v248, %v386
        %v419 = vsub.f32 %v249, %v387
        %v420 = vsub.f32 %v250, %v388
        %v421 = vsub.f32 %v251, %v389
        %v422 = vsub.f32 %v252, %v390
        %v423 = vsub.f32 %v253, %v391
        %v424 = vsub.f32 %v254, %v392
        %v425 = vsub.f32 %v255, %v393
        %v426 = vsub.f32 %v256, %v394
        %v427 = vsub.f32 %v257, %v395
        %v428 = vsub.f32 %v258, %v396
        %v429 = vsub.f32 %v259, %v397
        %v430 = vsub.f32 %v260, %v398
        %v431 = vsub.f32 %v261, %v399
        %v432 = vsub.f32 %v262, %v400
        %v433 = vsub.f32 %v263, %v401
        %v434 = vsub.f32 %v264, %v402
        %v435 = vsub.f32 %v265, %v403
        %v436 = vsub.f32 %v266, %v404
        %v437 = vsub.f32 %v267, %v405
        %v438 = vsub.f32 %v268, %v406
        %v439 = vsub.f32 %v269, %v407
        %v440 = vsub.f32 %v270, %v408
        %v441 = vsub.f32 %v271, %v409
        %v442 = vmul.f32 %v410, %v410
        %v443 = vmul.f32 %v411, %v411
        %v444 = vmul.f32 %v412, %v412
        %v445 = vmul.f32 %v413, %v413
        %v446 = vmul.f32 %v414, %v414
        %v447 = vmul.f32 %v415, %v415
        %v448 = vmul.f32 %v416, %v416
        %v449 = vmul.f32 %v417, %v417
        %v450 = vmul.f32 %v418, %v418
        %v451 = vmul.f32 %v419, %v419
        %v452 = vmul.f32 %v420, %v420
        %v453 = vmul.f32 %v421, %v421
        %v454 = vmul.f32 %v422, %v422
        %v455 = vmul.f32 %v423, %v423
        %v456 = vmul.f32 %v424, %v424
        %v457 = vmul.f32 %v425, %v425
        %v458 = vmul.f32 %v426, %v426
        %v459 = vmul.f32 %v427, %v427
        %v460 = vmul.f32 %v428, %v428
        %v461 = vmul.f32 %v429, %v429
        %v462 = vmul.f32 %v430, %v430
        %v463 = vmul.f32 %v431, %v431
        %v464 = vmul.f32 %v432, %v432
        %v465 = vmul.f32 %v433, %v433
        %v466 = vmul.f32 %v434, %v434
        %v467 = vmul.f32 %v435, %v435
        %v468 = vmul.f32 %v436, %v436
        %v469 = vmul.f32 %v437, %v437
        %v470 = vmul.f32 %v438, %v438
        %v471 = vmul.f32 %v439, %v439
        %v472 = vmul.f32 %v440, %v440
        %v473 = vmul.f32 %v441, %v441
        %v474 = vsel %vm274, %v442, 0.0
        %475 = vadd.xlane.f32.xlu0 %v474
        %v476 = vpop.xlane.xlu0 %475
        %v477 = vsel %vm274, %v443, 0.0
        %478 = vadd.xlane.f32.xlu0 %v477
        %v479 = vpop.xlane.xlu0 %478
        %v480 = vsel %vm274, %v444, 0.0
        %481 = vadd.xlane.f32.xlu0 %v480
        %v482 = vpop.xlane.xlu0 %481
        %v483 = vsel %vm274, %v445, 0.0
        %484 = vadd.xlane.f32.xlu0 %v483
        %v485 = vpop.xlane.xlu0 %484
        %v486 = vsel %vm274, %v446, 0.0
        %487 = vadd.xlane.f32.xlu0 %v486
        %v488 = vpop.xlane.xlu0 %487
        %v489 = vsel %vm274, %v447, 0.0
        %490 = vadd.xlane.f32.xlu0 %v489
        %v491 = vpop.xlane.xlu0 %490
        %v492 = vsel %vm274, %v448, 0.0
        %493 = vadd.xlane.f32.xlu0 %v492
        %v494 = vpop.xlane.xlu0 %493
        %v495 = vsel %vm274, %v449, 0.0
        %496 = vadd.xlane.f32.xlu0 %v495
        %v497 = vpop.xlane.xlu0 %496
        %v498 = vsel %vm274, %v450, 0.0
        %499 = vadd.xlane.f32.xlu0 %v498
        %v500 = vpop.xlane.xlu0 %499
        %v501 = vsel %vm274, %v451, 0.0
        %502 = vadd.xlane.f32.xlu0 %v501
        %v503 = vpop.xlane.xlu0 %502
        %v504 = vsel %vm274, %v452, 0.0
        %505 = vadd.xlane.f32.xlu0 %v504
        %v506 = vpop.xlane.xlu0 %505
        %v507 = vsel %vm274, %v453, 0.0
        %508 = vadd.xlane.f32.xlu0 %v507
        %v509 = vpop.xlane.xlu0 %508
        %v510 = vsel %vm274, %v454, 0.0
        %511 = vadd.xlane.f32.xlu0 %v510
        %v512 = vpop.xlane.xlu0 %511
        %v513 = vsel %vm274, %v455, 0.0
        %514 = vadd.xlane.f32.xlu0 %v513
        %v515 = vpop.xlane.xlu0 %514
        %v516 = vsel %vm274, %v456, 0.0
        %517 = vadd.xlane.f32.xlu0 %v516
        %v518 = vpop.xlane.xlu0 %517
        %v519 = vsel %vm274, %v457, 0.0
        %520 = vadd.xlane.f32.xlu0 %v519
        %v521 = vpop.xlane.xlu0 %520
        %v522 = vsel %vm274, %v458, 0.0
        %523 = vadd.xlane.f32.xlu0 %v522
        %v524 = vpop.xlane.xlu0 %523
        %v525 = vsel %vm274, %v459, 0.0
        %526 = vadd.xlane.f32.xlu0 %v525
        %v527 = vpop.xlane.xlu0 %526
        %v528 = vsel %vm274, %v460, 0.0
        %529 = vadd.xlane.f32.xlu0 %v528
        %v530 = vpop.xlane.xlu0 %529
        %v531 = vsel %vm274, %v461, 0.0
        %532 = vadd.xlane.f32.xlu0 %v531
        %v533 = vpop.xlane.xlu0 %532
        %v534 = vsel %vm274, %v462, 0.0
        %535 = vadd.xlane.f32.xlu0 %v534
        %v536 = vpop.xlane.xlu0 %535
        %v537 = vsel %vm274, %v463, 0.0
        %538 = vadd.xlane.f32.xlu0 %v537
        %v539 = vpop.xlane.xlu0 %538
        %v540 = vsel %vm274, %v464, 0.0
        %541 = vadd.xlane.f32.xlu0 %v540
        %v542 = vpop.xlane.xlu0 %541
        %v543 = vsel %vm274, %v465, 0.0
        %544 = vadd.xlane.f32.xlu0 %v543
        %v545 = vpop.xlane.xlu0 %544
        %v546 = vsel %vm274, %v466, 0.0
        %547 = vadd.xlane.f32.xlu0 %v546
        %v548 = vpop.xlane.xlu0 %547
        %v549 = vsel %vm274, %v467, 0.0
        %550 = vadd.xlane.f32.xlu0 %v549
        %v551 = vpop.xlane.xlu0 %550
        %v552 = vsel %vm274, %v468, 0.0
        %553 = vadd.xlane.f32.xlu0 %v552
        %v554 = vpop.xlane.xlu0 %553
        %v555 = vsel %vm274, %v469, 0.0
        %556 = vadd.xlane.f32.xlu0 %v555
        %v557 = vpop.xlane.xlu0 %556
        %v558 = vsel %vm274, %v470, 0.0
        %559 = vadd.xlane.f32.xlu0 %v558
        %v560 = vpop.xlane.xlu0 %559
        %v561 = vsel %vm274, %v471, 0.0
        %562 = vadd.xlane.f32.xlu0 %v561
        %v563 = vpop.xlane.xlu0 %562
        %v564 = vsel %vm274, %v472, 0.0
        %565 = vadd.xlane.f32.xlu0 %v564
        %v566 = vpop.xlane.xlu0 %565
        %v567 = vsel %vm274, %v473, 0.0
        %568 = vadd.xlane.f32.xlu0 %v567
        %v569 = vpop.xlane.xlu0 %568
        %v570 = vmul.f32 %v476, %v377
        %v571 = vmul.f32 %v479, %v377
        %v572 = vmul.f32 %v482, %v377
        %v573 = vmul.f32 %v485, %v377
        %v574 = vmul.f32 %v488, %v377
        %v575 = vmul.f32 %v491, %v377
        %v576 = vmul.f32 %v494, %v377
        %v577 = vmul.f32 %v497, %v377
        %v578 = vmul.f32 %v500, %v377
        %v579 = vmul.f32 %v503, %v377
        %v580 = vmul.f32 %v506, %v377
        %v581 = vmul.f32 %v509, %v377
        %v582 = vmul.f32 %v512, %v377
        %v583 = vmul.f32 %v515, %v377
        %v584 = vmul.f32 %v518, %v377
        %v585 = vmul.f32 %v521, %v377
        %v586 = vmul.f32 %v524, %v377
        %v587 = vmul.f32 %v527, %v377
        %v588 = vmul.f32 %v530, %v377
        %v589 = vmul.f32 %v533, %v377
        %v590 = vmul.f32 %v536, %v377
        %v591 = vmul.f32 %v539, %v377
        %v592 = vmul.f32 %v542, %v377
        %v593 = vmul.f32 %v545, %v377
        %v594 = vmul.f32 %v548, %v377
        %v595 = vmul.f32 %v551, %v377
        %v596 = vmul.f32 %v554, %v377
        %v597 = vmul.f32 %v557, %v377
        %v598 = vmul.f32 %v560, %v377
        %v599 = vmul.f32 %v563, %v377
        %v600 = vmul.f32 %v566, %v377
        %v601 = vmul.f32 %v569, %v377
        %v602 = vadd.f32 %v570, 1e-05
        %v603 = vadd.f32 %v571, 1e-05
        %v604 = vadd.f32 %v572, 1e-05
        %v605 = vadd.f32 %v573, 1e-05
        %v606 = vadd.f32 %v574, 1e-05
        %v607 = vadd.f32 %v575, 1e-05
        %v608 = vadd.f32 %v576, 1e-05
        %v609 = vadd.f32 %v577, 1e-05
        %v610 = vadd.f32 %v578, 1e-05
        %v611 = vadd.f32 %v579, 1e-05
        %v612 = vadd.f32 %v580, 1e-05
        %v613 = vadd.f32 %v581, 1e-05
        %v614 = vadd.f32 %v582, 1e-05
        %v615 = vadd.f32 %v583, 1e-05
        %v616 = vadd.f32 %v584, 1e-05
        %v617 = vadd.f32 %v585, 1e-05
        %v618 = vadd.f32 %v586, 1e-05
        %v619 = vadd.f32 %v587, 1e-05
        %v620 = vadd.f32 %v588, 1e-05
        %v621 = vadd.f32 %v589, 1e-05
        %v622 = vadd.f32 %v590, 1e-05
        %v623 = vadd.f32 %v591, 1e-05
        %v624 = vadd.f32 %v592, 1e-05
        %v625 = vadd.f32 %v593, 1e-05
        %v626 = vadd.f32 %v594, 1e-05
        %v627 = vadd.f32 %v595, 1e-05
        %v628 = vadd.f32 %v596, 1e-05
        %v629 = vadd.f32 %v597, 1e-05
        %v630 = vadd.f32 %v598, 1e-05
        %v631 = vadd.f32 %v599, 1e-05
        %v632 = vadd.f32 %v600, 1e-05
        %v633 = vadd.f32 %v601, 1e-05
        %v634 = vrsqrt.pop %v602
        %v635 = vmul.f32 %v634, %v602
        %v636 = vmul.f32 %v635, %v634
        %v637 = vmul.f32 0.5, %v636
        %v638 = vsub.f32 1.5, %v637
        %v639 = vmul.f32 %v634, %v638
        %vm640 = vweird.f32 %v602
        %vm641 = vweird.f32 %v634
        %vm642 = vmor %vm640, %vm641
        %v643 = vsel %vm642, %v634, %v639
        %v644 = vrsqrt.pop %v603
        %v645 = vmul.f32 %v644, %v603
        %v646 = vmul.f32 %v645, %v644
        %v647 = vmul.f32 0.5, %v646
        %v648 = vsub.f32 1.5, %v647
        %v649 = vmul.f32 %v644, %v648
        %vm650 = vweird.f32 %v603
        %vm651 = vweird.f32 %v644
        %vm652 = vmor %vm650, %vm651
        %v653 = vsel %vm652, %v644, %v649
        %v654 = vrsqrt.pop %v604
        %v655 = vmul.f32 %v654, %v604
        %v656 = vmul.f32 %v655, %v654
        %v657 = vmul.f32 0.5, %v656
        %v658 = vsub.f32 1.5, %v657
        %v659 = vmul.f32 %v654, %v658
        %vm660 = vweird.f32 %v604
        %vm661 = vweird.f32 %v654
        %vm662 = vmor %vm660, %vm661
        %v663 = vsel %vm662, %v654, %v659
        %v664 = vrsqrt.pop %v605
        %v665 = vmul.f32 %v664, %v605
        %v666 = vmul.f32 %v665, %v664
        %v667 = vmul.f32 0.5, %v666
        %v668 = vsub.f32 1.5, %v667
        %v669 = vmul.f32 %v664, %v668
        %vm670 = vweird.f32 %v605
        %vm671 = vweird.f32 %v664
        %vm672 = vmor %vm670, %vm671
        %v673 = vsel %vm672, %v664, %v669
        %v674 = vrsqrt.pop %v606
        %v675 = vmul.f32 %v674, %v606
        %v676 = vmul.f32 %v675, %v674
        %v677 = vmul.f32 0.5, %v676
        %v678 = vsub.f32 1.5, %v677
        %v679 = vmul.f32 %v674, %v678
        %vm680 = vweird.f32 %v606
        %vm681 = vweird.f32 %v674
        %vm682 = vmor %vm680, %vm681
        %v683 = vsel %vm682, %v674, %v679
        %v684 = vrsqrt.pop %v607
        %v685 = vmul.f32 %v684, %v607
        %v686 = vmul.f32 %v685, %v684
        %v687 = vmul.f32 0.5, %v686
        %v688 = vsub.f32 1.5, %v687
        %v689 = vmul.f32 %v684, %v688
        %vm690 = vweird.f32 %v607
        %vm691 = vweird.f32 %v684
        %vm692 = vmor %vm690, %vm691
        %v693 = vsel %vm692, %v684, %v689
        %v694 = vrsqrt.pop %v608
        %v695 = vmul.f32 %v694, %v608
        %v696 = vmul.f32 %v695, %v694
        %v697 = vmul.f32 0.5, %v696
        %v698 = vsub.f32 1.5, %v697
        %v699 = vmul.f32 %v694, %v698
        %vm700 = vweird.f32 %v608
        %vm701 = vweird.f32 %v694
        %vm702 = vmor %vm700, %vm701
        %v703 = vsel %vm702, %v694, %v699
        %v704 = vrsqrt.pop %v609
        %v705 = vmul.f32 %v704, %v609
        %v706 = vmul.f32 %v705, %v704
        %v707 = vmul.f32 0.5, %v706
        %v708 = vsub.f32 1.5, %v707
        %v709 = vmul.f32 %v704, %v708
        %vm710 = vweird.f32 %v609
        %vm711 = vweird.f32 %v704
        %vm712 = vmor %vm710, %vm711
        %v713 = vsel %vm712, %v704, %v709
        %v714 = vrsqrt.pop %v610
        %v715 = vmul.f32 %v714, %v610
        %v716 = vmul.f32 %v715, %v714
        %v717 = vmul.f32 0.5, %v716
        %v718 = vsub.f32 1.5, %v717
        %v719 = vmul.f32 %v714, %v718
        %vm720 = vweird.f32 %v610
        %vm721 = vweird.f32 %v714
        %vm722 = vmor %vm720, %vm721
        %v723 = vsel %vm722, %v714, %v719
        %v724 = vrsqrt.pop %v611
        %v725 = vmul.f32 %v724, %v611
        %v726 = vmul.f32 %v725, %v724
        %v727 = vmul.f32 0.5, %v726
        %v728 = vsub.f32 1.5, %v727
        %v729 = vmul.f32 %v724, %v728
        %vm730 = vweird.f32 %v611
        %vm731 = vweird.f32 %v724
        %vm732 = vmor %vm730, %vm731
        %v733 = vsel %vm732, %v724, %v729
        %v734 = vrsqrt.pop %v612
        %v735 = vmul.f32 %v734, %v612
        %v736 = vmul.f32 %v735, %v734
        %v737 = vmul.f32 0.5, %v736
        %v738 = vsub.f32 1.5, %v737
        %v739 = vmul.f32 %v734, %v738
        %vm740 = vweird.f32 %v612
        %vm741 = vweird.f32 %v734
        %vm742 = vmor %vm740, %vm741
        %v743 = vsel %vm742, %v734, %v739
        %v744 = vrsqrt.pop %v613
        %v745 = vmul.f32 %v744, %v613
        %v746 = vmul.f32 %v745, %v744
        %v747 = vmul.f32 0.5, %v746
        %v748 = vsub.f32 1.5, %v747
        %v749 = vmul.f32 %v744, %v748
        %vm750 = vweird.f32 %v613
        %vm751 = vweird.f32 %v744
        %vm752 = vmor %vm750, %vm751
        %v753 = vsel %vm752, %v744, %v749
        %v754 = vrsqrt.pop %v614
        %v755 = vmul.f32 %v754, %v614
        %v756 = vmul.f32 %v755, %v754
        %v757 = vmul.f32 0.5, %v756
        %v758 = vsub.f32 1.5, %v757
        %v759 = vmul.f32 %v754, %v758
        %vm760 = vweird.f32 %v614
        %vm761 = vweird.f32 %v754
        %vm762 = vmor %vm760, %vm761
        %v763 = vsel %vm762, %v754, %v759
        %v764 = vrsqrt.pop %v615
        %v765 = vmul.f32 %v764, %v615
        %v766 = vmul.f32 %v765, %v764
        %v767 = vmul.f32 0.5, %v766
        %v768 = vsub.f32 1.5, %v767
        %v769 = vmul.f32 %v764, %v768
        %vm770 = vweird.f32 %v615
        %vm771 = vweird.f32 %v764
        %vm772 = vmor %vm770, %vm771
        %v773 = vsel %vm772, %v764, %v769
        %v774 = vrsqrt.pop %v616
        %v775 = vmul.f32 %v774, %v616
        %v776 = vmul.f32 %v775, %v774
        %v777 = vmul.f32 0.5, %v776
        %v778 = vsub.f32 1.5, %v777
        %v779 = vmul.f32 %v774, %v778
        %vm780 = vweird.f32 %v616
        %vm781 = vweird.f32 %v774
        %vm782 = vmor %vm780, %vm781
        %v783 = vsel %vm782, %v774, %v779
        %v784 = vrsqrt.pop %v617
        %v785 = vmul.f32 %v784, %v617
        %v786 = vmul.f32 %v785, %v784
        %v787 = vmul.f32 0.5, %v786
        %v788 = vsub.f32 1.5, %v787
        %v789 = vmul.f32 %v784, %v788
        %vm790 = vweird.f32 %v617
        %vm791 = vweird.f32 %v784
        %vm792 = vmor %vm790, %vm791
        %v793 = vsel %vm792, %v784, %v789
        %v794 = vrsqrt.pop %v618
        %v795 = vmul.f32 %v794, %v618
        %v796 = vmul.f32 %v795, %v794
        %v797 = vmul.f32 0.5, %v796
        %v798 = vsub.f32 1.5, %v797
        %v799 = vmul.f32 %v794, %v798
        %vm800 = vweird.f32 %v618
        %vm801 = vweird.f32 %v794
        %vm802 = vmor %vm800, %vm801
        %v803 = vsel %vm802, %v794, %v799
        %v804 = vrsqrt.pop %v619
        %v805 = vmul.f32 %v804, %v619
        %v806 = vmul.f32 %v805, %v804
        %v807 = vmul.f32 0.5, %v806
        %v808 = vsub.f32 1.5, %v807
        %v809 = vmul.f32 %v804, %v808
        %vm810 = vweird.f32 %v619
        %vm811 = vweird.f32 %v804
        %vm812 = vmor %vm810, %vm811
        %v813 = vsel %vm812, %v804, %v809
        %v814 = vrsqrt.pop %v620
        %v815 = vmul.f32 %v814, %v620
        %v816 = vmul.f32 %v815, %v814
        %v817 = vmul.f32 0.5, %v816
        %v818 = vsub.f32 1.5, %v817
        %v819 = vmul.f32 %v814, %v818
        %vm820 = vweird.f32 %v620
        %vm821 = vweird.f32 %v814
        %vm822 = vmor %vm820, %vm821
        %v823 = vsel %vm822, %v814, %v819
        %v824 = vrsqrt.pop %v621
        %v825 = vmul.f32 %v824, %v621
        %v826 = vmul.f32 %v825, %v824
        %v827 = vmul.f32 0.5, %v826
        %v828 = vsub.f32 1.5, %v827
        %v829 = vmul.f32 %v824, %v828
        %vm830 = vweird.f32 %v621
        %vm831 = vweird.f32 %v824
        %vm832 = vmor %vm830, %vm831
        %v833 = vsel %vm832, %v824, %v829
        %v834 = vrsqrt.pop %v622
        %v835 = vmul.f32 %v834, %v622
        %v836 = vmul.f32 %v835, %v834
        %v837 = vmul.f32 0.5, %v836
        %v838 = vsub.f32 1.5, %v837
        %v839 = vmul.f32 %v834, %v838
        %vm840 = vweird.f32 %v622
        %vm841 = vweird.f32 %v834
        %vm842 = vmor %vm840, %vm841
        %v843 = vsel %vm842, %v834, %v839
        %v844 = vrsqrt.pop %v623
        %v845 = vmul.f32 %v844, %v623
        %v846 = vmul.f32 %v845, %v844
        %v847 = vmul.f32 0.5, %v846
        %v848 = vsub.f32 1.5, %v847
        %v849 = vmul.f32 %v844, %v848
        %vm850 = vweird.f32 %v623
        %vm851 = vweird.f32 %v844
        %vm852 = vmor %vm850, %vm851
        %v853 = vsel %vm852, %v844, %v849
        %v854 = vrsqrt.pop %v624
        %v855 = vmul.f32 %v854, %v624
        %v856 = vmul.f32 %v855, %v854
        %v857 = vmul.f32 0.5, %v856
        %v858 = vsub.f32 1.5, %v857
        %v859 = vmul.f32 %v854, %v858
        %vm860 = vweird.f32 %v624
        %vm861 = vweird.f32 %v854
        %vm862 = vmor %vm860, %vm861
        %v863 = vsel %vm862, %v854, %v859
        %v864 = vrsqrt.pop %v625
        %v865 = vmul.f32 %v864, %v625
        %v866 = vmul.f32 %v865, %v864
        %v867 = vmul.f32 0.5, %v866
        %v868 = vsub.f32 1.5, %v867
        %v869 = vmul.f32 %v864, %v868
        %vm870 = vweird.f32 %v625
        %vm871 = vweird.f32 %v864
        %vm872 = vmor %vm870, %vm871
        %v873 = vsel %vm872, %v864, %v869
        %v874 = vrsqrt.pop %v626
        %v875 = vmul.f32 %v874, %v626
        %v876 = vmul.f32 %v875, %v874
        %v877 = vmul.f32 0.5, %v876
        %v878 = vsub.f32 1.5, %v877
        %v879 = vmul.f32 %v874, %v878
        %vm880 = vweird.f32 %v626
        %vm881 = vweird.f32 %v874
        %vm882 = vmor %vm880, %vm881
        %v883 = vsel %vm882, %v874, %v879
        %v884 = vrsqrt.pop %v627
        %v885 = vmul.f32 %v884, %v627
        %v886 = vmul.f32 %v885, %v884
        %v887 = vmul.f32 0.5, %v886
        %v888 = vsub.f32 1.5, %v887
        %v889 = vmul.f32 %v884, %v888
        %vm890 = vweird.f32 %v627
        %vm891 = vweird.f32 %v884
        %vm892 = vmor %vm890, %vm891
        %v893 = vsel %vm892, %v884, %v889
        %v894 = vrsqrt.pop %v628
        %v895 = vmul.f32 %v894, %v628
        %v896 = vmul.f32 %v895, %v894
        %v897 = vmul.f32 0.5, %v896
        %v898 = vsub.f32 1.5, %v897
        %v899 = vmul.f32 %v894, %v898
        %vm900 = vweird.f32 %v628
        %vm901 = vweird.f32 %v894
        %vm902 = vmor %vm900, %vm901
        %v903 = vsel %vm902, %v894, %v899
        %v904 = vrsqrt.pop %v629
        %v905 = vmul.f32 %v904, %v629
        %v906 = vmul.f32 %v905, %v904
        %v907 = vmul.f32 0.5, %v906
        %v908 = vsub.f32 1.5, %v907
        %v909 = vmul.f32 %v904, %v908
        %vm910 = vweird.f32 %v629
        %vm911 = vweird.f32 %v904
        %vm912 = vmor %vm910, %vm911
        %v913 = vsel %vm912, %v904, %v909
        %v914 = vrsqrt.pop %v630
        %v915 = vmul.f32 %v914, %v630
        %v916 = vmul.f32 %v915, %v914
        %v917 = vmul.f32 0.5, %v916
        %v918 = vsub.f32 1.5, %v917
        %v919 = vmul.f32 %v914, %v918
        %vm920 = vweird.f32 %v630
        %vm921 = vweird.f32 %v914
        %vm922 = vmor %vm920, %vm921
        %v923 = vsel %vm922, %v914, %v919
        %v924 = vrsqrt.pop %v631
        %v925 = vmul.f32 %v924, %v631
        %v926 = vmul.f32 %v925, %v924
        %v927 = vmul.f32 0.5, %v926
        %v928 = vsub.f32 1.5, %v927
        %v929 = vmul.f32 %v924, %v928
        %vm930 = vweird.f32 %v631
        %vm931 = vweird.f32 %v924
        %vm932 = vmor %vm930, %vm931
        %v933 = vsel %vm932, %v924, %v929
        %v934 = vrsqrt.pop %v632
        %v935 = vmul.f32 %v934, %v632
        %v936 = vmul.f32 %v935, %v934
        %v937 = vmul.f32 0.5, %v936
        %v938 = vsub.f32 1.5, %v937
        %v939 = vmul.f32 %v934, %v938
        %vm940 = vweird.f32 %v632
        %vm941 = vweird.f32 %v934
        %vm942 = vmor %vm940, %vm941
        %v943 = vsel %vm942, %v934, %v939
        %v944 = vrsqrt.pop %v633
        %v945 = vmul.f32 %v944, %v633
        %v946 = vmul.f32 %v945, %v944
        %v947 = vmul.f32 0.5, %v946
        %v948 = vsub.f32 1.5, %v947
        %v949 = vmul.f32 %v944, %v948
        %vm950 = vweird.f32 %v633
        %vm951 = vweird.f32 %v944
        %vm952 = vmor %vm950, %vm951
        %v953 = vsel %vm952, %v944, %v949
        %v954 = vmul.f32 %v410, %v643
        %v955 = vmul.f32 %v411, %v653
        %v956 = vmul.f32 %v412, %v663
        %v957 = vmul.f32 %v413, %v673
        %v958 = vmul.f32 %v414, %v683
        %v959 = vmul.f32 %v415, %v693
        %v960 = vmul.f32 %v416, %v703
        %v961 = vmul.f32 %v417, %v713
        %v962 = vmul.f32 %v418, %v723
        %v963 = vmul.f32 %v419, %v733
        %v964 = vmul.f32 %v420, %v743
        %v965 = vmul.f32 %v421, %v753
        %v966 = vmul.f32 %v422, %v763
        %v967 = vmul.f32 %v423, %v773
        %v968 = vmul.f32 %v424, %v783
        %v969 = vmul.f32 %v425, %v793
        %v970 = vmul.f32 %v426, %v803
        %v971 = vmul.f32 %v427, %v813
        %v972 = vmul.f32 %v428, %v823
        %v973 = vmul.f32 %v429, %v833
        %v974 = vmul.f32 %v430, %v843
        %v975 = vmul.f32 %v431, %v853
        %v976 = vmul.f32 %v432, %v863
        %v977 = vmul.f32 %v433, %v873
        %v978 = vmul.f32 %v434, %v883
        %v979 = vmul.f32 %v435, %v893
        %v980 = vmul.f32 %v436, %v903
        %v981 = vmul.f32 %v437, %v913
        %v982 = vmul.f32 %v438, %v923
        %v983 = vmul.f32 %v439, %v933
        %v984 = vmul.f32 %v440, %v943
        %v985 = vmul.f32 %v441, %v953
        %v987 = vperm.slane %v272, 0
        %v989 = vmul.f32 %v954, %v987
        %v990 = vmul.f32 %v955, %v987
        %v991 = vmul.f32 %v956, %v987
        %v992 = vmul.f32 %v957, %v987
        %v993 = vmul.f32 %v958, %v987
        %v994 = vmul.f32 %v959, %v987
        %v995 = vmul.f32 %v960, %v987
        %v996 = vmul.f32 %v961, %v987
        %v997 = vmul.f32 %v962, %v987
        %v998 = vmul.f32 %v963, %v987
        %v999 = vmul.f32 %v964, %v987
        %v1000 = vmul.f32 %v965, %v987
        %v1001 = vmul.f32 %v966, %v987
        %v1002 = vmul.f32 %v967, %v987
        %v1003 = vmul.f32 %v968, %v987
        %v1004 = vmul.f32 %v969, %v987
        %v1005 = vmul.f32 %v970, %v987
        %v1006 = vmul.f32 %v971, %v987
        %v1007 = vmul.f32 %v972, %v987
        %v1008 = vmul.f32 %v973, %v987
        %v1009 = vmul.f32 %v974, %v987
        %v1010 = vmul.f32 %v975, %v987
        %v1011 = vmul.f32 %v976, %v987
        %v1012 = vmul.f32 %v977, %v987
        %v1013 = vmul.f32 %v978, %v987
        %v1014 = vmul.f32 %v979, %v987
        %v1015 = vmul.f32 %v980, %v987
        %v1016 = vmul.f32 %v981, %v987
        %v1017 = vmul.f32 %v982, %v987
        %v1018 = vmul.f32 %v983, %v987
        %v1019 = vmul.f32 %v984, %v987
        %v1020 = vmul.f32 %v985, %v987
        %v1022 = vperm.slane %v273, 0
        %v1024 = vadd.f32 %v989, %v1022
        %v1025 = vadd.f32 %v990, %v1022
        %v1026 = vadd.f32 %v991, %v1022
        %v1027 = vadd.f32 %v992, %v1022
        %v1028 = vadd.f32 %v993, %v1022
        %v1029 = vadd.f32 %v994, %v1022
        %v1030 = vadd.f32 %v995, %v1022
        %v1031 = vadd.f32 %v996, %v1022
        %v1032 = vadd.f32 %v997, %v1022
        %v1033 = vadd.f32 %v998, %v1022
        %v1034 = vadd.f32 %v999, %v1022
        %v1035 = vadd.f32 %v1000, %v1022
        %v1036 = vadd.f32 %v1001, %v1022
        %v1037 = vadd.f32 %v1002, %v1022
        %v1038 = vadd.f32 %v1003, %v1022
        %v1039 = vadd.f32 %v1004, %v1022
        %v1040 = vadd.f32 %v1005, %v1022
        %v1041 = vadd.f32 %v1006, %v1022
        %v1042 = vadd.f32 %v1007, %v1022
        %v1043 = vadd.f32 %v1008, %v1022
        %v1044 = vadd.f32 %v1009, %v1022
        %v1045 = vadd.f32 %v1010, %v1022
        %v1046 = vadd.f32 %v1011, %v1022
        %v1047 = vadd.f32 %v1012, %v1022
        %v1048 = vadd.f32 %v1013, %v1022
        %v1049 = vadd.f32 %v1014, %v1022
        %v1050 = vadd.f32 %v1015, %v1022
        %v1051 = vadd.f32 %v1016, %v1022
        %v1052 = vadd.f32 %v1017, %v1022
        %v1053 = vadd.f32 %v1018, %v1022
        %v1054 = vadd.f32 %v1019, %v1022
        %v1055 = vadd.f32 %v1020, %v1022
        %v1056 = vpack.c.bf16 %v1024, %v1024
        %v1057 = vpack.c.bf16 %v1025, %v1025
        %v1058 = vpack.c.bf16 %v1026, %v1026
        %v1059 = vpack.c.bf16 %v1027, %v1027
        %v1060 = vpack.c.bf16 %v1028, %v1028
        %v1061 = vpack.c.bf16 %v1029, %v1029
        %v1062 = vpack.c.bf16 %v1030, %v1030
        %v1063 = vpack.c.bf16 %v1031, %v1031
        %v1064 = vpack.c.bf16 %v1032, %v1032
        %v1065 = vpack.c.bf16 %v1033, %v1033
        %v1066 = vpack.c.bf16 %v1034, %v1034
        %v1067 = vpack.c.bf16 %v1035, %v1035
        %v1068 = vpack.c.bf16 %v1036, %v1036
        %v1069 = vpack.c.bf16 %v1037, %v1037
        %v1070 = vpack.c.bf16 %v1038, %v1038
        %v1071 = vpack.c.bf16 %v1039, %v1039
        %v1072 = vpack.c.bf16 %v1040, %v1040
        %v1073 = vpack.c.bf16 %v1041, %v1041
        %v1074 = vpack.c.bf16 %v1042, %v1042
        %v1075 = vpack.c.bf16 %v1043, %v1043
        %v1076 = vpack.c.bf16 %v1044, %v1044
        %v1077 = vpack.c.bf16 %v1045, %v1045
        %v1078 = vpack.c.bf16 %v1046, %v1046
        %v1079 = vpack.c.bf16 %v1047, %v1047
        %v1080 = vpack.c.bf16 %v1048, %v1048
        %v1081 = vpack.c.bf16 %v1049, %v1049
        %v1082 = vpack.c.bf16 %v1050, %v1050
        %v1083 = vpack.c.bf16 %v1051, %v1051
        %v1084 = vpack.c.bf16 %v1052, %v1052
        %v1085 = vpack.c.bf16 %v1053, %v1053
        %v1086 = vpack.c.bf16 %v1054, %v1054
        %v1087 = vpack.c.bf16 %v1055, %v1055
        %vm1088 = vcmask 257024
        %1089 = vst.msk [vmem:[%s238] sm:$0xf] %vm1088, %v1056
        %1090 = vst.msk [vmem:[%s238 + $0x4] sm:$0xf] %vm1088, %v1057
        %1091 = vst.msk [vmem:[%s238 + $0x8] sm:$0xf] %vm1088, %v1058
        %1092 = vst.msk [vmem:[%s238 + $0xc] sm:$0xf] %vm1088, %v1059
        %1093 = vst.msk [vmem:[%s238 + $0x10] sm:$0xf] %vm1088, %v1060
        %1094 = vst.msk [vmem:[%s238 + $0x14] sm:$0xf] %vm1088, %v1061
        %1095 = vst.msk [vmem:[%s238 + $0x18] sm:$0xf] %vm1088, %v1062
        %1096 = vst.msk [vmem:[%s238 + $0x1c] sm:$0xf] %vm1088, %v1063
        %1097 = vst.msk [vmem:[%s238 + $0x20] sm:$0xf] %vm1088, %v1064
        %1098 = vst.msk [vmem:[%s238 + $0x24] sm:$0xf] %vm1088, %v1065
        %1099 = vst.msk [vmem:[%s238 + $0x28] sm:$0xf] %vm1088, %v1066
        %1100 = vst.msk [vmem:[%s238 + $0x2c] sm:$0xf] %vm1088, %v1067
        %1101 = vst.msk [vmem:[%s238 + $0x30] sm:$0xf] %vm1088, %v1068
        %1102 = vst.msk [vmem:[%s238 + $0x34] sm:$0xf] %vm1088, %v1069
        %1103 = vst.msk [vmem:[%s238 + $0x38] sm:$0xf] %vm1088, %v1070
        %1104 = vst.msk [vmem:[%s238 + $0x3c] sm:$0xf] %vm1088, %v1071
        %1105 = vst.msk [vmem:[%s238 + $0x40] sm:$0xf] %vm1088, %v1072
        %1106 = vst.msk [vmem:[%s238 + $0x44] sm:$0xf] %vm1088, %v1073
        %1107 = vst.msk [vmem:[%s238 + $0x48] sm:$0xf] %vm1088, %v1074
        %1108 = vst.msk [vmem:[%s238 + $0x4c] sm:$0xf] %vm1088, %v1075
        %1109 = vst.msk [vmem:[%s238 + $0x50] sm:$0xf] %vm1088, %v1076
        %1110 = vst.msk [vmem:[%s238 + $0x54] sm:$0xf] %vm1088, %v1077
        %1111 = vst.msk [vmem:[%s238 + $0x58] sm:$0xf] %vm1088, %v1078
        %1112 = vst.msk [vmem:[%s238 + $0x5c] sm:$0xf] %vm1088, %v1079
        %1113 = vst.msk [vmem:[%s238 + $0x60] sm:$0xf] %vm1088, %v1080
        %1114 = vst.msk [vmem:[%s238 + $0x64] sm:$0xf] %vm1088, %v1081
        %1115 = vst.msk [vmem:[%s238 + $0x68] sm:$0xf] %vm1088, %v1082
        %1116 = vst.msk [vmem:[%s238 + $0x6c] sm:$0xf] %vm1088, %v1083
        %1117 = vst.msk [vmem:[%s238 + $0x70] sm:$0xf] %vm1088, %v1084
        %1118 = vst.msk [vmem:[%s238 + $0x74] sm:$0xf] %vm1088, %v1085
        %1119 = vst.msk [vmem:[%s238 + $0x78] sm:$0xf] %vm1088, %v1086
        %1120 = vst.msk [vmem:[%s238 + $0x7c] sm:$0xf] %vm1088, %v1087
        %s1121 = smul.u32 32, %s21
        %p1122 = scmp.lt.s32.totalorder %s20, 1
        %s1123 = scalar_select %p1122, %s20, 1
        %p1124 = scmp.lt.s32.totalorder %s1121, 31
        %s1125 = scalar_select %p1124, %s1121, 31
        %s1126 = smul.addr %s1123, 32
        %s1127 = sadd.s32 %s1125, %s1126
        %s1128 = smul.addr %s1127, 4
        %s1129 = scalar_lea.vmem %s3, %s1128
        // Predicated region
        $region41: #{hab_forward.4} parent=31 // pred_check
          %p1130 = pneg %p118
        $region42: #{hab_forward.4} parent=31 // pred_check_branch
          %1132 = sbr.rel (%p1130) target = $region44
        $region43: #{hab_forward.4} parent=31 // pred_region
          %s1133 = smul.u32 32, %s21
        $region44: #{hab_forward.4} parent=31 // pred_fallthru
          _
      $region32: #{hab_forward.4} parent=5 // pred_fallthru
        _
      %p1134 = scmp.le.s32.totalorder 2, %s11
      // Predicated region
      $region45: #{hab_forward.4} parent=5 // pred_check
        %p1135 = pneg %p1134
      $region46: #{hab_forward.4} parent=5 // pred_check_branch
        %1137 = sbr.rel (%p1135) target = $region48
      $region47: #{hab_forward.4} parent=5 // pred_region
        %s1138 = ssub.s32 %s11, 2
        // Predicated region
        $region49: #{hab_forward.4} parent=47 // pred_check
          %p1139 = pneg %p124
        $region50: #{hab_forward.4} parent=47 // pred_check_branch
          %1141 = sbr.rel (%p1139) target = $region52
        $region51: #{hab_forward.4} parent=47 // pred_region
          %s1142 = smul.u32 32, %s23
          %p1143 = scmp.lt.s32.totalorder %s22, 1
          %s1144 = scalar_select %p1143, %s22, 1
          %p1145 = scmp.lt.s32.totalorder %s1142, 31
          %s1146 = scalar_select %p1145, %s1142, 31
          %s1147 = smul.addr %s1144, 32
          %s1148 = sadd.s32 %s1146, %s1147
          %s1149 = smul.addr %s1148, 4
          %s1150 = scalar_lea.vmem %s3, %s1149
        $region52: #{hab_forward.4} parent=47 // pred_fallthru
          _
      $region48: #{hab_forward.4} parent=5 // pred_fallthru
        _
    $region6: #{hab_forward.4} parent=1 // loop_footer
      %s15 = sadd.s32 1, %s11
    $region7: #{hab_forward.4} parent=1 // loop_footer_branch
      %10 = sbr.rel target = $region3
    $region8: #{hab_forward.4} parent=1 // loop_exit
      _
    %1151 = vsyncpa [#allocation3], 1
    %s1152 = scalar_lea.sflag [#allocation3], 1
    %1153 = vsyncpa %s1152, 1
    %1154 = vsyncpa [#allocation5], 1

// kernel: hab_forward.6
$region0: #{hab_forward.6}
  #allocation0 [shape = 'u32[]', space=smem, size = 0x4, offset = 0x4, fixed_abs, tag = 'smem constant byte address 0x4 - core index']
  #allocation1 [shape = 'u32[72,128]{1,0:T(1,128)}', space=vmem, size = 0x9000, scoped, tag = 'internal scratch']
  %s0 = inlined_call_operand.vmem [shape: bf16[2,16,16,32], index: 0, kind: input, shape index: {}]
  %s1 = inlined_call_operand.vmem [shape: bf16[32,96], index: 1, kind: input, shape index: {}]
  %s2 = inlined_call_operand.vmem [shape: f32[1,96], index: 2, kind: input, shape index: {}]
  %s3 = inlined_call_operand.vmem [shape: bf16[32,32], index: 3, kind: input, shape index: {}]
  %s4 = inlined_call_operand.vmem [shape: f32[1,32], index: 4, kind: input, shape index: {}]
  %s5 = inlined_call_operand.vmem [shape: f32[2,64,64], index: 5, kind: input, shape index: {}]
  %s6 = inlined_call_operand.vmem [shape: bf16[2,16,16,32], index: 6, kind: output, shape index: {}]
  %s7 = sld [smem:[#allocation0]]
  $region57: #{hab_forward.6} parent=0
    _
  %s9 = ssub.s32 1, %s7
  %s10 = scalar_select 0, %s9, %s7
  loop: start=0, step=1, limit=6
  $region2: #{hab_forward.6} parent=0 // loop_pre_header
    _
  $region3: #{hab_forward.6} parent=0 // loop_header
    %s12 = sphi 0, %s16
    %p13 = scmp.ge.s32.totalorder %s12, 6
    %s19 = sphi 0, %s31
    %s20 = sphi 0, %s27
    %s21 = sphi 0, %s19
    %s22 = sphi 0, %s20
    %s23 = sphi 0, %s21
    %s24 = sphi 0, %s22
    %s36 = sphi 0, %s38
    %s39 = sphi 0, %s36
    %s40 = sphi 0, %s39
    %s56 = sphi 0, %s40
    %s60 = sphi 0, %s60
    %s62 = sphi 0, %s60
    %s63 = sphi 0, %s62
    %s77 = sphi 0, %s63
    %s81 = sphi 0, %s81
    %s83 = sphi 0, %s81
    %s84 = sphi 0, %s83
    %s98 = sphi 0, %s84
    %s102 = sphi 0, %s102
    %s104 = sphi 0, %s102
    %s105 = sphi 0, %s104
    %s119 = sphi 0, %s105
    %s123 = sphi 0, %s123
    %s125 = sphi 0, %s123
    %s126 = sphi 0, %s125
    %s140 = sphi 0, %s126
    %s144 = sphi 0, %s144
    %s146 = sphi 0, %s144
    %s147 = sphi 0, %s146
    %s161 = sphi 0, %s147
    %s169 = sphi 0, %s171
    %s172 = sphi 0, %s169
    %s173 = sphi 0, %s172
    %s189 = sphi 0, %s173
  $region4: #{hab_forward.6} parent=0 // loop_header_branch
    %15 = sbr.rel (%p13) target = $region8
  $region5: #{hab_forward.6} parent=0 // loop_body
    %s17 = ssub.s32 %s12, 1
    %s18 = ssub.s32 %s12, 2
    %s25 = sadd.s32 1, %s20
    %p26 = scmp.ge.s32.totalorder %s25, 2
    %s27 = scalar_select %p26, 0, %s25
    %s28 = sadd.s32 1, %s19
    %s29 = scalar_select %p26, %s28, %s19
    %p30 = scmp.ge.s32.totalorder %s29, 2
    %s31 = scalar_select %p30, 0, %s29
    %s32 = ssub.s32 %s19, %s31
    %s33 = ssub.s32 %s20, %s27
    %s34 = sor.u32 %s32, %s33
    %p35 = scmp.eq.s32.totalorder %s34, 0
    %s37 = sadd.s32 %s36, 1
    %s38 = scalar_select %p35, %s36, %s37
    %p41 = pneg %p35
    %p42 = scmp.eq.s32.totalorder %s12, 3
    %p43 = por %p41, %p42
    %p44 = scmp.ne.s32.totalorder %s36, %s39
    %p45 = scmp.eq.s32.totalorder %s12, 0
    %p46 = por %p44, %p45
    %p47 = scmp.ne.s32.totalorder %s36, %s39
    %p48 = scmp.eq.s32.totalorder %s17, 3
    %p49 = por %p47, %p48
    %p50 = scmp.ne.s32.totalorder %s39, %s40
    %p51 = scmp.eq.s32.totalorder %s17, 0
    %p52 = por %p50, %p51
    %p53 = scmp.ne.s32.totalorder %s39, %s40
    %p54 = scmp.eq.s32.totalorder %s18, 3
    %p55 = por %p53, %p54
    %p57 = scmp.ne.s32.totalorder %s40, %s56
    %p58 = scmp.eq.s32.totalorder %s18, 0
    %p59 = por %p57, %p58
    %s61 = sadd.s32 %s60, 1
    %p64 = scmp.eq.s32.totalorder %s12, 3
    %p65 = scmp.ne.s32.totalorder %s60, %s62
    %p66 = scmp.eq.s32.totalorder %s12, 0
    %p67 = por %p65, %p66
    %p68 = scmp.ne.s32.totalorder %s60, %s62
    %p69 = scmp.eq.s32.totalorder %s17, 3
    %p70 = por %p68, %p69
    %p71 = scmp.ne.s32.totalorder %s62, %s63
    %p72 = scmp.eq.s32.totalorder %s17, 0
    %p73 = por %p71, %p72
    %p74 = scmp.ne.s32.totalorder %s62, %s63
    %p75 = scmp.eq.s32.totalorder %s18, 3
    %p76 = por %p74, %p75
    %p78 = scmp.ne.s32.totalorder %s63, %s77
    %p79 = scmp.eq.s32.totalorder %s18, 0
    %p80 = por %p78, %p79
    %s82 = sadd.s32 %s81, 1
    %p85 = scmp.eq.s32.totalorder %s12, 3
    %p86 = scmp.ne.s32.totalorder %s81, %s83
    %p87 = scmp.eq.s32.totalorder %s12, 0
    %p88 = por %p86, %p87
    %p89 = scmp.ne.s32.totalorder %s81, %s83
    %p90 = scmp.eq.s32.totalorder %s17, 3
    %p91 = por %p89, %p90
    %p92 = scmp.ne.s32.totalorder %s83, %s84
    %p93 = scmp.eq.s32.totalorder %s17, 0
    %p94 = por %p92, %p93
    %p95 = scmp.ne.s32.totalorder %s83, %s84
    %p96 = scmp.eq.s32.totalorder %s18, 3
    %p97 = por %p95, %p96
    %p99 = scmp.ne.s32.totalorder %s84, %s98
    %p100 = scmp.eq.s32.totalorder %s18, 0
    %p101 = por %p99, %p100
    %s103 = sadd.s32 %s102, 1
    %p106 = scmp.eq.s32.totalorder %s12, 3
    %p107 = scmp.ne.s32.totalorder %s102, %s104
    %p108 = scmp.eq.s32.totalorder %s12, 0
    %p109 = por %p107, %p108
    %p110 = scmp.ne.s32.totalorder %s102, %s104
    %p111 = scmp.eq.s32.totalorder %s17, 3
    %p112 = por %p110, %p111
    %p113 = scmp.ne.s32.totalorder %s104, %s105
    %p114 = scmp.eq.s32.totalorder %s17, 0
    %p115 = por %p113, %p114
    %p116 = scmp.ne.s32.totalorder %s104, %s105
    %p117 = scmp.eq.s32.totalorder %s18, 3
    %p118 = por %p116, %p117
    %p120 = scmp.ne.s32.totalorder %s105, %s119
    %p121 = scmp.eq.s32.totalorder %s18, 0
    %p122 = por %p120, %p121
    %s124 = sadd.s32 %s123, 1
    %p127 = scmp.eq.s32.totalorder %s12, 3
    %p128 = scmp.ne.s32.totalorder %s123, %s125
    %p129 = scmp.eq.s32.totalorder %s12, 0
    %p130 = por %p128, %p129
    %p131 = scmp.ne.s32.totalorder %s123, %s125
    %p132 = scmp.eq.s32.totalorder %s17, 3
    %p133 = por %p131, %p132
    %p134 = scmp.ne.s32.totalorder %s125, %s126
    %p135 = scmp.eq.s32.totalorder %s17, 0
    %p136 = por %p134, %p135
    %p137 = scmp.ne.s32.totalorder %s125, %s126
    %p138 = scmp.eq.s32.totalorder %s18, 3
    %p139 = por %p137, %p138
    %p141 = scmp.ne.s32.totalorder %s126, %s140
    %p142 = scmp.eq.s32.totalorder %s18, 0
    %p143 = por %p141, %p142
    %s145 = sadd.s32 %s144, 1
    %p148 = scmp.eq.s32.totalorder %s12, 3
    %p149 = scmp.ne.s32.totalorder %s144, %s146
    %p150 = scmp.eq.s32.totalorder %s12, 0
    %p151 = por %p149, %p150
    %p152 = scmp.ne.s32.totalorder %s144, %s146
    %p153 = scmp.eq.s32.totalorder %s17, 3
    %p154 = por %p152, %p153
    %p155 = scmp.ne.s32.totalorder %s146, %s147
    %p156 = scmp.eq.s32.totalorder %s17, 0
    %p157 = por %p155, %p156
    %p158 = scmp.ne.s32.totalorder %s146, %s147
    %p159 = scmp.eq.s32.totalorder %s18, 3
    %p160 = por %p158, %p159
    %p162 = scmp.ne.s32.totalorder %s147, %s161
    %p163 = scmp.eq.s32.totalorder %s18, 0
    %p164 = por %p162, %p163
    %s165 = ssub.s32 %s19, %s31
    %s166 = ssub.s32 %s20, %s27
    %s167 = sor.u32 %s165, %s166
    %p168 = scmp.eq.s32.totalorder %s167, 0
    %s170 = sadd.s32 %s169, 1
    %s171 = scalar_select %p168, %s169, %s170
    %p174 = pneg %p168
    %p175 = scmp.eq.s32.totalorder %s12, 3
    %p176 = por %p174, %p175
    %p177 = scmp.ne.s32.totalorder %s169, %s172
    %p178 = scmp.eq.s32.totalorder %s12, 0
    %p179 = por %p177, %p178
    %p180 = scmp.ne.s32.totalorder %s169, %s172
    %p181 = scmp.eq.s32.totalorder %s17, 3
    %p182 = por %p180, %p181
    %p183 = scmp.ne.s32.totalorder %s172, %s173
    %p184 = scmp.eq.s32.totalorder %s17, 0
    %p185 = por %p183, %p184
    %p186 = scmp.ne.s32.totalorder %s172, %s173
    %p187 = scmp.eq.s32.totalorder %s18, 3
    %p188 = por %p186, %p187
    %p190 = scmp.ne.s32.totalorder %s173, %s189
    %p191 = scmp.eq.s32.totalorder %s18, 0
    %p192 = por %p190, %p191
    %p193 = scmp.le.s32.totalorder 1, %s12
    %p194 = scmp.lt.s32.totalorder %s12, 5
    %p195 = pnand %p193, %p194
    %p196 = pneg %p195
    // Predicated region
    $region9: #{hab_forward.6} parent=5 // pred_check
      _
    $region10: #{hab_forward.6} parent=5 // pred_check_branch
      %198 = sbr.rel (%p195) target = $region12
    $region11: #{hab_forward.6} parent=5 // pred_region
      %s199 = ssub.s32 %s12, 1
      // Predicated region
      $region13: #{hab_forward.6} parent=11 // pred_check
        %p200 = pneg %p73
      $region14: #{hab_forward.6} parent=11 // pred_check_branch
        %202 = sbr.rel (%p200) target = $region16
      $region15: #{hab_forward.6} parent=11 // pred_region
        _
      $region16: #{hab_forward.6} parent=11 // pred_fallthru
        _
      // Predicated region
      $region17: #{hab_forward.6} parent=11 // pred_check
        %p203 = pneg %p94
      $region18: #{hab_forward.6} parent=11 // pred_check_branch
        %205 = sbr.rel (%p203) target = $region20
      $region19: #{hab_forward.6} parent=11 // pred_region
        _
      $region20: #{hab_forward.6} parent=11 // pred_fallthru
        _
      // Predicated region
      $region21: #{hab_forward.6} parent=11 // pred_check
        %p206 = pneg %p115
      $region22: #{hab_forward.6} parent=11 // pred_check_branch
        %208 = sbr.rel (%p206) target = $region24
      $region23: #{hab_forward.6} parent=11 // pred_region
        _
      $region24: #{hab_forward.6} parent=11 // pred_fallthru
        _
      // Predicated region
      $region25: #{hab_forward.6} parent=11 // pred_check
        %p209 = pneg %p136
      $region26: #{hab_forward.6} parent=11 // pred_check_branch
        %211 = sbr.rel (%p209) target = $region28
      $region27: #{hab_forward.6} parent=11 // pred_region
        _
      $region28: #{hab_forward.6} parent=11 // pred_fallthru
        _
      // Predicated region
      $region29: #{hab_forward.6} parent=11 // pred_check
        %p212 = pneg %p157
      $region30: #{hab_forward.6} parent=11 // pred_check_branch
        %214 = sbr.rel (%p212) target = $region32
      $region31: #{hab_forward.6} parent=11 // pred_region
        _
      $region32: #{hab_forward.6} parent=11 // pred_fallthru
        _
    $region12: #{hab_forward.6} parent=5 // pred_fallthru
      _
    %p215 = scmp.lt.s32.totalorder %s12, 4
    // Predicated region
    $region33: #{hab_forward.6} parent=5 // pred_check
      %p216 = pneg %p215
    $region34: #{hab_forward.6} parent=5 // pred_check_branch
      %218 = sbr.rel (%p216) target = $region36
    $region35: #{hab_forward.6} parent=5 // pred_region
      // Predicated region
      $region37: #{hab_forward.6} parent=35 // pred_check
        %p219 = pneg %p46
      $region38: #{hab_forward.6} parent=35 // pred_check_branch
        %221 = sbr.rel (%p219) target = $region40
      $region39: #{hab_forward.6} parent=35 // pred_region
        %s222 = smul.u32 8, %s20
        %p223 = scmp.lt.s32.totalorder %s19, 1
        %s224 = scalar_select %p223, %s19, 1
        %p225 = scmp.lt.s32.totalorder %s222, 15
        %s226 = scalar_select %p225, %s222, 15
        %s227 = smul.addr %s226, 2
        %s228 = smul.addr %s224, 32
        %s229 = sadd.s32 %s227, %s228
        %s230 = smul.addr %s229, 4
        %s231 = scalar_lea.vmem %s0, %s230
        %s232 = smul.u32 8, %s20
      $region40: #{hab_forward.6} parent=35 // pred_fallthru
        _
    $region36: #{hab_forward.6} parent=5 // pred_fallthru
      _
    %p233 = scmp.le.s32.totalorder 1, %s12
    %p234 = scmp.lt.s32.totalorder %s12, 5
    %p235 = pnand %p233, %p234
    %p236 = pneg %p235
    // Predicated region
    $region41: #{hab_forward.6} parent=5 // pred_check
      _
    $region42: #{hab_forward.6} parent=5 // pred_check_branch
      %238 = sbr.rel (%p235) target = $region44
    $region43: #{hab_forward.6} parent=5 // pred_region
      %s239 = ssub.s32 %s12, 1
      %s240 = smul.u32 8, %s22
      %p241 = scmp.lt.s32.totalorder %s21, 1
      %s242 = scalar_select %p241, %s21, 1
      %p243 = scmp.lt.s32.totalorder %s240, 15
      %s244 = scalar_select %p243, %s240, 15
      %s245 = smul.addr %s244, 2
      %s246 = smul.addr %s242, 32
      %s247 = sadd.s32 %s245, %s246
      %s248 = smul.addr %s247, 4
      %s249 = scalar_lea.vmem %s0, %s248
      %p250 = pneg %p52
      %p251 = pneg %p49
      %p252 = pneg %p73
      %p253 = pneg %p70
      %p254 = pneg %p94
      %p255 = pneg %p91
      %p256 = pneg %p115
      %p257 = pneg %p112
      %p258 = pneg %p136
      %p259 = pneg %p133
      %p260 = pneg %p157
      %p261 = pneg %p154
      %p262 = pneg %p185
      %p263 = pneg %p182
      %s264 = smul.u32 8, %s22
      %p265 = scmp.lt.s32.totalorder %s21, 1
      %s266 = scalar_select %p265, %s21, 1
      %p267 = scmp.lt.s32.totalorder %s264, 15
      %s268 = scalar_select %p267, %s264, 15
      %s269 = smul.addr %s268, 2
      %s270 = smul.addr %s266, 32
      %s271 = sadd.s32 %s269, %s270
      %s272 = smul.addr %s271, 4
      %s273 = scalar_lea.vmem %s6, %s272
      %s274 = smul.u32 8, %s22
      %p275 = scmp.lt.s32.totalorder %s21, 1
      %s276 = scalar_select %p275, %s21, 1
      %p277 = scmp.lt.s32.totalorder %s274, 15
      %s278 = scalar_select %p277, %s274, 15
      %s279 = smul.addr %s278, 2
      %s280 = smul.addr %s276, 32
      %s281 = sadd.s32 %s279, %s280
      %s282 = smul.addr %s281, 4
      %s283 = scalar_lea.vmem %s0, %s282
      %s284 = smul.u32 8, %s22
      %s285 = smul.u32 8, %s22
      %p286 = scmp.lt.s32.totalorder %s21, 1
      %s287 = scalar_select %p286, %s21, 1
      %p288 = scmp.lt.s32.totalorder %s285, 15
      %s289 = scalar_select %p288, %s285, 15
      %s290 = smul.addr %s289, 2
      %s291 = smul.addr %s287, 32
      %s292 = sadd.s32 %s290, %s291
      %s293 = smul.addr %s292, 4
      %s294 = scalar_lea.vmem %s6, %s293
      %s295 = smul.u32 8, %s22
      %v297 = vld [vmem:[%s283] sm:$0xf]
      %v298 = vld [vmem:[%s283 + $0x4] sm:$0xf]
      %v299 = vld [vmem:[%s283 + $0x8] sm:$0xf]
      %v300 = vld [vmem:[%s283 + $0xc] sm:$0xf]
      %v301 = vld [vmem:[%s283 + $0x10] sm:$0xf]
      %v302 = vld [vmem:[%s283 + $0x14] sm:$0xf]
      %v303 = vld [vmem:[%s283 + $0x18] sm:$0xf]
      %v304 = vld [vmem:[%s283 + $0x1c] sm:$0xf]
      %v305 = vld [vmem:[%s283 + $0x20] sm:$0xf]
      %v306 = vld [vmem:[%s283 + $0x24] sm:$0xf]
      %v307 = vld [vmem:[%s283 + $0x28] sm:$0xf]
      %v308 = vld [vmem:[%s283 + $0x2c] sm:$0xf]
      %v309 = vld [vmem:[%s283 + $0x30] sm:$0xf]
      %v310 = vld [vmem:[%s283 + $0x34] sm:$0xf]
      %v311 = vld [vmem:[%s283 + $0x38] sm:$0xf]
      %v312 = vld [vmem:[%s283 + $0x3c] sm:$0xf]
      %v313 = vld [vmem:[%s1] sm:$0xf]
      %v314 = vld [vmem:[%s1 + $0x4] sm:$0xf]
      %v315 = vld [vmem:[%s1 + $0x8] sm:$0xf]
      %v316 = vld [vmem:[%s1 + $0xc] sm:$0xf]
      %v317 = vld [vmem:[%s2] sm:$0x1]
      %v319 = vperm.slane %v317, 0
      %v337 = vunpack.c.l.b16 %v297
      %v338 = vunpack.c.l.b16 %v298
      %v339 = vunpack.c.l.b16 %v299
      %v340 = vunpack.c.l.b16 %v300
      %v341 = vunpack.c.l.b16 %v301
      %v342 = vunpack.c.l.b16 %v302
      %v343 = vunpack.c.l.b16 %v303
      %v344 = vunpack.c.l.b16 %v304
      %v345 = vunpack.c.l.b16 %v305
      %v346 = vunpack.c.l.b16 %v306
      %v347 = vunpack.c.l.b16 %v307
      %v348 = vunpack.c.l.b16 %v308
      %v349 = vunpack.c.l.b16 %v309
      %v350 = vunpack.c.l.b16 %v310
      %v351 = vunpack.c.l.b16 %v311
      %v352 = vunpack.c.l.b16 %v312
      %v353 = vpack.c.b16 %v338, %v337
      %v354 = vpack.c.b16 %v340, %v339
      %v355 = vpack.c.b16 %v342, %v341
      %v356 = vpack.c.b16 %v344, %v343
      %v357 = vpack.c.b16 %v346, %v345
      %v358 = vpack.c.b16 %v348, %v347
      %v359 = vpack.c.b16 %v350, %v349
      %v360 = vpack.c.b16 %v352, %v351
      %v365 = vunpack.c.l.b16 %v313
      %v366 = vunpack.c.l.b16 %v314
      %v367 = vunpack.c.l.b16 %v315
      %v368 = vunpack.c.l.b16 %v316
      %v369 = vpack.c.b16 %v366, %v365
      %v370 = vpack.c.b16 %v368, %v367
      %vm373 = vcmask 261120
      %v375 = vsel %vm373, %v353, 0
      %v378 = vsel %vm373, %v354, 0
      %v381 = vsel %vm373, %v355, 0
      %v384 = vsel %vm373, %v356, 0
      %v387 = vsel %vm373, %v357, 0
      %v390 = vsel %vm373, %v358, 0
      %v393 = vsel %vm373, %v359, 0
      %v396 = vsel %vm373, %v360, 0
      %398 = vmatpush.bf16.msra.mxu0 0
      %399 = vmatpush.bf16.msra.mxu0 0
      %400 = vmatpush.bf16.msra.mxu0 0
      %401 = vmatpush.bf16.msra.mxu0 0
      %402 = vmatpush.bf16.msra.mxu0 0
      %403 = vmatpush.bf16.msra.mxu0 0
      %404 = vmatpush.bf16.msra.mxu0 %v370
      %405 = vmatpush.bf16.msra.mxu0 %v369
      %406 = vmatmul.bf16.gmra.mxu0 %v375
      %v407 = vpop.f32.mrf.mxu0
      %v408 = vadd.f32 %v319, %v407
      %v409 = vpop.f32.mrf.mxu0
      %v410 = vadd.f32 %v319, %v409
      %411 = vmatmul.bf16.gmra.mxu0 %v378
      %v412 = vpop.f32.mrf.mxu0
      %v413 = vadd.f32 %v319, %v412
      %v414 = vpop.f32.mrf.mxu0
      %v415 = vadd.f32 %v319, %v414
      %416 = vmatmul.bf16.gmra.mxu0 %v381
      %v417 = vpop.f32.mrf.mxu0
      %v418 = vadd.f32 %v319, %v417
      %v419 = vpop.f32.mrf.mxu0
      %v420 = vadd.f32 %v319, %v419
      %421 = vmatmul.bf16.gmra.mxu0 %v384
      %v422 = vpop.f32.mrf.mxu0
      %v423 = vadd.f32 %v319, %v422
      %v424 = vpop.f32.mrf.mxu0
      %v425 = vadd.f32 %v319, %v424
      %426 = vmatmul.bf16.gmra.mxu0 %v387
      %v427 = vpop.f32.mrf.mxu0
      %v428 = vadd.f32 %v319, %v427
      %v429 = vpop.f32.mrf.mxu0
      %v430 = vadd.f32 %v319, %v429
      %431 = vmatmul.bf16.gmra.mxu0 %v390
      %v432 = vpop.f32.mrf.mxu0
      %v433 = vadd.f32 %v319, %v432
      %v434 = vpop.f32.mrf.mxu0
      %v435 = vadd.f32 %v319, %v434
      %436 = vmatmul.bf16.gmra.mxu0 %v393
      %v437 = vpop.f32.mrf.mxu0
      %v438 = vadd.f32 %v319, %v437
      %v439 = vpop.f32.mrf.mxu0
      %v440 = vadd.f32 %v319, %v439
      %441 = vmatmul.bf16.gmra.mxu0 %v396
      %v442 = vpop.f32.mrf.mxu0
      %v443 = vadd.f32 %v319, %v442
      %v444 = vpop.f32.mrf.mxu0
      %v445 = vadd.f32 %v319, %v444
      %446 = vdwg.mxu0
      %v447 = vmul.f32 %v408, 0.25
      %v448 = vmul.f32 %v413, 0.25
      %v449 = vmul.f32 %v418, 0.25
      %v450 = vmul.f32 %v423, 0.25
      %v451 = vmul.f32 %v428, 0.25
      %v452 = vmul.f32 %v433, 0.25
      %v453 = vmul.f32 %v438, 0.25
      %v454 = vmul.f32 %v443, 0.25
      %v455 = vpack.c.bf16 %v448, %v447
      %v456 = vpack.c.bf16 %v450, %v449
      %v457 = vpack.c.bf16 %v452, %v451
      %v458 = vpack.c.bf16 %v454, %v453
      %v459 = vpack.c.bf16 %v413, %v408
      %v460 = vpack.c.bf16 %v423, %v418
      %v461 = vpack.c.bf16 %v433, %v428
      %v462 = vpack.c.bf16 %v443, %v438
      %v463 = vld [vmem:[%s5] sm:$0xff]
      %v464 = vld [vmem:[%s5 + $0x8] sm:$0xff]
      %v465 = vld [vmem:[%s5 + $0x10] sm:$0xff]
      %v466 = vld [vmem:[%s5 + $0x18] sm:$0xff]
      %v467 = vld [vmem:[%s5 + $0x20] sm:$0xff]
      %v468 = vld [vmem:[%s5 + $0x28] sm:$0xff]
      %v469 = vld [vmem:[%s5 + $0x30] sm:$0xff]
      %v470 = vld [vmem:[%s5 + $0x38] sm:$0xff]
      %475 = vrot.lane.b32.xlu0 %v459, 96
      %v476 = vpop.permute.xlu0 %475
      %477 = vrot.lane.b32.xlu0 %v460, 96
      %v478 = vpop.permute.xlu0 %477
      %479 = vrot.lane.b32.xlu0 %v461, 96
      %v480 = vpop.permute.xlu0 %479
      %481 = vrot.lane.b32.xlu0 %v462, 96
      %v482 = vpop.permute.xlu0 %481
      %vm483 = vcmask 130048
      %v485 = vsel %vm483, %v455, 0
      %v488 = vsel %vm483, %v456, 0
      %v491 = vsel %vm483, %v457, 0
      %v494 = vsel %vm483, %v458, 0
      %v497 = vsel %vm483, %v476, 0
      %v500 = vsel %vm483, %v478, 0
      %v503 = vsel %vm483, %v480, 0
      %v506 = vsel %vm483, %v482, 0
      %508 = vmatpush.bf16.xpose.msra.mxu0 0
      %509 = vmatpush.bf16.xpose.msra.mxu0 0
      %510 = vmatpush.bf16.xpose.msra.mxu0 0
      %511 = vmatpush.bf16.xpose.msra.mxu0 0
      %512 = vmatpush.bf16.xpose.msra.mxu0 %v506
      %513 = vmatpush.bf16.xpose.msra.mxu0 %v503
      %514 = vmatpush.bf16.xpose.msra.mxu0 %v500
      %515 = vmatpush.bf16.xpose.msra.mxu0 %v497
      %516 = vmatmul.bf16.gmra.mxu0 %v485
      %v517 = vpop.f32.mrf.mxu0
      %v518 = vadd.f32 %v463, %v517
      %v519 = vpop.f32.mrf.mxu0
      %v520 = vadd.f32 %v464, %v519
      %521 = vmatmul.bf16.gmra.mxu0 %v488
      %v522 = vpop.f32.mrf.mxu0
      %v523 = vadd.f32 %v465, %v522
      %v524 = vpop.f32.mrf.mxu0
      %v525 = vadd.f32 %v466, %v524
      %526 = vmatmul.bf16.gmra.mxu0 %v491
      %v527 = vpop.f32.mrf.mxu0
      %v528 = vadd.f32 %v467, %v527
      %v529 = vpop.f32.mrf.mxu0
      %v530 = vadd.f32 %v468, %v529
      %531 = vmatmul.bf16.gmra.mxu0 %v494
      %v532 = vpop.f32.mrf.mxu0
      %v533 = vadd.f32 %v469, %v532
      %v534 = vpop.f32.mrf.mxu0
      %v535 = vadd.f32 %v470, %v534
      %536 = vdwg.mxu0
      %vm537 = vcmask 523264
      %v538 = vsel %vm537, %v518, -inf
      %539 = vmax.xlane.f32.xlu0 %v538
      %v540 = vpop.xlane.xlu0 %539
      %v541 = vsel %vm537, %v520, -inf
      %542 = vmax.xlane.f32.xlu0 %v541
      %v543 = vpop.xlane.xlu0 %542
      %v544 = vsel %vm537, %v523, -inf
      %545 = vmax.xlane.f32.xlu0 %v544
      %v546 = vpop.xlane.xlu0 %545
      %v547 = vsel %vm537, %v525, -inf
      %548 = vmax.xlane.f32.xlu0 %v547
      %v549 = vpop.xlane.xlu0 %548
      %v550 = vsel %vm537, %v528, -inf
      %551 = vmax.xlane.f32.xlu0 %v550
      %v552 = vpop.xlane.xlu0 %551
      %v553 = vsel %vm537, %v530, -inf
      %554 = vmax.xlane.f32.xlu0 %v553
      %v555 = vpop.xlane.xlu0 %554
      %v556 = vsel %vm537, %v533, -inf
      %557 = vmax.xlane.f32.xlu0 %v556
      %v558 = vpop.xlane.xlu0 %557
      %v559 = vsel %vm537, %v535, -inf
      %560 = vmax.xlane.f32.xlu0 %v559
      %v561 = vpop.xlane.xlu0 %560
      %v562 = vsub.f32 %v518, %v540
      %v563 = vsub.f32 %v520, %v543
      %v564 = vsub.f32 %v523, %v546
      %v565 = vsub.f32 %v525, %v549
      %v566 = vsub.f32 %v528, %v552
      %v567 = vsub.f32 %v530, %v555
      %v568 = vsub.f32 %v533, %v558
      %v569 = vsub.f32 %v535, %v561
      %v570 = vmul.f32 %v562, 1.442695
      %v571 = vpow.pop %v570
      %v572 = vmul.f32 %v563, 1.442695
      %v573 = vpow.pop %v572
      %v574 = vmul.f32 %v564, 1.442695
      %v575 = vpow.pop %v574
      %v576 = vmul.f32 %v565, 1.442695
      %v577 = vpow.pop %v576
      %v578 = vmul.f32 %v566, 1.442695
      %v579 = vpow.pop %v578
      %v580 = vmul.f32 %v567, 1.442695
      %v581 = vpow.pop %v580
      %v582 = vmul.f32 %v568, 1.442695
      %v583 = vpow.pop %v582
      %v584 = vmul.f32 %v569, 1.442695
      %v585 = vpow.pop %v584
      %v586 = vsel %vm537, %v571, 0.0
      %587 = vadd.xlane.f32.xlu0 %v586
      %v588 = vpop.xlane.xlu0 %587
      %v589 = vsel %vm537, %v573, 0.0
      %590 = vadd.xlane.f32.xlu0 %v589
      %v591 = vpop.xlane.xlu0 %590
      %v592 = vsel %vm537, %v575, 0.0
      %593 = vadd.xlane.f32.xlu0 %v592
      %v594 = vpop.xlane.xlu0 %593
      %v595 = vsel %vm537, %v577, 0.0
      %596 = vadd.xlane.f32.xlu0 %v595
      %v597 = vpop.xlane.xlu0 %596
      %v598 = vsel %vm537, %v579, 0.0
      %599 = vadd.xlane.f32.xlu0 %v598
      %v600 = vpop.xlane.xlu0 %599
      %v601 = vsel %vm537, %v581, 0.0
      %602 = vadd.xlane.f32.xlu0 %v601
      %v603 = vpop.xlane.xlu0 %602
      %v604 = vsel %vm537, %v583, 0.0
      %605 = vadd.xlane.f32.xlu0 %v604
      %v606 = vpop.xlane.xlu0 %605
      %v607 = vsel %vm537, %v585, 0.0
      %608 = vadd.xlane.f32.xlu0 %v607
      %v609 = vpop.xlane.xlu0 %608
      %v610 = vrcp.pop %v588
      %v611 = vrcp.pop %v591
      %v612 = vrcp.pop %v594
      %v613 = vrcp.pop %v597
      %v614 = vrcp.pop %v600
      %v615 = vrcp.pop %v603
      %v616 = vrcp.pop %v606
      %v617 = vrcp.pop %v609
      %v618 = vmul.f32 %v571, %v610
      %v619 = vmul.f32 %v573, %v611
      %v620 = vmul.f32 %v575, %v612
      %v621 = vmul.f32 %v577, %v613
      %v622 = vmul.f32 %v579, %v614
      %v623 = vmul.f32 %v581, %v615
      %v624 = vmul.f32 %v583, %v616
      %v625 = vmul.f32 %v585, %v617
      %v626 = vpack.c.bf16 %v619, %v618
      %v627 = vpack.c.bf16 %v621, %v620
      %v628 = vpack.c.bf16 %v623, %v622
      %v629 = vpack.c.bf16 %v625, %v624
      %630 = vrot.lane.b32.xlu0 %v459, 64
      %v631 = vpop.permute.xlu0 %630
      %632 = vrot.lane.b32.xlu0 %v460, 64
      %v633 = vpop.permute.xlu0 %632
      %634 = vrot.lane.b32.xlu0 %v461, 64
      %v635 = vpop.permute.xlu0 %634
      %636 = vrot.lane.b32.xlu0 %v462, 64
      %v637 = vpop.permute.xlu0 %636
      %v643 = vsel %vm537, %v626, 0
      %v646 = vsel %vm537, %v627, 0
      %v649 = vsel %vm537, %v628, 0
      %v652 = vsel %vm537, %v629, 0
      %654 = vmatpush.bf16.msra.mxu0 0
      %655 = vmatpush.bf16.msra.mxu0 0
      %656 = vmatpush.bf16.msra.mxu0 0
      %657 = vmatpush.bf16.msra.mxu0 0
      %658 = vmatpush.bf16.msra.mxu0 %v637
      %659 = vmatpush.bf16.msra.mxu0 %v635
      %660 = vmatpush.bf16.msra.mxu0 %v633
      %661 = vmatpush.bf16.msra.mxu0 %v631
      %662 = vmatmul.bf16.gmra.mxu0 %v643
      %v663 = vpop.f32.mrf.mxu0
      %v664 = vadd.f32 0.0, %v663
      %v665 = vpop.f32.mrf.mxu0
      %v666 = vadd.f32 0.0, %v665
      %667 = vmatmul.bf16.gmra.mxu0 %v646
      %v668 = vpop.f32.mrf.mxu0
      %v669 = vadd.f32 0.0, %v668
      %v670 = vpop.f32.mrf.mxu0
      %v671 = vadd.f32 0.0, %v670
      %672 = vmatmul.bf16.gmra.mxu0 %v649
      %v673 = vpop.f32.mrf.mxu0
      %v674 = vadd.f32 0.0, %v673
      %v675 = vpop.f32.mrf.mxu0
      %v676 = vadd.f32 0.0, %v675
      %677 = vmatmul.bf16.gmra.mxu0 %v652
      %v678 = vpop.f32.mrf.mxu0
      %v679 = vadd.f32 0.0, %v678
      %v680 = vpop.f32.mrf.mxu0
      %v681 = vadd.f32 0.0, %v680
      %682 = vdwg.mxu0
      %s683 = scalar_lea.vmem %s5, 64
      %v684 = vld [vmem:[%s683] sm:$0xff]
      %v685 = vld [vmem:[%s683 + $0x8] sm:$0xff]
      %v686 = vld [vmem:[%s683 + $0x10] sm:$0xff]
      %v687 = vld [vmem:[%s683 + $0x18] sm:$0xff]
      %v688 = vld [vmem:[%s683 + $0x20] sm:$0xff]
      %v689 = vld [vmem:[%s683 + $0x28] sm:$0xff]
      %v690 = vld [vmem:[%s683 + $0x30] sm:$0xff]
      %v691 = vld [vmem:[%s683 + $0x38] sm:$0xff]
      %696 = vrot.lane.b32.xlu0 %v455, 112
      %v697 = vpop.permute.xlu0 %696
      %698 = vrot.lane.b32.xlu0 %v456, 112
      %v699 = vpop.permute.xlu0 %698
      %700 = vrot.lane.b32.xlu0 %v457, 112
      %v701 = vpop.permute.xlu0 %700
      %702 = vrot.lane.b32.xlu0 %v458, 112
      %v703 = vpop.permute.xlu0 %702
      %704 = vrot.lane.b32.xlu0 %v459, 80
      %v705 = vpop.permute.xlu0 %704
      %706 = vrot.lane.b32.xlu0 %v460, 80
      %v707 = vpop.permute.xlu0 %706
      %708 = vrot.lane.b32.xlu0 %v461, 80
      %v709 = vpop.permute.xlu0 %708
      %710 = vrot.lane.b32.xlu0 %v462, 80
      %v711 = vpop.permute.xlu0 %710
      %v713 = vsel %vm483, %v697, 0
      %v716 = vsel %vm483, %v699, 0
      %v719 = vsel %vm483, %v701, 0
      %v722 = vsel %vm483, %v703, 0
      %v725 = vsel %vm483, %v705, 0
      %v728 = vsel %vm483, %v707, 0
      %v731 = vsel %vm483, %v709, 0
      %v734 = vsel %vm483, %v711, 0
      %736 = vmatpush.bf16.xpose.msra.mxu0 0
      %737 = vmatpush.bf16.xpose.msra.mxu0 0
      %738 = vmatpush.bf16.xpose.msra.mxu0 0
      %739 = vmatpush.bf16.xpose.msra.mxu0 0
      %740 = vmatpush.bf16.xpose.msra.mxu0 %v734
      %741 = vmatpush.bf16.xpose.msra.mxu0 %v731
      %742 = vmatpush.bf16.xpose.msra.mxu0 %v728
      %743 = vmatpush.bf16.xpose.msra.mxu0 %v725
      %744 = vmatmul.bf16.gmra.mxu0 %v713
      %v745 = vpop.f32.mrf.mxu0
      %v746 = vadd.f32 %v684, %v745
      %v747 = vpop.f32.mrf.mxu0
      %v748 = vadd.f32 %v685, %v747
      %749 = vmatmul.bf16.gmra.mxu0 %v716
      %v750 = vpop.f32.mrf.mxu0
      %v751 = vadd.f32 %v686, %v750
      %v752 = vpop.f32.mrf.mxu0
      %v753 = vadd.f32 %v687, %v752
      %754 = vmatmul.bf16.gmra.mxu0 %v719
      %v755 = vpop.f32.mrf.mxu0
      %v756 = vadd.f32 %v688, %v755
      %v757 = vpop.f32.mrf.mxu0
      %v758 = vadd.f32 %v689, %v757
      %759 = vmatmul.bf16.gmra.mxu0 %v722
      %v760 = vpop.f32.mrf.mxu0
      %v761 = vadd.f32 %v690, %v760
      %v762 = vpop.f32.mrf.mxu0
      %v763 = vadd.f32 %v691, %v762
      %764 = vdwg.mxu0
      %v765 = vsel %vm537, %v746, -inf
      %766 = vmax.xlane.f32.xlu0 %v765
      %v767 = vpop.xlane.xlu0 %766
      %v768 = vsel %vm537, %v748, -inf
      %769 = vmax.xlane.f32.xlu0 %v768
      %v770 = vpop.xlane.xlu0 %769
      %v771 = vsel %vm537, %v751, -inf
      %772 = vmax.xlane.f32.xlu0 %v771
      %v773 = vpop.xlane.xlu0 %772
      %v774 = vsel %vm537, %v753, -inf
      %775 = vmax.xlane.f32.xlu0 %v774
      %v776 = vpop.xlane.xlu0 %775
      %v777 = vsel %vm537, %v756, -inf
      %778 = vmax.xlane.f32.xlu0 %v777
      %v779 = vpop.xlane.xlu0 %778
      %v780 = vsel %vm537, %v758, -inf
      %781 = vmax.xlane.f32.xlu0 %v780
      %v782 = vpop.xlane.xlu0 %781
      %v783 = vsel %vm537, %v761, -inf
      %784 = vmax.xlane.f32.xlu0 %v783
      %v785 = vpop.xlane.xlu0 %784
      %v786 = vsel %vm537, %v763, -inf
      %787 = vmax.xlane.f32.xlu0 %v786
      %v788 = vpop.xlane.xlu0 %787
      %v789 = vsub.f32 %v746, %v767
      %v790 = vsub.f32 %v748, %v770
      %v791 = vsub.f32 %v751, %v773
      %v792 = vsub.f32 %v753, %v776
      %v793 = vsub.f32 %v756, %v779
      %v794 = vsub.f32 %v758, %v782
      %v795 = vsub.f32 %v761, %v785
      %v796 = vsub.f32 %v763, %v788
      %v797 = vmul.f32 %v789, 1.442695
      %v798 = vpow.pop %v797
      %v799 = vmul.f32 %v790, 1.442695
      %v800 = vpow.pop %v799
      %v801 = vmul.f32 %v791, 1.442695
      %v802 = vpow.pop %v801
      %v803 = vmul.f32 %v792, 1.442695
      %v804 = vpow.pop %v803
      %v805 = vmul.f32 %v793, 1.442695
      %v806 = vpow.pop %v805
      %v807 = vmul.f32 %v794, 1.442695
      %v808 = vpow.pop %v807
      %v809 = vmul.f32 %v795, 1.442695
      %v810 = vpow.pop %v809
      %v811 = vmul.f32 %v796, 1.442695
      %v812 = vpow.pop %v811
      %v813 = vsel %vm537, %v798, 0.0
      %814 = vadd.xlane.f32.xlu0 %v813
      %v815 = vpop.xlane.xlu0 %814
      %v816 = vsel %vm537, %v800, 0.0
      %817 = vadd.xlane.f32.xlu0 %v816
      %v818 = vpop.xlane.xlu0 %817
      %v819 = vsel %vm537, %v802, 0.0
      %820 = vadd.xlane.f32.xlu0 %v819
      %v821 = vpop.xlane.xlu0 %820
      %v822 = vsel %vm537, %v804, 0.0
      %823 = vadd.xlane.f32.xlu0 %v822
      %v824 = vpop.xlane.xlu0 %823
      %v825 = vsel %vm537, %v806, 0.0
      %826 = vadd.xlane.f32.xlu0 %v825
      %v827 = vpop.xlane.xlu0 %826
      %v828 = vsel %vm537, %v808, 0.0
      %829 = vadd.xlane.f32.xlu0 %v828
      %v830 = vpop.xlane.xlu0 %829
      %v831 = vsel %vm537, %v810, 0.0
      %832 = vadd.xlane.f32.xlu0 %v831
      %v833 = vpop.xlane.xlu0 %832
      %v834 = vsel %vm537, %v812, 0.0
      %835 = vadd.xlane.f32.xlu0 %v834
      %v836 = vpop.xlane.xlu0 %835
      %v837 = vrcp.pop %v815
      %v838 = vrcp.pop %v818
      %v839 = vrcp.pop %v821
      %v840 = vrcp.pop %v824
      %v841 = vrcp.pop %v827
      %v842 = vrcp.pop %v830
      %v843 = vrcp.pop %v833
      %v844 = vrcp.pop %v836
      %v845 = vmul.f32 %v798, %v837
      %v846 = vmul.f32 %v800, %v838
      %v847 = vmul.f32 %v802, %v839
      %v848 = vmul.f32 %v804, %v840
      %v849 = vmul.f32 %v806, %v841
      %v850 = vmul.f32 %v808, %v842
      %v851 = vmul.f32 %v810, %v843
      %v852 = vmul.f32 %v812, %v844
      %v853 = vpack.c.bf16 %v846, %v845
      %v854 = vpack.c.bf16 %v848, %v847
      %v855 = vpack.c.bf16 %v850, %v849
      %v856 = vpack.c.bf16 %v852, %v851
      %857 = vrot.lane.b32.xlu0 %v459, 48
      %v858 = vpop.permute.xlu0 %857
      %859 = vrot.lane.b32.xlu0 %v460, 48
      %v860 = vpop.permute.xlu0 %859
      %861 = vrot.lane.b32.xlu0 %v461, 48
      %v862 = vpop.permute.xlu0 %861
      %863 = vrot.lane.b32.xlu0 %v462, 48
      %v864 = vpop.permute.xlu0 %863
      %v870 = vsel %vm537, %v853, 0
      %v873 = vsel %vm537, %v854, 0
      %v876 = vsel %vm537, %v855, 0
      %v879 = vsel %vm537, %v856, 0
      %881 = vmatpush.bf16.msra.mxu0 0
      %882 = vmatpush.bf16.msra.mxu0 0
      %883 = vmatpush.bf16.msra.mxu0 0
      %884 = vmatpush.bf16.msra.mxu0 0
      %885 = vmatpush.bf16.msra.mxu0 %v864
      %886 = vmatpush.bf16.msra.mxu0 %v862
      %887 = vmatpush.bf16.msra.mxu0 %v860
      %888 = vmatpush.bf16.msra.mxu0 %v858
      %889 = vmatmul.bf16.gmra.mxu0 %v870
      %v890 = vpop.f32.mrf.mxu0
      %v891 = vadd.f32 0.0, %v890
      %v892 = vpop.f32.mrf.mxu0
      %v893 = vadd.f32 0.0, %v892
      %894 = vmatmul.bf16.gmra.mxu0 %v873
      %v895 = vpop.f32.mrf.mxu0
      %v896 = vadd.f32 0.0, %v895
      %v897 = vpop.f32.mrf.mxu0
      %v898 = vadd.f32 0.0, %v897
      %899 = vmatmul.bf16.gmra.mxu0 %v876
      %v900 = vpop.f32.mrf.mxu0
      %v901 = vadd.f32 0.0, %v900
      %v902 = vpop.f32.mrf.mxu0
      %v903 = vadd.f32 0.0, %v902
      %904 = vmatmul.bf16.gmra.mxu0 %v879
      %v905 = vpop.f32.mrf.mxu0
      %v906 = vadd.f32 0.0, %v905
      %v907 = vpop.f32.mrf.mxu0
      %v908 = vadd.f32 0.0, %v907
      %909 = vdwg.mxu0
      %918 = vrot.lane.b32.xlu0 %v891, 16
      %v919 = vpop.permute.xlu0 %918
      %920 = vrot.lane.b32.xlu0 %v893, 16
      %v921 = vpop.permute.xlu0 %920
      %922 = vrot.lane.b32.xlu0 %v896, 16
      %v923 = vpop.permute.xlu0 %922
      %924 = vrot.lane.b32.xlu0 %v898, 16
      %v925 = vpop.permute.xlu0 %924
      %926 = vrot.lane.b32.xlu0 %v901, 16
      %v927 = vpop.permute.xlu0 %926
      %928 = vrot.lane.b32.xlu0 %v903, 16
      %v929 = vpop.permute.xlu0 %928
      %930 = vrot.lane.b32.xlu0 %v906, 16
      %v931 = vpop.permute.xlu0 %930
      %932 = vrot.lane.b32.xlu0 %v908, 16
      %v933 = vpop.permute.xlu0 %932
      %v942 = vsel %vm483, %v664, %v919
      %v943 = vsel %vm483, %v666, %v921
      %v944 = vsel %vm483, %v669, %v923
      %v945 = vsel %vm483, %v671, %v925
      %v946 = vsel %vm483, %v674, %v927
      %v947 = vsel %vm483, %v676, %v929
      %v948 = vsel %vm483, %v679, %v931
      %v949 = vsel %vm483, %v681, %v933
      %v950 = vmul.f32 %v410, 0.25
      %v951 = vmul.f32 %v415, 0.25
      %v952 = vmul.f32 %v420, 0.25
      %v953 = vmul.f32 %v425, 0.25
      %v954 = vmul.f32 %v430, 0.25
      %v955 = vmul.f32 %v435, 0.25
      %v956 = vmul.f32 %v440, 0.25
      %v957 = vmul.f32 %v445, 0.25
      %v958 = vpack.c.bf16 %v951, %v950
      %v959 = vpack.c.bf16 %v953, %v952
      %v960 = vpack.c.bf16 %v955, %v954
      %v961 = vpack.c.bf16 %v957, %v956
      %v962 = vpack.c.bf16 %v415, %v410
      %v963 = vpack.c.bf16 %v425, %v420
      %v964 = vpack.c.bf16 %v435, %v430
      %v965 = vpack.c.bf16 %v445, %v440
      %970 = vrot.lane.b32.xlu0 %v962, 96
      %v971 = vpop.permute.xlu0 %970
      %972 = vrot.lane.b32.xlu0 %v963, 96
      %v973 = vpop.permute.xlu0 %972
      %974 = vrot.lane.b32.xlu0 %v964, 96
      %v975 = vpop.permute.xlu0 %974
      %976 = vrot.lane.b32.xlu0 %v965, 96
      %v977 = vpop.permute.xlu0 %976
      %v979 = vsel %vm483, %v958, 0
      %v982 = vsel %vm483, %v959, 0
      %v985 = vsel %vm483, %v960, 0
      %v988 = vsel %vm483, %v961, 0
      %v991 = vsel %vm483, %v971, 0
      %v994 = vsel %vm483, %v973, 0
      %v997 = vsel %vm483, %v975, 0
      %v1000 = vsel %vm483, %v977, 0
      %1002 = vmatpush.bf16.xpose.msra.mxu0 0
      %1003 = vmatpush.bf16.xpose.msra.mxu0 0
      %1004 = vmatpush.bf16.xpose.msra.mxu0 0
      %1005 = vmatpush.bf16.xpose.msra.mxu0 0
      %1006 = vmatpush.bf16.xpose.msra.mxu0 %v1000
      %1007 = vmatpush.bf16.xpose.msra.mxu0 %v997
      %1008 = vmatpush.bf16.xpose.msra.mxu0 %v994
      %1009 = vmatpush.bf16.xpose.msra.mxu0 %v991
      %1010 = vmatmul.bf16.gmra.mxu0 %v979
      %v1011 = vpop.f32.mrf.mxu0
      %v1012 = vadd.f32 %v463, %v1011
      %v1013 = vpop.f32.mrf.mxu0
      %v1014 = vadd.f32 %v464, %v1013
      %1015 = vmatmul.bf16.gmra.mxu0 %v982
      %v1016 = vpop.f32.mrf.mxu0
      %v1017 = vadd.f32 %v465, %v1016
      %v1018 = vpop.f32.mrf.mxu0
      %v1019 = vadd.f32 %v466, %v1018
      %1020 = vmatmul.bf16.gmra.mxu0 %v985
      %v1021 = vpop.f32.mrf.mxu0
      %v1022 = vadd.f32 %v467, %v1021
      %v1023 = vpop.f32.mrf.mxu0
      %v1024 = vadd.f32 %v468, %v1023
      %1025 = vmatmul.bf16.gmra.mxu0 %v988
      %v1026 = vpop.f32.mrf.mxu0
      %v1027 = vadd.f32 %v469, %v1026
      %v1028 = vpop.f32.mrf.mxu0
      %v1029 = vadd.f32 %v470, %v1028
      %1030 = vdwg.mxu0
      %v1031 = vsel %vm537, %v1012, -inf
      %1032 = vmax.xlane.f32.xlu0 %v1031
      %v1033 = vpop.xlane.xlu0 %1032
      %v1034 = vsel %vm537, %v1014, -inf
      %1035 = vmax.xlane.f32.xlu0 %v1034
      %v1036 = vpop.xlane.xlu0 %1035
      %v1037 = vsel %vm537, %v1017, -inf
      %1038 = vmax.xlane.f32.xlu0 %v1037
      %v1039 = vpop.xlane.xlu0 %1038
      %v1040 = vsel %vm537, %v1019, -inf
      %1041 = vmax.xlane.f32.xlu0 %v1040
      %v1042 = vpop.xlane.xlu0 %1041
      %v1043 = vsel %vm537, %v1022, -inf
      %1044 = vmax.xlane.f32.xlu0 %v1043
      %v1045 = vpop.xlane.xlu0 %1044
      %v1046 = vsel %vm537, %v1024, -inf
      %1047 = vmax.xlane.f32.xlu0 %v1046
      %v1048 = vpop.xlane.xlu0 %1047
      %v1049 = vsel %vm537, %v1027, -inf
      %1050 = vmax.xlane.f32.xlu0 %v1049
      %v1051 = vpop.xlane.xlu0 %1050
      %v1052 = vsel %vm537, %v1029, -inf
      %1053 = vmax.xlane.f32.xlu0 %v1052
      %v1054 = vpop.xlane.xlu0 %1053
      %v1055 = vsub.f32 %v1012, %v1033
      %v1056 = vsub.f32 %v1014, %v1036
      %v1057 = vsub.f32 %v1017, %v1039
      %v1058 = vsub.f32 %v1019, %v1042
      %v1059 = vsub.f32 %v1022, %v1045
      %v1060 = vsub.f32 %v1024, %v1048
      %v1061 = vsub.f32 %v1027, %v1051
      %v1062 = vsub.f32 %v1029, %v1054
      %v1063 = vmul.f32 %v1055, 1.442695
      %v1064 = vpow.pop %v1063
      %v1065 = vmul.f32 %v1056, 1.442695
      %v1066 = vpow.pop %v1065
      %v1067 = vmul.f32 %v1057, 1.442695
      %v1068 = vpow.pop %v1067
      %v1069 = vmul.f32 %v1058, 1.442695
      %v1070 = vpow.pop %v1069
      %v1071 = vmul.f32 %v1059, 1.442695
      %v1072 = vpow.pop %v1071
      %v1073 = vmul.f32 %v1060, 1.442695
      %v1074 = vpow.pop %v1073
      %v1075 = vmul.f32 %v1061, 1.442695
      %v1076 = vpow.pop %v1075
      %v1077 = vmul.f32 %v1062, 1.442695
      %v1078 = vpow.pop %v1077
      %v1079 = vsel %vm537, %v1064, 0.0
      %1080 = vadd.xlane.f32.xlu0 %v1079
      %v1081 = vpop.xlane.xlu0 %1080
      %v1082 = vsel %vm537, %v1066, 0.0
      %1083 = vadd.xlane.f32.xlu0 %v1082
      %v1084 = vpop.xlane.xlu0 %1083
      %v1085 = vsel %vm537, %v1068, 0.0
      %1086 = vadd.xlane.f32.xlu0 %v1085
      %v1087 = vpop.xlane.xlu0 %1086
      %v1088 = vsel %vm537, %v1070, 0.0
      %1089 = vadd.xlane.f32.xlu0 %v1088
      %v1090 = vpop.xlane.xlu0 %1089
      %v1091 = vsel %vm537, %v1072, 0.0
      %1092 = vadd.xlane.f32.xlu0 %v1091
      %v1093 = vpop.xlane.xlu0 %1092
      %v1094 = vsel %vm537, %v1074, 0.0
      %1095 = vadd.xlane.f32.xlu0 %v1094
      %v1096 = vpop.xlane.xlu0 %1095
      %v1097 = vsel %vm537, %v1076, 0.0
      %1098 = vadd.xlane.f32.xlu0 %v1097
      %v1099 = vpop.xlane.xlu0 %1098
      %v1100 = vsel %vm537, %v1078, 0.0
      %1101 = vadd.xlane.f32.xlu0 %v1100
      %v1102 = vpop.xlane.xlu0 %1101
      %v1103 = vrcp.pop %v1081
      %v1104 = vrcp.pop %v1084
      %v1105 = vrcp.pop %v1087
      %v1106 = vrcp.pop %v1090
      %v1107 = vrcp.pop %v1093
      %v1108 = vrcp.pop %v1096
      %v1109 = vrcp.pop %v1099
      %v1110 = vrcp.pop %v1102
      %v1111 = vmul.f32 %v1064, %v1103
      %v1112 = vmul.f32 %v1066, %v1104
      %v1113 = vmul.f32 %v1068, %v1105
      %v1114 = vmul.f32 %v1070, %v1106
      %v1115 = vmul.f32 %v1072, %v1107
      %v1116 = vmul.f32 %v1074, %v1108
      %v1117 = vmul.f32 %v1076, %v1109
      %v1118 = vmul.f32 %v1078, %v1110
      %v1119 = vpack.c.bf16 %v1112, %v1111
      %v1120 = vpack.c.bf16 %v1114, %v1113
      %v1121 = vpack.c.bf16 %v1116, %v1115
      %v1122 = vpack.c.bf16 %v1118, %v1117
      %1123 = vrot.lane.b32.xlu0 %v962, 64
      %v1124 = vpop.permute.xlu0 %1123
      %1125 = vrot.lane.b32.xlu0 %v963, 64
      %v1126 = vpop.permute.xlu0 %1125
      %1127 = vrot.lane.b32.xlu0 %v964, 64
      %v1128 = vpop.permute.xlu0 %1127
      %1129 = vrot.lane.b32.xlu0 %v965, 64
      %v1130 = vpop.permute.xlu0 %1129
      %v1136 = vsel %vm537, %v1119, 0
      %v1139 = vsel %vm537, %v1120, 0
      %v1142 = vsel %vm537, %v1121, 0
      %v1145 = vsel %vm537, %v1122, 0
      %1147 = vmatpush.bf16.msra.mxu0 0
      %1148 = vmatpush.bf16.msra.mxu0 0
      %1149 = vmatpush.bf16.msra.mxu0 0
      %1150 = vmatpush.bf16.msra.mxu0 0
      %1151 = vmatpush.bf16.msra.mxu0 %v1130
      %1152 = vmatpush.bf16.msra.mxu0 %v1128
      %1153 = vmatpush.bf16.msra.mxu0 %v1126
      %1154 = vmatpush.bf16.msra.mxu0 %v1124
      %1155 = vmatmul.bf16.gmra.mxu0 %v1136
      %v1156 = vpop.f32.mrf.mxu0
      %v1157 = vadd.f32 0.0, %v1156
      %v1158 = vpop.f32.mrf.mxu0
      %v1159 = vadd.f32 0.0, %v1158
      %1160 = vmatmul.bf16.gmra.mxu0 %v1139
      %v1161 = vpop.f32.mrf.mxu0
      %v1162 = vadd.f32 0.0, %v1161
      %v1163 = vpop.f32.mrf.mxu0
      %v1164 = vadd.f32 0.0, %v1163
      %1165 = vmatmul.bf16.gmra.mxu0 %v1142
      %v1166 = vpop.f32.mrf.mxu0
      %v1167 = vadd.f32 0.0, %v1166
      %v1168 = vpop.f32.mrf.mxu0
      %v1169 = vadd.f32 0.0, %v1168
      %1170 = vmatmul.bf16.gmra.mxu0 %v1145
      %v1171 = vpop.f32.mrf.mxu0
      %v1172 = vadd.f32 0.0, %v1171
      %v1173 = vpop.f32.mrf.mxu0
      %v1174 = vadd.f32 0.0, %v1173
      %1175 = vdwg.mxu0
      %1180 = vrot.lane.b32.xlu0 %v958, 112
      %v1181 = vpop.permute.xlu0 %1180
      %1182 = vrot.lane.b32.xlu0 %v959, 112
      %v1183 = vpop.permute.xlu0 %1182
      %1184 = vrot.lane.b32.xlu0 %v960, 112
      %v1185 = vpop.permute.xlu0 %1184
      %1186 = vrot.lane.b32.xlu0 %v961, 112
      %v1187 = vpop.permute.xlu0 %1186
      %1188 = vrot.lane.b32.xlu0 %v962, 80
      %v1189 = vpop.permute.xlu0 %1188
      %1190 = vrot.lane.b32.xlu0 %v963, 80
      %v1191 = vpop.permute.xlu0 %1190
      %1192 = vrot.lane.b32.xlu0 %v964, 80
      %v1193 = vpop.permute.xlu0 %1192
      %1194 = vrot.lane.b32.xlu0 %v965, 80
      %v1195 = vpop.permute.xlu0 %1194
      %v1197 = vsel %vm483, %v1181, 0
      %v1200 = vsel %vm483, %v1183, 0
      %v1203 = vsel %vm483, %v1185, 0
      %v1206 = vsel %vm483, %v1187, 0
      %v1209 = vsel %vm483, %v1189, 0
      %v1212 = vsel %vm483, %v1191, 0
      %v1215 = vsel %vm483, %v1193, 0
      %v1218 = vsel %vm483, %v1195, 0
      %1220 = vmatpush.bf16.xpose.msra.mxu0 0
      %1221 = vmatpush.bf16.xpose.msra.mxu0 0
      %1222 = vmatpush.bf16.xpose.msra.mxu0 0
      %1223 = vmatpush.bf16.xpose.msra.mxu0 0
      %1224 = vmatpush.bf16.xpose.msra.mxu0 %v1218
      %1225 = vmatpush.bf16.xpose.msra.mxu0 %v1215
      %1226 = vmatpush.bf16.xpose.msra.mxu0 %v1212
      %1227 = vmatpush.bf16.xpose.msra.mxu0 %v1209
      %1228 = vmatmul.bf16.gmra.mxu0 %v1197
      %v1229 = vpop.f32.mrf.mxu0
      %v1230 = vadd.f32 %v684, %v1229
      %v1231 = vpop.f32.mrf.mxu0
      %v1232 = vadd.f32 %v685, %v1231
      %1233 = vmatmul.bf16.gmra.mxu0 %v1200
      %v1234 = vpop.f32.mrf.mxu0
      %v1235 = vadd.f32 %v686, %v1234
      %v1236 = vpop.f32.mrf.mxu0
      %v1237 = vadd.f32 %v687, %v1236
      %1238 = vmatmul.bf16.gmra.mxu0 %v1203
      %v1239 = vpop.f32.mrf.mxu0
      %v1240 = vadd.f32 %v688, %v1239
      %v1241 = vpop.f32.mrf.mxu0
      %v1242 = vadd.f32 %v689, %v1241
      %1243 = vmatmul.bf16.gmra.mxu0 %v1206
      %v1244 = vpop.f32.mrf.mxu0
      %v1245 = vadd.f32 %v690, %v1244
      %v1246 = vpop.f32.mrf.mxu0
      %v1247 = vadd.f32 %v691, %v1246
      %1248 = vdwg.mxu0
      %v1249 = vsel %vm537, %v1230, -inf
      %1250 = vmax.xlane.f32.xlu0 %v1249
      %v1251 = vpop.xlane.xlu0 %1250
      %v1252 = vsel %vm537, %v1232, -inf
      %1253 = vmax.xlane.f32.xlu0 %v1252
      %v1254 = vpop.xlane.xlu0 %1253
      %v1255 = vsel %vm537, %v1235, -inf
      %1256 = vmax.xlane.f32.xlu0 %v1255
      %v1257 = vpop.xlane.xlu0 %1256
      %v1258 = vsel %vm537, %v1237, -inf
      %1259 = vmax.xlane.f32.xlu0 %v1258
      %v1260 = vpop.xlane.xlu0 %1259
      %v1261 = vsel %vm537, %v1240, -inf
      %1262 = vmax.xlane.f32.xlu0 %v1261
      %v1263 = vpop.xlane.xlu0 %1262
      %v1264 = vsel %vm537, %v1242, -inf
      %1265 = vmax.xlane.f32.xlu0 %v1264
      %v1266 = vpop.xlane.xlu0 %1265
      %v1267 = vsel %vm537, %v1245, -inf
      %1268 = vmax.xlane.f32.xlu0 %v1267
      %v1269 = vpop.xlane.xlu0 %1268
      %v1270 = vsel %vm537, %v1247, -inf
      %1271 = vmax.xlane.f32.xlu0 %v1270
      %v1272 = vpop.xlane.xlu0 %1271
      %v1273 = vsub.f32 %v1230, %v1251
      %v1274 = vsub.f32 %v1232, %v1254
      %v1275 = vsub.f32 %v1235, %v1257
      %v1276 = vsub.f32 %v1237, %v1260
      %v1277 = vsub.f32 %v1240, %v1263
      %v1278 = vsub.f32 %v1242, %v1266
      %v1279 = vsub.f32 %v1245, %v1269
      %v1280 = vsub.f32 %v1247, %v1272
      %v1281 = vmul.f32 %v1273, 1.442695
      %v1282 = vpow.pop %v1281
      %v1283 = vmul.f32 %v1274, 1.442695
      %v1284 = vpow.pop %v1283
      %v1285 = vmul.f32 %v1275, 1.442695
      %v1286 = vpow.pop %v1285
      %v1287 = vmul.f32 %v1276, 1.442695
      %v1288 = vpow.pop %v1287
      %v1289 = vmul.f32 %v1277, 1.442695
      %v1290 = vpow.pop %v1289
      %v1291 = vmul.f32 %v1278, 1.442695
      %v1292 = vpow.pop %v1291
      %v1293 = vmul.f32 %v1279, 1.442695
      %v1294 = vpow.pop %v1293
      %v1295 = vmul.f32 %v1280, 1.442695
      %v1296 = vpow.pop %v1295
      %v1297 = vsel %vm537, %v1282, 0.0
      %1298 = vadd.xlane.f32.xlu0 %v1297
      %v1299 = vpop.xlane.xlu0 %1298
      %v1300 = vsel %vm537, %v1284, 0.0
      %1301 = vadd.xlane.f32.xlu0 %v1300
      %v1302 = vpop.xlane.xlu0 %1301
      %v1303 = vsel %vm537, %v1286, 0.0
      %1304 = vadd.xlane.f32.xlu0 %v1303
      %v1305 = vpop.xlane.xlu0 %1304
      %v1306 = vsel %vm537, %v1288, 0.0
      %1307 = vadd.xlane.f32.xlu0 %v1306
      %v1308 = vpop.xlane.xlu0 %1307
      %v1309 = vsel %vm537, %v1290, 0.0
      %1310 = vadd.xlane.f32.xlu0 %v1309
      %v1311 = vpop.xlane.xlu0 %1310
      %v1312 = vsel %vm537, %v1292, 0.0
      %1313 = vadd.xlane.f32.xlu0 %v1312
      %v1314 = vpop.xlane.xlu0 %1313
      %v1315 = vsel %vm537, %v1294, 0.0
      %1316 = vadd.xlane.f32.xlu0 %v1315
      %v1317 = vpop.xlane.xlu0 %1316
      %v1318 = vsel %vm537, %v1296, 0.0
      %1319 = vadd.xlane.f32.xlu0 %v1318
      %v1320 = vpop.xlane.xlu0 %1319
      %v1321 = vrcp.pop %v1299
      %v1322 = vrcp.pop %v1302
      %v1323 = vrcp.pop %v1305
      %v1324 = vrcp.pop %v1308
      %v1325 = vrcp.pop %v1311
      %v1326 = vrcp.pop %v1314
      %v1327 = vrcp.pop %v1317
      %v1328 = vrcp.pop %v1320
      %v1329 = vmul.f32 %v1282, %v1321
      %v1330 = vmul.f32 %v1284, %v1322
      %v1331 = vmul.f32 %v1286, %v1323
      %v1332 = vmul.f32 %v1288, %v1324
      %v1333 = vmul.f32 %v1290, %v1325
      %v1334 = vmul.f32 %v1292, %v1326
      %v1335 = vmul.f32 %v1294, %v1327
      %v1336 = vmul.f32 %v1296, %v1328
      %v1337 = vpack.c.bf16 %v1330, %v1329
      %v1338 = vpack.c.bf16 %v1332, %v1331
      %v1339 = vpack.c.bf16 %v1334, %v1333
      %v1340 = vpack.c.bf16 %v1336, %v1335
      %1341 = vrot.lane.b32.xlu0 %v962, 48
      %v1342 = vpop.permute.xlu0 %1341
      %1343 = vrot.lane.b32.xlu0 %v963, 48
      %v1344 = vpop.permute.xlu0 %1343
      %1345 = vrot.lane.b32.xlu0 %v964, 48
      %v1346 = vpop.permute.xlu0 %1345
      %1347 = vrot.lane.b32.xlu0 %v965, 48
      %v1348 = vpop.permute.xlu0 %1347
      %v1354 = vsel %vm537, %v1337, 0
      %v1357 = vsel %vm537, %v1338, 0
      %v1360 = vsel %vm537, %v1339, 0
      %v1363 = vsel %vm537, %v1340, 0
      %1365 = vmatpush.bf16.msra.mxu0 0
      %1366 = vmatpush.bf16.msra.mxu0 0
      %1367 = vmatpush.bf16.msra.mxu0 0
      %1368 = vmatpush.bf16.msra.mxu0 0
      %1369 = vmatpush.bf16.msra.mxu0 %v1348
      %1370 = vmatpush.bf16.msra.mxu0 %v1346
      %1371 = vmatpush.bf16.msra.mxu0 %v1344
      %1372 = vmatpush.bf16.msra.mxu0 %v1342
      %1373 = vmatmul.bf16.gmra.mxu0 %v1354
      %v1374 = vpop.f32.mrf.mxu0
      %v1375 = vadd.f32 0.0, %v1374
      %v1376 = vpop.f32.mrf.mxu0
      %v1377 = vadd.f32 0.0, %v1376
      %1378 = vmatmul.bf16.gmra.mxu0 %v1357
      %v1379 = vpop.f32.mrf.mxu0
      %v1380 = vadd.f32 0.0, %v1379
      %v1381 = vpop.f32.mrf.mxu0
      %v1382 = vadd.f32 0.0, %v1381
      %1383 = vmatmul.bf16.gmra.mxu0 %v1360
      %v1384 = vpop.f32.mrf.mxu0
      %v1385 = vadd.f32 0.0, %v1384
      %v1386 = vpop.f32.mrf.mxu0
      %v1387 = vadd.f32 0.0, %v1386
      %1388 = vmatmul.bf16.gmra.mxu0 %v1363
      %v1389 = vpop.f32.mrf.mxu0
      %v1390 = vadd.f32 0.0, %v1389
      %v1391 = vpop.f32.mrf.mxu0
      %v1392 = vadd.f32 0.0, %v1391
      %1393 = vdwg.mxu0
      %1402 = vrot.lane.b32.xlu0 %v1375, 16
      %v1403 = vpop.permute.xlu0 %1402
      %1404 = vrot.lane.b32.xlu0 %v1377, 16
      %v1405 = vpop.permute.xlu0 %1404
      %1406 = vrot.lane.b32.xlu0 %v1380, 16
      %v1407 = vpop.permute.xlu0 %1406
      %1408 = vrot.lane.b32.xlu0 %v1382, 16
      %v1409 = vpop.permute.xlu0 %1408
      %1410 = vrot.lane.b32.xlu0 %v1385, 16
      %v1411 = vpop.permute.xlu0 %1410
      %1412 = vrot.lane.b32.xlu0 %v1387, 16
      %v1413 = vpop.permute.xlu0 %1412
      %1414 = vrot.lane.b32.xlu0 %v1390, 16
      %v1415 = vpop.permute.xlu0 %1414
      %1416 = vrot.lane.b32.xlu0 %v1392, 16
      %v1417 = vpop.permute.xlu0 %1416
      %v1426 = vsel %vm483, %v1157, %v1403
      %v1427 = vsel %vm483, %v1159, %v1405
      %v1428 = vsel %vm483, %v1162, %v1407
      %v1429 = vsel %vm483, %v1164, %v1409
      %v1430 = vsel %vm483, %v1167, %v1411
      %v1431 = vsel %vm483, %v1169, %v1413
      %v1432 = vsel %vm483, %v1172, %v1415
      %v1433 = vsel %vm483, %v1174, %v1417
      %v1434 = vpack.c.bf16 %v943, %v942
      %v1435 = vpack.c.bf16 %v945, %v944
      %v1436 = vpack.c.bf16 %v947, %v946
      %v1437 = vpack.c.bf16 %v949, %v948
      %v1438 = vpack.c.bf16 %v1427, %v1426
      %v1439 = vpack.c.bf16 %v1429, %v1428
      %v1440 = vpack.c.bf16 %v1431, %v1430
      %v1441 = vpack.c.bf16 %v1433, %v1432
      %v1442 = vld [vmem:[%s3] sm:$0xf]
      %v1443 = vld [vmem:[%s3 + $0x4] sm:$0xf]
      %v1444 = vld [vmem:[%s3 + $0x8] sm:$0xf]
      %v1445 = vld [vmem:[%s3 + $0xc] sm:$0xf]
      %v1446 = vld [vmem:[%s4] sm:$0x1]
      %v1448 = vperm.slane %v1446, 0
      %v1454 = vunpack.c.l.b16 %v1442
      %v1455 = vunpack.c.l.b16 %v1443
      %v1456 = vunpack.c.l.b16 %v1444
      %v1457 = vunpack.c.l.b16 %v1445
      %v1458 = vpack.c.b16 %v1455, %v1454
      %v1459 = vpack.c.b16 %v1457, %v1456
      %v1463 = vsel %vm373, %v1434, 0
      %v1466 = vsel %vm373, %v1435, 0
      %v1469 = vsel %vm373, %v1436, 0
      %v1472 = vsel %vm373, %v1437, 0
      %v1475 = vsel %vm373, %v1438, 0
      %v1478 = vsel %vm373, %v1439, 0
      %v1481 = vsel %vm373, %v1440, 0
      %v1484 = vsel %vm373, %v1441, 0
      %1486 = vmatpush.bf16.msra.mxu0 0
      %1487 = vmatpush.bf16.msra.mxu0 0
      %1488 = vmatpush.bf16.msra.mxu0 0
      %1489 = vmatpush.bf16.msra.mxu0 0
      %1490 = vmatpush.bf16.msra.mxu0 0
      %1491 = vmatpush.bf16.msra.mxu0 0
      %1492 = vmatpush.bf16.msra.mxu0 %v1459
      %1493 = vmatpush.bf16.msra.mxu0 %v1458
      %1494 = vmatmul.bf16.gmra.mxu0 %v1463
      %v1495 = vpop.f32.mrf.mxu0
      %v1496 = vadd.f32 %v1448, %v1495
      %v1497 = vpop.f32.mrf.mxu0
      %v1498 = vadd.f32 %v1448, %v1497
      %1499 = vmatmul.bf16.gmra.mxu0 %v1466
      %v1500 = vpop.f32.mrf.mxu0
      %v1501 = vadd.f32 %v1448, %v1500
      %v1502 = vpop.f32.mrf.mxu0
      %v1503 = vadd.f32 %v1448, %v1502
      %1504 = vmatmul.bf16.gmra.mxu0 %v1469
      %v1505 = vpop.f32.mrf.mxu0
      %v1506 = vadd.f32 %v1448, %v1505
      %v1507 = vpop.f32.mrf.mxu0
      %v1508 = vadd.f32 %v1448, %v1507
      %1509 = vmatmul.bf16.gmra.mxu0 %v1472
      %v1510 = vpop.f32.mrf.mxu0
      %v1511 = vadd.f32 %v1448, %v1510
      %v1512 = vpop.f32.mrf.mxu0
      %v1513 = vadd.f32 %v1448, %v1512
      %1514 = vmatmul.bf16.gmra.mxu0 %v1475
      %v1515 = vpop.f32.mrf.mxu0
      %v1516 = vadd.f32 %v1448, %v1515
      %v1517 = vpop.f32.mrf.mxu0
      %v1518 = vadd.f32 %v1448, %v1517
      %1519 = vmatmul.bf16.gmra.mxu0 %v1478
      %v1520 = vpop.f32.mrf.mxu0
      %v1521 = vadd.f32 %v1448, %v1520
      %v1522 = vpop.f32.mrf.mxu0
      %v1523 = vadd.f32 %v1448, %v1522
      %1524 = vmatmul.bf16.gmra.mxu0 %v1481
      %v1525 = vpop.f32.mrf.mxu0
      %v1526 = vadd.f32 %v1448, %v1525
      %v1527 = vpop.f32.mrf.mxu0
      %v1528 = vadd.f32 %v1448, %v1527
      %1529 = vmatmul.bf16.gmra.mxu0 %v1484
      %v1530 = vpop.f32.mrf.mxu0
      %v1531 = vadd.f32 %v1448, %v1530
      %v1532 = vpop.f32.mrf.mxu0
      %v1533 = vadd.f32 %v1448, %v1532
      %1534 = vdwg.mxu0
      %v1535 = vpack.c.bf16 %v1496, %v1496
      %v1536 = vpack.c.bf16 %v1498, %v1498
      %v1537 = vpack.c.bf16 %v1501, %v1501
      %v1538 = vpack.c.bf16 %v1503, %v1503
      %v1539 = vpack.c.bf16 %v1506, %v1506
      %v1540 = vpack.c.bf16 %v1508, %v1508
      %v1541 = vpack.c.bf16 %v1511, %v1511
      %v1542 = vpack.c.bf16 %v1513, %v1513
      %vm1543 = vcmask 257024
      %1544 = vst.msk [vmem:[%s294] sm:$0xf] %vm1543, %v1535
      %1545 = vst.msk [vmem:[%s294 + $0x8] sm:$0xf] %vm1543, %v1536
      %1546 = vst.msk [vmem:[%s294 + $0x10] sm:$0xf] %vm1543, %v1537
      %1547 = vst.msk [vmem:[%s294 + $0x18] sm:$0xf] %vm1543, %v1538
      %1548 = vst.msk [vmem:[%s294 + $0x20] sm:$0xf] %vm1543, %v1539
      %1549 = vst.msk [vmem:[%s294 + $0x28] sm:$0xf] %vm1543, %v1540
      %1550 = vst.msk [vmem:[%s294 + $0x30] sm:$0xf] %vm1543, %v1541
      %1551 = vst.msk [vmem:[%s294 + $0x38] sm:$0xf] %vm1543, %v1542
      %v1552 = vpack.c.bf16 %v1516, %v1516
      %v1553 = vpack.c.bf16 %v1518, %v1518
      %v1554 = vpack.c.bf16 %v1521, %v1521
      %v1555 = vpack.c.bf16 %v1523, %v1523
      %v1556 = vpack.c.bf16 %v1526, %v1526
      %v1557 = vpack.c.bf16 %v1528, %v1528
      %v1558 = vpack.c.bf16 %v1531, %v1531
      %v1559 = vpack.c.bf16 %v1533, %v1533
      %1560 = vst.msk [vmem:[%s294 + $0x4] sm:$0xf] %vm1543, %v1552
      %1561 = vst.msk [vmem:[%s294 + $0xc] sm:$0xf] %vm1543, %v1553
      %1562 = vst.msk [vmem:[%s294 + $0x14] sm:$0xf] %vm1543, %v1554
      %1563 = vst.msk [vmem:[%s294 + $0x1c] sm:$0xf] %vm1543, %v1555
      %1564 = vst.msk [vmem:[%s294 + $0x24] sm:$0xf] %vm1543, %v1556
      %1565 = vst.msk [vmem:[%s294 + $0x2c] sm:$0xf] %vm1543, %v1557
      %1566 = vst.msk [vmem:[%s294 + $0x34] sm:$0xf] %vm1543, %v1558
      %1567 = vst.msk [vmem:[%s294 + $0x3c] sm:$0xf] %vm1543, %v1559
      %s1568 = smul.u32 8, %s22
      %p1569 = scmp.lt.s32.totalorder %s21, 1
      %s1570 = scalar_select %p1569, %s21, 1
      %p1571 = scmp.lt.s32.totalorder %s1568, 15
      %s1572 = scalar_select %p1571, %s1568, 15
      %s1573 = smul.addr %s1572, 2
      %s1574 = smul.addr %s1570, 32
      %s1575 = sadd.s32 %s1573, %s1574
      %s1576 = smul.addr %s1575, 4
      %s1577 = scalar_lea.vmem %s6, %s1576
      // Predicated region
      $region45: #{hab_forward.6} parent=43 // pred_check
        %p1578 = pneg %p182
      $region46: #{hab_forward.6} parent=43 // pred_check_branch
        %1580 = sbr.rel (%p1578) target = $region48
      $region47: #{hab_forward.6} parent=43 // pred_region
        %s1581 = smul.u32 8, %s22
      $region48: #{hab_forward.6} parent=43 // pred_fallthru
        _
    $region44: #{hab_forward.6} parent=5 // pred_fallthru
      _
    %p1582 = scmp.le.s32.totalorder 2, %s12
    // Predicated region
    $region49: #{hab_forward.6} parent=5 // pred_check
      %p1583 = pneg %p1582
    $region50: #{hab_forward.6} parent=5 // pred_check_branch
      %1585 = sbr.rel (%p1583) target = $region52
    $region51: #{hab_forward.6} parent=5 // pred_region
      %s1586 = ssub.s32 %s12, 2
      // Predicated region
      $region53: #{hab_forward.6} parent=51 // pred_check
        %p1587 = pneg %p188
      $region54: #{hab_forward.6} parent=51 // pred_check_branch
        %1589 = sbr.rel (%p1587) target = $region56
      $region55: #{hab_forward.6} parent=51 // pred_region
        %s1590 = smul.u32 8, %s24
        %p1591 = scmp.lt.s32.totalorder %s23, 1
        %s1592 = scalar_select %p1591, %s23, 1
        %p1593 = scmp.lt.s32.totalorder %s1590, 15
        %s1594 = scalar_select %p1593, %s1590, 15
        %s1595 = smul.addr %s1594, 2
        %s1596 = smul.addr %s1592, 32
        %s1597 = sadd.s32 %s1595, %s1596
        %s1598 = smul.addr %s1597, 4
        %s1599 = scalar_lea.vmem %s6, %s1598
      $region56: #{hab_forward.6} parent=51 // pred_fallthru
        _
    $region52: #{hab_forward.6} parent=5 // pred_fallthru
      _
  $region6: #{hab_forward.6} parent=0 // loop_footer
    %s16 = sadd.s32 1, %s12
  $region7: #{hab_forward.6} parent=0 // loop_footer_branch
    %11 = sbr.rel target = $region3
  $region8: #{hab_forward.6} parent=0 // loop_exit
    _

// kernel: hab_forward.7
$region0: #{hab_forward.7}
  #allocation0 [shape = 'u32[]', space=smem, size = 0x4, offset = 0x4, fixed_abs, tag = 'smem constant byte address 0x4 - core index']
  #allocation1 [shape = 'u32[72,128]{1,0:T(1,128)}', space=vmem, size = 0x9000, scoped, tag = 'internal scratch']
  %s0 = inlined_call_operand.vmem [shape: f32[2,256,32], index: 0, kind: input, shape index: {}]
  %s1 = inlined_call_operand.vmem [shape: bf16[2,256,32], index: 1, kind: input, shape index: {}]
  %s2 = inlined_call_operand.vmem [shape: bf16[2,256,32], index: 2, kind: input, shape index: {}]
  %s3 = inlined_call_operand.vmem [shape: f32[1,32], index: 3, kind: input, shape index: {}]
  %s4 = inlined_call_operand.vmem [shape: f32[1,32], index: 4, kind: input, shape index: {}]
  %s5 = inlined_call_operand.vmem [shape: bf16[32,128], index: 5, kind: input, shape index: {}]
  %s6 = inlined_call_operand.vmem [shape: f32[1,128], index: 6, kind: input, shape index: {}]
  %s7 = inlined_call_operand.vmem [shape: bf16[128,32], index: 7, kind: input, shape index: {}]
  %s8 = inlined_call_operand.vmem [shape: f32[1,32], index: 8, kind: input, shape index: {}]
  %s9 = inlined_call_operand.vmem [shape: f32[2,256,32], index: 9, kind: output, shape index: {}]
  %s10 = sld [smem:[#allocation0]]
  $region69: #{hab_forward.7} parent=0
    _
  %s12 = ssub.s32 1, %s10
  %s13 = scalar_select 0, %s12, %s10
  loop: start=0, step=1, limit=4
  $region2: #{hab_forward.7} parent=0 // loop_pre_header
    _
  $region3: #{hab_forward.7} parent=0 // loop_header
    %s15 = sphi 0, %s19
    %p16 = scmp.ge.s32.totalorder %s15, 4
    %s22 = sphi 0, %s34
    %s23 = sphi 0, %s30
    %s24 = sphi 0, %s22
    %s25 = sphi 0, %s23
    %s26 = sphi 0, %s24
    %s27 = sphi 0, %s25
    %s39 = sphi 0, %s41
    %s42 = sphi 0, %s39
    %s43 = sphi 0, %s42
    %s59 = sphi 0, %s43
    %s67 = sphi 0, %s69
    %s70 = sphi 0, %s67
    %s71 = sphi 0, %s70
    %s87 = sphi 0, %s71
    %s95 = sphi 0, %s97
    %s98 = sphi 0, %s95
    %s99 = sphi 0, %s98
    %s115 = sphi 0, %s99
    %s119 = sphi 0, %s119
    %s121 = sphi 0, %s119
    %s122 = sphi 0, %s121
    %s136 = sphi 0, %s122
    %s140 = sphi 0, %s140
    %s142 = sphi 0, %s140
    %s143 = sphi 0, %s142
    %s157 = sphi 0, %s143
    %s161 = sphi 0, %s161
    %s163 = sphi 0, %s161
    %s164 = sphi 0, %s163
    %s178 = sphi 0, %s164
    %s182 = sphi 0, %s182
    %s184 = sphi 0, %s182
    %s185 = sphi 0, %s184
    %s199 = sphi 0, %s185
    %s203 = sphi 0, %s203
    %s205 = sphi 0, %s203
    %s206 = sphi 0, %s205
    %s220 = sphi 0, %s206
    %s224 = sphi 0, %s224
    %s226 = sphi 0, %s224
    %s227 = sphi 0, %s226
    %s241 = sphi 0, %s227
    %s249 = sphi 0, %s251
    %s252 = sphi 0, %s249
    %s253 = sphi 0, %s252
    %s269 = sphi 0, %s253
  $region4: #{hab_forward.7} parent=0 // loop_header_branch
    %18 = sbr.rel (%p16) target = $region8
  $region5: #{hab_forward.7} parent=0 // loop_body
    %s20 = ssub.s32 %s15, 1
    %s21 = ssub.s32 %s15, 2
    %s28 = sadd.s32 1, %s23
    %p29 = scmp.ge.s32.totalorder %s28, 1
    %s30 = scalar_select %p29, 0, %s28
    %s31 = sadd.s32 1, %s22
    %s32 = scalar_select %p29, %s31, %s22
    %p33 = scmp.ge.s32.totalorder %s32, 2
    %s34 = scalar_select %p33, 0, %s32
    %s35 = ssub.s32 %s22, %s34
    %s36 = ssub.s32 %s23, %s30
    %s37 = sor.u32 %s35, %s36
    %p38 = scmp.eq.s32.totalorder %s37, 0
    %s40 = sadd.s32 %s39, 1
    %s41 = scalar_select %p38, %s39, %s40
    %p44 = pneg %p38
    %p45 = scmp.eq.s32.totalorder %s15, 1
    %p46 = por %p44, %p45
    %p47 = scmp.ne.s32.totalorder %s39, %s42
    %p48 = scmp.eq.s32.totalorder %s15, 0
    %p49 = por %p47, %p48
    %p50 = scmp.ne.s32.totalorder %s39, %s42
    %p51 = scmp.eq.s32.totalorder %s20, 1
    %p52 = por %p50, %p51
    %p53 = scmp.ne.s32.totalorder %s42, %s43
    %p54 = scmp.eq.s32.totalorder %s20, 0
    %p55 = por %p53, %p54
    %p56 = scmp.ne.s32.totalorder %s42, %s43
    %p57 = scmp.eq.s32.totalorder %s21, 1
    %p58 = por %p56, %p57
    %p60 = scmp.ne.s32.totalorder %s43, %s59
    %p61 = scmp.eq.s32.totalorder %s21, 0
    %p62 = por %p60, %p61
    %s63 = ssub.s32 %s22, %s34
    %s64 = ssub.s32 %s23, %s30
    %s65 = sor.u32 %s63, %s64
    %p66 = scmp.eq.s32.totalorder %s65, 0
    %s68 = sadd.s32 %s67, 1
    %s69 = scalar_select %p66, %s67, %s68
    %p72 = pneg %p66
    %p73 = scmp.eq.s32.totalorder %s15, 1
    %p74 = por %p72, %p73
    %p75 = scmp.ne.s32.totalorder %s67, %s70
    %p76 = scmp.eq.s32.totalorder %s15, 0
    %p77 = por %p75, %p76
    %p78 = scmp.ne.s32.totalorder %s67, %s70
    %p79 = scmp.eq.s32.totalorder %s20, 1
    %p80 = por %p78, %p79
    %p81 = scmp.ne.s32.totalorder %s70, %s71
    %p82 = scmp.eq.s32.totalorder %s20, 0
    %p83 = por %p81, %p82
    %p84 = scmp.ne.s32.totalorder %s70, %s71
    %p85 = scmp.eq.s32.totalorder %s21, 1
    %p86 = por %p84, %p85
    %p88 = scmp.ne.s32.totalorder %s71, %s87
    %p89 = scmp.eq.s32.totalorder %s21, 0
    %p90 = por %p88, %p89
    %s91 = ssub.s32 %s22, %s34
    %s92 = ssub.s32 %s23, %s30
    %s93 = sor.u32 %s91, %s92
    %p94 = scmp.eq.s32.totalorder %s93, 0
    %s96 = sadd.s32 %s95, 1
    %s97 = scalar_select %p94, %s95, %s96
    %p100 = pneg %p94
    %p101 = scmp.eq.s32.totalorder %s15, 1
    %p102 = por %p100, %p101
    %p103 = scmp.ne.s32.totalorder %s95, %s98
    %p104 = scmp.eq.s32.totalorder %s15, 0
    %p105 = por %p103, %p104
    %p106 = scmp.ne.s32.totalorder %s95, %s98
    %p107 = scmp.eq.s32.totalorder %s20, 1
    %p108 = por %p106, %p107
    %p109 = scmp.ne.s32.totalorder %s98, %s99
    %p110 = scmp.eq.s32.totalorder %s20, 0
    %p111 = por %p109, %p110
    %p112 = scmp.ne.s32.totalorder %s98, %s99
    %p113 = scmp.eq.s32.totalorder %s21, 1
    %p114 = por %p112, %p113
    %p116 = scmp.ne.s32.totalorder %s99, %s115
    %p117 = scmp.eq.s32.totalorder %s21, 0
    %p118 = por %p116, %p117
    %s120 = sadd.s32 %s119, 1
    %p123 = scmp.eq.s32.totalorder %s15, 1
    %p124 = scmp.ne.s32.totalorder %s119, %s121
    %p125 = scmp.eq.s32.totalorder %s15, 0
    %p126 = por %p124, %p125
    %p127 = scmp.ne.s32.totalorder %s119, %s121
    %p128 = scmp.eq.s32.totalorder %s20, 1
    %p129 = por %p127, %p128
    %p130 = scmp.ne.s32.totalorder %s121, %s122
    %p131 = scmp.eq.s32.totalorder %s20, 0
    %p132 = por %p130, %p131
    %p133 = scmp.ne.s32.totalorder %s121, %s122
    %p134 = scmp.eq.s32.totalorder %s21, 1
    %p135 = por %p133, %p134
    %p137 = scmp.ne.s32.totalorder %s122, %s136
    %p138 = scmp.eq.s32.totalorder %s21, 0
    %p139 = por %p137, %p138
    %s141 = sadd.s32 %s140, 1
    %p144 = scmp.eq.s32.totalorder %s15, 1
    %p145 = scmp.ne.s32.totalorder %s140, %s142
    %p146 = scmp.eq.s32.totalorder %s15, 0
    %p147 = por %p145, %p146
    %p148 = scmp.ne.s32.totalorder %s140, %s142
    %p149 = scmp.eq.s32.totalorder %s20, 1
    %p150 = por %p148, %p149
    %p151 = scmp.ne.s32.totalorder %s142, %s143
    %p152 = scmp.eq.s32.totalorder %s20, 0
    %p153 = por %p151, %p152
    %p154 = scmp.ne.s32.totalorder %s142, %s143
    %p155 = scmp.eq.s32.totalorder %s21, 1
    %p156 = por %p154, %p155
    %p158 = scmp.ne.s32.totalorder %s143, %s157
    %p159 = scmp.eq.s32.totalorder %s21, 0
    %p160 = por %p158, %p159
    %s162 = sadd.s32 %s161, 1
    %p165 = scmp.eq.s32.totalorder %s15, 1
    %p166 = scmp.ne.s32.totalorder %s161, %s163
    %p167 = scmp.eq.s32.totalorder %s15, 0
    %p168 = por %p166, %p167
    %p169 = scmp.ne.s32.totalorder %s161, %s163
    %p170 = scmp.eq.s32.totalorder %s20, 1
    %p171 = por %p169, %p170
    %p172 = scmp.ne.s32.totalorder %s163, %s164
    %p173 = scmp.eq.s32.totalorder %s20, 0
    %p174 = por %p172, %p173
    %p175 = scmp.ne.s32.totalorder %s163, %s164
    %p176 = scmp.eq.s32.totalorder %s21, 1
    %p177 = por %p175, %p176
    %p179 = scmp.ne.s32.totalorder %s164, %s178
    %p180 = scmp.eq.s32.totalorder %s21, 0
    %p181 = por %p179, %p180
    %s183 = sadd.s32 %s182, 1
    %p186 = scmp.eq.s32.totalorder %s15, 1
    %p187 = scmp.ne.s32.totalorder %s182, %s184
    %p188 = scmp.eq.s32.totalorder %s15, 0
    %p189 = por %p187, %p188
    %p190 = scmp.ne.s32.totalorder %s182, %s184
    %p191 = scmp.eq.s32.totalorder %s20, 1
    %p192 = por %p190, %p191
    %p193 = scmp.ne.s32.totalorder %s184, %s185
    %p194 = scmp.eq.s32.totalorder %s20, 0
    %p195 = por %p193, %p194
    %p196 = scmp.ne.s32.totalorder %s184, %s185
    %p197 = scmp.eq.s32.totalorder %s21, 1
    %p198 = por %p196, %p197
    %p200 = scmp.ne.s32.totalorder %s185, %s199
    %p201 = scmp.eq.s32.totalorder %s21, 0
    %p202 = por %p200, %p201
    %s204 = sadd.s32 %s203, 1
    %p207 = scmp.eq.s32.totalorder %s15, 1
    %p208 = scmp.ne.s32.totalorder %s203, %s205
    %p209 = scmp.eq.s32.totalorder %s15, 0
    %p210 = por %p208, %p209
    %p211 = scmp.ne.s32.totalorder %s203, %s205
    %p212 = scmp.eq.s32.totalorder %s20, 1
    %p213 = por %p211, %p212
    %p214 = scmp.ne.s32.totalorder %s205, %s206
    %p215 = scmp.eq.s32.totalorder %s20, 0
    %p216 = por %p214, %p215
    %p217 = scmp.ne.s32.totalorder %s205, %s206
    %p218 = scmp.eq.s32.totalorder %s21, 1
    %p219 = por %p217, %p218
    %p221 = scmp.ne.s32.totalorder %s206, %s220
    %p222 = scmp.eq.s32.totalorder %s21, 0
    %p223 = por %p221, %p222
    %s225 = sadd.s32 %s224, 1
    %p228 = scmp.eq.s32.totalorder %s15, 1
    %p229 = scmp.ne.s32.totalorder %s224, %s226
    %p230 = scmp.eq.s32.totalorder %s15, 0
    %p231 = por %p229, %p230
    %p232 = scmp.ne.s32.totalorder %s224, %s226
    %p233 = scmp.eq.s32.totalorder %s20, 1
    %p234 = por %p232, %p233
    %p235 = scmp.ne.s32.totalorder %s226, %s227
    %p236 = scmp.eq.s32.totalorder %s20, 0
    %p237 = por %p235, %p236
    %p238 = scmp.ne.s32.totalorder %s226, %s227
    %p239 = scmp.eq.s32.totalorder %s21, 1
    %p240 = por %p238, %p239
    %p242 = scmp.ne.s32.totalorder %s227, %s241
    %p243 = scmp.eq.s32.totalorder %s21, 0
    %p244 = por %p242, %p243
    %s245 = ssub.s32 %s22, %s34
    %s246 = ssub.s32 %s23, %s30
    %s247 = sor.u32 %s245, %s246
    %p248 = scmp.eq.s32.totalorder %s247, 0
    %s250 = sadd.s32 %s249, 1
    %s251 = scalar_select %p248, %s249, %s250
    %p254 = pneg %p248
    %p255 = scmp.eq.s32.totalorder %s15, 1
    %p256 = por %p254, %p255
    %p257 = scmp.ne.s32.totalorder %s249, %s252
    %p258 = scmp.eq.s32.totalorder %s15, 0
    %p259 = por %p257, %p258
    %p260 = scmp.ne.s32.totalorder %s249, %s252
    %p261 = scmp.eq.s32.totalorder %s20, 1
    %p262 = por %p260, %p261
    %p263 = scmp.ne.s32.totalorder %s252, %s253
    %p264 = scmp.eq.s32.totalorder %s20, 0
    %p265 = por %p263, %p264
    %p266 = scmp.ne.s32.totalorder %s252, %s253
    %p267 = scmp.eq.s32.totalorder %s21, 1
    %p268 = por %p266, %p267
    %p270 = scmp.ne.s32.totalorder %s253, %s269
    %p271 = scmp.eq.s32.totalorder %s21, 0
    %p272 = por %p270, %p271
    %p273 = scmp.le.s32.totalorder 1, %s15
    %p274 = scmp.lt.s32.totalorder %s15, 3
    %p275 = pnand %p273, %p274
    %p276 = pneg %p275
    // Predicated region
    $region9: #{hab_forward.7} parent=5 // pred_check
      _
    $region10: #{hab_forward.7} parent=5 // pred_check_branch
      %278 = sbr.rel (%p275) target = $region12
    $region11: #{hab_forward.7} parent=5 // pred_region
      %s279 = ssub.s32 %s15, 1
      // Predicated region
      $region13: #{hab_forward.7} parent=11 // pred_check
        %p280 = pneg %p132
      $region14: #{hab_forward.7} parent=11 // pred_check_branch
        %282 = sbr.rel (%p280) target = $region16
      $region15: #{hab_forward.7} parent=11 // pred_region
        _
      $region16: #{hab_forward.7} parent=11 // pred_fallthru
        _
      // Predicated region
      $region17: #{hab_forward.7} parent=11 // pred_check
        %p283 = pneg %p153
      $region18: #{hab_forward.7} parent=11 // pred_check_branch
        %285 = sbr.rel (%p283) target = $region20
      $region19: #{hab_forward.7} parent=11 // pred_region
        _
      $region20: #{hab_forward.7} parent=11 // pred_fallthru
        _
      // Predicated region
      $region21: #{hab_forward.7} parent=11 // pred_check
        %p286 = pneg %p174
      $region22: #{hab_forward.7} parent=11 // pred_check_branch
        %288 = sbr.rel (%p286) target = $region24
      $region23: #{hab_forward.7} parent=11 // pred_region
        _
      $region24: #{hab_forward.7} parent=11 // pred_fallthru
        _
      // Predicated region
      $region25: #{hab_forward.7} parent=11 // pred_check
        %p289 = pneg %p195
      $region26: #{hab_forward.7} parent=11 // pred_check_branch
        %291 = sbr.rel (%p289) target = $region28
      $region27: #{hab_forward.7} parent=11 // pred_region
        _
      $region28: #{hab_forward.7} parent=11 // pred_fallthru
        _
      // Predicated region
      $region29: #{hab_forward.7} parent=11 // pred_check
        %p292 = pneg %p216
      $region30: #{hab_forward.7} parent=11 // pred_check_branch
        %294 = sbr.rel (%p292) target = $region32
      $region31: #{hab_forward.7} parent=11 // pred_region
        _
      $region32: #{hab_forward.7} parent=11 // pred_fallthru
        _
      // Predicated region
      $region33: #{hab_forward.7} parent=11 // pred_check
        %p295 = pneg %p237
      $region34: #{hab_forward.7} parent=11 // pred_check_branch
        %297 = sbr.rel (%p295) target = $region36
      $region35: #{hab_forward.7} parent=11 // pred_region
        _
      $region36: #{hab_forward.7} parent=11 // pred_fallthru
        _
    $region12: #{hab_forward.7} parent=5 // pred_fallthru
      _
    %p298 = scmp.lt.s32.totalorder %s15, 2
    // Predicated region
    $region37: #{hab_forward.7} parent=5 // pred_check
      %p299 = pneg %p298
    $region38: #{hab_forward.7} parent=5 // pred_check_branch
      %301 = sbr.rel (%p299) target = $region40
    $region39: #{hab_forward.7} parent=5 // pred_region
      // Predicated region
      $region41: #{hab_forward.7} parent=39 // pred_check
        %p302 = pneg %p49
      $region42: #{hab_forward.7} parent=39 // pred_check_branch
        %304 = sbr.rel (%p302) target = $region44
      $region43: #{hab_forward.7} parent=39 // pred_region
        %s305 = smul.u32 32, %s23
        %p306 = scmp.lt.s32.totalorder %s22, 1
        %s307 = scalar_select %p306, %s22, 1
        %p308 = scmp.lt.s32.totalorder %s305, 31
        %s309 = scalar_select %p308, %s305, 31
        %s310 = smul.addr %s307, 32
        %s311 = sadd.s32 %s309, %s310
        %s312 = smul.addr %s311, 8
        %s313 = scalar_lea.vmem %s0, %s312
        %s314 = smul.u32 32, %s23
      $region44: #{hab_forward.7} parent=39 // pred_fallthru
        _
      // Predicated region
      $region45: #{hab_forward.7} parent=39 // pred_check
        %p315 = pneg %p77
      $region46: #{hab_forward.7} parent=39 // pred_check_branch
        %317 = sbr.rel (%p315) target = $region48
      $region47: #{hab_forward.7} parent=39 // pred_region
        %s318 = smul.u32 32, %s23
        %p319 = scmp.lt.s32.totalorder %s22, 1
        %s320 = scalar_select %p319, %s22, 1
        %p321 = scmp.lt.s32.totalorder %s318, 31
        %s322 = scalar_select %p321, %s318, 31
        %s323 = smul.addr %s320, 32
        %s324 = sadd.s32 %s322, %s323
        %s325 = smul.addr %s324, 4
        %s326 = scalar_lea.vmem %s1, %s325
        %s327 = smul.u32 32, %s23
      $region48: #{hab_forward.7} parent=39 // pred_fallthru
        _
      // Predicated region
      $region49: #{hab_forward.7} parent=39 // pred_check
        %p328 = pneg %p105
      $region50: #{hab_forward.7} parent=39 // pred_check_branch
        %330 = sbr.rel (%p328) target = $region52
      $region51: #{hab_forward.7} parent=39 // pred_region
        %s331 = smul.u32 32, %s23
        %p332 = scmp.lt.s32.totalorder %s22, 1
        %s333 = scalar_select %p332, %s22, 1
        %p334 = scmp.lt.s32.totalorder %s331, 31
        %s335 = scalar_select %p334, %s331, 31
        %s336 = smul.addr %s333, 32
        %s337 = sadd.s32 %s335, %s336
        %s338 = smul.addr %s337, 4
        %s339 = scalar_lea.vmem %s2, %s338
        %s340 = smul.u32 32, %s23
      $region52: #{hab_forward.7} parent=39 // pred_fallthru
        _
    $region40: #{hab_forward.7} parent=5 // pred_fallthru
      _
    %p341 = scmp.le.s32.totalorder 1, %s15
    %p342 = scmp.lt.s32.totalorder %s15, 3
    %p343 = pnand %p341, %p342
    %p344 = pneg %p343
    // Predicated region
    $region53: #{hab_forward.7} parent=5 // pred_check
      _
    $region54: #{hab_forward.7} parent=5 // pred_check_branch
      %346 = sbr.rel (%p343) target = $region56
    $region55: #{hab_forward.7} parent=5 // pred_region
      %s347 = ssub.s32 %s15, 1
      %s348 = smul.u32 32, %s25
      %p349 = scmp.lt.s32.totalorder %s24, 1
      %s350 = scalar_select %p349, %s24, 1
      %p351 = scmp.lt.s32.totalorder %s348, 31
      %s352 = scalar_select %p351, %s348, 31
      %s353 = smul.addr %s350, 32
      %s354 = sadd.s32 %s352, %s353
      %s355 = smul.addr %s354, 8
      %s356 = scalar_lea.vmem %s0, %s355
      %p357 = pneg %p55
      %p358 = pneg %p52
      %s359 = smul.u32 32, %s25
      %p360 = scmp.lt.s32.totalorder %s24, 1
      %s361 = scalar_select %p360, %s24, 1
      %p362 = scmp.lt.s32.totalorder %s359, 31
      %s363 = scalar_select %p362, %s359, 31
      %s364 = smul.addr %s361, 32
      %s365 = sadd.s32 %s363, %s364
      %s366 = smul.addr %s365, 4
      %s367 = scalar_lea.vmem %s1, %s366
      %p368 = pneg %p83
      %p369 = pneg %p80
      %s370 = smul.u32 32, %s25
      %p371 = scmp.lt.s32.totalorder %s24, 1
      %s372 = scalar_select %p371, %s24, 1
      %p373 = scmp.lt.s32.totalorder %s370, 31
      %s374 = scalar_select %p373, %s370, 31
      %s375 = smul.addr %s372, 32
      %s376 = sadd.s32 %s374, %s375
      %s377 = smul.addr %s376, 4
      %s378 = scalar_lea.vmem %s2, %s377
      %p379 = pneg %p111
      %p380 = pneg %p108
      %p381 = pneg %p132
      %p382 = pneg %p129
      %p383 = pneg %p153
      %p384 = pneg %p150
      %p385 = pneg %p174
      %p386 = pneg %p171
      %p387 = pneg %p195
      %p388 = pneg %p192
      %p389 = pneg %p216
      %p390 = pneg %p213
      %p391 = pneg %p237
      %p392 = pneg %p234
      %p393 = pneg %p265
      %p394 = pneg %p262
      %s395 = smul.u32 32, %s25
      %p396 = scmp.lt.s32.totalorder %s24, 1
      %s397 = scalar_select %p396, %s24, 1
      %p398 = scmp.lt.s32.totalorder %s395, 31
      %s399 = scalar_select %p398, %s395, 31
      %s400 = smul.addr %s397, 32
      %s401 = sadd.s32 %s399, %s400
      %s402 = smul.addr %s401, 8
      %s403 = scalar_lea.vmem %s9, %s402
      %s404 = smul.u32 32, %s25
      %p405 = scmp.lt.s32.totalorder %s24, 1
      %s406 = scalar_select %p405, %s24, 1
      %p407 = scmp.lt.s32.totalorder %s404, 31
      %s408 = scalar_select %p407, %s404, 31
      %s409 = smul.addr %s406, 32
      %s410 = sadd.s32 %s408, %s409
      %s411 = smul.addr %s410, 8
      %s412 = scalar_lea.vmem %s0, %s411
      %s413 = smul.u32 32, %s25
      %s414 = smul.u32 32, %s25
      %p415 = scmp.lt.s32.totalorder %s24, 1
      %s416 = scalar_select %p415, %s24, 1
      %p417 = scmp.lt.s32.totalorder %s414, 31
      %s418 = scalar_select %p417, %s414, 31
      %s419 = smul.addr %s416, 32
      %s420 = sadd.s32 %s418, %s419
      %s421 = smul.addr %s420, 4
      %s422 = scalar_lea.vmem %s1, %s421
      %s423 = smul.u32 32, %s25
      %s424 = smul.u32 32, %s25
      %p425 = scmp.lt.s32.totalorder %s24, 1
      %s426 = scalar_select %p425, %s24, 1
      %p427 = scmp.lt.s32.totalorder %s424, 31
      %s428 = scalar_select %p427, %s424, 31
      %s429 = smul.addr %s426, 32
      %s430 = sadd.s32 %s428, %s429
      %s431 = smul.addr %s430, 4
      %s432 = scalar_lea.vmem %s2, %s431
      %s433 = smul.u32 32, %s25
      %s434 = smul.u32 32, %s25
      %p435 = scmp.lt.s32.totalorder %s24, 1
      %s436 = scalar_select %p435, %s24, 1
      %p437 = scmp.lt.s32.totalorder %s434, 31
      %s438 = scalar_select %p437, %s434, 31
      %s439 = smul.addr %s436, 32
      %s440 = sadd.s32 %s438, %s439
      %s441 = smul.addr %s440, 8
      %s442 = scalar_lea.vmem %s9, %s441
      %s443 = smul.u32 32, %s25
      %v445 = vld [vmem:[%s412] sm:$0xff]
      %v446 = vld [vmem:[%s412 + $0x8] sm:$0xff]
      %v447 = vld [vmem:[%s412 + $0x10] sm:$0xff]
      %v448 = vld [vmem:[%s412 + $0x18] sm:$0xff]
      %v449 = vld [vmem:[%s412 + $0x20] sm:$0xff]
      %v450 = vld [vmem:[%s412 + $0x28] sm:$0xff]
      %v451 = vld [vmem:[%s412 + $0x30] sm:$0xff]
      %v452 = vld [vmem:[%s412 + $0x38] sm:$0xff]
      %v453 = vld [vmem:[%s412 + $0x40] sm:$0xff]
      %v454 = vld [vmem:[%s412 + $0x48] sm:$0xff]
      %v455 = vld [vmem:[%s412 + $0x50] sm:$0xff]
      %v456 = vld [vmem:[%s412 + $0x58] sm:$0xff]
      %v457 = vld [vmem:[%s412 + $0x60] sm:$0xff]
      %v458 = vld [vmem:[%s412 + $0x68] sm:$0xff]
      %v459 = vld [vmem:[%s412 + $0x70] sm:$0xff]
      %v460 = vld [vmem:[%s412 + $0x78] sm:$0xff]
      %v461 = vld [vmem:[%s412 + $0x80] sm:$0xff]
      %v462 = vld [vmem:[%s412 + $0x88] sm:$0xff]
      %v463 = vld [vmem:[%s412 + $0x90] sm:$0xff]
      %v464 = vld [vmem:[%s412 + $0x98] sm:$0xff]
      %v465 = vld [vmem:[%s412 + $0xa0] sm:$0xff]
      %v466 = vld [vmem:[%s412 + $0xa8] sm:$0xff]
      %v467 = vld [vmem:[%s412 + $0xb0] sm:$0xff]
      %v468 = vld [vmem:[%s412 + $0xb8] sm:$0xff]
      %v469 = vld [vmem:[%s412 + $0xc0] sm:$0xff]
      %v470 = vld [vmem:[%s412 + $0xc8] sm:$0xff]
      %v471 = vld [vmem:[%s412 + $0xd0] sm:$0xff]
      %v472 = vld [vmem:[%s412 + $0xd8] sm:$0xff]
      %v473 = vld [vmem:[%s412 + $0xe0] sm:$0xff]
      %v474 = vld [vmem:[%s412 + $0xe8] sm:$0xff]
      %v475 = vld [vmem:[%s412 + $0xf0] sm:$0xff]
      %v476 = vld [vmem:[%s412 + $0xf8] sm:$0xff]
      %v477 = vld [vmem:[%s422] sm:$0xf]
      %v478 = vld [vmem:[%s422 + $0x4] sm:$0xf]
      %v479 = vld [vmem:[%s422 + $0x8] sm:$0xf]
      %v480 = vld [vmem:[%s422 + $0xc] sm:$0xf]
      %v481 = vld [vmem:[%s422 + $0x10] sm:$0xf]
      %v482 = vld [vmem:[%s422 + $0x14] sm:$0xf]
      %v483 = vld [vmem:[%s422 + $0x18] sm:$0xf]
      %v484 = vld [vmem:[%s422 + $0x1c] sm:$0xf]
      %v485 = vld [vmem:[%s422 + $0x20] sm:$0xf]
      %v486 = vld [vmem:[%s422 + $0x24] sm:$0xf]
      %v487 = vld [vmem:[%s422 + $0x28] sm:$0xf]
      %v488 = vld [vmem:[%s422 + $0x2c] sm:$0xf]
      %v489 = vld [vmem:[%s422 + $0x30] sm:$0xf]
      %v490 = vld [vmem:[%s422 + $0x34] sm:$0xf]
      %v491 = vld [vmem:[%s422 + $0x38] sm:$0xf]
      %v492 = vld [vmem:[%s422 + $0x3c] sm:$0xf]
      %v493 = vld [vmem:[%s422 + $0x40] sm:$0xf]
      %v494 = vld [vmem:[%s422 + $0x44] sm:$0xf]
      %v495 = vld [vmem:[%s422 + $0x48] sm:$0xf]
      %v496 = vld [vmem:[%s422 + $0x4c] sm:$0xf]
      %v497 = vld [vmem:[%s422 + $0x50] sm:$0xf]
      %v498 = vld [vmem:[%s422 + $0x54] sm:$0xf]
      %v499 = vld [vmem:[%s422 + $0x58] sm:$0xf]
      %v500 = vld [vmem:[%s422 + $0x5c] sm:$0xf]
      %v501 = vld [vmem:[%s422 + $0x60] sm:$0xf]
      %v502 = vld [vmem:[%s422 + $0x64] sm:$0xf]
      %v503 = vld [vmem:[%s422 + $0x68] sm:$0xf]
      %v504 = vld [vmem:[%s422 + $0x6c] sm:$0xf]
      %v505 = vld [vmem:[%s422 + $0x70] sm:$0xf]
      %v506 = vld [vmem:[%s422 + $0x74] sm:$0xf]
      %v507 = vld [vmem:[%s422 + $0x78] sm:$0xf]
      %v508 = vld [vmem:[%s422 + $0x7c] sm:$0xf]
      %v509 = vunpack.c.l.bf16 %v477
      %v510 = vunpack.c.l.bf16 %v478
      %v511 = vunpack.c.l.bf16 %v479
      %v512 = vunpack.c.l.bf16 %v480
      %v513 = vunpack.c.l.bf16 %v481
      %v514 = vunpack.c.l.bf16 %v482
      %v515 = vunpack.c.l.bf16 %v483
      %v516 = vunpack.c.l.bf16 %v484
      %v517 = vunpack.c.l.bf16 %v485
      %v518 = vunpack.c.l.bf16 %v486
      %v519 = vunpack.c.l.bf16 %v487
      %v520 = vunpack.c.l.bf16 %v488
      %v521 = vunpack.c.l.bf16 %v489
      %v522 = vunpack.c.l.bf16 %v490
      %v523 = vunpack.c.l.bf16 %v491
      %v524 = vunpack.c.l.bf16 %v492
      %v525 = vunpack.c.l.bf16 %v493
      %v526 = vunpack.c.l.bf16 %v494
      %v527 = vunpack.c.l.bf16 %v495
      %v528 = vunpack.c.l.bf16 %v496
      %v529 = vunpack.c.l.bf16 %v497
      %v530 = vunpack.c.l.bf16 %v498
      %v531 = vunpack.c.l.bf16 %v499
      %v532 = vunpack.c.l.bf16 %v500
      %v533 = vunpack.c.l.bf16 %v501
      %v534 = vunpack.c.l.bf16 %v502
      %v535 = vunpack.c.l.bf16 %v503
      %v536 = vunpack.c.l.bf16 %v504
      %v537 = vunpack.c.l.bf16 %v505
      %v538 = vunpack.c.l.bf16 %v506
      %v539 = vunpack.c.l.bf16 %v507
      %v540 = vunpack.c.l.bf16 %v508
      %v541 = vadd.f32 %v445, %v509
      %v542 = vadd.f32 %v446, %v510
      %v543 = vadd.f32 %v447, %v511
      %v544 = vadd.f32 %v448, %v512
      %v545 = vadd.f32 %v449, %v513
      %v546 = vadd.f32 %v450, %v514
      %v547 = vadd.f32 %v451, %v515
      %v548 = vadd.f32 %v452, %v516
      %v549 = vadd.f32 %v453, %v517
      %v550 = vadd.f32 %v454, %v518
      %v551 = vadd.f32 %v455, %v519
      %v552 = vadd.f32 %v456, %v520
      %v553 = vadd.f32 %v457, %v521
      %v554 = vadd.f32 %v458, %v522
      %v555 = vadd.f32 %v459, %v523
      %v556 = vadd.f32 %v460, %v524
      %v557 = vadd.f32 %v461, %v525
      %v558 = vadd.f32 %v462, %v526
      %v559 = vadd.f32 %v463, %v527
      %v560 = vadd.f32 %v464, %v528
      %v561 = vadd.f32 %v465, %v529
      %v562 = vadd.f32 %v466, %v530
      %v563 = vadd.f32 %v467, %v531
      %v564 = vadd.f32 %v468, %v532
      %v565 = vadd.f32 %v469, %v533
      %v566 = vadd.f32 %v470, %v534
      %v567 = vadd.f32 %v471, %v535
      %v568 = vadd.f32 %v472, %v536
      %v569 = vadd.f32 %v473, %v537
      %v570 = vadd.f32 %v474, %v538
      %v571 = vadd.f32 %v475, %v539
      %v572 = vadd.f32 %v476, %v540
      %v573 = vld [vmem:[%s432] sm:$0xf]
      %v574 = vld [vmem:[%s432 + $0x4] sm:$0xf]
      %v575 = vld [vmem:[%s432 + $0x8] sm:$0xf]
      %v576 = vld [vmem:[%s432 + $0xc] sm:$0xf]
      %v577 = vld [vmem:[%s432 + $0x10] sm:$0xf]
      %v578 = vld [vmem:[%s432 + $0x14] sm:$0xf]
      %v579 = vld [vmem:[%s432 + $0x18] sm:$0xf]
      %v580 = vld [vmem:[%s432 + $0x1c] sm:$0xf]
      %v581 = vld [vmem:[%s432 + $0x20] sm:$0xf]
      %v582 = vld [vmem:[%s432 + $0x24] sm:$0xf]
      %v583 = vld [vmem:[%s432 + $0x28] sm:$0xf]
      %v584 = vld [vmem:[%s432 + $0x2c] sm:$0xf]
      %v585 = vld [vmem:[%s432 + $0x30] sm:$0xf]
      %v586 = vld [vmem:[%s432 + $0x34] sm:$0xf]
      %v587 = vld [vmem:[%s432 + $0x38] sm:$0xf]
      %v588 = vld [vmem:[%s432 + $0x3c] sm:$0xf]
      %v589 = vld [vmem:[%s432 + $0x40] sm:$0xf]
      %v590 = vld [vmem:[%s432 + $0x44] sm:$0xf]
      %v591 = vld [vmem:[%s432 + $0x48] sm:$0xf]
      %v592 = vld [vmem:[%s432 + $0x4c] sm:$0xf]
      %v593 = vld [vmem:[%s432 + $0x50] sm:$0xf]
      %v594 = vld [vmem:[%s432 + $0x54] sm:$0xf]
      %v595 = vld [vmem:[%s432 + $0x58] sm:$0xf]
      %v596 = vld [vmem:[%s432 + $0x5c] sm:$0xf]
      %v597 = vld [vmem:[%s432 + $0x60] sm:$0xf]
      %v598 = vld [vmem:[%s432 + $0x64] sm:$0xf]
      %v599 = vld [vmem:[%s432 + $0x68] sm:$0xf]
      %v600 = vld [vmem:[%s432 + $0x6c] sm:$0xf]
      %v601 = vld [vmem:[%s432 + $0x70] sm:$0xf]
      %v602 = vld [vmem:[%s432 + $0x74] sm:$0xf]
      %v603 = vld [vmem:[%s432 + $0x78] sm:$0xf]
      %v604 = vld [vmem:[%s432 + $0x7c] sm:$0xf]
      %v605 = vunpack.c.l.bf16 %v573
      %v606 = vunpack.c.l.bf16 %v574
      %v607 = vunpack.c.l.bf16 %v575
      %v608 = vunpack.c.l.bf16 %v576
      %v609 = vunpack.c.l.bf16 %v577
      %v610 = vunpack.c.l.bf16 %v578
      %v611 = vunpack.c.l.bf16 %v579
      %v612 = vunpack.c.l.bf16 %v580
      %v613 = vunpack.c.l.bf16 %v581
      %v614 = vunpack.c.l.bf16 %v582
      %v615 = vunpack.c.l.bf16 %v583
      %v616 = vunpack.c.l.bf16 %v584
      %v617 = vunpack.c.l.bf16 %v585
      %v618 = vunpack.c.l.bf16 %v586
      %v619 = vunpack.c.l.bf16 %v587
      %v620 = vunpack.c.l.bf16 %v588
      %v621 = vunpack.c.l.bf16 %v589
      %v622 = vunpack.c.l.bf16 %v590
      %v623 = vunpack.c.l.bf16 %v591
      %v624 = vunpack.c.l.bf16 %v592
      %v625 = vunpack.c.l.bf16 %v593
      %v626 = vunpack.c.l.bf16 %v594
      %v627 = vunpack.c.l.bf16 %v595
      %v628 = vunpack.c.l.bf16 %v596
      %v629 = vunpack.c.l.bf16 %v597
      %v630 = vunpack.c.l.bf16 %v598
      %v631 = vunpack.c.l.bf16 %v599
      %v632 = vunpack.c.l.bf16 %v600
      %v633 = vunpack.c.l.bf16 %v601
      %v634 = vunpack.c.l.bf16 %v602
      %v635 = vunpack.c.l.bf16 %v603
      %v636 = vunpack.c.l.bf16 %v604
      %v637 = vmul.f32 %v605, 0.01
      %v638 = vmul.f32 %v606, 0.01
      %v639 = vmul.f32 %v607, 0.01
      %v640 = vmul.f32 %v608, 0.01
      %v641 = vmul.f32 %v609, 0.01
      %v642 = vmul.f32 %v610, 0.01
      %v643 = vmul.f32 %v611, 0.01
      %v644 = vmul.f32 %v612, 0.01
      %v645 = vmul.f32 %v613, 0.01
      %v646 = vmul.f32 %v614, 0.01
      %v647 = vmul.f32 %v615, 0.01
      %v648 = vmul.f32 %v616, 0.01
      %v649 = vmul.f32 %v617, 0.01
      %v650 = vmul.f32 %v618, 0.01
      %v651 = vmul.f32 %v619, 0.01
      %v652 = vmul.f32 %v620, 0.01
      %v653 = vmul.f32 %v621, 0.01
      %v654 = vmul.f32 %v622, 0.01
      %v655 = vmul.f32 %v623, 0.01
      %v656 = vmul.f32 %v624, 0.01
      %v657 = vmul.f32 %v625, 0.01
      %v658 = vmul.f32 %v626, 0.01
      %v659 = vmul.f32 %v627, 0.01
      %v660 = vmul.f32 %v628, 0.01
      %v661 = vmul.f32 %v629, 0.01
      %v662 = vmul.f32 %v630, 0.01
      %v663 = vmul.f32 %v631, 0.01
      %v664 = vmul.f32 %v632, 0.01
      %v665 = vmul.f32 %v633, 0.01
      %v666 = vmul.f32 %v634, 0.01
      %v667 = vmul.f32 %v635, 0.01
      %v668 = vmul.f32 %v636, 0.01
      %v669 = vadd.f32 %v541, %v637
      %v670 = vadd.f32 %v542, %v638
      %v671 = vadd.f32 %v543, %v639
      %v672 = vadd.f32 %v544, %v640
      %v673 = vadd.f32 %v545, %v641
      %v674 = vadd.f32 %v546, %v642
      %v675 = vadd.f32 %v547, %v643
      %v676 = vadd.f32 %v548, %v644
      %v677 = vadd.f32 %v549, %v645
      %v678 = vadd.f32 %v550, %v646
      %v679 = vadd.f32 %v551, %v647
      %v680 = vadd.f32 %v552, %v648
      %v681 = vadd.f32 %v553, %v649
      %v682 = vadd.f32 %v554, %v650
      %v683 = vadd.f32 %v555, %v651
      %v684 = vadd.f32 %v556, %v652
      %v685 = vadd.f32 %v557, %v653
      %v686 = vadd.f32 %v558, %v654
      %v687 = vadd.f32 %v559, %v655
      %v688 = vadd.f32 %v560, %v656
      %v689 = vadd.f32 %v561, %v657
      %v690 = vadd.f32 %v562, %v658
      %v691 = vadd.f32 %v563, %v659
      %v692 = vadd.f32 %v564, %v660
      %v693 = vadd.f32 %v565, %v661
      %v694 = vadd.f32 %v566, %v662
      %v695 = vadd.f32 %v567, %v663
      %v696 = vadd.f32 %v568, %v664
      %v697 = vadd.f32 %v569, %v665
      %v698 = vadd.f32 %v570, %v666
      %v699 = vadd.f32 %v571, %v667
      %v700 = vadd.f32 %v572, %v668
      %v701 = vld [vmem:[%s3] sm:$0x1]
      %v702 = vld [vmem:[%s4] sm:$0x1]
      %vm703 = vcmask 261120
      %v704 = vsel %vm703, %v669, 0.0
      %705 = vadd.xlane.f32.xlu0 %v704
      %v706 = vpop.xlane.xlu0 %705
      %v707 = vsel %vm703, %v670, 0.0
      %708 = vadd.xlane.f32.xlu0 %v707
      %v709 = vpop.xlane.xlu0 %708
      %v710 = vsel %vm703, %v671, 0.0
      %711 = vadd.xlane.f32.xlu0 %v710
      %v712 = vpop.xlane.xlu0 %711
      %v713 = vsel %vm703, %v672, 0.0
      %714 = vadd.xlane.f32.xlu0 %v713
      %v715 = vpop.xlane.xlu0 %714
      %v716 = vsel %vm703, %v673, 0.0
      %717 = vadd.xlane.f32.xlu0 %v716
      %v718 = vpop.xlane.xlu0 %717
      %v719 = vsel %vm703, %v674, 0.0
      %720 = vadd.xlane.f32.xlu0 %v719
      %v721 = vpop.xlane.xlu0 %720
      %v722 = vsel %vm703, %v675, 0.0
      %723 = vadd.xlane.f32.xlu0 %v722
      %v724 = vpop.xlane.xlu0 %723
      %v725 = vsel %vm703, %v676, 0.0
      %726 = vadd.xlane.f32.xlu0 %v725
      %v727 = vpop.xlane.xlu0 %726
      %v728 = vsel %vm703, %v677, 0.0
      %729 = vadd.xlane.f32.xlu0 %v728
      %v730 = vpop.xlane.xlu0 %729
      %v731 = vsel %vm703, %v678, 0.0
      %732 = vadd.xlane.f32.xlu0 %v731
      %v733 = vpop.xlane.xlu0 %732
      %v734 = vsel %vm703, %v679, 0.0
      %735 = vadd.xlane.f32.xlu0 %v734
      %v736 = vpop.xlane.xlu0 %735
      %v737 = vsel %vm703, %v680, 0.0
      %738 = vadd.xlane.f32.xlu0 %v737
      %v739 = vpop.xlane.xlu0 %738
      %v740 = vsel %vm703, %v681, 0.0
      %741 = vadd.xlane.f32.xlu0 %v740
      %v742 = vpop.xlane.xlu0 %741
      %v743 = vsel %vm703, %v682, 0.0
      %744 = vadd.xlane.f32.xlu0 %v743
      %v745 = vpop.xlane.xlu0 %744
      %v746 = vsel %vm703, %v683, 0.0
      %747 = vadd.xlane.f32.xlu0 %v746
      %v748 = vpop.xlane.xlu0 %747
      %v749 = vsel %vm703, %v684, 0.0
      %750 = vadd.xlane.f32.xlu0 %v749
      %v751 = vpop.xlane.xlu0 %750
      %v752 = vsel %vm703, %v685, 0.0
      %753 = vadd.xlane.f32.xlu0 %v752
      %v754 = vpop.xlane.xlu0 %753
      %v755 = vsel %vm703, %v686, 0.0
      %756 = vadd.xlane.f32.xlu0 %v755
      %v757 = vpop.xlane.xlu0 %756
      %v758 = vsel %vm703, %v687, 0.0
      %759 = vadd.xlane.f32.xlu0 %v758
      %v760 = vpop.xlane.xlu0 %759
      %v761 = vsel %vm703, %v688, 0.0
      %762 = vadd.xlane.f32.xlu0 %v761
      %v763 = vpop.xlane.xlu0 %762
      %v764 = vsel %vm703, %v689, 0.0
      %765 = vadd.xlane.f32.xlu0 %v764
      %v766 = vpop.xlane.xlu0 %765
      %v767 = vsel %vm703, %v690, 0.0
      %768 = vadd.xlane.f32.xlu0 %v767
      %v769 = vpop.xlane.xlu0 %768
      %v770 = vsel %vm703, %v691, 0.0
      %771 = vadd.xlane.f32.xlu0 %v770
      %v772 = vpop.xlane.xlu0 %771
      %v773 = vsel %vm703, %v692, 0.0
      %774 = vadd.xlane.f32.xlu0 %v773
      %v775 = vpop.xlane.xlu0 %774
      %v776 = vsel %vm703, %v693, 0.0
      %777 = vadd.xlane.f32.xlu0 %v776
      %v778 = vpop.xlane.xlu0 %777
      %v779 = vsel %vm703, %v694, 0.0
      %780 = vadd.xlane.f32.xlu0 %v779
      %v781 = vpop.xlane.xlu0 %780
      %v782 = vsel %vm703, %v695, 0.0
      %783 = vadd.xlane.f32.xlu0 %v782
      %v784 = vpop.xlane.xlu0 %783
      %v785 = vsel %vm703, %v696, 0.0
      %786 = vadd.xlane.f32.xlu0 %v785
      %v787 = vpop.xlane.xlu0 %786
      %v788 = vsel %vm703, %v697, 0.0
      %789 = vadd.xlane.f32.xlu0 %v788
      %v790 = vpop.xlane.xlu0 %789
      %v791 = vsel %vm703, %v698, 0.0
      %792 = vadd.xlane.f32.xlu0 %v791
      %v793 = vpop.xlane.xlu0 %792
      %v794 = vsel %vm703, %v699, 0.0
      %795 = vadd.xlane.f32.xlu0 %v794
      %v796 = vpop.xlane.xlu0 %795
      %v797 = vsel %vm703, %v700, 0.0
      %798 = vadd.xlane.f32.xlu0 %v797
      %v799 = vpop.xlane.xlu0 %798
      %v800 = vrcp.pop 32.0
      %v801 = vmul.f32 32.0, %v800
      %v802 = vsub.f32 1.0, %v801
      %v803 = vmul.f32 %v800, %v802
      %v804 = vadd.f32 %v800, %v803
      %vm805 = vweird.f32 %v800
      %v806 = vsel %vm805, %v800, %v804
      %v807 = vmul.f32 %v706, %v806
      %v808 = vmul.f32 %v709, %v806
      %v809 = vmul.f32 %v712, %v806
      %v810 = vmul.f32 %v715, %v806
      %v811 = vmul.f32 %v718, %v806
      %v812 = vmul.f32 %v721, %v806
      %v813 = vmul.f32 %v724, %v806
      %v814 = vmul.f32 %v727, %v806
      %v815 = vmul.f32 %v730, %v806
      %v816 = vmul.f32 %v733, %v806
      %v817 = vmul.f32 %v736, %v806
      %v818 = vmul.f32 %v739, %v806
      %v819 = vmul.f32 %v742, %v806
      %v820 = vmul.f32 %v745, %v806
      %v821 = vmul.f32 %v748, %v806
      %v822 = vmul.f32 %v751, %v806
      %v823 = vmul.f32 %v754, %v806
      %v824 = vmul.f32 %v757, %v806
      %v825 = vmul.f32 %v760, %v806
      %v826 = vmul.f32 %v763, %v806
      %v827 = vmul.f32 %v766, %v806
      %v828 = vmul.f32 %v769, %v806
      %v829 = vmul.f32 %v772, %v806
      %v830 = vmul.f32 %v775, %v806
      %v831 = vmul.f32 %v778, %v806
      %v832 = vmul.f32 %v781, %v806
      %v833 = vmul.f32 %v784, %v806
      %v834 = vmul.f32 %v787, %v806
      %v835 = vmul.f32 %v790, %v806
      %v836 = vmul.f32 %v793, %v806
      %v837 = vmul.f32 %v796, %v806
      %v838 = vmul.f32 %v799, %v806
      %v839 = vsub.f32 %v669, %v807
      %v840 = vsub.f32 %v670, %v808
      %v841 = vsub.f32 %v671, %v809
      %v842 = vsub.f32 %v672, %v810
      %v843 = vsub.f32 %v673, %v811
      %v844 = vsub.f32 %v674, %v812
      %v845 = vsub.f32 %v675, %v813
      %v846 = vsub.f32 %v676, %v814
      %v847 = vsub.f32 %v677, %v815
      %v848 = vsub.f32 %v678, %v816
      %v849 = vsub.f32 %v679, %v817
      %v850 = vsub.f32 %v680, %v818
      %v851 = vsub.f32 %v681, %v819
      %v852 = vsub.f32 %v682, %v820
      %v853 = vsub.f32 %v683, %v821
      %v854 = vsub.f32 %v684, %v822
      %v855 = vsub.f32 %v685, %v823
      %v856 = vsub.f32 %v686, %v824
      %v857 = vsub.f32 %v687, %v825
      %v858 = vsub.f32 %v688, %v826
      %v859 = vsub.f32 %v689, %v827
      %v860 = vsub.f32 %v690, %v828
      %v861 = vsub.f32 %v691, %v829
      %v862 = vsub.f32 %v692, %v830
      %v863 = vsub.f32 %v693, %v831
      %v864 = vsub.f32 %v694, %v832
      %v865 = vsub.f32 %v695, %v833
      %v866 = vsub.f32 %v696, %v834
      %v867 = vsub.f32 %v697, %v835
      %v868 = vsub.f32 %v698, %v836
      %v869 = vsub.f32 %v699, %v837
      %v870 = vsub.f32 %v700, %v838
      %v871 = vmul.f32 %v839, %v839
      %v872 = vmul.f32 %v840, %v840
      %v873 = vmul.f32 %v841, %v841
      %v874 = vmul.f32 %v842, %v842
      %v875 = vmul.f32 %v843, %v843
      %v876 = vmul.f32 %v844, %v844
      %v877 = vmul.f32 %v845, %v845
      %v878 = vmul.f32 %v846, %v846
      %v879 = vmul.f32 %v847, %v847
      %v880 = vmul.f32 %v848, %v848
      %v881 = vmul.f32 %v849, %v849
      %v882 = vmul.f32 %v850, %v850
      %v883 = vmul.f32 %v851, %v851
      %v884 = vmul.f32 %v852, %v852
      %v885 = vmul.f32 %v853, %v853
      %v886 = vmul.f32 %v854, %v854
      %v887 = vmul.f32 %v855, %v855
      %v888 = vmul.f32 %v856, %v856
      %v889 = vmul.f32 %v857, %v857
      %v890 = vmul.f32 %v858, %v858
      %v891 = vmul.f32 %v859, %v859
      %v892 = vmul.f32 %v860, %v860
      %v893 = vmul.f32 %v861, %v861
      %v894 = vmul.f32 %v862, %v862
      %v895 = vmul.f32 %v863, %v863
      %v896 = vmul.f32 %v864, %v864
      %v897 = vmul.f32 %v865, %v865
      %v898 = vmul.f32 %v866, %v866
      %v899 = vmul.f32 %v867, %v867
      %v900 = vmul.f32 %v868, %v868
      %v901 = vmul.f32 %v869, %v869
      %v902 = vmul.f32 %v870, %v870
      %v903 = vsel %vm703, %v871, 0.0
      %904 = vadd.xlane.f32.xlu0 %v903
      %v905 = vpop.xlane.xlu0 %904
      %v906 = vsel %vm703, %v872, 0.0
      %907 = vadd.xlane.f32.xlu0 %v906
      %v908 = vpop.xlane.xlu0 %907
      %v909 = vsel %vm703, %v873, 0.0
      %910 = vadd.xlane.f32.xlu0 %v909
      %v911 = vpop.xlane.xlu0 %910
      %v912 = vsel %vm703, %v874, 0.0
      %913 = vadd.xlane.f32.xlu0 %v912
      %v914 = vpop.xlane.xlu0 %913
      %v915 = vsel %vm703, %v875, 0.0
      %916 = vadd.xlane.f32.xlu0 %v915
      %v917 = vpop.xlane.xlu0 %916
      %v918 = vsel %vm703, %v876, 0.0
      %919 = vadd.xlane.f32.xlu0 %v918
      %v920 = vpop.xlane.xlu0 %919
      %v921 = vsel %vm703, %v877, 0.0
      %922 = vadd.xlane.f32.xlu0 %v921
      %v923 = vpop.xlane.xlu0 %922
      %v924 = vsel %vm703, %v878, 0.0
      %925 = vadd.xlane.f32.xlu0 %v924
      %v926 = vpop.xlane.xlu0 %925
      %v927 = vsel %vm703, %v879, 0.0
      %928 = vadd.xlane.f32.xlu0 %v927
      %v929 = vpop.xlane.xlu0 %928
      %v930 = vsel %vm703, %v880, 0.0
      %931 = vadd.xlane.f32.xlu0 %v930
      %v932 = vpop.xlane.xlu0 %931
      %v933 = vsel %vm703, %v881, 0.0
      %934 = vadd.xlane.f32.xlu0 %v933
      %v935 = vpop.xlane.xlu0 %934
      %v936 = vsel %vm703, %v882, 0.0
      %937 = vadd.xlane.f32.xlu0 %v936
      %v938 = vpop.xlane.xlu0 %937
      %v939 = vsel %vm703, %v883, 0.0
      %940 = vadd.xlane.f32.xlu0 %v939
      %v941 = vpop.xlane.xlu0 %940
      %v942 = vsel %vm703, %v884, 0.0
      %943 = vadd.xlane.f32.xlu0 %v942
      %v944 = vpop.xlane.xlu0 %943
      %v945 = vsel %vm703, %v885, 0.0
      %946 = vadd.xlane.f32.xlu0 %v945
      %v947 = vpop.xlane.xlu0 %946
      %v948 = vsel %vm703, %v886, 0.0
      %949 = vadd.xlane.f32.xlu0 %v948
      %v950 = vpop.xlane.xlu0 %949
      %v951 = vsel %vm703, %v887, 0.0
      %952 = vadd.xlane.f32.xlu0 %v951
      %v953 = vpop.xlane.xlu0 %952
      %v954 = vsel %vm703, %v888, 0.0
      %955 = vadd.xlane.f32.xlu0 %v954
      %v956 = vpop.xlane.xlu0 %955
      %v957 = vsel %vm703, %v889, 0.0
      %958 = vadd.xlane.f32.xlu0 %v957
      %v959 = vpop.xlane.xlu0 %958
      %v960 = vsel %vm703, %v890, 0.0
      %961 = vadd.xlane.f32.xlu0 %v960
      %v962 = vpop.xlane.xlu0 %961
      %v963 = vsel %vm703, %v891, 0.0
      %964 = vadd.xlane.f32.xlu0 %v963
      %v965 = vpop.xlane.xlu0 %964
      %v966 = vsel %vm703, %v892, 0.0
      %967 = vadd.xlane.f32.xlu0 %v966
      %v968 = vpop.xlane.xlu0 %967
      %v969 = vsel %vm703, %v893, 0.0
      %970 = vadd.xlane.f32.xlu0 %v969
      %v971 = vpop.xlane.xlu0 %970
      %v972 = vsel %vm703, %v894, 0.0
      %973 = vadd.xlane.f32.xlu0 %v972
      %v974 = vpop.xlane.xlu0 %973
      %v975 = vsel %vm703, %v895, 0.0
      %976 = vadd.xlane.f32.xlu0 %v975
      %v977 = vpop.xlane.xlu0 %976
      %v978 = vsel %vm703, %v896, 0.0
      %979 = vadd.xlane.f32.xlu0 %v978
      %v980 = vpop.xlane.xlu0 %979
      %v981 = vsel %vm703, %v897, 0.0
      %982 = vadd.xlane.f32.xlu0 %v981
      %v983 = vpop.xlane.xlu0 %982
      %v984 = vsel %vm703, %v898, 0.0
      %985 = vadd.xlane.f32.xlu0 %v984
      %v986 = vpop.xlane.xlu0 %985
      %v987 = vsel %vm703, %v899, 0.0
      %988 = vadd.xlane.f32.xlu0 %v987
      %v989 = vpop.xlane.xlu0 %988
      %v990 = vsel %vm703, %v900, 0.0
      %991 = vadd.xlane.f32.xlu0 %v990
      %v992 = vpop.xlane.xlu0 %991
      %v993 = vsel %vm703, %v901, 0.0
      %994 = vadd.xlane.f32.xlu0 %v993
      %v995 = vpop.xlane.xlu0 %994
      %v996 = vsel %vm703, %v902, 0.0
      %997 = vadd.xlane.f32.xlu0 %v996
      %v998 = vpop.xlane.xlu0 %997
      %v999 = vmul.f32 %v905, %v806
      %v1000 = vmul.f32 %v908, %v806
      %v1001 = vmul.f32 %v911, %v806
      %v1002 = vmul.f32 %v914, %v806
      %v1003 = vmul.f32 %v917, %v806
      %v1004 = vmul.f32 %v920, %v806
      %v1005 = vmul.f32 %v923, %v806
      %v1006 = vmul.f32 %v926, %v806
      %v1007 = vmul.f32 %v929, %v806
      %v1008 = vmul.f32 %v932, %v806
      %v1009 = vmul.f32 %v935, %v806
      %v1010 = vmul.f32 %v938, %v806
      %v1011 = vmul.f32 %v941, %v806
      %v1012 = vmul.f32 %v944, %v806
      %v1013 = vmul.f32 %v947, %v806
      %v1014 = vmul.f32 %v950, %v806
      %v1015 = vmul.f32 %v953, %v806
      %v1016 = vmul.f32 %v956, %v806
      %v1017 = vmul.f32 %v959, %v806
      %v1018 = vmul.f32 %v962, %v806
      %v1019 = vmul.f32 %v965, %v806
      %v1020 = vmul.f32 %v968, %v806
      %v1021 = vmul.f32 %v971, %v806
      %v1022 = vmul.f32 %v974, %v806
      %v1023 = vmul.f32 %v977, %v806
      %v1024 = vmul.f32 %v980, %v806
      %v1025 = vmul.f32 %v983, %v806
      %v1026 = vmul.f32 %v986, %v806
      %v1027 = vmul.f32 %v989, %v806
      %v1028 = vmul.f32 %v992, %v806
      %v1029 = vmul.f32 %v995, %v806
      %v1030 = vmul.f32 %v998, %v806
      %v1031 = vadd.f32 %v999, 1e-05
      %v1032 = vadd.f32 %v1000, 1e-05
      %v1033 = vadd.f32 %v1001, 1e-05
      %v1034 = vadd.f32 %v1002, 1e-05
      %v1035 = vadd.f32 %v1003, 1e-05
      %v1036 = vadd.f32 %v1004, 1e-05
      %v1037 = vadd.f32 %v1005, 1e-05
      %v1038 = vadd.f32 %v1006, 1e-05
      %v1039 = vadd.f32 %v1007, 1e-05
      %v1040 = vadd.f32 %v1008, 1e-05
      %v1041 = vadd.f32 %v1009, 1e-05
      %v1042 = vadd.f32 %v1010, 1e-05
      %v1043 = vadd.f32 %v1011, 1e-05
      %v1044 = vadd.f32 %v1012, 1e-05
      %v1045 = vadd.f32 %v1013, 1e-05
      %v1046 = vadd.f32 %v1014, 1e-05
      %v1047 = vadd.f32 %v1015, 1e-05
      %v1048 = vadd.f32 %v1016, 1e-05
      %v1049 = vadd.f32 %v1017, 1e-05
      %v1050 = vadd.f32 %v1018, 1e-05
      %v1051 = vadd.f32 %v1019, 1e-05
      %v1052 = vadd.f32 %v1020, 1e-05
      %v1053 = vadd.f32 %v1021, 1e-05
      %v1054 = vadd.f32 %v1022, 1e-05
      %v1055 = vadd.f32 %v1023, 1e-05
      %v1056 = vadd.f32 %v1024, 1e-05
      %v1057 = vadd.f32 %v1025, 1e-05
      %v1058 = vadd.f32 %v1026, 1e-05
      %v1059 = vadd.f32 %v1027, 1e-05
      %v1060 = vadd.f32 %v1028, 1e-05
      %v1061 = vadd.f32 %v1029, 1e-05
      %v1062 = vadd.f32 %v1030, 1e-05
      %v1063 = vrsqrt.pop %v1031
      %v1064 = vmul.f32 %v1063, %v1031
      %v1065 = vmul.f32 %v1064, %v1063
      %v1066 = vmul.f32 0.5, %v1065
      %v1067 = vsub.f32 1.5, %v1066
      %v1068 = vmul.f32 %v1063, %v1067
      %vm1069 = vweird.f32 %v1031
      %vm1070 = vweird.f32 %v1063
      %vm1071 = vmor %vm1069, %vm1070
      %v1072 = vsel %vm1071, %v1063, %v1068
      %v1073 = vrsqrt.pop %v1032
      %v1074 = vmul.f32 %v1073, %v1032
      %v1075 = vmul.f32 %v1074, %v1073
      %v1076 = vmul.f32 0.5, %v1075
      %v1077 = vsub.f32 1.5, %v1076
      %v1078 = vmul.f32 %v1073, %v1077
      %vm1079 = vweird.f32 %v1032
      %vm1080 = vweird.f32 %v1073
      %vm1081 = vmor %vm1079, %vm1080
      %v1082 = vsel %vm1081, %v1073, %v1078
      %v1083 = vrsqrt.pop %v1033
      %v1084 = vmul.f32 %v1083, %v1033
      %v1085 = vmul.f32 %v1084, %v1083
      %v1086 = vmul.f32 0.5, %v1085
      %v1087 = vsub.f32 1.5, %v1086
      %v1088 = vmul.f32 %v1083, %v1087
      %vm1089 = vweird.f32 %v1033
      %vm1090 = vweird.f32 %v1083
      %vm1091 = vmor %vm1089, %vm1090
      %v1092 = vsel %vm1091, %v1083, %v1088
      %v1093 = vrsqrt.pop %v1034
      %v1094 = vmul.f32 %v1093, %v1034
      %v1095 = vmul.f32 %v1094, %v1093
      %v1096 = vmul.f32 0.5, %v1095
      %v1097 = vsub.f32 1.5, %v1096
      %v1098 = vmul.f32 %v1093, %v1097
      %vm1099 = vweird.f32 %v1034
      %vm1100 = vweird.f32 %v1093
      %vm1101 = vmor %vm1099, %vm1100
      %v1102 = vsel %vm1101, %v1093, %v1098
      %v1103 = vrsqrt.pop %v1035
      %v1104 = vmul.f32 %v1103, %v1035
      %v1105 = vmul.f32 %v1104, %v1103
      %v1106 = vmul.f32 0.5, %v1105
      %v1107 = vsub.f32 1.5, %v1106
      %v1108 = vmul.f32 %v1103, %v1107
      %vm1109 = vweird.f32 %v1035
      %vm1110 = vweird.f32 %v1103
      %vm1111 = vmor %vm1109, %vm1110
      %v1112 = vsel %vm1111, %v1103, %v1108
      %v1113 = vrsqrt.pop %v1036
      %v1114 = vmul.f32 %v1113, %v1036
      %v1115 = vmul.f32 %v1114, %v1113
      %v1116 = vmul.f32 0.5, %v1115
      %v1117 = vsub.f32 1.5, %v1116
      %v1118 = vmul.f32 %v1113, %v1117
      %vm1119 = vweird.f32 %v1036
      %vm1120 = vweird.f32 %v1113
      %vm1121 = vmor %vm1119, %vm1120
      %v1122 = vsel %vm1121, %v1113, %v1118
      %v1123 = vrsqrt.pop %v1037
      %v1124 = vmul.f32 %v1123, %v1037
      %v1125 = vmul.f32 %v1124, %v1123
      %v1126 = vmul.f32 0.5, %v1125
      %v1127 = vsub.f32 1.5, %v1126
      %v1128 = vmul.f32 %v1123, %v1127
      %vm1129 = vweird.f32 %v1037
      %vm1130 = vweird.f32 %v1123
      %vm1131 = vmor %vm1129, %vm1130
      %v1132 = vsel %vm1131, %v1123, %v1128
      %v1133 = vrsqrt.pop %v1038
      %v1134 = vmul.f32 %v1133, %v1038
      %v1135 = vmul.f32 %v1134, %v1133
      %v1136 = vmul.f32 0.5, %v1135
      %v1137 = vsub.f32 1.5, %v1136
      %v1138 = vmul.f32 %v1133, %v1137
      %vm1139 = vweird.f32 %v1038
      %vm1140 = vweird.f32 %v1133
      %vm1141 = vmor %vm1139, %vm1140
      %v1142 = vsel %vm1141, %v1133, %v1138
      %v1143 = vrsqrt.pop %v1039
      %v1144 = vmul.f32 %v1143, %v1039
      %v1145 = vmul.f32 %v1144, %v1143
      %v1146 = vmul.f32 0.5, %v1145
      %v1147 = vsub.f32 1.5, %v1146
      %v1148 = vmul.f32 %v1143, %v1147
      %vm1149 = vweird.f32 %v1039
      %vm1150 = vweird.f32 %v1143
      %vm1151 = vmor %vm1149, %vm1150
      %v1152 = vsel %vm1151, %v1143, %v1148
      %v1153 = vrsqrt.pop %v1040
      %v1154 = vmul.f32 %v1153, %v1040
      %v1155 = vmul.f32 %v1154, %v1153
      %v1156 = vmul.f32 0.5, %v1155
      %v1157 = vsub.f32 1.5, %v1156
      %v1158 = vmul.f32 %v1153, %v1157
      %vm1159 = vweird.f32 %v1040
      %vm1160 = vweird.f32 %v1153
      %vm1161 = vmor %vm1159, %vm1160
      %v1162 = vsel %vm1161, %v1153, %v1158
      %v1163 = vrsqrt.pop %v1041
      %v1164 = vmul.f32 %v1163, %v1041
      %v1165 = vmul.f32 %v1164, %v1163
      %v1166 = vmul.f32 0.5, %v1165
      %v1167 = vsub.f32 1.5, %v1166
      %v1168 = vmul.f32 %v1163, %v1167
      %vm1169 = vweird.f32 %v1041
      %vm1170 = vweird.f32 %v1163
      %vm1171 = vmor %vm1169, %vm1170
      %v1172 = vsel %vm1171, %v1163, %v1168
      %v1173 = vrsqrt.pop %v1042
      %v1174 = vmul.f32 %v1173, %v1042
      %v1175 = vmul.f32 %v1174, %v1173
      %v1176 = vmul.f32 0.5, %v1175
      %v1177 = vsub.f32 1.5, %v1176
      %v1178 = vmul.f32 %v1173, %v1177
      %vm1179 = vweird.f32 %v1042
      %vm1180 = vweird.f32 %v1173
      %vm1181 = vmor %vm1179, %vm1180
      %v1182 = vsel %vm1181, %v1173, %v1178
      %v1183 = vrsqrt.pop %v1043
      %v1184 = vmul.f32 %v1183, %v1043
      %v1185 = vmul.f32 %v1184, %v1183
      %v1186 = vmul.f32 0.5, %v1185
      %v1187 = vsub.f32 1.5, %v1186
      %v1188 = vmul.f32 %v1183, %v1187
      %vm1189 = vweird.f32 %v1043
      %vm1190 = vweird.f32 %v1183
      %vm1191 = vmor %vm1189, %vm1190
      %v1192 = vsel %vm1191, %v1183, %v1188
      %v1193 = vrsqrt.pop %v1044
      %v1194 = vmul.f32 %v1193, %v1044
      %v1195 = vmul.f32 %v1194, %v1193
      %v1196 = vmul.f32 0.5, %v1195
      %v1197 = vsub.f32 1.5, %v1196
      %v1198 = vmul.f32 %v1193, %v1197
      %vm1199 = vweird.f32 %v1044
      %vm1200 = vweird.f32 %v1193
      %vm1201 = vmor %vm1199, %vm1200
      %v1202 = vsel %vm1201, %v1193, %v1198
      %v1203 = vrsqrt.pop %v1045
      %v1204 = vmul.f32 %v1203, %v1045
      %v1205 = vmul.f32 %v1204, %v1203
      %v1206 = vmul.f32 0.5, %v1205
      %v1207 = vsub.f32 1.5, %v1206
      %v1208 = vmul.f32 %v1203, %v1207
      %vm1209 = vweird.f32 %v1045
      %vm1210 = vweird.f32 %v1203
      %vm1211 = vmor %vm1209, %vm1210
      %v1212 = vsel %vm1211, %v1203, %v1208
      %v1213 = vrsqrt.pop %v1046
      %v1214 = vmul.f32 %v1213, %v1046
      %v1215 = vmul.f32 %v1214, %v1213
      %v1216 = vmul.f32 0.5, %v1215
      %v1217 = vsub.f32 1.5, %v1216
      %v1218 = vmul.f32 %v1213, %v1217
      %vm1219 = vweird.f32 %v1046
      %vm1220 = vweird.f32 %v1213
      %vm1221 = vmor %vm1219, %vm1220
      %v1222 = vsel %vm1221, %v1213, %v1218
      %v1223 = vrsqrt.pop %v1047
      %v1224 = vmul.f32 %v1223, %v1047
      %v1225 = vmul.f32 %v1224, %v1223
      %v1226 = vmul.f32 0.5, %v1225
      %v1227 = vsub.f32 1.5, %v1226
      %v1228 = vmul.f32 %v1223, %v1227
      %vm1229 = vweird.f32 %v1047
      %vm1230 = vweird.f32 %v1223
      %vm1231 = vmor %vm1229, %vm1230
      %v1232 = vsel %vm1231, %v1223, %v1228
      %v1233 = vrsqrt.pop %v1048
      %v1234 = vmul.f32 %v1233, %v1048
      %v1235 = vmul.f32 %v1234, %v1233
      %v1236 = vmul.f32 0.5, %v1235
      %v1237 = vsub.f32 1.5, %v1236
      %v1238 = vmul.f32 %v1233, %v1237
      %vm1239 = vweird.f32 %v1048
      %vm1240 = vweird.f32 %v1233
      %vm1241 = vmor %vm1239, %vm1240
      %v1242 = vsel %vm1241, %v1233, %v1238
      %v1243 = vrsqrt.pop %v1049
      %v1244 = vmul.f32 %v1243, %v1049
      %v1245 = vmul.f32 %v1244, %v1243
      %v1246 = vmul.f32 0.5, %v1245
      %v1247 = vsub.f32 1.5, %v1246
      %v1248 = vmul.f32 %v1243, %v1247
      %vm1249 = vweird.f32 %v1049
      %vm1250 = vweird.f32 %v1243
      %vm1251 = vmor %vm1249, %vm1250
      %v1252 = vsel %vm1251, %v1243, %v1248
      %v1253 = vrsqrt.pop %v1050
      %v1254 = vmul.f32 %v1253, %v1050
      %v1255 = vmul.f32 %v1254, %v1253
      %v1256 = vmul.f32 0.5, %v1255
      %v1257 = vsub.f32 1.5, %v1256
      %v1258 = vmul.f32 %v1253, %v1257
      %vm1259 = vweird.f32 %v1050
      %vm1260 = vweird.f32 %v1253
      %vm1261 = vmor %vm1259, %vm1260
      %v1262 = vsel %vm1261, %v1253, %v1258
      %v1263 = vrsqrt.pop %v1051
      %v1264 = vmul.f32 %v1263, %v1051
      %v1265 = vmul.f32 %v1264, %v1263
      %v1266 = vmul.f32 0.5, %v1265
      %v1267 = vsub.f32 1.5, %v1266
      %v1268 = vmul.f32 %v1263, %v1267
      %vm1269 = vweird.f32 %v1051
      %vm1270 = vweird.f32 %v1263
      %vm1271 = vmor %vm1269, %vm1270
      %v1272 = vsel %vm1271, %v1263, %v1268
      %v1273 = vrsqrt.pop %v1052
      %v1274 = vmul.f32 %v1273, %v1052
      %v1275 = vmul.f32 %v1274, %v1273
      %v1276 = vmul.f32 0.5, %v1275
      %v1277 = vsub.f32 1.5, %v1276
      %v1278 = vmul.f32 %v1273, %v1277
      %vm1279 = vweird.f32 %v1052
      %vm1280 = vweird.f32 %v1273
      %vm1281 = vmor %vm1279, %vm1280
      %v1282 = vsel %vm1281, %v1273, %v1278
      %v1283 = vrsqrt.pop %v1053
      %v1284 = vmul.f32 %v1283, %v1053
      %v1285 = vmul.f32 %v1284, %v1283
      %v1286 = vmul.f32 0.5, %v1285
      %v1287 = vsub.f32 1.5, %v1286
      %v1288 = vmul.f32 %v1283, %v1287
      %vm1289 = vweird.f32 %v1053
      %vm1290 = vweird.f32 %v1283
      %vm1291 = vmor %vm1289, %vm1290
      %v1292 = vsel %vm1291, %v1283, %v1288
      %v1293 = vrsqrt.pop %v1054
      %v1294 = vmul.f32 %v1293, %v1054
      %v1295 = vmul.f32 %v1294, %v1293
      %v1296 = vmul.f32 0.5, %v1295
      %v1297 = vsub.f32 1.5, %v1296
      %v1298 = vmul.f32 %v1293, %v1297
      %vm1299 = vweird.f32 %v1054
      %vm1300 = vweird.f32 %v1293
      %vm1301 = vmor %vm1299, %vm1300
      %v1302 = vsel %vm1301, %v1293, %v1298
      %v1303 = vrsqrt.pop %v1055
      %v1304 = vmul.f32 %v1303, %v1055
      %v1305 = vmul.f32 %v1304, %v1303
      %v1306 = vmul.f32 0.5, %v1305
      %v1307 = vsub.f32 1.5, %v1306
      %v1308 = vmul.f32 %v1303, %v1307
      %vm1309 = vweird.f32 %v1055
      %vm1310 = vweird.f32 %v1303
      %vm1311 = vmor %vm1309, %vm1310
      %v1312 = vsel %vm1311, %v1303, %v1308
      %v1313 = vrsqrt.pop %v1056
      %v1314 = vmul.f32 %v1313, %v1056
      %v1315 = vmul.f32 %v1314, %v1313
      %v1316 = vmul.f32 0.5, %v1315
      %v1317 = vsub.f32 1.5, %v1316
      %v1318 = vmul.f32 %v1313, %v1317
      %vm1319 = vweird.f32 %v1056
      %vm1320 = vweird.f32 %v1313
      %vm1321 = vmor %vm1319, %vm1320
      %v1322 = vsel %vm1321, %v1313, %v1318
      %v1323 = vrsqrt.pop %v1057
      %v1324 = vmul.f32 %v1323, %v1057
      %v1325 = vmul.f32 %v1324, %v1323
      %v1326 = vmul.f32 0.5, %v1325
      %v1327 = vsub.f32 1.5, %v1326
      %v1328 = vmul.f32 %v1323, %v1327
      %vm1329 = vweird.f32 %v1057
      %vm1330 = vweird.f32 %v1323
      %vm1331 = vmor %vm1329, %vm1330
      %v1332 = vsel %vm1331, %v1323, %v1328
      %v1333 = vrsqrt.pop %v1058
      %v1334 = vmul.f32 %v1333, %v1058
      %v1335 = vmul.f32 %v1334, %v1333
      %v1336 = vmul.f32 0.5, %v1335
      %v1337 = vsub.f32 1.5, %v1336
      %v1338 = vmul.f32 %v1333, %v1337
      %vm1339 = vweird.f32 %v1058
      %vm1340 = vweird.f32 %v1333
      %vm1341 = vmor %vm1339, %vm1340
      %v1342 = vsel %vm1341, %v1333, %v1338
      %v1343 = vrsqrt.pop %v1059
      %v1344 = vmul.f32 %v1343, %v1059
      %v1345 = vmul.f32 %v1344, %v1343
      %v1346 = vmul.f32 0.5, %v1345
      %v1347 = vsub.f32 1.5, %v1346
      %v1348 = vmul.f32 %v1343, %v1347
      %vm1349 = vweird.f32 %v1059
      %vm1350 = vweird.f32 %v1343
      %vm1351 = vmor %vm1349, %vm1350
      %v1352 = vsel %vm1351, %v1343, %v1348
      %v1353 = vrsqrt.pop %v1060
      %v1354 = vmul.f32 %v1353, %v1060
      %v1355 = vmul.f32 %v1354, %v1353
      %v1356 = vmul.f32 0.5, %v1355
      %v1357 = vsub.f32 1.5, %v1356
      %v1358 = vmul.f32 %v1353, %v1357
      %vm1359 = vweird.f32 %v1060
      %vm1360 = vweird.f32 %v1353
      %vm1361 = vmor %vm1359, %vm1360
      %v1362 = vsel %vm1361, %v1353, %v1358
      %v1363 = vrsqrt.pop %v1061
      %v1364 = vmul.f32 %v1363, %v1061
      %v1365 = vmul.f32 %v1364, %v1363
      %v1366 = vmul.f32 0.5, %v1365
      %v1367 = vsub.f32 1.5, %v1366
      %v1368 = vmul.f32 %v1363, %v1367
      %vm1369 = vweird.f32 %v1061
      %vm1370 = vweird.f32 %v1363
      %vm1371 = vmor %vm1369, %vm1370
      %v1372 = vsel %vm1371, %v1363, %v1368
      %v1373 = vrsqrt.pop %v1062
      %v1374 = vmul.f32 %v1373, %v1062
      %v1375 = vmul.f32 %v1374, %v1373
      %v1376 = vmul.f32 0.5, %v1375
      %v1377 = vsub.f32 1.5, %v1376
      %v1378 = vmul.f32 %v1373, %v1377
      %vm1379 = vweird.f32 %v1062
      %vm1380 = vweird.f32 %v1373
      %vm1381 = vmor %vm1379, %vm1380
      %v1382 = vsel %vm1381, %v1373, %v1378
      %v1383 = vmul.f32 %v839, %v1072
      %v1384 = vmul.f32 %v840, %v1082
      %v1385 = vmul.f32 %v841, %v1092
      %v1386 = vmul.f32 %v842, %v1102
      %v1387 = vmul.f32 %v843, %v1112
      %v1388 = vmul.f32 %v844, %v1122
      %v1389 = vmul.f32 %v845, %v1132
      %v1390 = vmul.f32 %v846, %v1142
      %v1391 = vmul.f32 %v847, %v1152
      %v1392 = vmul.f32 %v848, %v1162
      %v1393 = vmul.f32 %v849, %v1172
      %v1394 = vmul.f32 %v850, %v1182
      %v1395 = vmul.f32 %v851, %v1192
      %v1396 = vmul.f32 %v852, %v1202
      %v1397 = vmul.f32 %v853, %v1212
      %v1398 = vmul.f32 %v854, %v1222
      %v1399 = vmul.f32 %v855, %v1232
      %v1400 = vmul.f32 %v856, %v1242
      %v1401 = vmul.f32 %v857, %v1252
      %v1402 = vmul.f32 %v858, %v1262
      %v1403 = vmul.f32 %v859, %v1272
      %v1404 = vmul.f32 %v860, %v1282
      %v1405 = vmul.f32 %v861, %v1292
      %v1406 = vmul.f32 %v862, %v1302
      %v1407 = vmul.f32 %v863, %v1312
      %v1408 = vmul.f32 %v864, %v1322
      %v1409 = vmul.f32 %v865, %v1332
      %v1410 = vmul.f32 %v866, %v1342
      %v1411 = vmul.f32 %v867, %v1352
      %v1412 = vmul.f32 %v868, %v1362
      %v1413 = vmul.f32 %v869, %v1372
      %v1414 = vmul.f32 %v870, %v1382
      %v1416 = vperm.slane %v701, 0
      %v1418 = vmul.f32 %v1383, %v1416
      %v1419 = vmul.f32 %v1384, %v1416
      %v1420 = vmul.f32 %v1385, %v1416
      %v1421 = vmul.f32 %v1386, %v1416
      %v1422 = vmul.f32 %v1387, %v1416
      %v1423 = vmul.f32 %v1388, %v1416
      %v1424 = vmul.f32 %v1389, %v1416
      %v1425 = vmul.f32 %v1390, %v1416
      %v1426 = vmul.f32 %v1391, %v1416
      %v1427 = vmul.f32 %v1392, %v1416
      %v1428 = vmul.f32 %v1393, %v1416
      %v1429 = vmul.f32 %v1394, %v1416
      %v1430 = vmul.f32 %v1395, %v1416
      %v1431 = vmul.f32 %v1396, %v1416
      %v1432 = vmul.f32 %v1397, %v1416
      %v1433 = vmul.f32 %v1398, %v1416
      %v1434 = vmul.f32 %v1399, %v1416
      %v1435 = vmul.f32 %v1400, %v1416
      %v1436 = vmul.f32 %v1401, %v1416
      %v1437 = vmul.f32 %v1402, %v1416
      %v1438 = vmul.f32 %v1403, %v1416
      %v1439 = vmul.f32 %v1404, %v1416
      %v1440 = vmul.f32 %v1405, %v1416
      %v1441 = vmul.f32 %v1406, %v1416
      %v1442 = vmul.f32 %v1407, %v1416
      %v1443 = vmul.f32 %v1408, %v1416
      %v1444 = vmul.f32 %v1409, %v1416
      %v1445 = vmul.f32 %v1410, %v1416
      %v1446 = vmul.f32 %v1411, %v1416
      %v1447 = vmul.f32 %v1412, %v1416
      %v1448 = vmul.f32 %v1413, %v1416
      %v1449 = vmul.f32 %v1414, %v1416
      %v1451 = vperm.slane %v702, 0
      %v1453 = vadd.f32 %v1418, %v1451
      %v1454 = vadd.f32 %v1419, %v1451
      %v1455 = vadd.f32 %v1420, %v1451
      %v1456 = vadd.f32 %v1421, %v1451
      %v1457 = vadd.f32 %v1422, %v1451
      %v1458 = vadd.f32 %v1423, %v1451
      %v1459 = vadd.f32 %v1424, %v1451
      %v1460 = vadd.f32 %v1425, %v1451
      %v1461 = vadd.f32 %v1426, %v1451
      %v1462 = vadd.f32 %v1427, %v1451
      %v1463 = vadd.f32 %v1428, %v1451
      %v1464 = vadd.f32 %v1429, %v1451
      %v1465 = vadd.f32 %v1430, %v1451
      %v1466 = vadd.f32 %v1431, %v1451
      %v1467 = vadd.f32 %v1432, %v1451
      %v1468 = vadd.f32 %v1433, %v1451
      %v1469 = vadd.f32 %v1434, %v1451
      %v1470 = vadd.f32 %v1435, %v1451
      %v1471 = vadd.f32 %v1436, %v1451
      %v1472 = vadd.f32 %v1437, %v1451
      %v1473 = vadd.f32 %v1438, %v1451
      %v1474 = vadd.f32 %v1439, %v1451
      %v1475 = vadd.f32 %v1440, %v1451
      %v1476 = vadd.f32 %v1441, %v1451
      %v1477 = vadd.f32 %v1442, %v1451
      %v1478 = vadd.f32 %v1443, %v1451
      %v1479 = vadd.f32 %v1444, %v1451
      %v1480 = vadd.f32 %v1445, %v1451
      %v1481 = vadd.f32 %v1446, %v1451
      %v1482 = vadd.f32 %v1447, %v1451
      %v1483 = vadd.f32 %v1448, %v1451
      %v1484 = vadd.f32 %v1449, %v1451
      %v1485 = vpack.c.bf16 %v1454, %v1453
      %v1486 = vpack.c.bf16 %v1456, %v1455
      %v1487 = vpack.c.bf16 %v1458, %v1457
      %v1488 = vpack.c.bf16 %v1460, %v1459
      %v1489 = vpack.c.bf16 %v1462, %v1461
      %v1490 = vpack.c.bf16 %v1464, %v1463
      %v1491 = vpack.c.bf16 %v1466, %v1465
      %v1492 = vpack.c.bf16 %v1468, %v1467
      %v1493 = vpack.c.bf16 %v1470, %v1469
      %v1494 = vpack.c.bf16 %v1472, %v1471
      %v1495 = vpack.c.bf16 %v1474, %v1473
      %v1496 = vpack.c.bf16 %v1476, %v1475
      %v1497 = vpack.c.bf16 %v1478, %v1477
      %v1498 = vpack.c.bf16 %v1480, %v1479
      %v1499 = vpack.c.bf16 %v1482, %v1481
      %v1500 = vpack.c.bf16 %v1484, %v1483
      %v1501 = vld [vmem:[%s5] sm:$0xf]
      %v1502 = vld [vmem:[%s5 + $0x4] sm:$0xf]
      %v1503 = vld [vmem:[%s5 + $0x8] sm:$0xf]
      %v1504 = vld [vmem:[%s5 + $0xc] sm:$0xf]
      %v1505 = vld [vmem:[%s6] sm:$0x1]
      %v1507 = vperm.slane %v1505, 0
      %v1513 = vunpack.c.l.b16 %v1501
      %v1514 = vunpack.c.l.b16 %v1502
      %v1515 = vunpack.c.l.b16 %v1503
      %v1516 = vunpack.c.l.b16 %v1504
      %v1517 = vpack.c.b16 %v1514, %v1513
      %v1518 = vpack.c.b16 %v1516, %v1515
      %v1522 = vsel %vm703, %v1485, 0
      %v1525 = vsel %vm703, %v1486, 0
      %v1528 = vsel %vm703, %v1487, 0
      %v1531 = vsel %vm703, %v1488, 0
      %v1534 = vsel %vm703, %v1489, 0
      %v1537 = vsel %vm703, %v1490, 0
      %v1540 = vsel %vm703, %v1491, 0
      %v1543 = vsel %vm703, %v1492, 0
      %v1546 = vsel %vm703, %v1493, 0
      %v1549 = vsel %vm703, %v1494, 0
      %v1552 = vsel %vm703, %v1495, 0
      %v1555 = vsel %vm703, %v1496, 0
      %v1558 = vsel %vm703, %v1497, 0
      %v1561 = vsel %vm703, %v1498, 0
      %v1564 = vsel %vm703, %v1499, 0
      %v1567 = vsel %vm703, %v1500, 0
      %1569 = vmatpush.bf16.msra.mxu0 0
      %1570 = vmatpush.bf16.msra.mxu0 0
      %1571 = vmatpush.bf16.msra.mxu0 0
      %1572 = vmatpush.bf16.msra.mxu0 0
      %1573 = vmatpush.bf16.msra.mxu0 0
      %1574 = vmatpush.bf16.msra.mxu0 0
      %1575 = vmatpush.bf16.msra.mxu0 %v1518
      %1576 = vmatpush.bf16.msra.mxu0 %v1517
      %1577 = vmatmul.bf16.gmra.mxu0 %v1522
      %v1578 = vpop.f32.mrf.mxu0
      %v1579 = vadd.f32 %v1507, %v1578
      %v1580 = vpop.f32.mrf.mxu0
      %v1581 = vadd.f32 %v1507, %v1580
      %1582 = vmatmul.bf16.gmra.mxu0 %v1525
      %v1583 = vpop.f32.mrf.mxu0
      %v1584 = vadd.f32 %v1507, %v1583
      %v1585 = vpop.f32.mrf.mxu0
      %v1586 = vadd.f32 %v1507, %v1585
      %1587 = vmatmul.bf16.gmra.mxu0 %v1528
      %v1588 = vpop.f32.mrf.mxu0
      %v1589 = vadd.f32 %v1507, %v1588
      %v1590 = vpop.f32.mrf.mxu0
      %v1591 = vadd.f32 %v1507, %v1590
      %1592 = vmatmul.bf16.gmra.mxu0 %v1531
      %v1593 = vpop.f32.mrf.mxu0
      %v1594 = vadd.f32 %v1507, %v1593
      %v1595 = vpop.f32.mrf.mxu0
      %v1596 = vadd.f32 %v1507, %v1595
      %1597 = vmatmul.bf16.gmra.mxu0 %v1534
      %v1598 = vpop.f32.mrf.mxu0
      %v1599 = vadd.f32 %v1507, %v1598
      %v1600 = vpop.f32.mrf.mxu0
      %v1601 = vadd.f32 %v1507, %v1600
      %1602 = vmatmul.bf16.gmra.mxu0 %v1537
      %v1603 = vpop.f32.mrf.mxu0
      %v1604 = vadd.f32 %v1507, %v1603
      %v1605 = vpop.f32.mrf.mxu0
      %v1606 = vadd.f32 %v1507, %v1605
      %1607 = vmatmul.bf16.gmra.mxu0 %v1540
      %v1608 = vpop.f32.mrf.mxu0
      %v1609 = vadd.f32 %v1507, %v1608
      %v1610 = vpop.f32.mrf.mxu0
      %v1611 = vadd.f32 %v1507, %v1610
      %1612 = vmatmul.bf16.gmra.mxu0 %v1543
      %v1613 = vpop.f32.mrf.mxu0
      %v1614 = vadd.f32 %v1507, %v1613
      %v1615 = vpop.f32.mrf.mxu0
      %v1616 = vadd.f32 %v1507, %v1615
      %1617 = vmatmul.bf16.gmra.mxu0 %v1546
      %v1618 = vpop.f32.mrf.mxu0
      %v1619 = vadd.f32 %v1507, %v1618
      %v1620 = vpop.f32.mrf.mxu0
      %v1621 = vadd.f32 %v1507, %v1620
      %1622 = vmatmul.bf16.gmra.mxu0 %v1549
      %v1623 = vpop.f32.mrf.mxu0
      %v1624 = vadd.f32 %v1507, %v1623
      %v1625 = vpop.f32.mrf.mxu0
      %v1626 = vadd.f32 %v1507, %v1625
      %1627 = vmatmul.bf16.gmra.mxu0 %v1552
      %v1628 = vpop.f32.mrf.mxu0
      %v1629 = vadd.f32 %v1507, %v1628
      %v1630 = vpop.f32.mrf.mxu0
      %v1631 = vadd.f32 %v1507, %v1630
      %1632 = vmatmul.bf16.gmra.mxu0 %v1555
      %v1633 = vpop.f32.mrf.mxu0
      %v1634 = vadd.f32 %v1507, %v1633
      %v1635 = vpop.f32.mrf.mxu0
      %v1636 = vadd.f32 %v1507, %v1635
      %1637 = vmatmul.bf16.gmra.mxu0 %v1558
      %v1638 = vpop.f32.mrf.mxu0
      %v1639 = vadd.f32 %v1507, %v1638
      %v1640 = vpop.f32.mrf.mxu0
      %v1641 = vadd.f32 %v1507, %v1640
      %1642 = vmatmul.bf16.gmra.mxu0 %v1561
      %v1643 = vpop.f32.mrf.mxu0
      %v1644 = vadd.f32 %v1507, %v1643
      %v1645 = vpop.f32.mrf.mxu0
      %v1646 = vadd.f32 %v1507, %v1645
      %1647 = vmatmul.bf16.gmra.mxu0 %v1564
      %v1648 = vpop.f32.mrf.mxu0
      %v1649 = vadd.f32 %v1507, %v1648
      %v1650 = vpop.f32.mrf.mxu0
      %v1651 = vadd.f32 %v1507, %v1650
      %1652 = vmatmul.bf16.gmra.mxu0 %v1567
      %v1653 = vpop.f32.mrf.mxu0
      %v1654 = vadd.f32 %v1507, %v1653
      %v1655 = vpop.f32.mrf.mxu0
      %v1656 = vadd.f32 %v1507, %v1655
      %1657 = vdwg.mxu0
      %v1658 = vmul.f32 %v1579, %v1579
      %v1659 = vmul.f32 %v1581, %v1581
      %v1660 = vmul.f32 %v1584, %v1584
      %v1661 = vmul.f32 %v1586, %v1586
      %v1662 = vmul.f32 %v1589, %v1589
      %v1663 = vmul.f32 %v1591, %v1591
      %v1664 = vmul.f32 %v1594, %v1594
      %v1665 = vmul.f32 %v1596, %v1596
      %v1666 = vmul.f32 %v1599, %v1599
      %v1667 = vmul.f32 %v1601, %v1601
      %v1668 = vmul.f32 %v1604, %v1604
      %v1669 = vmul.f32 %v1606, %v1606
      %v1670 = vmul.f32 %v1609, %v1609
      %v1671 = vmul.f32 %v1611, %v1611
      %v1672 = vmul.f32 %v1614, %v1614
      %v1673 = vmul.f32 %v1616, %v1616
      %v1674 = vmul.f32 %v1619, %v1619
      %v1675 = vmul.f32 %v1621, %v1621
      %v1676 = vmul.f32 %v1624, %v1624
      %v1677 = vmul.f32 %v1626, %v1626
      %v1678 = vmul.f32 %v1629, %v1629
      %v1679 = vmul.f32 %v1631, %v1631
      %v1680 = vmul.f32 %v1634, %v1634
      %v1681 = vmul.f32 %v1636, %v1636
      %v1682 = vmul.f32 %v1639, %v1639
      %v1683 = vmul.f32 %v1641, %v1641
      %v1684 = vmul.f32 %v1644, %v1644
      %v1685 = vmul.f32 %v1646, %v1646
      %v1686 = vmul.f32 %v1649, %v1649
      %v1687 = vmul.f32 %v1651, %v1651
      %v1688 = vmul.f32 %v1654, %v1654
      %v1689 = vmul.f32 %v1656, %v1656
      %v1690 = vmul.f32 %v1579, %v1658
      %v1691 = vmul.f32 %v1581, %v1659
      %v1692 = vmul.f32 %v1584, %v1660
      %v1693 = vmul.f32 %v1586, %v1661
      %v1694 = vmul.f32 %v1589, %v1662
      %v1695 = vmul.f32 %v1591, %v1663
      %v1696 = vmul.f32 %v1594, %v1664
      %v1697 = vmul.f32 %v1596, %v1665
      %v1698 = vmul.f32 %v1599, %v1666
      %v1699 = vmul.f32 %v1601, %v1667
      %v1700 = vmul.f32 %v1604, %v1668
      %v1701 = vmul.f32 %v1606, %v1669
      %v1702 = vmul.f32 %v1609, %v1670
      %v1703 = vmul.f32 %v1611, %v1671
      %v1704 = vmul.f32 %v1614, %v1672
      %v1705 = vmul.f32 %v1616, %v1673
      %v1706 = vmul.f32 %v1619, %v1674
      %v1707 = vmul.f32 %v1621, %v1675
      %v1708 = vmul.f32 %v1624, %v1676
      %v1709 = vmul.f32 %v1626, %v1677
      %v1710 = vmul.f32 %v1629, %v1678
      %v1711 = vmul.f32 %v1631, %v1679
      %v1712 = vmul.f32 %v1634, %v1680
      %v1713 = vmul.f32 %v1636, %v1681
      %v1714 = vmul.f32 %v1639, %v1682
      %v1715 = vmul.f32 %v1641, %v1683
      %v1716 = vmul.f32 %v1644, %v1684
      %v1717 = vmul.f32 %v1646, %v1685
      %v1718 = vmul.f32 %v1649, %v1686
      %v1719 = vmul.f32 %v1651, %v1687
      %v1720 = vmul.f32 %v1654, %v1688
      %v1721 = vmul.f32 %v1656, %v1689
      %v1722 = vmul.f32 %v1690, 0.044715
      %v1723 = vmul.f32 %v1691, 0.044715
      %v1724 = vmul.f32 %v1692, 0.044715
      %v1725 = vmul.f32 %v1693, 0.044715
      %v1726 = vmul.f32 %v1694, 0.044715
      %v1727 = vmul.f32 %v1695, 0.044715
      %v1728 = vmul.f32 %v1696, 0.044715
      %v1729 = vmul.f32 %v1697, 0.044715
      %v1730 = vmul.f32 %v1698, 0.044715
      %v1731 = vmul.f32 %v1699, 0.044715
      %v1732 = vmul.f32 %v1700, 0.044715
      %v1733 = vmul.f32 %v1701, 0.044715
      %v1734 = vmul.f32 %v1702, 0.044715
      %v1735 = vmul.f32 %v1703, 0.044715
      %v1736 = vmul.f32 %v1704, 0.044715
      %v1737 = vmul.f32 %v1705, 0.044715
      %v1738 = vmul.f32 %v1706, 0.044715
      %v1739 = vmul.f32 %v1707, 0.044715
      %v1740 = vmul.f32 %v1708, 0.044715
      %v1741 = vmul.f32 %v1709, 0.044715
      %v1742 = vmul.f32 %v1710, 0.044715
      %v1743 = vmul.f32 %v1711, 0.044715
      %v1744 = vmul.f32 %v1712, 0.044715
      %v1745 = vmul.f32 %v1713, 0.044715
      %v1746 = vmul.f32 %v1714, 0.044715
      %v1747 = vmul.f32 %v1715, 0.044715
      %v1748 = vmul.f32 %v1716, 0.044715
      %v1749 = vmul.f32 %v1717, 0.044715
      %v1750 = vmul.f32 %v1718, 0.044715
      %v1751 = vmul.f32 %v1719, 0.044715
      %v1752 = vmul.f32 %v1720, 0.044715
      %v1753 = vmul.f32 %v1721, 0.044715
      %v1754 = vadd.f32 %v1579, %v1722
      %v1755 = vadd.f32 %v1581, %v1723
      %v1756 = vadd.f32 %v1584, %v1724
      %v1757 = vadd.f32 %v1586, %v1725
      %v1758 = vadd.f32 %v1589, %v1726
      %v1759 = vadd.f32 %v1591, %v1727
      %v1760 = vadd.f32 %v1594, %v1728
      %v1761 = vadd.f32 %v1596, %v1729
      %v1762 = vadd.f32 %v1599, %v1730
      %v1763 = vadd.f32 %v1601, %v1731
      %v1764 = vadd.f32 %v1604, %v1732
      %v1765 = vadd.f32 %v1606, %v1733
      %v1766 = vadd.f32 %v1609, %v1734
      %v1767 = vadd.f32 %v1611, %v1735
      %v1768 = vadd.f32 %v1614, %v1736
      %v1769 = vadd.f32 %v1616, %v1737
      %v1770 = vadd.f32 %v1619, %v1738
      %v1771 = vadd.f32 %v1621, %v1739
      %v1772 = vadd.f32 %v1624, %v1740
      %v1773 = vadd.f32 %v1626, %v1741
      %v1774 = vadd.f32 %v1629, %v1742
      %v1775 = vadd.f32 %v1631, %v1743
      %v1776 = vadd.f32 %v1634, %v1744
      %v1777 = vadd.f32 %v1636, %v1745
      %v1778 = vadd.f32 %v1639, %v1746
      %v1779 = vadd.f32 %v1641, %v1747
      %v1780 = vadd.f32 %v1644, %v1748
      %v1781 = vadd.f32 %v1646, %v1749
      %v1782 = vadd.f32 %v1649, %v1750
      %v1783 = vadd.f32 %v1651, %v1751
      %v1784 = vadd.f32 %v1654, %v1752
      %v1785 = vadd.f32 %v1656, %v1753
      %v1786 = vmul.f32 %v1754, 0.7978846
      %v1787 = vmul.f32 %v1755, 0.7978846
      %v1788 = vmul.f32 %v1756, 0.7978846
      %v1789 = vmul.f32 %v1757, 0.7978846
      %v1790 = vmul.f32 %v1758, 0.7978846
      %v1791 = vmul.f32 %v1759, 0.7978846
      %v1792 = vmul.f32 %v1760, 0.7978846
      %v1793 = vmul.f32 %v1761, 0.7978846
      %v1794 = vmul.f32 %v1762, 0.7978846
      %v1795 = vmul.f32 %v1763, 0.7978846
      %v1796 = vmul.f32 %v1764, 0.7978846
      %v1797 = vmul.f32 %v1765, 0.7978846
      %v1798 = vmul.f32 %v1766, 0.7978846
      %v1799 = vmul.f32 %v1767, 0.7978846
      %v1800 = vmul.f32 %v1768, 0.7978846
      %v1801 = vmul.f32 %v1769, 0.7978846
      %v1802 = vmul.f32 %v1770, 0.7978846
      %v1803 = vmul.f32 %v1771, 0.7978846
      %v1804 = vmul.f32 %v1772, 0.7978846
      %v1805 = vmul.f32 %v1773, 0.7978846
      %v1806 = vmul.f32 %v1774, 0.7978846
      %v1807 = vmul.f32 %v1775, 0.7978846
      %v1808 = vmul.f32 %v1776, 0.7978846
      %v1809 = vmul.f32 %v1777, 0.7978846
      %v1810 = vmul.f32 %v1778, 0.7978846
      %v1811 = vmul.f32 %v1779, 0.7978846
      %v1812 = vmul.f32 %v1780, 0.7978846
      %v1813 = vmul.f32 %v1781, 0.7978846
      %v1814 = vmul.f32 %v1782, 0.7978846
      %v1815 = vmul.f32 %v1783, 0.7978846
      %v1816 = vmul.f32 %v1784, 0.7978846
      %v1817 = vmul.f32 %v1785, 0.7978846
      %v1818 = vtanh.pop %v1786
      %v1819 = vtanh.pop %v1787
      %v1820 = vtanh.pop %v1788
      %v1821 = vtanh.pop %v1789
      %v1822 = vtanh.pop %v1790
      %v1823 = vtanh.pop %v1791
      %v1824 = vtanh.pop %v1792
      %v1825 = vtanh.pop %v1793
      %v1826 = vtanh.pop %v1794
      %v1827 = vtanh.pop %v1795
      %v1828 = vtanh.pop %v1796
      %v1829 = vtanh.pop %v1797
      %v1830 = vtanh.pop %v1798
      %v1831 = vtanh.pop %v1799
      %v1832 = vtanh.pop %v1800
      %v1833 = vtanh.pop %v1801
      %v1834 = vtanh.pop %v1802
      %v1835 = vtanh.pop %v1803
      %v1836 = vtanh.pop %v1804
      %v1837 = vtanh.pop %v1805
      %v1838 = vtanh.pop %v1806
      %v1839 = vtanh.pop %v1807
      %v1840 = vtanh.pop %v1808
      %v1841 = vtanh.pop %v1809
      %v1842 = vtanh.pop %v1810
      %v1843 = vtanh.pop %v1811
      %v1844 = vtanh.pop %v1812
      %v1845 = vtanh.pop %v1813
      %v1846 = vtanh.pop %v1814
      %v1847 = vtanh.pop %v1815
      %v1848 = vtanh.pop %v1816
      %v1849 = vtanh.pop %v1817
      %v1850 = vadd.f32 %v1818, 1.0
      %v1851 = vadd.f32 %v1819, 1.0
      %v1852 = vadd.f32 %v1820, 1.0
      %v1853 = vadd.f32 %v1821, 1.0
      %v1854 = vadd.f32 %v1822, 1.0
      %v1855 = vadd.f32 %v1823, 1.0
      %v1856 = vadd.f32 %v1824, 1.0
      %v1857 = vadd.f32 %v1825, 1.0
      %v1858 = vadd.f32 %v1826, 1.0
      %v1859 = vadd.f32 %v1827, 1.0
      %v1860 = vadd.f32 %v1828, 1.0
      %v1861 = vadd.f32 %v1829, 1.0
      %v1862 = vadd.f32 %v1830, 1.0
      %v1863 = vadd.f32 %v1831, 1.0
      %v1864 = vadd.f32 %v1832, 1.0
      %v1865 = vadd.f32 %v1833, 1.0
      %v1866 = vadd.f32 %v1834, 1.0
      %v1867 = vadd.f32 %v1835, 1.0
      %v1868 = vadd.f32 %v1836, 1.0
      %v1869 = vadd.f32 %v1837, 1.0
      %v1870 = vadd.f32 %v1838, 1.0
      %v1871 = vadd.f32 %v1839, 1.0
      %v1872 = vadd.f32 %v1840, 1.0
      %v1873 = vadd.f32 %v1841, 1.0
      %v1874 = vadd.f32 %v1842, 1.0
      %v1875 = vadd.f32 %v1843, 1.0
      %v1876 = vadd.f32 %v1844, 1.0
      %v1877 = vadd.f32 %v1845, 1.0
      %v1878 = vadd.f32 %v1846, 1.0
      %v1879 = vadd.f32 %v1847, 1.0
      %v1880 = vadd.f32 %v1848, 1.0
      %v1881 = vadd.f32 %v1849, 1.0
      %v1882 = vmul.f32 %v1850, 0.5
      %v1883 = vmul.f32 %v1851, 0.5
      %v1884 = vmul.f32 %v1852, 0.5
      %v1885 = vmul.f32 %v1853, 0.5
      %v1886 = vmul.f32 %v1854, 0.5
      %v1887 = vmul.f32 %v1855, 0.5
      %v1888 = vmul.f32 %v1856, 0.5
      %v1889 = vmul.f32 %v1857, 0.5
      %v1890 = vmul.f32 %v1858, 0.5
      %v1891 = vmul.f32 %v1859, 0.5
      %v1892 = vmul.f32 %v1860, 0.5
      %v1893 = vmul.f32 %v1861, 0.5
      %v1894 = vmul.f32 %v1862, 0.5
      %v1895 = vmul.f32 %v1863, 0.5
      %v1896 = vmul.f32 %v1864, 0.5
      %v1897 = vmul.f32 %v1865, 0.5
      %v1898 = vmul.f32 %v1866, 0.5
      %v1899 = vmul.f32 %v1867, 0.5
      %v1900 = vmul.f32 %v1868, 0.5
      %v1901 = vmul.f32 %v1869, 0.5
      %v1902 = vmul.f32 %v1870, 0.5
      %v1903 = vmul.f32 %v1871, 0.5
      %v1904 = vmul.f32 %v1872, 0.5
      %v1905 = vmul.f32 %v1873, 0.5
      %v1906 = vmul.f32 %v1874, 0.5
      %v1907 = vmul.f32 %v1875, 0.5
      %v1908 = vmul.f32 %v1876, 0.5
      %v1909 = vmul.f32 %v1877, 0.5
      %v1910 = vmul.f32 %v1878, 0.5
      %v1911 = vmul.f32 %v1879, 0.5
      %v1912 = vmul.f32 %v1880, 0.5
      %v1913 = vmul.f32 %v1881, 0.5
      %v1914 = vmul.f32 %v1579, %v1882
      %v1915 = vmul.f32 %v1581, %v1883
      %v1916 = vmul.f32 %v1584, %v1884
      %v1917 = vmul.f32 %v1586, %v1885
      %v1918 = vmul.f32 %v1589, %v1886
      %v1919 = vmul.f32 %v1591, %v1887
      %v1920 = vmul.f32 %v1594, %v1888
      %v1921 = vmul.f32 %v1596, %v1889
      %v1922 = vmul.f32 %v1599, %v1890
      %v1923 = vmul.f32 %v1601, %v1891
      %v1924 = vmul.f32 %v1604, %v1892
      %v1925 = vmul.f32 %v1606, %v1893
      %v1926 = vmul.f32 %v1609, %v1894
      %v1927 = vmul.f32 %v1611, %v1895
      %v1928 = vmul.f32 %v1614, %v1896
      %v1929 = vmul.f32 %v1616, %v1897
      %v1930 = vmul.f32 %v1619, %v1898
      %v1931 = vmul.f32 %v1621, %v1899
      %v1932 = vmul.f32 %v1624, %v1900
      %v1933 = vmul.f32 %v1626, %v1901
      %v1934 = vmul.f32 %v1629, %v1902
      %v1935 = vmul.f32 %v1631, %v1903
      %v1936 = vmul.f32 %v1634, %v1904
      %v1937 = vmul.f32 %v1636, %v1905
      %v1938 = vmul.f32 %v1639, %v1906
      %v1939 = vmul.f32 %v1641, %v1907
      %v1940 = vmul.f32 %v1644, %v1908
      %v1941 = vmul.f32 %v1646, %v1909
      %v1942 = vmul.f32 %v1649, %v1910
      %v1943 = vmul.f32 %v1651, %v1911
      %v1944 = vmul.f32 %v1654, %v1912
      %v1945 = vmul.f32 %v1656, %v1913
      %v1946 = vpack.c.bf16 %v1915, %v1914
      %v1947 = vpack.c.bf16 %v1917, %v1916
      %v1948 = vpack.c.bf16 %v1919, %v1918
      %v1949 = vpack.c.bf16 %v1921, %v1920
      %v1950 = vpack.c.bf16 %v1923, %v1922
      %v1951 = vpack.c.bf16 %v1925, %v1924
      %v1952 = vpack.c.bf16 %v1927, %v1926
      %v1953 = vpack.c.bf16 %v1929, %v1928
      %v1954 = vpack.c.bf16 %v1931, %v1930
      %v1955 = vpack.c.bf16 %v1933, %v1932
      %v1956 = vpack.c.bf16 %v1935, %v1934
      %v1957 = vpack.c.bf16 %v1937, %v1936
      %v1958 = vpack.c.bf16 %v1939, %v1938
      %v1959 = vpack.c.bf16 %v1941, %v1940
      %v1960 = vpack.c.bf16 %v1943, %v1942
      %v1961 = vpack.c.bf16 %v1945, %v1944
      %v1962 = vld [vmem:[%s7] sm:$0xf]
      %v1963 = vld [vmem:[%s7 + $0x4] sm:$0xf]
      %v1964 = vld [vmem:[%s7 + $0x8] sm:$0xf]
      %v1965 = vld [vmem:[%s7 + $0xc] sm:$0xf]
      %v1966 = vld [vmem:[%s7 + $0x10] sm:$0xf]
      %v1967 = vld [vmem:[%s7 + $0x14] sm:$0xf]
      %v1968 = vld [vmem:[%s7 + $0x18] sm:$0xf]
      %v1969 = vld [vmem:[%s7 + $0x1c] sm:$0xf]
      %v1970 = vld [vmem:[%s7 + $0x20] sm:$0xf]
      %v1971 = vld [vmem:[%s7 + $0x24] sm:$0xf]
      %v1972 = vld [vmem:[%s7 + $0x28] sm:$0xf]
      %v1973 = vld [vmem:[%s7 + $0x2c] sm:$0xf]
      %v1974 = vld [vmem:[%s7 + $0x30] sm:$0xf]
      %v1975 = vld [vmem:[%s7 + $0x34] sm:$0xf]
      %v1976 = vld [vmem:[%s7 + $0x38] sm:$0xf]
      %v1977 = vld [vmem:[%s7 + $0x3c] sm:$0xf]
      %v1978 = vld [vmem:[%s8] sm:$0x1]
      %v1980 = vperm.slane %v1978, 0
      %v1998 = vunpack.c.l.b16 %v1962
      %v1999 = vunpack.c.l.b16 %v1963
      %v2000 = vunpack.c.l.b16 %v1964
      %v2001 = vunpack.c.l.b16 %v1965
      %v2002 = vunpack.c.l.b16 %v1966
      %v2003 = vunpack.c.l.b16 %v1967
      %v2004 = vunpack.c.l.b16 %v1968
      %v2005 = vunpack.c.l.b16 %v1969
      %v2006 = vunpack.c.l.b16 %v1970
      %v2007 = vunpack.c.l.b16 %v1971
      %v2008 = vunpack.c.l.b16 %v1972
      %v2009 = vunpack.c.l.b16 %v1973
      %v2010 = vunpack.c.l.b16 %v1974
      %v2011 = vunpack.c.l.b16 %v1975
      %v2012 = vunpack.c.l.b16 %v1976
      %v2013 = vunpack.c.l.b16 %v1977
      %v2014 = vpack.c.b16 %v1999, %v1998
      %v2015 = vpack.c.b16 %v2001, %v2000
      %v2016 = vpack.c.b16 %v2003, %v2002
      %v2017 = vpack.c.b16 %v2005, %v2004
      %v2018 = vpack.c.b16 %v2007, %v2006
      %v2019 = vpack.c.b16 %v2009, %v2008
      %v2020 = vpack.c.b16 %v2011, %v2010
      %v2021 = vpack.c.b16 %v2013, %v2012
      %2030 = vmatpush.bf16.msra.mxu0 %v2021
      %2031 = vmatpush.bf16.msra.mxu0 %v2020
      %2032 = vmatpush.bf16.msra.mxu0 %v2019
      %2033 = vmatpush.bf16.msra.mxu0 %v2018
      %2034 = vmatpush.bf16.msra.mxu0 %v2017
      %2035 = vmatpush.bf16.msra.mxu0 %v2016
      %2036 = vmatpush.bf16.msra.mxu0 %v2015
      %2037 = vmatpush.bf16.msra.mxu0 %v2014
      %2038 = vmatmul.bf16.gmra.mxu0 %v1946
      %v2039 = vpop.f32.mrf.mxu0
      %v2040 = vadd.f32 %v1980, %v2039
      %v2041 = vpop.f32.mrf.mxu0
      %v2042 = vadd.f32 %v1980, %v2041
      %2043 = vmatmul.bf16.gmra.mxu0 %v1947
      %v2044 = vpop.f32.mrf.mxu0
      %v2045 = vadd.f32 %v1980, %v2044
      %v2046 = vpop.f32.mrf.mxu0
      %v2047 = vadd.f32 %v1980, %v2046
      %2048 = vmatmul.bf16.gmra.mxu0 %v1948
      %v2049 = vpop.f32.mrf.mxu0
      %v2050 = vadd.f32 %v1980, %v2049
      %v2051 = vpop.f32.mrf.mxu0
      %v2052 = vadd.f32 %v1980, %v2051
      %2053 = vmatmul.bf16.gmra.mxu0 %v1949
      %v2054 = vpop.f32.mrf.mxu0
      %v2055 = vadd.f32 %v1980, %v2054
      %v2056 = vpop.f32.mrf.mxu0
      %v2057 = vadd.f32 %v1980, %v2056
      %2058 = vmatmul.bf16.gmra.mxu0 %v1950
      %v2059 = vpop.f32.mrf.mxu0
      %v2060 = vadd.f32 %v1980, %v2059
      %v2061 = vpop.f32.mrf.mxu0
      %v2062 = vadd.f32 %v1980, %v2061
      %2063 = vmatmul.bf16.gmra.mxu0 %v1951
      %v2064 = vpop.f32.mrf.mxu0
      %v2065 = vadd.f32 %v1980, %v2064
      %v2066 = vpop.f32.mrf.mxu0
      %v2067 = vadd.f32 %v1980, %v2066
      %2068 = vmatmul.bf16.gmra.mxu0 %v1952
      %v2069 = vpop.f32.mrf.mxu0
      %v2070 = vadd.f32 %v1980, %v2069
      %v2071 = vpop.f32.mrf.mxu0
      %v2072 = vadd.f32 %v1980, %v2071
      %2073 = vmatmul.bf16.gmra.mxu0 %v1953
      %v2074 = vpop.f32.mrf.mxu0
      %v2075 = vadd.f32 %v1980, %v2074
      %v2076 = vpop.f32.mrf.mxu0
      %v2077 = vadd.f32 %v1980, %v2076
      %2078 = vmatmul.bf16.gmra.mxu0 %v1954
      %v2079 = vpop.f32.mrf.mxu0
      %v2080 = vadd.f32 %v1980, %v2079
      %v2081 = vpop.f32.mrf.mxu0
      %v2082 = vadd.f32 %v1980, %v2081
      %2083 = vmatmul.bf16.gmra.mxu0 %v1955
      %v2084 = vpop.f32.mrf.mxu0
      %v2085 = vadd.f32 %v1980, %v2084
      %v2086 = vpop.f32.mrf.mxu0
      %v2087 = vadd.f32 %v1980, %v2086
      %2088 = vmatmul.bf16.gmra.mxu0 %v1956
      %v2089 = vpop.f32.mrf.mxu0
      %v2090 = vadd.f32 %v1980, %v2089
      %v2091 = vpop.f32.mrf.mxu0
      %v2092 = vadd.f32 %v1980, %v2091
      %2093 = vmatmul.bf16.gmra.mxu0 %v1957
      %v2094 = vpop.f32.mrf.mxu0
      %v2095 = vadd.f32 %v1980, %v2094
      %v2096 = vpop.f32.mrf.mxu0
      %v2097 = vadd.f32 %v1980, %v2096
      %2098 = vmatmul.bf16.gmra.mxu0 %v1958
      %v2099 = vpop.f32.mrf.mxu0
      %v2100 = vadd.f32 %v1980, %v2099
      %v2101 = vpop.f32.mrf.mxu0
      %v2102 = vadd.f32 %v1980, %v2101
      %2103 = vmatmul.bf16.gmra.mxu0 %v1959
      %v2104 = vpop.f32.mrf.mxu0
      %v2105 = vadd.f32 %v1980, %v2104
      %v2106 = vpop.f32.mrf.mxu0
      %v2107 = vadd.f32 %v1980, %v2106
      %2108 = vmatmul.bf16.gmra.mxu0 %v1960
      %v2109 = vpop.f32.mrf.mxu0
      %v2110 = vadd.f32 %v1980, %v2109
      %v2111 = vpop.f32.mrf.mxu0
      %v2112 = vadd.f32 %v1980, %v2111
      %2113 = vmatmul.bf16.gmra.mxu0 %v1961
      %v2114 = vpop.f32.mrf.mxu0
      %v2115 = vadd.f32 %v1980, %v2114
      %v2116 = vpop.f32.mrf.mxu0
      %v2117 = vadd.f32 %v1980, %v2116
      %2118 = vdwg.mxu0
      %v2119 = vadd.f32 %v669, %v2040
      %v2120 = vadd.f32 %v670, %v2042
      %v2121 = vadd.f32 %v671, %v2045
      %v2122 = vadd.f32 %v672, %v2047
      %v2123 = vadd.f32 %v673, %v2050
      %v2124 = vadd.f32 %v674, %v2052
      %v2125 = vadd.f32 %v675, %v2055
      %v2126 = vadd.f32 %v676, %v2057
      %v2127 = vadd.f32 %v677, %v2060
      %v2128 = vadd.f32 %v678, %v2062
      %v2129 = vadd.f32 %v679, %v2065
      %v2130 = vadd.f32 %v680, %v2067
      %v2131 = vadd.f32 %v681, %v2070
      %v2132 = vadd.f32 %v682, %v2072
      %v2133 = vadd.f32 %v683, %v2075
      %v2134 = vadd.f32 %v684, %v2077
      %v2135 = vadd.f32 %v685, %v2080
      %v2136 = vadd.f32 %v686, %v2082
      %v2137 = vadd.f32 %v687, %v2085
      %v2138 = vadd.f32 %v688, %v2087
      %v2139 = vadd.f32 %v689, %v2090
      %v2140 = vadd.f32 %v690, %v2092
      %v2141 = vadd.f32 %v691, %v2095
      %v2142 = vadd.f32 %v692, %v2097
      %v2143 = vadd.f32 %v693, %v2100
      %v2144 = vadd.f32 %v694, %v2102
      %v2145 = vadd.f32 %v695, %v2105
      %v2146 = vadd.f32 %v696, %v2107
      %v2147 = vadd.f32 %v697, %v2110
      %v2148 = vadd.f32 %v698, %v2112
      %v2149 = vadd.f32 %v699, %v2115
      %v2150 = vadd.f32 %v700, %v2117
      %2151 = vst.msk [vmem:[%s442] sm:$0xff] %vm703, %v2119
      %2152 = vst.msk [vmem:[%s442 + $0x8] sm:$0xff] %vm703, %v2120
      %2153 = vst.msk [vmem:[%s442 + $0x10] sm:$0xff] %vm703, %v2121
      %2154 = vst.msk [vmem:[%s442 + $0x18] sm:$0xff] %vm703, %v2122
      %2155 = vst.msk [vmem:[%s442 + $0x20] sm:$0xff] %vm703, %v2123
      %2156 = vst.msk [vmem:[%s442 + $0x28] sm:$0xff] %vm703, %v2124
      %2157 = vst.msk [vmem:[%s442 + $0x30] sm:$0xff] %vm703, %v2125
      %2158 = vst.msk [vmem:[%s442 + $0x38] sm:$0xff] %vm703, %v2126
      %2159 = vst.msk [vmem:[%s442 + $0x40] sm:$0xff] %vm703, %v2127
      %2160 = vst.msk [vmem:[%s442 + $0x48] sm:$0xff] %vm703, %v2128
      %2161 = vst.msk [vmem:[%s442 + $0x50] sm:$0xff] %vm703, %v2129
      %2162 = vst.msk [vmem:[%s442 + $0x58] sm:$0xff] %vm703, %v2130
      %2163 = vst.msk [vmem:[%s442 + $0x60] sm:$0xff] %vm703, %v2131
      %2164 = vst.msk [vmem:[%s442 + $0x68] sm:$0xff] %vm703, %v2132
      %2165 = vst.msk [vmem:[%s442 + $0x70] sm:$0xff] %vm703, %v2133
      %2166 = vst.msk [vmem:[%s442 + $0x78] sm:$0xff] %vm703, %v2134
      %2167 = vst.msk [vmem:[%s442 + $0x80] sm:$0xff] %vm703, %v2135
      %2168 = vst.msk [vmem:[%s442 + $0x88] sm:$0xff] %vm703, %v2136
      %2169 = vst.msk [vmem:[%s442 + $0x90] sm:$0xff] %vm703, %v2137
      %2170 = vst.msk [vmem:[%s442 + $0x98] sm:$0xff] %vm703, %v2138
      %2171 = vst.msk [vmem:[%s442 + $0xa0] sm:$0xff] %vm703, %v2139
      %2172 = vst.msk [vmem:[%s442 + $0xa8] sm:$0xff] %vm703, %v2140
      %2173 = vst.msk [vmem:[%s442 + $0xb0] sm:$0xff] %vm703, %v2141
      %2174 = vst.msk [vmem:[%s442 + $0xb8] sm:$0xff] %vm703, %v2142
      %2175 = vst.msk [vmem:[%s442 + $0xc0] sm:$0xff] %vm703, %v2143
      %2176 = vst.msk [vmem:[%s442 + $0xc8] sm:$0xff] %vm703, %v2144
      %2177 = vst.msk [vmem:[%s442 + $0xd0] sm:$0xff] %vm703, %v2145
      %2178 = vst.msk [vmem:[%s442 + $0xd8] sm:$0xff] %vm703, %v2146
      %2179 = vst.msk [vmem:[%s442 + $0xe0] sm:$0xff] %vm703, %v2147
      %2180 = vst.msk [vmem:[%s442 + $0xe8] sm:$0xff] %vm703, %v2148
      %2181 = vst.msk [vmem:[%s442 + $0xf0] sm:$0xff] %vm703, %v2149
      %2182 = vst.msk [vmem:[%s442 + $0xf8] sm:$0xff] %vm703, %v2150
      %s2183 = smul.u32 32, %s25
      %p2184 = scmp.lt.s32.totalorder %s24, 1
      %s2185 = scalar_select %p2184, %s24, 1
      %p2186 = scmp.lt.s32.totalorder %s2183, 31
      %s2187 = scalar_select %p2186, %s2183, 31
      %s2188 = smul.addr %s2185, 32
      %s2189 = sadd.s32 %s2187, %s2188
      %s2190 = smul.addr %s2189, 8
      %s2191 = scalar_lea.vmem %s9, %s2190
      // Predicated region
      $region57: #{hab_forward.7} parent=55 // pred_check
        %p2192 = pneg %p262
      $region58: #{hab_forward.7} parent=55 // pred_check_branch
        %2194 = sbr.rel (%p2192) target = $region60
      $region59: #{hab_forward.7} parent=55 // pred_region
        %s2195 = smul.u32 32, %s25
      $region60: #{hab_forward.7} parent=55 // pred_fallthru
        _
    $region56: #{hab_forward.7} parent=5 // pred_fallthru
      _
    %p2196 = scmp.le.s32.totalorder 2, %s15
    // Predicated region
    $region61: #{hab_forward.7} parent=5 // pred_check
      %p2197 = pneg %p2196
    $region62: #{hab_forward.7} parent=5 // pred_check_branch
      %2199 = sbr.rel (%p2197) target = $region64
    $region63: #{hab_forward.7} parent=5 // pred_region
      %s2200 = ssub.s32 %s15, 2
      // Predicated region
      $region65: #{hab_forward.7} parent=63 // pred_check
        %p2201 = pneg %p268
      $region66: #{hab_forward.7} parent=63 // pred_check_branch
        %2203 = sbr.rel (%p2201) target = $region68
      $region67: #{hab_forward.7} parent=63 // pred_region
        %s2204 = smul.u32 32, %s27
        %p2205 = scmp.lt.s32.totalorder %s26, 1
        %s2206 = scalar_select %p2205, %s26, 1
        %p2207 = scmp.lt.s32.totalorder %s2204, 31
        %s2208 = scalar_select %p2207, %s2204, 31
        %s2209 = smul.addr %s2206, 32
        %s2210 = sadd.s32 %s2208, %s2209
        %s2211 = smul.addr %s2210, 8
        %s2212 = scalar_lea.vmem %s9, %s2211
      $region68: #{hab_forward.7} parent=63 // pred_fallthru
        _
    $region64: #{hab_forward.7} parent=5 // pred_fallthru
      _
  $region6: #{hab_forward.7} parent=0 // loop_footer
    %s19 = sadd.s32 1, %s15
  $region7: #{hab_forward.7} parent=0 // loop_footer_branch
    %14 = sbr.rel target = $region3
  $region8: #{hab_forward.7} parent=0 // loop_exit
    _

// kernel: hab_forward.5
$region0: #{hab_forward.5}
  #allocation0 [shape = 'u32[]', space=smem, size = 0x4, offset = 0x4, fixed_abs, tag = 'smem constant byte address 0x4 - core index']
  #allocation1 [shape = 'u32[72,128]{1,0:T(1,128)}', space=vmem, size = 0x9000, scoped, tag = 'internal scratch']
  %s0 = inlined_call_operand.vmem [shape: bf16[2,16,16,32], index: 0, kind: input, shape index: {}]
  %s1 = inlined_call_operand.vmem [shape: bf16[288,16], index: 1, kind: input, shape index: {}]
  %s2 = inlined_call_operand.vmem [shape: f32[1,16], index: 2, kind: input, shape index: {}]
  %s3 = inlined_call_operand.vmem [shape: bf16[144,32], index: 3, kind: input, shape index: {}]
  %s4 = inlined_call_operand.vmem [shape: f32[1,32], index: 4, kind: input, shape index: {}]
  %s5 = inlined_call_operand.vmem [shape: f32[32,4], index: 5, kind: input, shape index: {}]
  %s6 = inlined_call_operand.vmem [shape: f32[1,4], index: 6, kind: input, shape index: {}]
  %s7 = inlined_call_operand.vmem [shape: f32[4,32], index: 7, kind: input, shape index: {}]
  %s8 = inlined_call_operand.vmem [shape: f32[1,32], index: 8, kind: input, shape index: {}]
  %s9 = inlined_call_operand.vmem [shape: bf16[2,256,32], index: 9, kind: output, shape index: {}]
  %s10 = sld [smem:[#allocation0]]
  $region69: #{hab_forward.5} parent=0
    _
  %s12 = ssub.s32 1, %s10
  %s13 = scalar_select 0, %s12, %s10
  loop: start=0, step=1, limit=4
  $region2: #{hab_forward.5} parent=0 // loop_pre_header
    _
  $region3: #{hab_forward.5} parent=0 // loop_header
    %s15 = sphi 0, %s19
    %p16 = scmp.ge.s32.totalorder %s15, 4
    %s25 = sphi 0, %s27
    %s28 = sphi 0, %s25
    %s29 = sphi 0, %s28
    %s45 = sphi 0, %s29
    %s49 = sphi 0, %s49
    %s51 = sphi 0, %s49
    %s52 = sphi 0, %s51
    %s66 = sphi 0, %s52
    %s70 = sphi 0, %s70
    %s72 = sphi 0, %s70
    %s73 = sphi 0, %s72
    %s87 = sphi 0, %s73
    %s91 = sphi 0, %s91
    %s93 = sphi 0, %s91
    %s94 = sphi 0, %s93
    %s108 = sphi 0, %s94
    %s112 = sphi 0, %s112
    %s114 = sphi 0, %s112
    %s115 = sphi 0, %s114
    %s129 = sphi 0, %s115
    %s133 = sphi 0, %s133
    %s135 = sphi 0, %s133
    %s136 = sphi 0, %s135
    %s150 = sphi 0, %s136
    %s154 = sphi 0, %s154
    %s156 = sphi 0, %s154
    %s157 = sphi 0, %s156
    %s171 = sphi 0, %s157
    %s175 = sphi 0, %s175
    %s177 = sphi 0, %s175
    %s178 = sphi 0, %s177
    %s192 = sphi 0, %s178
    %s196 = sphi 0, %s196
    %s198 = sphi 0, %s196
    %s199 = sphi 0, %s198
    %s213 = sphi 0, %s199
    %s219 = sphi 0, %s221
    %s222 = sphi 0, %s219
    %s223 = sphi 0, %s222
    %s239 = sphi 0, %s223
  $region4: #{hab_forward.5} parent=0 // loop_header_branch
    %18 = sbr.rel (%p16) target = $region8
  $region5: #{hab_forward.5} parent=0 // loop_body
    %s20 = ssub.s32 %s15, 1
    %s21 = ssub.s32 %s15, 2
    %s22 = sadd.s32 %s15, 1
    %s23 = ssub.s32 %s15, %s22
    %p24 = scmp.eq.s32.totalorder %s23, 0
    %s26 = sadd.s32 %s25, 1
    %s27 = scalar_select %p24, %s25, %s26
    %p30 = pneg %p24
    %p31 = scmp.eq.s32.totalorder %s15, 1
    %p32 = por %p30, %p31
    %p33 = scmp.ne.s32.totalorder %s25, %s28
    %p34 = scmp.eq.s32.totalorder %s15, 0
    %p35 = por %p33, %p34
    %p36 = scmp.ne.s32.totalorder %s25, %s28
    %p37 = scmp.eq.s32.totalorder %s20, 1
    %p38 = por %p36, %p37
    %p39 = scmp.ne.s32.totalorder %s28, %s29
    %p40 = scmp.eq.s32.totalorder %s20, 0
    %p41 = por %p39, %p40
    %p42 = scmp.ne.s32.totalorder %s28, %s29
    %p43 = scmp.eq.s32.totalorder %s21, 1
    %p44 = por %p42, %p43
    %p46 = scmp.ne.s32.totalorder %s29, %s45
    %p47 = scmp.eq.s32.totalorder %s21, 0
    %p48 = por %p46, %p47
    %s50 = sadd.s32 %s49, 1
    %p53 = scmp.eq.s32.totalorder %s15, 1
    %p54 = scmp.ne.s32.totalorder %s49, %s51
    %p55 = scmp.eq.s32.totalorder %s15, 0
    %p56 = por %p54, %p55
    %p57 = scmp.ne.s32.totalorder %s49, %s51
    %p58 = scmp.eq.s32.totalorder %s20, 1
    %p59 = por %p57, %p58
    %p60 = scmp.ne.s32.totalorder %s51, %s52
    %p61 = scmp.eq.s32.totalorder %s20, 0
    %p62 = por %p60, %p61
    %p63 = scmp.ne.s32.totalorder %s51, %s52
    %p64 = scmp.eq.s32.totalorder %s21, 1
    %p65 = por %p63, %p64
    %p67 = scmp.ne.s32.totalorder %s52, %s66
    %p68 = scmp.eq.s32.totalorder %s21, 0
    %p69 = por %p67, %p68
    %s71 = sadd.s32 %s70, 1
    %p74 = scmp.eq.s32.totalorder %s15, 1
    %p75 = scmp.ne.s32.totalorder %s70, %s72
    %p76 = scmp.eq.s32.totalorder %s15, 0
    %p77 = por %p75, %p76
    %p78 = scmp.ne.s32.totalorder %s70, %s72
    %p79 = scmp.eq.s32.totalorder %s20, 1
    %p80 = por %p78, %p79
    %p81 = scmp.ne.s32.totalorder %s72, %s73
    %p82 = scmp.eq.s32.totalorder %s20, 0
    %p83 = por %p81, %p82
    %p84 = scmp.ne.s32.totalorder %s72, %s73
    %p85 = scmp.eq.s32.totalorder %s21, 1
    %p86 = por %p84, %p85
    %p88 = scmp.ne.s32.totalorder %s73, %s87
    %p89 = scmp.eq.s32.totalorder %s21, 0
    %p90 = por %p88, %p89
    %s92 = sadd.s32 %s91, 1
    %p95 = scmp.eq.s32.totalorder %s15, 1
    %p96 = scmp.ne.s32.totalorder %s91, %s93
    %p97 = scmp.eq.s32.totalorder %s15, 0
    %p98 = por %p96, %p97
    %p99 = scmp.ne.s32.totalorder %s91, %s93
    %p100 = scmp.eq.s32.totalorder %s20, 1
    %p101 = por %p99, %p100
    %p102 = scmp.ne.s32.totalorder %s93, %s94
    %p103 = scmp.eq.s32.totalorder %s20, 0
    %p104 = por %p102, %p103
    %p105 = scmp.ne.s32.totalorder %s93, %s94
    %p106 = scmp.eq.s32.totalorder %s21, 1
    %p107 = por %p105, %p106
    %p109 = scmp.ne.s32.totalorder %s94, %s108
    %p110 = scmp.eq.s32.totalorder %s21, 0
    %p111 = por %p109, %p110
    %s113 = sadd.s32 %s112, 1
    %p116 = scmp.eq.s32.totalorder %s15, 1
    %p117 = scmp.ne.s32.totalorder %s112, %s114
    %p118 = scmp.eq.s32.totalorder %s15, 0
    %p119 = por %p117, %p118
    %p120 = scmp.ne.s32.totalorder %s112, %s114
    %p121 = scmp.eq.s32.totalorder %s20, 1
    %p122 = por %p120, %p121
    %p123 = scmp.ne.s32.totalorder %s114, %s115
    %p124 = scmp.eq.s32.totalorder %s20, 0
    %p125 = por %p123, %p124
    %p126 = scmp.ne.s32.totalorder %s114, %s115
    %p127 = scmp.eq.s32.totalorder %s21, 1
    %p128 = por %p126, %p127
    %p130 = scmp.ne.s32.totalorder %s115, %s129
    %p131 = scmp.eq.s32.totalorder %s21, 0
    %p132 = por %p130, %p131
    %s134 = sadd.s32 %s133, 1
    %p137 = scmp.eq.s32.totalorder %s15, 1
    %p138 = scmp.ne.s32.totalorder %s133, %s135
    %p139 = scmp.eq.s32.totalorder %s15, 0
    %p140 = por %p138, %p139
    %p141 = scmp.ne.s32.totalorder %s133, %s135
    %p142 = scmp.eq.s32.totalorder %s20, 1
    %p143 = por %p141, %p142
    %p144 = scmp.ne.s32.totalorder %s135, %s136
    %p145 = scmp.eq.s32.totalorder %s20, 0
    %p146 = por %p144, %p145
    %p147 = scmp.ne.s32.totalorder %s135, %s136
    %p148 = scmp.eq.s32.totalorder %s21, 1
    %p149 = por %p147, %p148
    %p151 = scmp.ne.s32.totalorder %s136, %s150
    %p152 = scmp.eq.s32.totalorder %s21, 0
    %p153 = por %p151, %p152
    %s155 = sadd.s32 %s154, 1
    %p158 = scmp.eq.s32.totalorder %s15, 1
    %p159 = scmp.ne.s32.totalorder %s154, %s156
    %p160 = scmp.eq.s32.totalorder %s15, 0
    %p161 = por %p159, %p160
    %p162 = scmp.ne.s32.totalorder %s154, %s156
    %p163 = scmp.eq.s32.totalorder %s20, 1
    %p164 = por %p162, %p163
    %p165 = scmp.ne.s32.totalorder %s156, %s157
    %p166 = scmp.eq.s32.totalorder %s20, 0
    %p167 = por %p165, %p166
    %p168 = scmp.ne.s32.totalorder %s156, %s157
    %p169 = scmp.eq.s32.totalorder %s21, 1
    %p170 = por %p168, %p169
    %p172 = scmp.ne.s32.totalorder %s157, %s171
    %p173 = scmp.eq.s32.totalorder %s21, 0
    %p174 = por %p172, %p173
    %s176 = sadd.s32 %s175, 1
    %p179 = scmp.eq.s32.totalorder %s15, 1
    %p180 = scmp.ne.s32.totalorder %s175, %s177
    %p181 = scmp.eq.s32.totalorder %s15, 0
    %p182 = por %p180, %p181
    %p183 = scmp.ne.s32.totalorder %s175, %s177
    %p184 = scmp.eq.s32.totalorder %s20, 1
    %p185 = por %p183, %p184
    %p186 = scmp.ne.s32.totalorder %s177, %s178
    %p187 = scmp.eq.s32.totalorder %s20, 0
    %p188 = por %p186, %p187
    %p189 = scmp.ne.s32.totalorder %s177, %s178
    %p190 = scmp.eq.s32.totalorder %s21, 1
    %p191 = por %p189, %p190
    %p193 = scmp.ne.s32.totalorder %s178, %s192
    %p194 = scmp.eq.s32.totalorder %s21, 0
    %p195 = por %p193, %p194
    %s197 = sadd.s32 %s196, 1
    %p200 = scmp.eq.s32.totalorder %s15, 1
    %p201 = scmp.ne.s32.totalorder %s196, %s198
    %p202 = scmp.eq.s32.totalorder %s15, 0
    %p203 = por %p201, %p202
    %p204 = scmp.ne.s32.totalorder %s196, %s198
    %p205 = scmp.eq.s32.totalorder %s20, 1
    %p206 = por %p204, %p205
    %p207 = scmp.ne.s32.totalorder %s198, %s199
    %p208 = scmp.eq.s32.totalorder %s20, 0
    %p209 = por %p207, %p208
    %p210 = scmp.ne.s32.totalorder %s198, %s199
    %p211 = scmp.eq.s32.totalorder %s21, 1
    %p212 = por %p210, %p211
    %p214 = scmp.ne.s32.totalorder %s199, %s213
    %p215 = scmp.eq.s32.totalorder %s21, 0
    %p216 = por %p214, %p215
    %s217 = ssub.s32 %s15, %s22
    %p218 = scmp.eq.s32.totalorder %s217, 0
    %s220 = sadd.s32 %s219, 1
    %s221 = scalar_select %p218, %s219, %s220
    %p224 = pneg %p218
    %p225 = scmp.eq.s32.totalorder %s15, 1
    %p226 = por %p224, %p225
    %p227 = scmp.ne.s32.totalorder %s219, %s222
    %p228 = scmp.eq.s32.totalorder %s15, 0
    %p229 = por %p227, %p228
    %p230 = scmp.ne.s32.totalorder %s219, %s222
    %p231 = scmp.eq.s32.totalorder %s20, 1
    %p232 = por %p230, %p231
    %p233 = scmp.ne.s32.totalorder %s222, %s223
    %p234 = scmp.eq.s32.totalorder %s20, 0
    %p235 = por %p233, %p234
    %p236 = scmp.ne.s32.totalorder %s222, %s223
    %p237 = scmp.eq.s32.totalorder %s21, 1
    %p238 = por %p236, %p237
    %p240 = scmp.ne.s32.totalorder %s223, %s239
    %p241 = scmp.eq.s32.totalorder %s21, 0
    %p242 = por %p240, %p241
    %p243 = scmp.le.s32.totalorder 1, %s15
    %p244 = scmp.lt.s32.totalorder %s15, 3
    %p245 = pnand %p243, %p244
    %p246 = pneg %p245
    // Predicated region
    $region9: #{hab_forward.5} parent=5 // pred_check
      _
    $region10: #{hab_forward.5} parent=5 // pred_check_branch
      %248 = sbr.rel (%p245) target = $region12
    $region11: #{hab_forward.5} parent=5 // pred_region
      %s249 = ssub.s32 %s15, 1
      // Predicated region
      $region13: #{hab_forward.5} parent=11 // pred_check
        %p250 = pneg %p62
      $region14: #{hab_forward.5} parent=11 // pred_check_branch
        %252 = sbr.rel (%p250) target = $region16
      $region15: #{hab_forward.5} parent=11 // pred_region
        _
      $region16: #{hab_forward.5} parent=11 // pred_fallthru
        _
      // Predicated region
      $region17: #{hab_forward.5} parent=11 // pred_check
        %p253 = pneg %p83
      $region18: #{hab_forward.5} parent=11 // pred_check_branch
        %255 = sbr.rel (%p253) target = $region20
      $region19: #{hab_forward.5} parent=11 // pred_region
        _
      $region20: #{hab_forward.5} parent=11 // pred_fallthru
        _
      // Predicated region
      $region21: #{hab_forward.5} parent=11 // pred_check
        %p256 = pneg %p104
      $region22: #{hab_forward.5} parent=11 // pred_check_branch
        %258 = sbr.rel (%p256) target = $region24
      $region23: #{hab_forward.5} parent=11 // pred_region
        _
      $region24: #{hab_forward.5} parent=11 // pred_fallthru
        _
      // Predicated region
      $region25: #{hab_forward.5} parent=11 // pred_check
        %p259 = pneg %p125
      $region26: #{hab_forward.5} parent=11 // pred_check_branch
        %261 = sbr.rel (%p259) target = $region28
      $region27: #{hab_forward.5} parent=11 // pred_region
        _
      $region28: #{hab_forward.5} parent=11 // pred_fallthru
        _
      // Predicated region
      $region29: #{hab_forward.5} parent=11 // pred_check
        %p262 = pneg %p146
      $region30: #{hab_forward.5} parent=11 // pred_check_branch
        %264 = sbr.rel (%p262) target = $region32
      $region31: #{hab_forward.5} parent=11 // pred_region
        _
      $region32: #{hab_forward.5} parent=11 // pred_fallthru
        _
      // Predicated region
      $region33: #{hab_forward.5} parent=11 // pred_check
        %p265 = pneg %p167
      $region34: #{hab_forward.5} parent=11 // pred_check_branch
        %267 = sbr.rel (%p265) target = $region36
      $region35: #{hab_forward.5} parent=11 // pred_region
        _
      $region36: #{hab_forward.5} parent=11 // pred_fallthru
        _
      // Predicated region
      $region37: #{hab_forward.5} parent=11 // pred_check
        %p268 = pneg %p188
      $region38: #{hab_forward.5} parent=11 // pred_check_branch
        %270 = sbr.rel (%p268) target = $region40
      $region39: #{hab_forward.5} parent=11 // pred_region
        _
      $region40: #{hab_forward.5} parent=11 // pred_fallthru
        _
      // Predicated region
      $region41: #{hab_forward.5} parent=11 // pred_check
        %p271 = pneg %p209
      $region42: #{hab_forward.5} parent=11 // pred_check_branch
        %273 = sbr.rel (%p271) target = $region44
      $region43: #{hab_forward.5} parent=11 // pred_region
        _
      $region44: #{hab_forward.5} parent=11 // pred_fallthru
        _
    $region12: #{hab_forward.5} parent=5 // pred_fallthru
      _
    %p274 = scmp.lt.s32.totalorder %s15, 2
    // Predicated region
    $region45: #{hab_forward.5} parent=5 // pred_check
      %p275 = pneg %p274
    $region46: #{hab_forward.5} parent=5 // pred_check_branch
      %277 = sbr.rel (%p275) target = $region48
    $region47: #{hab_forward.5} parent=5 // pred_region
      // Predicated region
      $region49: #{hab_forward.5} parent=47 // pred_check
        %p278 = pneg %p35
      $region50: #{hab_forward.5} parent=47 // pred_check_branch
        %280 = sbr.rel (%p278) target = $region52
      $region51: #{hab_forward.5} parent=47 // pred_region
        %p281 = scmp.lt.s32.totalorder %s15, 1
        %s282 = scalar_select %p281, %s15, 1
        %s283 = smul.addr %s282, 32
        %s284 = smul.addr %s283, 4
        %s285 = scalar_lea.vmem %s0, %s284
      $region52: #{hab_forward.5} parent=47 // pred_fallthru
        _
    $region48: #{hab_forward.5} parent=5 // pred_fallthru
      _
    %p286 = scmp.le.s32.totalorder 1, %s15
    %p287 = scmp.lt.s32.totalorder %s15, 3
    %p288 = pnand %p286, %p287
    %p289 = pneg %p288
    // Predicated region
    $region53: #{hab_forward.5} parent=5 // pred_check
      _
    $region54: #{hab_forward.5} parent=5 // pred_check_branch
      %291 = sbr.rel (%p288) target = $region56
    $region55: #{hab_forward.5} parent=5 // pred_region
      %s292 = ssub.s32 %s15, 1
      %p293 = scmp.lt.s32.totalorder %s20, 1
      %s294 = scalar_select %p293, %s20, 1
      %s295 = smul.addr %s294, 32
      %s296 = smul.addr %s295, 4
      %s297 = scalar_lea.vmem %s0, %s296
      %p298 = pneg %p41
      %p299 = pneg %p38
      %p300 = pneg %p62
      %p301 = pneg %p59
      %p302 = pneg %p83
      %p303 = pneg %p80
      %p304 = pneg %p104
      %p305 = pneg %p101
      %p306 = pneg %p125
      %p307 = pneg %p122
      %p308 = pneg %p146
      %p309 = pneg %p143
      %p310 = pneg %p167
      %p311 = pneg %p164
      %p312 = pneg %p188
      %p313 = pneg %p185
      %p314 = pneg %p209
      %p315 = pneg %p206
      %p316 = pneg %p235
      %p317 = pneg %p232
      %p318 = scmp.lt.s32.totalorder %s20, 1
      %s319 = scalar_select %p318, %s20, 1
      %s320 = smul.addr %s319, 32
      %s321 = smul.addr %s320, 4
      %s322 = scalar_lea.vmem %s9, %s321
      %p323 = scmp.lt.s32.totalorder %s20, 1
      %s324 = scalar_select %p323, %s20, 1
      %s325 = smul.addr %s324, 32
      %s326 = smul.addr %s325, 4
      %s327 = scalar_lea.vmem %s0, %s326
      %p328 = scmp.lt.s32.totalorder %s20, 1
      %s329 = scalar_select %p328, %s20, 1
      %s330 = smul.addr %s329, 32
      %s331 = smul.addr %s330, 4
      %s332 = scalar_lea.vmem %s9, %s331
      %v334 = vld [vmem:[%s327] sm:$0xf]
      %v335 = vld [vmem:[%s327 + $0x4] sm:$0xf]
      %v336 = vld [vmem:[%s327 + $0x8] sm:$0xf]
      %v337 = vld [vmem:[%s327 + $0xc] sm:$0xf]
      %v338 = vld [vmem:[%s327 + $0x10] sm:$0xf]
      %v339 = vld [vmem:[%s327 + $0x14] sm:$0xf]
      %v340 = vld [vmem:[%s327 + $0x18] sm:$0xf]
      %v341 = vld [vmem:[%s327 + $0x1c] sm:$0xf]
      %v342 = vld [vmem:[%s327 + $0x20] sm:$0xf]
      %v343 = vld [vmem:[%s327 + $0x24] sm:$0xf]
      %v344 = vld [vmem:[%s327 + $0x28] sm:$0xf]
      %v345 = vld [vmem:[%s327 + $0x2c] sm:$0xf]
      %v346 = vld [vmem:[%s327 + $0x30] sm:$0xf]
      %v347 = vld [vmem:[%s327 + $0x34] sm:$0xf]
      %v348 = vld [vmem:[%s327 + $0x38] sm:$0xf]
      %v349 = vld [vmem:[%s327 + $0x3c] sm:$0xf]
      %v350 = vld [vmem:[%s327 + $0x40] sm:$0xf]
      %v351 = vld [vmem:[%s327 + $0x44] sm:$0xf]
      %v352 = vld [vmem:[%s327 + $0x48] sm:$0xf]
      %v353 = vld [vmem:[%s327 + $0x4c] sm:$0xf]
      %v354 = vld [vmem:[%s327 + $0x50] sm:$0xf]
      %v355 = vld [vmem:[%s327 + $0x54] sm:$0xf]
      %v356 = vld [vmem:[%s327 + $0x58] sm:$0xf]
      %v357 = vld [vmem:[%s327 + $0x5c] sm:$0xf]
      %v358 = vld [vmem:[%s327 + $0x60] sm:$0xf]
      %v359 = vld [vmem:[%s327 + $0x64] sm:$0xf]
      %v360 = vld [vmem:[%s327 + $0x68] sm:$0xf]
      %v361 = vld [vmem:[%s327 + $0x6c] sm:$0xf]
      %v362 = vld [vmem:[%s327 + $0x70] sm:$0xf]
      %v363 = vld [vmem:[%s327 + $0x74] sm:$0xf]
      %v364 = vld [vmem:[%s327 + $0x78] sm:$0xf]
      %v365 = vld [vmem:[%s327 + $0x7c] sm:$0xf]
      %v398 = vunpack.c.l.b16 %v334
      %v399 = vunpack.c.l.b16 %v335
      %v400 = vunpack.c.l.b16 %v336
      %v401 = vunpack.c.l.b16 %v337
      %v402 = vunpack.c.l.b16 %v338
      %v403 = vunpack.c.l.b16 %v339
      %v404 = vunpack.c.l.b16 %v340
      %v405 = vunpack.c.l.b16 %v341
      %v406 = vunpack.c.l.b16 %v342
      %v407 = vunpack.c.l.b16 %v343
      %v408 = vunpack.c.l.b16 %v344
      %v409 = vunpack.c.l.b16 %v345
      %v410 = vunpack.c.l.b16 %v346
      %v411 = vunpack.c.l.b16 %v347
      %v412 = vunpack.c.l.b16 %v348
      %v413 = vunpack.c.l.b16 %v349
      %v414 = vunpack.c.l.b16 %v350
      %v415 = vunpack.c.l.b16 %v351
      %v416 = vunpack.c.l.b16 %v352
      %v417 = vunpack.c.l.b16 %v353
      %v418 = vunpack.c.l.b16 %v354
      %v419 = vunpack.c.l.b16 %v355
      %v420 = vunpack.c.l.b16 %v356
      %v421 = vunpack.c.l.b16 %v357
      %v422 = vunpack.c.l.b16 %v358
      %v423 = vunpack.c.l.b16 %v359
      %v424 = vunpack.c.l.b16 %v360
      %v425 = vunpack.c.l.b16 %v361
      %v426 = vunpack.c.l.b16 %v362
      %v427 = vunpack.c.l.b16 %v363
      %v428 = vunpack.c.l.b16 %v364
      %v429 = vunpack.c.l.b16 %v365
      %v430 = vpack.c.b16 %v399, %v398
      %v431 = vpack.c.b16 %v401, %v400
      %v432 = vpack.c.b16 %v403, %v402
      %v433 = vpack.c.b16 %v405, %v404
      %v434 = vpack.c.b16 %v407, %v406
      %v435 = vpack.c.b16 %v409, %v408
      %v436 = vpack.c.b16 %v411, %v410
      %v437 = vpack.c.b16 %v413, %v412
      %v438 = vpack.c.b16 %v415, %v414
      %v439 = vpack.c.b16 %v417, %v416
      %v440 = vpack.c.b16 %v419, %v418
      %v441 = vpack.c.b16 %v421, %v420
      %v442 = vpack.c.b16 %v423, %v422
      %v443 = vpack.c.b16 %v425, %v424
      %v444 = vpack.c.b16 %v427, %v426
      %v445 = vpack.c.b16 %v429, %v428
      %v447 = vshrl.u32 0, 16
      %v449 = vrot.slane %v447, 7
      %v450 = vshll.u32 0, 16
      %v452 = vor.u32 %v449, %v450
      %v454 = vshrl.u32 %v430, 16
      %v456 = vrot.slane %v454, 7
      %v457 = vshll.u32 %v430, 16
      %v459 = vor.u32 %v456, %v457
      %v461 = vshrl.u32 %v431, 16
      %v463 = vrot.slane %v461, 7
      %v464 = vshll.u32 %v431, 16
      %v466 = vor.u32 %v463, %v464
      %v468 = vshrl.u32 %v432, 16
      %v470 = vrot.slane %v468, 7
      %v471 = vshll.u32 %v432, 16
      %v473 = vor.u32 %v470, %v471
      %v475 = vshrl.u32 %v433, 16
      %v477 = vrot.slane %v475, 7
      %v478 = vshll.u32 %v433, 16
      %v480 = vor.u32 %v477, %v478
      %v482 = vshrl.u32 %v434, 16
      %v484 = vrot.slane %v482, 7
      %v485 = vshll.u32 %v434, 16
      %v487 = vor.u32 %v484, %v485
      %v489 = vshrl.u32 %v435, 16
      %v491 = vrot.slane %v489, 7
      %v492 = vshll.u32 %v435, 16
      %v494 = vor.u32 %v491, %v492
      %v496 = vshrl.u32 %v436, 16
      %v498 = vrot.slane %v496, 7
      %v499 = vshll.u32 %v436, 16
      %v501 = vor.u32 %v498, %v499
      %v503 = vshrl.u32 %v437, 16
      %v505 = vrot.slane %v503, 7
      %v506 = vshll.u32 %v437, 16
      %v508 = vor.u32 %v505, %v506
      %v510 = vshrl.u32 %v438, 16
      %v512 = vrot.slane %v510, 7
      %v513 = vshll.u32 %v438, 16
      %v515 = vor.u32 %v512, %v513
      %v517 = vshrl.u32 %v439, 16
      %v519 = vrot.slane %v517, 7
      %v520 = vshll.u32 %v439, 16
      %v522 = vor.u32 %v519, %v520
      %v524 = vshrl.u32 %v440, 16
      %v526 = vrot.slane %v524, 7
      %v527 = vshll.u32 %v440, 16
      %v529 = vor.u32 %v526, %v527
      %v531 = vshrl.u32 %v441, 16
      %v533 = vrot.slane %v531, 7
      %v534 = vshll.u32 %v441, 16
      %v536 = vor.u32 %v533, %v534
      %v538 = vshrl.u32 %v442, 16
      %v540 = vrot.slane %v538, 7
      %v541 = vshll.u32 %v442, 16
      %v543 = vor.u32 %v540, %v541
      %v545 = vshrl.u32 %v443, 16
      %v547 = vrot.slane %v545, 7
      %v548 = vshll.u32 %v443, 16
      %v550 = vor.u32 %v547, %v548
      %v552 = vshrl.u32 %v444, 16
      %v554 = vrot.slane %v552, 7
      %v555 = vshll.u32 %v444, 16
      %v557 = vor.u32 %v554, %v555
      %v559 = vshrl.u32 %v445, 16
      %v561 = vrot.slane %v559, 7
      %v562 = vshll.u32 %v445, 16
      %v564 = vor.u32 %v561, %v562
      %vm599 = vcmask 1040384
      %vm600 = vsmask.f32 256
      %vm601 = vmand %vm599, %vm600
      %v602 = vsel %vm601, 0, %v452
      %v603 = vsel %vm601, 0, %v459
      %v604 = vsel %vm601, 0, %v466
      %v605 = vsel %vm601, 0, %v473
      %v606 = vsel %vm601, 0, %v480
      %v607 = vsel %vm601, 0, %v487
      %v608 = vsel %vm601, 0, %v494
      %v609 = vsel %vm601, 0, %v501
      %v610 = vsel %vm601, 0, %v508
      %v611 = vsel %vm601, 0, %v515
      %v612 = vsel %vm601, 0, %v522
      %v613 = vsel %vm601, 0, %v529
      %v614 = vsel %vm601, 0, %v536
      %v615 = vsel %vm601, 0, %v543
      %v616 = vsel %vm601, 0, %v550
      %v617 = vsel %vm601, 0, %v557
      %v618 = vsel %vm601, 0, %v564
      %v619 = vsel %vm601, %v449, 0
      %v620 = vsel %vm601, %v456, 0
      %v621 = vsel %vm601, %v463, 0
      %v622 = vsel %vm601, %v470, 0
      %v623 = vsel %vm601, %v477, 0
      %v624 = vsel %vm601, %v484, 0
      %v625 = vsel %vm601, %v491, 0
      %v626 = vsel %vm601, %v498, 0
      %v627 = vsel %vm601, %v505, 0
      %v628 = vsel %vm601, %v512, 0
      %v629 = vsel %vm601, %v519, 0
      %v630 = vsel %vm601, %v526, 0
      %v631 = vsel %vm601, %v533, 0
      %v632 = vsel %vm601, %v540, 0
      %v633 = vsel %vm601, %v547, 0
      %v634 = vsel %vm601, %v554, 0
      %v635 = vsel %vm601, %v561, 0
      %vm636 = vsmask.f32 7424
      %v638 = vshrl.u32 %v602, 16
      %v640 = vshll.u32 %v602, 16
      %v642 = vrot.slane %v640, 1
      %v643 = vor.u32 %v638, %v642
      %v645 = vshll.u32 %v619, 16
      %v647 = vrot.slane %v645, 1
      %v648 = vsel %vm636, %v643, %v647
      %v650 = vshrl.u32 %v603, 16
      %v652 = vshll.u32 %v603, 16
      %v654 = vrot.slane %v652, 1
      %v655 = vor.u32 %v650, %v654
      %v657 = vshll.u32 %v620, 16
      %v659 = vrot.slane %v657, 1
      %v660 = vsel %vm636, %v655, %v659
      %v662 = vshrl.u32 %v604, 16
      %v664 = vshll.u32 %v604, 16
      %v666 = vrot.slane %v664, 1
      %v667 = vor.u32 %v662, %v666
      %v669 = vshll.u32 %v621, 16
      %v671 = vrot.slane %v669, 1
      %v672 = vsel %vm636, %v667, %v671
      %v674 = vshrl.u32 %v605, 16
      %v676 = vshll.u32 %v605, 16
      %v678 = vrot.slane %v676, 1
      %v679 = vor.u32 %v674, %v678
      %v681 = vshll.u32 %v622, 16
      %v683 = vrot.slane %v681, 1
      %v684 = vsel %vm636, %v679, %v683
      %v686 = vshrl.u32 %v606, 16
      %v688 = vshll.u32 %v606, 16
      %v690 = vrot.slane %v688, 1
      %v691 = vor.u32 %v686, %v690
      %v693 = vshll.u32 %v623, 16
      %v695 = vrot.slane %v693, 1
      %v696 = vsel %vm636, %v691, %v695
      %v698 = vshrl.u32 %v607, 16
      %v700 = vshll.u32 %v607, 16
      %v702 = vrot.slane %v700, 1
      %v703 = vor.u32 %v698, %v702
      %v705 = vshll.u32 %v624, 16
      %v707 = vrot.slane %v705, 1
      %v708 = vsel %vm636, %v703, %v707
      %v710 = vshrl.u32 %v608, 16
      %v712 = vshll.u32 %v608, 16
      %v714 = vrot.slane %v712, 1
      %v715 = vor.u32 %v710, %v714
      %v717 = vshll.u32 %v625, 16
      %v719 = vrot.slane %v717, 1
      %v720 = vsel %vm636, %v715, %v719
      %v722 = vshrl.u32 %v609, 16
      %v724 = vshll.u32 %v609, 16
      %v726 = vrot.slane %v724, 1
      %v727 = vor.u32 %v722, %v726
      %v729 = vshll.u32 %v626, 16
      %v731 = vrot.slane %v729, 1
      %v732 = vsel %vm636, %v727, %v731
      %v734 = vshrl.u32 %v610, 16
      %v736 = vshll.u32 %v610, 16
      %v738 = vrot.slane %v736, 1
      %v739 = vor.u32 %v734, %v738
      %v741 = vshll.u32 %v627, 16
      %v743 = vrot.slane %v741, 1
      %v744 = vsel %vm636, %v739, %v743
      %v746 = vshrl.u32 %v611, 16
      %v748 = vshll.u32 %v611, 16
      %v750 = vrot.slane %v748, 1
      %v751 = vor.u32 %v746, %v750
      %v753 = vshll.u32 %v628, 16
      %v755 = vrot.slane %v753, 1
      %v756 = vsel %vm636, %v751, %v755
      %v758 = vshrl.u32 %v612, 16
      %v760 = vshll.u32 %v612, 16
      %v762 = vrot.slane %v760, 1
      %v763 = vor.u32 %v758, %v762
      %v765 = vshll.u32 %v629, 16
      %v767 = vrot.slane %v765, 1
      %v768 = vsel %vm636, %v763, %v767
      %v770 = vshrl.u32 %v613, 16
      %v772 = vshll.u32 %v613, 16
      %v774 = vrot.slane %v772, 1
      %v775 = vor.u32 %v770, %v774
      %v777 = vshll.u32 %v630, 16
      %v779 = vrot.slane %v777, 1
      %v780 = vsel %vm636, %v775, %v779
      %v782 = vshrl.u32 %v614, 16
      %v784 = vshll.u32 %v614, 16
      %v786 = vrot.slane %v784, 1
      %v787 = vor.u32 %v782, %v786
      %v789 = vshll.u32 %v631, 16
      %v791 = vrot.slane %v789, 1
      %v792 = vsel %vm636, %v787, %v791
      %v794 = vshrl.u32 %v615, 16
      %v796 = vshll.u32 %v615, 16
      %v798 = vrot.slane %v796, 1
      %v799 = vor.u32 %v794, %v798
      %v801 = vshll.u32 %v632, 16
      %v803 = vrot.slane %v801, 1
      %v804 = vsel %vm636, %v799, %v803
      %v806 = vshrl.u32 %v616, 16
      %v808 = vshll.u32 %v616, 16
      %v810 = vrot.slane %v808, 1
      %v811 = vor.u32 %v806, %v810
      %v813 = vshll.u32 %v633, 16
      %v815 = vrot.slane %v813, 1
      %v816 = vsel %vm636, %v811, %v815
      %v818 = vshrl.u32 %v617, 16
      %v820 = vshll.u32 %v617, 16
      %v822 = vrot.slane %v820, 1
      %v823 = vor.u32 %v818, %v822
      %v825 = vshll.u32 %v634, 16
      %v827 = vrot.slane %v825, 1
      %v828 = vsel %vm636, %v823, %v827
      %vm861 = vcmask 1046528
      %v862 = vrot.slane %v602, 1
      %v863 = vrot.slane %v619, 1
      %v864 = vsel %vm861, %v862, %v863
      %v865 = vrot.slane %v603, 1
      %v866 = vrot.slane %v620, 1
      %v867 = vsel %vm861, %v865, %v866
      %v868 = vrot.slane %v604, 1
      %v869 = vrot.slane %v621, 1
      %v870 = vsel %vm861, %v868, %v869
      %v871 = vrot.slane %v605, 1
      %v872 = vrot.slane %v622, 1
      %v873 = vsel %vm861, %v871, %v872
      %v874 = vrot.slane %v606, 1
      %v875 = vrot.slane %v623, 1
      %v876 = vsel %vm861, %v874, %v875
      %v877 = vrot.slane %v607, 1
      %v878 = vrot.slane %v624, 1
      %v879 = vsel %vm861, %v877, %v878
      %v880 = vrot.slane %v608, 1
      %v881 = vrot.slane %v625, 1
      %v882 = vsel %vm861, %v880, %v881
      %v883 = vrot.slane %v609, 1
      %v884 = vrot.slane %v626, 1
      %v885 = vsel %vm861, %v883, %v884
      %v886 = vrot.slane %v610, 1
      %v887 = vrot.slane %v627, 1
      %v888 = vsel %vm861, %v886, %v887
      %v889 = vrot.slane %v611, 1
      %v890 = vrot.slane %v628, 1
      %v891 = vsel %vm861, %v889, %v890
      %v892 = vrot.slane %v612, 1
      %v893 = vrot.slane %v629, 1
      %v894 = vsel %vm861, %v892, %v893
      %v895 = vrot.slane %v613, 1
      %v896 = vrot.slane %v630, 1
      %v897 = vsel %vm861, %v895, %v896
      %v898 = vrot.slane %v614, 1
      %v899 = vrot.slane %v631, 1
      %v900 = vsel %vm861, %v898, %v899
      %v901 = vrot.slane %v615, 1
      %v902 = vrot.slane %v632, 1
      %v903 = vsel %vm861, %v901, %v902
      %v904 = vrot.slane %v616, 1
      %v905 = vrot.slane %v633, 1
      %v906 = vsel %vm861, %v904, %v905
      %v907 = vrot.slane %v617, 1
      %v908 = vrot.slane %v634, 1
      %v909 = vsel %vm861, %v907, %v908
      %v911 = vshrl.u32 %v618, 16
      %v913 = vshll.u32 %v618, 16
      %v915 = vrot.slane %v913, 1
      %v916 = vor.u32 %v911, %v915
      %v918 = vshll.u32 %v635, 16
      %v920 = vrot.slane %v918, 1
      %v921 = vsel %vm636, %v916, %v920
      %v924 = vrot.slane %v618, 1
      %v925 = vrot.slane %v635, 1
      %v926 = vsel %vm861, %v924, %v925
      %927 = vrot.lane.b32.xlu0 %v648, 32
      %v928 = vpop.permute.xlu0 %927
      %929 = vrot.lane.b32.xlu0 %v660, 32
      %v930 = vpop.permute.xlu0 %929
      %931 = vrot.lane.b32.xlu0 %v672, 32
      %v932 = vpop.permute.xlu0 %931
      %933 = vrot.lane.b32.xlu0 %v684, 32
      %v934 = vpop.permute.xlu0 %933
      %935 = vrot.lane.b32.xlu0 %v696, 32
      %v936 = vpop.permute.xlu0 %935
      %937 = vrot.lane.b32.xlu0 %v708, 32
      %v938 = vpop.permute.xlu0 %937
      %939 = vrot.lane.b32.xlu0 %v720, 32
      %v940 = vpop.permute.xlu0 %939
      %941 = vrot.lane.b32.xlu0 %v732, 32
      %v942 = vpop.permute.xlu0 %941
      %943 = vrot.lane.b32.xlu0 %v744, 32
      %v944 = vpop.permute.xlu0 %943
      %945 = vrot.lane.b32.xlu0 %v756, 32
      %v946 = vpop.permute.xlu0 %945
      %947 = vrot.lane.b32.xlu0 %v768, 32
      %v948 = vpop.permute.xlu0 %947
      %949 = vrot.lane.b32.xlu0 %v780, 32
      %v950 = vpop.permute.xlu0 %949
      %951 = vrot.lane.b32.xlu0 %v792, 32
      %v952 = vpop.permute.xlu0 %951
      %953 = vrot.lane.b32.xlu0 %v804, 32
      %v954 = vpop.permute.xlu0 %953
      %955 = vrot.lane.b32.xlu0 %v816, 32
      %v956 = vpop.permute.xlu0 %955
      %957 = vrot.lane.b32.xlu0 %v828, 32
      %v958 = vpop.permute.xlu0 %957
      %959 = vrot.lane.b32.xlu0 %v864, 64
      %v960 = vpop.permute.xlu0 %959
      %961 = vrot.lane.b32.xlu0 %v867, 64
      %v962 = vpop.permute.xlu0 %961
      %963 = vrot.lane.b32.xlu0 %v870, 64
      %v964 = vpop.permute.xlu0 %963
      %965 = vrot.lane.b32.xlu0 %v873, 64
      %v966 = vpop.permute.xlu0 %965
      %967 = vrot.lane.b32.xlu0 %v876, 64
      %v968 = vpop.permute.xlu0 %967
      %969 = vrot.lane.b32.xlu0 %v879, 64
      %v970 = vpop.permute.xlu0 %969
      %971 = vrot.lane.b32.xlu0 %v882, 64
      %v972 = vpop.permute.xlu0 %971
      %973 = vrot.lane.b32.xlu0 %v885, 64
      %v974 = vpop.permute.xlu0 %973
      %975 = vrot.lane.b32.xlu0 %v888, 64
      %v976 = vpop.permute.xlu0 %975
      %977 = vrot.lane.b32.xlu0 %v891, 64
      %v978 = vpop.permute.xlu0 %977
      %979 = vrot.lane.b32.xlu0 %v894, 64
      %v980 = vpop.permute.xlu0 %979
      %981 = vrot.lane.b32.xlu0 %v897, 64
      %v982 = vpop.permute.xlu0 %981
      %983 = vrot.lane.b32.xlu0 %v900, 64
      %v984 = vpop.permute.xlu0 %983
      %985 = vrot.lane.b32.xlu0 %v903, 64
      %v986 = vpop.permute.xlu0 %985
      %987 = vrot.lane.b32.xlu0 %v906, 64
      %v988 = vpop.permute.xlu0 %987
      %989 = vrot.lane.b32.xlu0 %v909, 64
      %v990 = vpop.permute.xlu0 %989
      %991 = vrot.lane.b32.xlu0 %v603, 96
      %v992 = vpop.permute.xlu0 %991
      %993 = vrot.lane.b32.xlu0 %v604, 96
      %v994 = vpop.permute.xlu0 %993
      %995 = vrot.lane.b32.xlu0 %v605, 96
      %v996 = vpop.permute.xlu0 %995
      %997 = vrot.lane.b32.xlu0 %v606, 96
      %v998 = vpop.permute.xlu0 %997
      %999 = vrot.lane.b32.xlu0 %v607, 96
      %v1000 = vpop.permute.xlu0 %999
      %1001 = vrot.lane.b32.xlu0 %v608, 96
      %v1002 = vpop.permute.xlu0 %1001
      %1003 = vrot.lane.b32.xlu0 %v609, 96
      %v1004 = vpop.permute.xlu0 %1003
      %1005 = vrot.lane.b32.xlu0 %v610, 96
      %v1006 = vpop.permute.xlu0 %1005
      %1007 = vrot.lane.b32.xlu0 %v611, 96
      %v1008 = vpop.permute.xlu0 %1007
      %1009 = vrot.lane.b32.xlu0 %v612, 96
      %v1010 = vpop.permute.xlu0 %1009
      %1011 = vrot.lane.b32.xlu0 %v613, 96
      %v1012 = vpop.permute.xlu0 %1011
      %1013 = vrot.lane.b32.xlu0 %v614, 96
      %v1014 = vpop.permute.xlu0 %1013
      %1015 = vrot.lane.b32.xlu0 %v615, 96
      %v1016 = vpop.permute.xlu0 %1015
      %1017 = vrot.lane.b32.xlu0 %v616, 96
      %v1018 = vpop.permute.xlu0 %1017
      %1019 = vrot.lane.b32.xlu0 %v617, 96
      %v1020 = vpop.permute.xlu0 %1019
      %1021 = vrot.lane.b32.xlu0 %v618, 96
      %v1022 = vpop.permute.xlu0 %1021
      %1023 = vrot.lane.b32.xlu0 %v867, 32
      %v1024 = vpop.permute.xlu0 %1023
      %1025 = vrot.lane.b32.xlu0 %v870, 32
      %v1026 = vpop.permute.xlu0 %1025
      %1027 = vrot.lane.b32.xlu0 %v873, 32
      %v1028 = vpop.permute.xlu0 %1027
      %1029 = vrot.lane.b32.xlu0 %v876, 32
      %v1030 = vpop.permute.xlu0 %1029
      %1031 = vrot.lane.b32.xlu0 %v879, 32
      %v1032 = vpop.permute.xlu0 %1031
      %1033 = vrot.lane.b32.xlu0 %v882, 32
      %v1034 = vpop.permute.xlu0 %1033
      %1035 = vrot.lane.b32.xlu0 %v885, 32
      %v1036 = vpop.permute.xlu0 %1035
      %1037 = vrot.lane.b32.xlu0 %v888, 32
      %v1038 = vpop.permute.xlu0 %1037
      %1039 = vrot.lane.b32.xlu0 %v891, 32
      %v1040 = vpop.permute.xlu0 %1039
      %1041 = vrot.lane.b32.xlu0 %v894, 32
      %v1042 = vpop.permute.xlu0 %1041
      %1043 = vrot.lane.b32.xlu0 %v897, 32
      %v1044 = vpop.permute.xlu0 %1043
      %1045 = vrot.lane.b32.xlu0 %v900, 32
      %v1046 = vpop.permute.xlu0 %1045
      %1047 = vrot.lane.b32.xlu0 %v903, 32
      %v1048 = vpop.permute.xlu0 %1047
      %1049 = vrot.lane.b32.xlu0 %v906, 32
      %v1050 = vpop.permute.xlu0 %1049
      %1051 = vrot.lane.b32.xlu0 %v909, 32
      %v1052 = vpop.permute.xlu0 %1051
      %1053 = vrot.lane.b32.xlu0 %v926, 32
      %v1054 = vpop.permute.xlu0 %1053
      %1055 = vrot.lane.b32.xlu0 %v604, 64
      %v1056 = vpop.permute.xlu0 %1055
      %1057 = vrot.lane.b32.xlu0 %v605, 64
      %v1058 = vpop.permute.xlu0 %1057
      %1059 = vrot.lane.b32.xlu0 %v606, 64
      %v1060 = vpop.permute.xlu0 %1059
      %1061 = vrot.lane.b32.xlu0 %v607, 64
      %v1062 = vpop.permute.xlu0 %1061
      %1063 = vrot.lane.b32.xlu0 %v608, 64
      %v1064 = vpop.permute.xlu0 %1063
      %1065 = vrot.lane.b32.xlu0 %v609, 64
      %v1066 = vpop.permute.xlu0 %1065
      %1067 = vrot.lane.b32.xlu0 %v610, 64
      %v1068 = vpop.permute.xlu0 %1067
      %1069 = vrot.lane.b32.xlu0 %v611, 64
      %v1070 = vpop.permute.xlu0 %1069
      %1071 = vrot.lane.b32.xlu0 %v612, 64
      %v1072 = vpop.permute.xlu0 %1071
      %1073 = vrot.lane.b32.xlu0 %v613, 64
      %v1074 = vpop.permute.xlu0 %1073
      %1075 = vrot.lane.b32.xlu0 %v614, 64
      %v1076 = vpop.permute.xlu0 %1075
      %1077 = vrot.lane.b32.xlu0 %v615, 64
      %v1078 = vpop.permute.xlu0 %1077
      %1079 = vrot.lane.b32.xlu0 %v616, 64
      %v1080 = vpop.permute.xlu0 %1079
      %1081 = vrot.lane.b32.xlu0 %v617, 64
      %v1082 = vpop.permute.xlu0 %1081
      %1083 = vrot.lane.b32.xlu0 %v618, 64
      %v1084 = vpop.permute.xlu0 %1083
      %1085 = vrot.lane.b32.xlu0 %v602, 64
      %v1086 = vpop.permute.xlu0 %1085
      %1087 = vrot.lane.b32.xlu0 %v672, 96
      %v1088 = vpop.permute.xlu0 %1087
      %1089 = vrot.lane.b32.xlu0 %v684, 96
      %v1090 = vpop.permute.xlu0 %1089
      %1091 = vrot.lane.b32.xlu0 %v696, 96
      %v1092 = vpop.permute.xlu0 %1091
      %1093 = vrot.lane.b32.xlu0 %v708, 96
      %v1094 = vpop.permute.xlu0 %1093
      %1095 = vrot.lane.b32.xlu0 %v720, 96
      %v1096 = vpop.permute.xlu0 %1095
      %1097 = vrot.lane.b32.xlu0 %v732, 96
      %v1098 = vpop.permute.xlu0 %1097
      %1099 = vrot.lane.b32.xlu0 %v744, 96
      %v1100 = vpop.permute.xlu0 %1099
      %1101 = vrot.lane.b32.xlu0 %v756, 96
      %v1102 = vpop.permute.xlu0 %1101
      %1103 = vrot.lane.b32.xlu0 %v768, 96
      %v1104 = vpop.permute.xlu0 %1103
      %1105 = vrot.lane.b32.xlu0 %v780, 96
      %v1106 = vpop.permute.xlu0 %1105
      %1107 = vrot.lane.b32.xlu0 %v792, 96
      %v1108 = vpop.permute.xlu0 %1107
      %1109 = vrot.lane.b32.xlu0 %v804, 96
      %v1110 = vpop.permute.xlu0 %1109
      %1111 = vrot.lane.b32.xlu0 %v816, 96
      %v1112 = vpop.permute.xlu0 %1111
      %1113 = vrot.lane.b32.xlu0 %v828, 96
      %v1114 = vpop.permute.xlu0 %1113
      %1115 = vrot.lane.b32.xlu0 %v921, 96
      %v1116 = vpop.permute.xlu0 %1115
      %1117 = vrot.lane.b32.xlu0 %v648, 96
      %v1118 = vpop.permute.xlu0 %1117
      %vm1119 = vcmask 261120
      %v1121 = vsel %vm1119, %v602, %v928
      %v1123 = vsel %vm1119, %v603, %v930
      %v1125 = vsel %vm1119, %v604, %v932
      %v1127 = vsel %vm1119, %v605, %v934
      %v1129 = vsel %vm1119, %v606, %v936
      %v1131 = vsel %vm1119, %v607, %v938
      %v1133 = vsel %vm1119, %v608, %v940
      %v1135 = vsel %vm1119, %v609, %v942
      %v1137 = vsel %vm1119, %v610, %v944
      %v1139 = vsel %vm1119, %v611, %v946
      %v1141 = vsel %vm1119, %v612, %v948
      %v1143 = vsel %vm1119, %v613, %v950
      %v1145 = vsel %vm1119, %v614, %v952
      %v1147 = vsel %vm1119, %v615, %v954
      %v1149 = vsel %vm1119, %v616, %v956
      %v1151 = vsel %vm1119, %v617, %v958
      %vm1152 = vcmask 523264
      %v1154 = vsel %vm1152, %v1121, %v960
      %v1156 = vsel %vm1152, %v1123, %v962
      %v1158 = vsel %vm1152, %v1125, %v964
      %v1160 = vsel %vm1152, %v1127, %v966
      %v1162 = vsel %vm1152, %v1129, %v968
      %v1164 = vsel %vm1152, %v1131, %v970
      %v1166 = vsel %vm1152, %v1133, %v972
      %v1168 = vsel %vm1152, %v1135, %v974
      %v1170 = vsel %vm1152, %v1137, %v976
      %v1172 = vsel %vm1152, %v1139, %v978
      %v1174 = vsel %vm1152, %v1141, %v980
      %v1176 = vsel %vm1152, %v1143, %v982
      %v1178 = vsel %vm1152, %v1145, %v984
      %v1180 = vsel %vm1152, %v1147, %v986
      %v1182 = vsel %vm1152, %v1149, %v988
      %v1184 = vsel %vm1152, %v1151, %v990
      %vm1185 = vcmask 785408
      %v1187 = vsel %vm1185, %v1154, %v992
      %v1190 = vsel %vm1185, %v1156, %v994
      %v1193 = vsel %vm1185, %v1158, %v996
      %v1196 = vsel %vm1185, %v1160, %v998
      %v1199 = vsel %vm1185, %v1162, %v1000
      %v1202 = vsel %vm1185, %v1164, %v1002
      %v1205 = vsel %vm1185, %v1166, %v1004
      %v1208 = vsel %vm1185, %v1168, %v1006
      %v1211 = vsel %vm1185, %v1170, %v1008
      %v1214 = vsel %vm1185, %v1172, %v1010
      %v1217 = vsel %vm1185, %v1174, %v1012
      %v1220 = vsel %vm1185, %v1176, %v1014
      %v1223 = vsel %vm1185, %v1178, %v1016
      %v1226 = vsel %vm1185, %v1180, %v1018
      %v1229 = vsel %vm1185, %v1182, %v1020
      %v1232 = vsel %vm1185, %v1184, %v1022
      %v1236 = vsel %vm1119, %v660, %v1024
      %v1239 = vsel %vm1119, %v672, %v1026
      %v1242 = vsel %vm1119, %v684, %v1028
      %v1245 = vsel %vm1119, %v696, %v1030
      %v1248 = vsel %vm1119, %v708, %v1032
      %v1251 = vsel %vm1119, %v720, %v1034
      %v1254 = vsel %vm1119, %v732, %v1036
      %v1257 = vsel %vm1119, %v744, %v1038
      %v1260 = vsel %vm1119, %v756, %v1040
      %v1263 = vsel %vm1119, %v768, %v1042
      %v1266 = vsel %vm1119, %v780, %v1044
      %v1269 = vsel %vm1119, %v792, %v1046
      %v1272 = vsel %vm1119, %v804, %v1048
      %v1275 = vsel %vm1119, %v816, %v1050
      %v1278 = vsel %vm1119, %v828, %v1052
      %v1281 = vsel %vm1119, %v921, %v1054
      %v1283 = vsel %vm1152, %v1236, %v1056
      %v1285 = vsel %vm1152, %v1239, %v1058
      %v1287 = vsel %vm1152, %v1242, %v1060
      %v1289 = vsel %vm1152, %v1245, %v1062
      %v1291 = vsel %vm1152, %v1248, %v1064
      %v1293 = vsel %vm1152, %v1251, %v1066
      %v1295 = vsel %vm1152, %v1254, %v1068
      %v1297 = vsel %vm1152, %v1257, %v1070
      %v1299 = vsel %vm1152, %v1260, %v1072
      %v1301 = vsel %vm1152, %v1263, %v1074
      %v1303 = vsel %vm1152, %v1266, %v1076
      %v1305 = vsel %vm1152, %v1269, %v1078
      %v1307 = vsel %vm1152, %v1272, %v1080
      %v1309 = vsel %vm1152, %v1275, %v1082
      %v1311 = vsel %vm1152, %v1278, %v1084
      %v1313 = vsel %vm1152, %v1281, %v1086
      %v1315 = vsel %vm1185, %v1283, %v1088
      %v1318 = vsel %vm1185, %v1285, %v1090
      %v1321 = vsel %vm1185, %v1287, %v1092
      %v1324 = vsel %vm1185, %v1289, %v1094
      %v1327 = vsel %vm1185, %v1291, %v1096
      %v1330 = vsel %vm1185, %v1293, %v1098
      %v1333 = vsel %vm1185, %v1295, %v1100
      %v1336 = vsel %vm1185, %v1297, %v1102
      %v1339 = vsel %vm1185, %v1299, %v1104
      %v1342 = vsel %vm1185, %v1301, %v1106
      %v1345 = vsel %vm1185, %v1303, %v1108
      %v1348 = vsel %vm1185, %v1305, %v1110
      %v1351 = vsel %vm1185, %v1307, %v1112
      %v1354 = vsel %vm1185, %v1309, %v1114
      %v1357 = vsel %vm1185, %v1311, %v1116
      %v1360 = vsel %vm1185, %v1313, %v1118
      %v1362 = vld [vmem:[%s1] sm:$0xf]
      %v1363 = vld [vmem:[%s1 + $0x4] sm:$0xf]
      %v1364 = vld [vmem:[%s1 + $0x8] sm:$0xf]
      %v1365 = vld [vmem:[%s1 + $0xc] sm:$0xf]
      %v1366 = vld [vmem:[%s1 + $0x10] sm:$0xf]
      %v1367 = vld [vmem:[%s1 + $0x14] sm:$0xf]
      %v1368 = vld [vmem:[%s1 + $0x18] sm:$0xf]
      %v1369 = vld [vmem:[%s1 + $0x1c] sm:$0xf]
      %v1370 = vld [vmem:[%s1 + $0x20] sm:$0xf]
      %v1371 = vld [vmem:[%s1 + $0x24] sm:$0xf]
      %v1372 = vld [vmem:[%s1 + $0x28] sm:$0xf]
      %v1373 = vld [vmem:[%s1 + $0x2c] sm:$0xf]
      %v1374 = vld [vmem:[%s1 + $0x30] sm:$0xf]
      %v1375 = vld [vmem:[%s1 + $0x34] sm:$0xf]
      %v1376 = vld [vmem:[%s1 + $0x38] sm:$0xf]
      %v1377 = vld [vmem:[%s1 + $0x3c] sm:$0xf]
      %v1378 = vld [vmem:[%s1 + $0x40] sm:$0xf]
      %v1379 = vld [vmem:[%s1 + $0x44] sm:$0xf]
      %v1380 = vld [vmem:[%s1 + $0x48] sm:$0xf]
      %v1381 = vld [vmem:[%s1 + $0x4c] sm:$0xf]
      %v1382 = vld [vmem:[%s1 + $0x50] sm:$0xf]
      %v1383 = vld [vmem:[%s1 + $0x54] sm:$0xf]
      %v1384 = vld [vmem:[%s1 + $0x58] sm:$0xf]
      %v1385 = vld [vmem:[%s1 + $0x5c] sm:$0xf]
      %v1386 = vld [vmem:[%s1 + $0x60] sm:$0xf]
      %v1387 = vld [vmem:[%s1 + $0x64] sm:$0xf]
      %v1388 = vld [vmem:[%s1 + $0x68] sm:$0xf]
      %v1389 = vld [vmem:[%s1 + $0x6c] sm:$0xf]
      %v1390 = vld [vmem:[%s1 + $0x70] sm:$0xf]
      %v1391 = vld [vmem:[%s1 + $0x74] sm:$0xf]
      %v1392 = vld [vmem:[%s1 + $0x78] sm:$0xf]
      %v1393 = vld [vmem:[%s1 + $0x7c] sm:$0xf]
      %v1394 = vld [vmem:[%s1 + $0x80] sm:$0xf]
      %v1395 = vld [vmem:[%s1 + $0x84] sm:$0xf]
      %v1396 = vld [vmem:[%s1 + $0x88] sm:$0xf]
      %v1397 = vld [vmem:[%s1 + $0x8c] sm:$0xf]
      %v1398 = vld [vmem:[%s2] sm:$0x1]
      %v1400 = vperm.slane %v1398, 0
      %v1438 = vunpack.c.l.b16 %v1362
      %v1439 = vunpack.c.l.b16 %v1363
      %v1440 = vunpack.c.l.b16 %v1364
      %v1441 = vunpack.c.l.b16 %v1365
      %v1442 = vunpack.c.l.b16 %v1366
      %v1443 = vunpack.c.l.b16 %v1367
      %v1444 = vunpack.c.l.b16 %v1368
      %v1445 = vunpack.c.l.b16 %v1369
      %v1446 = vunpack.c.l.b16 %v1370
      %v1447 = vunpack.c.l.b16 %v1371
      %v1448 = vunpack.c.l.b16 %v1372
      %v1449 = vunpack.c.l.b16 %v1373
      %v1450 = vunpack.c.l.b16 %v1374
      %v1451 = vunpack.c.l.b16 %v1375
      %v1452 = vunpack.c.l.b16 %v1376
      %v1453 = vunpack.c.l.b16 %v1377
      %v1454 = vunpack.c.l.b16 %v1378
      %v1455 = vunpack.c.l.b16 %v1379
      %v1456 = vunpack.c.l.b16 %v1380
      %v1457 = vunpack.c.l.b16 %v1381
      %v1458 = vunpack.c.l.b16 %v1382
      %v1459 = vunpack.c.l.b16 %v1383
      %v1460 = vunpack.c.l.b16 %v1384
      %v1461 = vunpack.c.l.b16 %v1385
      %v1462 = vunpack.c.l.b16 %v1386
      %v1463 = vunpack.c.l.b16 %v1387
      %v1464 = vunpack.c.l.b16 %v1388
      %v1465 = vunpack.c.l.b16 %v1389
      %v1466 = vunpack.c.l.b16 %v1390
      %v1467 = vunpack.c.l.b16 %v1391
      %v1468 = vunpack.c.l.b16 %v1392
      %v1469 = vunpack.c.l.b16 %v1393
      %v1470 = vunpack.c.l.b16 %v1394
      %v1471 = vunpack.c.l.b16 %v1395
      %v1472 = vunpack.c.l.b16 %v1396
      %v1473 = vunpack.c.l.b16 %v1397
      %v1474 = vpack.c.b16 %v1439, %v1438
      %v1475 = vpack.c.b16 %v1441, %v1440
      %v1476 = vpack.c.b16 %v1443, %v1442
      %v1477 = vpack.c.b16 %v1445, %v1444
      %v1478 = vpack.c.b16 %v1447, %v1446
      %v1479 = vpack.c.b16 %v1449, %v1448
      %v1480 = vpack.c.b16 %v1451, %v1450
      %v1481 = vpack.c.b16 %v1453, %v1452
      %v1482 = vpack.c.b16 %v1455, %v1454
      %v1483 = vpack.c.b16 %v1457, %v1456
      %v1484 = vpack.c.b16 %v1459, %v1458
      %v1485 = vpack.c.b16 %v1461, %v1460
      %v1486 = vpack.c.b16 %v1463, %v1462
      %v1487 = vpack.c.b16 %v1465, %v1464
      %v1488 = vpack.c.b16 %v1467, %v1466
      %v1489 = vpack.c.b16 %v1469, %v1468
      %v1490 = vpack.c.b16 %v1471, %v1470
      %v1491 = vpack.c.b16 %v1473, %v1472
      %v1511 = vsel %vm1119, %v870, 0
      %v1514 = vsel %vm1119, %v873, 0
      %v1517 = vsel %vm1119, %v876, 0
      %v1520 = vsel %vm1119, %v879, 0
      %v1523 = vsel %vm1119, %v882, 0
      %v1526 = vsel %vm1119, %v885, 0
      %v1529 = vsel %vm1119, %v888, 0
      %v1532 = vsel %vm1119, %v891, 0
      %v1535 = vsel %vm1119, %v894, 0
      %v1538 = vsel %vm1119, %v897, 0
      %v1541 = vsel %vm1119, %v900, 0
      %v1544 = vsel %vm1119, %v903, 0
      %v1547 = vsel %vm1119, %v906, 0
      %v1550 = vsel %vm1119, %v909, 0
      %v1553 = vsel %vm1119, %v926, 0
      %v1556 = vsel %vm1119, %v864, 0
      %1558 = vmatpush.bf16.msra.mxu0 %v1481
      %1559 = vmatpush.bf16.msra.mxu0 %v1480
      %1560 = vmatpush.bf16.msra.mxu0 %v1479
      %1561 = vmatpush.bf16.msra.mxu0 %v1478
      %1562 = vmatpush.bf16.msra.mxu0 %v1477
      %1563 = vmatpush.bf16.msra.mxu0 %v1476
      %1564 = vmatpush.bf16.msra.mxu0 %v1475
      %1565 = vmatpush.bf16.msra.mxu0 %v1474
      %1566 = vmatmul.bf16.gmra.mxu0 %v1187
      %v1567 = vpop.f32.mrf.mxu0
      %v1568 = vadd.f32 %v1400, %v1567
      %v1569 = vpop.f32.mrf.mxu0
      %v1570 = vadd.f32 %v1400, %v1569
      %1571 = vmatmul.bf16.gmra.mxu0 %v1190
      %v1572 = vpop.f32.mrf.mxu0
      %v1573 = vadd.f32 %v1400, %v1572
      %v1574 = vpop.f32.mrf.mxu0
      %v1575 = vadd.f32 %v1400, %v1574
      %1576 = vmatmul.bf16.gmra.mxu0 %v1193
      %v1577 = vpop.f32.mrf.mxu0
      %v1578 = vadd.f32 %v1400, %v1577
      %v1579 = vpop.f32.mrf.mxu0
      %v1580 = vadd.f32 %v1400, %v1579
      %1581 = vmatmul.bf16.gmra.mxu0 %v1196
      %v1582 = vpop.f32.mrf.mxu0
      %v1583 = vadd.f32 %v1400, %v1582
      %v1584 = vpop.f32.mrf.mxu0
      %v1585 = vadd.f32 %v1400, %v1584
      %1586 = vmatmul.bf16.gmra.mxu0 %v1199
      %v1587 = vpop.f32.mrf.mxu0
      %v1588 = vadd.f32 %v1400, %v1587
      %v1589 = vpop.f32.mrf.mxu0
      %v1590 = vadd.f32 %v1400, %v1589
      %1591 = vmatmul.bf16.gmra.mxu0 %v1202
      %v1592 = vpop.f32.mrf.mxu0
      %v1593 = vadd.f32 %v1400, %v1592
      %v1594 = vpop.f32.mrf.mxu0
      %v1595 = vadd.f32 %v1400, %v1594
      %1596 = vmatmul.bf16.gmra.mxu0 %v1205
      %v1597 = vpop.f32.mrf.mxu0
      %v1598 = vadd.f32 %v1400, %v1597
      %v1599 = vpop.f32.mrf.mxu0
      %v1600 = vadd.f32 %v1400, %v1599
      %1601 = vmatmul.bf16.gmra.mxu0 %v1208
      %v1602 = vpop.f32.mrf.mxu0
      %v1603 = vadd.f32 %v1400, %v1602
      %v1604 = vpop.f32.mrf.mxu0
      %v1605 = vadd.f32 %v1400, %v1604
      %1606 = vmatmul.bf16.gmra.mxu0 %v1211
      %v1607 = vpop.f32.mrf.mxu0
      %v1608 = vadd.f32 %v1400, %v1607
      %v1609 = vpop.f32.mrf.mxu0
      %v1610 = vadd.f32 %v1400, %v1609
      %1611 = vmatmul.bf16.gmra.mxu0 %v1214
      %v1612 = vpop.f32.mrf.mxu0
      %v1613 = vadd.f32 %v1400, %v1612
      %v1614 = vpop.f32.mrf.mxu0
      %v1615 = vadd.f32 %v1400, %v1614
      %1616 = vmatmul.bf16.gmra.mxu0 %v1217
      %v1617 = vpop.f32.mrf.mxu0
      %v1618 = vadd.f32 %v1400, %v1617
      %v1619 = vpop.f32.mrf.mxu0
      %v1620 = vadd.f32 %v1400, %v1619
      %1621 = vmatmul.bf16.gmra.mxu0 %v1220
      %v1622 = vpop.f32.mrf.mxu0
      %v1623 = vadd.f32 %v1400, %v1622
      %v1624 = vpop.f32.mrf.mxu0
      %v1625 = vadd.f32 %v1400, %v1624
      %1626 = vmatmul.bf16.gmra.mxu0 %v1223
      %v1627 = vpop.f32.mrf.mxu0
      %v1628 = vadd.f32 %v1400, %v1627
      %v1629 = vpop.f32.mrf.mxu0
      %v1630 = vadd.f32 %v1400, %v1629
      %1631 = vmatmul.bf16.gmra.mxu0 %v1226
      %v1632 = vpop.f32.mrf.mxu0
      %v1633 = vadd.f32 %v1400, %v1632
      %v1634 = vpop.f32.mrf.mxu0
      %v1635 = vadd.f32 %v1400, %v1634
      %1636 = vmatmul.bf16.gmra.mxu0 %v1229
      %v1637 = vpop.f32.mrf.mxu0
      %v1638 = vadd.f32 %v1400, %v1637
      %v1639 = vpop.f32.mrf.mxu0
      %v1640 = vadd.f32 %v1400, %v1639
      %1641 = vmatmul.bf16.gmra.mxu0 %v1232
      %v1642 = vpop.f32.mrf.mxu0
      %v1643 = vadd.f32 %v1400, %v1642
      %v1644 = vpop.f32.mrf.mxu0
      %v1645 = vadd.f32 %v1400, %v1644
      %1646 = vdwg.mxu0
      %1647 = vmatpush.bf16.msra.mxu0 %v1489
      %1648 = vmatpush.bf16.msra.mxu0 %v1488
      %1649 = vmatpush.bf16.msra.mxu0 %v1487
      %1650 = vmatpush.bf16.msra.mxu0 %v1486
      %1651 = vmatpush.bf16.msra.mxu0 %v1485
      %1652 = vmatpush.bf16.msra.mxu0 %v1484
      %1653 = vmatpush.bf16.msra.mxu0 %v1483
      %1654 = vmatpush.bf16.msra.mxu0 %v1482
      %1655 = vmatmul.bf16.gmra.mxu0 %v1315
      %v1656 = vpop.f32.mrf.mxu0
      %v1657 = vadd.f32 %v1568, %v1656
      %v1658 = vpop.f32.mrf.mxu0
      %v1659 = vadd.f32 %v1570, %v1658
      %1660 = vmatmul.bf16.gmra.mxu0 %v1318
      %v1661 = vpop.f32.mrf.mxu0
      %v1662 = vadd.f32 %v1573, %v1661
      %v1663 = vpop.f32.mrf.mxu0
      %v1664 = vadd.f32 %v1575, %v1663
      %1665 = vmatmul.bf16.gmra.mxu0 %v1321
      %v1666 = vpop.f32.mrf.mxu0
      %v1667 = vadd.f32 %v1578, %v1666
      %v1668 = vpop.f32.mrf.mxu0
      %v1669 = vadd.f32 %v1580, %v1668
      %1670 = vmatmul.bf16.gmra.mxu0 %v1324
      %v1671 = vpop.f32.mrf.mxu0
      %v1672 = vadd.f32 %v1583, %v1671
      %v1673 = vpop.f32.mrf.mxu0
      %v1674 = vadd.f32 %v1585, %v1673
      %1675 = vmatmul.bf16.gmra.mxu0 %v1327
      %v1676 = vpop.f32.mrf.mxu0
      %v1677 = vadd.f32 %v1588, %v1676
      %v1678 = vpop.f32.mrf.mxu0
      %v1679 = vadd.f32 %v1590, %v1678
      %1680 = vmatmul.bf16.gmra.mxu0 %v1330
      %v1681 = vpop.f32.mrf.mxu0
      %v1682 = vadd.f32 %v1593, %v1681
      %v1683 = vpop.f32.mrf.mxu0
      %v1684 = vadd.f32 %v1595, %v1683
      %1685 = vmatmul.bf16.gmra.mxu0 %v1333
      %v1686 = vpop.f32.mrf.mxu0
      %v1687 = vadd.f32 %v1598, %v1686
      %v1688 = vpop.f32.mrf.mxu0
      %v1689 = vadd.f32 %v1600, %v1688
      %1690 = vmatmul.bf16.gmra.mxu0 %v1336
      %v1691 = vpop.f32.mrf.mxu0
      %v1692 = vadd.f32 %v1603, %v1691
      %v1693 = vpop.f32.mrf.mxu0
      %v1694 = vadd.f32 %v1605, %v1693
      %1695 = vmatmul.bf16.gmra.mxu0 %v1339
      %v1696 = vpop.f32.mrf.mxu0
      %v1697 = vadd.f32 %v1608, %v1696
      %v1698 = vpop.f32.mrf.mxu0
      %v1699 = vadd.f32 %v1610, %v1698
      %1700 = vmatmul.bf16.gmra.mxu0 %v1342
      %v1701 = vpop.f32.mrf.mxu0
      %v1702 = vadd.f32 %v1613, %v1701
      %v1703 = vpop.f32.mrf.mxu0
      %v1704 = vadd.f32 %v1615, %v1703
      %1705 = vmatmul.bf16.gmra.mxu0 %v1345
      %v1706 = vpop.f32.mrf.mxu0
      %v1707 = vadd.f32 %v1618, %v1706
      %v1708 = vpop.f32.mrf.mxu0
      %v1709 = vadd.f32 %v1620, %v1708
      %1710 = vmatmul.bf16.gmra.mxu0 %v1348
      %v1711 = vpop.f32.mrf.mxu0
      %v1712 = vadd.f32 %v1623, %v1711
      %v1713 = vpop.f32.mrf.mxu0
      %v1714 = vadd.f32 %v1625, %v1713
      %1715 = vmatmul.bf16.gmra.mxu0 %v1351
      %v1716 = vpop.f32.mrf.mxu0
      %v1717 = vadd.f32 %v1628, %v1716
      %v1718 = vpop.f32.mrf.mxu0
      %v1719 = vadd.f32 %v1630, %v1718
      %1720 = vmatmul.bf16.gmra.mxu0 %v1354
      %v1721 = vpop.f32.mrf.mxu0
      %v1722 = vadd.f32 %v1633, %v1721
      %v1723 = vpop.f32.mrf.mxu0
      %v1724 = vadd.f32 %v1635, %v1723
      %1725 = vmatmul.bf16.gmra.mxu0 %v1357
      %v1726 = vpop.f32.mrf.mxu0
      %v1727 = vadd.f32 %v1638, %v1726
      %v1728 = vpop.f32.mrf.mxu0
      %v1729 = vadd.f32 %v1640, %v1728
      %1730 = vmatmul.bf16.gmra.mxu0 %v1360
      %v1731 = vpop.f32.mrf.mxu0
      %v1732 = vadd.f32 %v1643, %v1731
      %v1733 = vpop.f32.mrf.mxu0
      %v1734 = vadd.f32 %v1645, %v1733
      %1735 = vdwg.mxu0
      %1736 = vmatpush.bf16.msra.mxu0 0
      %1737 = vmatpush.bf16.msra.mxu0 0
      %1738 = vmatpush.bf16.msra.mxu0 0
      %1739 = vmatpush.bf16.msra.mxu0 0
      %1740 = vmatpush.bf16.msra.mxu0 0
      %1741 = vmatpush.bf16.msra.mxu0 0
      %1742 = vmatpush.bf16.msra.mxu0 %v1491
      %1743 = vmatpush.bf16.msra.mxu0 %v1490
      %1744 = vmatmul.bf16.gmra.mxu0 %v1511
      %v1745 = vpop.f32.mrf.mxu0
      %v1746 = vadd.f32 %v1657, %v1745
      %v1747 = vpop.f32.mrf.mxu0
      %v1748 = vadd.f32 %v1659, %v1747
      %1749 = vmatmul.bf16.gmra.mxu0 %v1514
      %v1750 = vpop.f32.mrf.mxu0
      %v1751 = vadd.f32 %v1662, %v1750
      %v1752 = vpop.f32.mrf.mxu0
      %v1753 = vadd.f32 %v1664, %v1752
      %1754 = vmatmul.bf16.gmra.mxu0 %v1517
      %v1755 = vpop.f32.mrf.mxu0
      %v1756 = vadd.f32 %v1667, %v1755
      %v1757 = vpop.f32.mrf.mxu0
      %v1758 = vadd.f32 %v1669, %v1757
      %1759 = vmatmul.bf16.gmra.mxu0 %v1520
      %v1760 = vpop.f32.mrf.mxu0
      %v1761 = vadd.f32 %v1672, %v1760
      %v1762 = vpop.f32.mrf.mxu0
      %v1763 = vadd.f32 %v1674, %v1762
      %1764 = vmatmul.bf16.gmra.mxu0 %v1523
      %v1765 = vpop.f32.mrf.mxu0
      %v1766 = vadd.f32 %v1677, %v1765
      %v1767 = vpop.f32.mrf.mxu0
      %v1768 = vadd.f32 %v1679, %v1767
      %1769 = vmatmul.bf16.gmra.mxu0 %v1526
      %v1770 = vpop.f32.mrf.mxu0
      %v1771 = vadd.f32 %v1682, %v1770
      %v1772 = vpop.f32.mrf.mxu0
      %v1773 = vadd.f32 %v1684, %v1772
      %1774 = vmatmul.bf16.gmra.mxu0 %v1529
      %v1775 = vpop.f32.mrf.mxu0
      %v1776 = vadd.f32 %v1687, %v1775
      %v1777 = vpop.f32.mrf.mxu0
      %v1778 = vadd.f32 %v1689, %v1777
      %1779 = vmatmul.bf16.gmra.mxu0 %v1532
      %v1780 = vpop.f32.mrf.mxu0
      %v1781 = vadd.f32 %v1692, %v1780
      %v1782 = vpop.f32.mrf.mxu0
      %v1783 = vadd.f32 %v1694, %v1782
      %1784 = vmatmul.bf16.gmra.mxu0 %v1535
      %v1785 = vpop.f32.mrf.mxu0
      %v1786 = vadd.f32 %v1697, %v1785
      %v1787 = vpop.f32.mrf.mxu0
      %v1788 = vadd.f32 %v1699, %v1787
      %1789 = vmatmul.bf16.gmra.mxu0 %v1538
      %v1790 = vpop.f32.mrf.mxu0
      %v1791 = vadd.f32 %v1702, %v1790
      %v1792 = vpop.f32.mrf.mxu0
      %v1793 = vadd.f32 %v1704, %v1792
      %1794 = vmatmul.bf16.gmra.mxu0 %v1541
      %v1795 = vpop.f32.mrf.mxu0
      %v1796 = vadd.f32 %v1707, %v1795
      %v1797 = vpop.f32.mrf.mxu0
      %v1798 = vadd.f32 %v1709, %v1797
      %1799 = vmatmul.bf16.gmra.mxu0 %v1544
      %v1800 = vpop.f32.mrf.mxu0
      %v1801 = vadd.f32 %v1712, %v1800
      %v1802 = vpop.f32.mrf.mxu0
      %v1803 = vadd.f32 %v1714, %v1802
      %1804 = vmatmul.bf16.gmra.mxu0 %v1547
      %v1805 = vpop.f32.mrf.mxu0
      %v1806 = vadd.f32 %v1717, %v1805
      %v1807 = vpop.f32.mrf.mxu0
      %v1808 = vadd.f32 %v1719, %v1807
      %1809 = vmatmul.bf16.gmra.mxu0 %v1550
      %v1810 = vpop.f32.mrf.mxu0
      %v1811 = vadd.f32 %v1722, %v1810
      %v1812 = vpop.f32.mrf.mxu0
      %v1813 = vadd.f32 %v1724, %v1812
      %1814 = vmatmul.bf16.gmra.mxu0 %v1553
      %v1815 = vpop.f32.mrf.mxu0
      %v1816 = vadd.f32 %v1727, %v1815
      %v1817 = vpop.f32.mrf.mxu0
      %v1818 = vadd.f32 %v1729, %v1817
      %1819 = vmatmul.bf16.gmra.mxu0 %v1556
      %v1820 = vpop.f32.mrf.mxu0
      %v1821 = vadd.f32 %v1732, %v1820
      %v1822 = vpop.f32.mrf.mxu0
      %v1823 = vadd.f32 %v1734, %v1822
      %1824 = vdwg.mxu0
      %v1825 = vmul.f32 %v1746, %v1746
      %v1826 = vmul.f32 %v1748, %v1748
      %v1827 = vmul.f32 %v1751, %v1751
      %v1828 = vmul.f32 %v1753, %v1753
      %v1829 = vmul.f32 %v1756, %v1756
      %v1830 = vmul.f32 %v1758, %v1758
      %v1831 = vmul.f32 %v1761, %v1761
      %v1832 = vmul.f32 %v1763, %v1763
      %v1833 = vmul.f32 %v1766, %v1766
      %v1834 = vmul.f32 %v1768, %v1768
      %v1835 = vmul.f32 %v1771, %v1771
      %v1836 = vmul.f32 %v1773, %v1773
      %v1837 = vmul.f32 %v1776, %v1776
      %v1838 = vmul.f32 %v1778, %v1778
      %v1839 = vmul.f32 %v1781, %v1781
      %v1840 = vmul.f32 %v1783, %v1783
      %v1841 = vmul.f32 %v1786, %v1786
      %v1842 = vmul.f32 %v1788, %v1788
      %v1843 = vmul.f32 %v1791, %v1791
      %v1844 = vmul.f32 %v1793, %v1793
      %v1845 = vmul.f32 %v1796, %v1796
      %v1846 = vmul.f32 %v1798, %v1798
      %v1847 = vmul.f32 %v1801, %v1801
      %v1848 = vmul.f32 %v1803, %v1803
      %v1849 = vmul.f32 %v1806, %v1806
      %v1850 = vmul.f32 %v1808, %v1808
      %v1851 = vmul.f32 %v1811, %v1811
      %v1852 = vmul.f32 %v1813, %v1813
      %v1853 = vmul.f32 %v1816, %v1816
      %v1854 = vmul.f32 %v1818, %v1818
      %v1855 = vmul.f32 %v1821, %v1821
      %v1856 = vmul.f32 %v1823, %v1823
      %v1857 = vmul.f32 %v1746, %v1825
      %v1858 = vmul.f32 %v1748, %v1826
      %v1859 = vmul.f32 %v1751, %v1827
      %v1860 = vmul.f32 %v1753, %v1828
      %v1861 = vmul.f32 %v1756, %v1829
      %v1862 = vmul.f32 %v1758, %v1830
      %v1863 = vmul.f32 %v1761, %v1831
      %v1864 = vmul.f32 %v1763, %v1832
      %v1865 = vmul.f32 %v1766, %v1833
      %v1866 = vmul.f32 %v1768, %v1834
      %v1867 = vmul.f32 %v1771, %v1835
      %v1868 = vmul.f32 %v1773, %v1836
      %v1869 = vmul.f32 %v1776, %v1837
      %v1870 = vmul.f32 %v1778, %v1838
      %v1871 = vmul.f32 %v1781, %v1839
      %v1872 = vmul.f32 %v1783, %v1840
      %v1873 = vmul.f32 %v1786, %v1841
      %v1874 = vmul.f32 %v1788, %v1842
      %v1875 = vmul.f32 %v1791, %v1843
      %v1876 = vmul.f32 %v1793, %v1844
      %v1877 = vmul.f32 %v1796, %v1845
      %v1878 = vmul.f32 %v1798, %v1846
      %v1879 = vmul.f32 %v1801, %v1847
      %v1880 = vmul.f32 %v1803, %v1848
      %v1881 = vmul.f32 %v1806, %v1849
      %v1882 = vmul.f32 %v1808, %v1850
      %v1883 = vmul.f32 %v1811, %v1851
      %v1884 = vmul.f32 %v1813, %v1852
      %v1885 = vmul.f32 %v1816, %v1853
      %v1886 = vmul.f32 %v1818, %v1854
      %v1887 = vmul.f32 %v1821, %v1855
      %v1888 = vmul.f32 %v1823, %v1856
      %v1889 = vmul.f32 %v1857, 0.044715
      %v1890 = vmul.f32 %v1858, 0.044715
      %v1891 = vmul.f32 %v1859, 0.044715
      %v1892 = vmul.f32 %v1860, 0.044715
      %v1893 = vmul.f32 %v1861, 0.044715
      %v1894 = vmul.f32 %v1862, 0.044715
      %v1895 = vmul.f32 %v1863, 0.044715
      %v1896 = vmul.f32 %v1864, 0.044715
      %v1897 = vmul.f32 %v1865, 0.044715
      %v1898 = vmul.f32 %v1866, 0.044715
      %v1899 = vmul.f32 %v1867, 0.044715
      %v1900 = vmul.f32 %v1868, 0.044715
      %v1901 = vmul.f32 %v1869, 0.044715
      %v1902 = vmul.f32 %v1870, 0.044715
      %v1903 = vmul.f32 %v1871, 0.044715
      %v1904 = vmul.f32 %v1872, 0.044715
      %v1905 = vmul.f32 %v1873, 0.044715
      %v1906 = vmul.f32 %v1874, 0.044715
      %v1907 = vmul.f32 %v1875, 0.044715
      %v1908 = vmul.f32 %v1876, 0.044715
      %v1909 = vmul.f32 %v1877, 0.044715
      %v1910 = vmul.f32 %v1878, 0.044715
      %v1911 = vmul.f32 %v1879, 0.044715
      %v1912 = vmul.f32 %v1880, 0.044715
      %v1913 = vmul.f32 %v1881, 0.044715
      %v1914 = vmul.f32 %v1882, 0.044715
      %v1915 = vmul.f32 %v1883, 0.044715
      %v1916 = vmul.f32 %v1884, 0.044715
      %v1917 = vmul.f32 %v1885, 0.044715
      %v1918 = vmul.f32 %v1886, 0.044715
      %v1919 = vmul.f32 %v1887, 0.044715
      %v1920 = vmul.f32 %v1888, 0.044715
      %v1921 = vadd.f32 %v1746, %v1889
      %v1922 = vadd.f32 %v1748, %v1890
      %v1923 = vadd.f32 %v1751, %v1891
      %v1924 = vadd.f32 %v1753, %v1892
      %v1925 = vadd.f32 %v1756, %v1893
      %v1926 = vadd.f32 %v1758, %v1894
      %v1927 = vadd.f32 %v1761, %v1895
      %v1928 = vadd.f32 %v1763, %v1896
      %v1929 = vadd.f32 %v1766, %v1897
      %v1930 = vadd.f32 %v1768, %v1898
      %v1931 = vadd.f32 %v1771, %v1899
      %v1932 = vadd.f32 %v1773, %v1900
      %v1933 = vadd.f32 %v1776, %v1901
      %v1934 = vadd.f32 %v1778, %v1902
      %v1935 = vadd.f32 %v1781, %v1903
      %v1936 = vadd.f32 %v1783, %v1904
      %v1937 = vadd.f32 %v1786, %v1905
      %v1938 = vadd.f32 %v1788, %v1906
      %v1939 = vadd.f32 %v1791, %v1907
      %v1940 = vadd.f32 %v1793, %v1908
      %v1941 = vadd.f32 %v1796, %v1909
      %v1942 = vadd.f32 %v1798, %v1910
      %v1943 = vadd.f32 %v1801, %v1911
      %v1944 = vadd.f32 %v1803, %v1912
      %v1945 = vadd.f32 %v1806, %v1913
      %v1946 = vadd.f32 %v1808, %v1914
      %v1947 = vadd.f32 %v1811, %v1915
      %v1948 = vadd.f32 %v1813, %v1916
      %v1949 = vadd.f32 %v1816, %v1917
      %v1950 = vadd.f32 %v1818, %v1918
      %v1951 = vadd.f32 %v1821, %v1919
      %v1952 = vadd.f32 %v1823, %v1920
      %v1953 = vmul.f32 %v1921, 0.7978846
      %v1954 = vmul.f32 %v1922, 0.7978846
      %v1955 = vmul.f32 %v1923, 0.7978846
      %v1956 = vmul.f32 %v1924, 0.7978846
      %v1957 = vmul.f32 %v1925, 0.7978846
      %v1958 = vmul.f32 %v1926, 0.7978846
      %v1959 = vmul.f32 %v1927, 0.7978846
      %v1960 = vmul.f32 %v1928, 0.7978846
      %v1961 = vmul.f32 %v1929, 0.7978846
      %v1962 = vmul.f32 %v1930, 0.7978846
      %v1963 = vmul.f32 %v1931, 0.7978846
      %v1964 = vmul.f32 %v1932, 0.7978846
      %v1965 = vmul.f32 %v1933, 0.7978846
      %v1966 = vmul.f32 %v1934, 0.7978846
      %v1967 = vmul.f32 %v1935, 0.7978846
      %v1968 = vmul.f32 %v1936, 0.7978846
      %v1969 = vmul.f32 %v1937, 0.7978846
      %v1970 = vmul.f32 %v1938, 0.7978846
      %v1971 = vmul.f32 %v1939, 0.7978846
      %v1972 = vmul.f32 %v1940, 0.7978846
      %v1973 = vmul.f32 %v1941, 0.7978846
      %v1974 = vmul.f32 %v1942, 0.7978846
      %v1975 = vmul.f32 %v1943, 0.7978846
      %v1976 = vmul.f32 %v1944, 0.7978846
      %v1977 = vmul.f32 %v1945, 0.7978846
      %v1978 = vmul.f32 %v1946, 0.7978846
      %v1979 = vmul.f32 %v1947, 0.7978846
      %v1980 = vmul.f32 %v1948, 0.7978846
      %v1981 = vmul.f32 %v1949, 0.7978846
      %v1982 = vmul.f32 %v1950, 0.7978846
      %v1983 = vmul.f32 %v1951, 0.7978846
      %v1984 = vmul.f32 %v1952, 0.7978846
      %v1985 = vtanh.pop %v1953
      %v1986 = vtanh.pop %v1954
      %v1987 = vtanh.pop %v1955
      %v1988 = vtanh.pop %v1956
      %v1989 = vtanh.pop %v1957
      %v1990 = vtanh.pop %v1958
      %v1991 = vtanh.pop %v1959
      %v1992 = vtanh.pop %v1960
      %v1993 = vtanh.pop %v1961
      %v1994 = vtanh.pop %v1962
      %v1995 = vtanh.pop %v1963
      %v1996 = vtanh.pop %v1964
      %v1997 = vtanh.pop %v1965
      %v1998 = vtanh.pop %v1966
      %v1999 = vtanh.pop %v1967
      %v2000 = vtanh.pop %v1968
      %v2001 = vtanh.pop %v1969
      %v2002 = vtanh.pop %v1970
      %v2003 = vtanh.pop %v1971
      %v2004 = vtanh.pop %v1972
      %v2005 = vtanh.pop %v1973
      %v2006 = vtanh.pop %v1974
      %v2007 = vtanh.pop %v1975
      %v2008 = vtanh.pop %v1976
      %v2009 = vtanh.pop %v1977
      %v2010 = vtanh.pop %v1978
      %v2011 = vtanh.pop %v1979
      %v2012 = vtanh.pop %v1980
      %v2013 = vtanh.pop %v1981
      %v2014 = vtanh.pop %v1982
      %v2015 = vtanh.pop %v1983
      %v2016 = vtanh.pop %v1984
      %v2017 = vadd.f32 %v1985, 1.0
      %v2018 = vadd.f32 %v1986, 1.0
      %v2019 = vadd.f32 %v1987, 1.0
      %v2020 = vadd.f32 %v1988, 1.0
      %v2021 = vadd.f32 %v1989, 1.0
      %v2022 = vadd.f32 %v1990, 1.0
      %v2023 = vadd.f32 %v1991, 1.0
      %v2024 = vadd.f32 %v1992, 1.0
      %v2025 = vadd.f32 %v1993, 1.0
      %v2026 = vadd.f32 %v1994, 1.0
      %v2027 = vadd.f32 %v1995, 1.0
      %v2028 = vadd.f32 %v1996, 1.0
      %v2029 = vadd.f32 %v1997, 1.0
      %v2030 = vadd.f32 %v1998, 1.0
      %v2031 = vadd.f32 %v1999, 1.0
      %v2032 = vadd.f32 %v2000, 1.0
      %v2033 = vadd.f32 %v2001, 1.0
      %v2034 = vadd.f32 %v2002, 1.0
      %v2035 = vadd.f32 %v2003, 1.0
      %v2036 = vadd.f32 %v2004, 1.0
      %v2037 = vadd.f32 %v2005, 1.0
      %v2038 = vadd.f32 %v2006, 1.0
      %v2039 = vadd.f32 %v2007, 1.0
      %v2040 = vadd.f32 %v2008, 1.0
      %v2041 = vadd.f32 %v2009, 1.0
      %v2042 = vadd.f32 %v2010, 1.0
      %v2043 = vadd.f32 %v2011, 1.0
      %v2044 = vadd.f32 %v2012, 1.0
      %v2045 = vadd.f32 %v2013, 1.0
      %v2046 = vadd.f32 %v2014, 1.0
      %v2047 = vadd.f32 %v2015, 1.0
      %v2048 = vadd.f32 %v2016, 1.0
      %v2049 = vmul.f32 %v2017, 0.5
      %v2050 = vmul.f32 %v2018, 0.5
      %v2051 = vmul.f32 %v2019, 0.5
      %v2052 = vmul.f32 %v2020, 0.5
      %v2053 = vmul.f32 %v2021, 0.5
      %v2054 = vmul.f32 %v2022, 0.5
      %v2055 = vmul.f32 %v2023, 0.5
      %v2056 = vmul.f32 %v2024, 0.5
      %v2057 = vmul.f32 %v2025, 0.5
      %v2058 = vmul.f32 %v2026, 0.5
      %v2059 = vmul.f32 %v2027, 0.5
      %v2060 = vmul.f32 %v2028, 0.5
      %v2061 = vmul.f32 %v2029, 0.5
      %v2062 = vmul.f32 %v2030, 0.5
      %v2063 = vmul.f32 %v2031, 0.5
      %v2064 = vmul.f32 %v2032, 0.5
      %v2065 = vmul.f32 %v2033, 0.5
      %v2066 = vmul.f32 %v2034, 0.5
      %v2067 = vmul.f32 %v2035, 0.5
      %v2068 = vmul.f32 %v2036, 0.5
      %v2069 = vmul.f32 %v2037, 0.5
      %v2070 = vmul.f32 %v2038, 0.5
      %v2071 = vmul.f32 %v2039, 0.5
      %v2072 = vmul.f32 %v2040, 0.5
      %v2073 = vmul.f32 %v2041, 0.5
      %v2074 = vmul.f32 %v2042, 0.5
      %v2075 = vmul.f32 %v2043, 0.5
      %v2076 = vmul.f32 %v2044, 0.5
      %v2077 = vmul.f32 %v2045, 0.5
      %v2078 = vmul.f32 %v2046, 0.5
      %v2079 = vmul.f32 %v2047, 0.5
      %v2080 = vmul.f32 %v2048, 0.5
      %v2081 = vmul.f32 %v1746, %v2049
      %v2082 = vmul.f32 %v1748, %v2050
      %v2083 = vmul.f32 %v1751, %v2051
      %v2084 = vmul.f32 %v1753, %v2052
      %v2085 = vmul.f32 %v1756, %v2053
      %v2086 = vmul.f32 %v1758, %v2054
      %v2087 = vmul.f32 %v1761, %v2055
      %v2088 = vmul.f32 %v1763, %v2056
      %v2089 = vmul.f32 %v1766, %v2057
      %v2090 = vmul.f32 %v1768, %v2058
      %v2091 = vmul.f32 %v1771, %v2059
      %v2092 = vmul.f32 %v1773, %v2060
      %v2093 = vmul.f32 %v1776, %v2061
      %v2094 = vmul.f32 %v1778, %v2062
      %v2095 = vmul.f32 %v1781, %v2063
      %v2096 = vmul.f32 %v1783, %v2064
      %v2097 = vmul.f32 %v1786, %v2065
      %v2098 = vmul.f32 %v1788, %v2066
      %v2099 = vmul.f32 %v1791, %v2067
      %v2100 = vmul.f32 %v1793, %v2068
      %v2101 = vmul.f32 %v1796, %v2069
      %v2102 = vmul.f32 %v1798, %v2070
      %v2103 = vmul.f32 %v1801, %v2071
      %v2104 = vmul.f32 %v1803, %v2072
      %v2105 = vmul.f32 %v1806, %v2073
      %v2106 = vmul.f32 %v1808, %v2074
      %v2107 = vmul.f32 %v1811, %v2075
      %v2108 = vmul.f32 %v1813, %v2076
      %v2109 = vmul.f32 %v1816, %v2077
      %v2110 = vmul.f32 %v1818, %v2078
      %v2111 = vmul.f32 %v1821, %v2079
      %v2112 = vmul.f32 %v1823, %v2080
      %v2113 = vpack.c.bf16 %v2081, %v2081
      %v2114 = vpack.c.bf16 %v2082, %v2082
      %v2115 = vpack.c.bf16 %v2083, %v2083
      %v2116 = vpack.c.bf16 %v2084, %v2084
      %v2117 = vpack.c.bf16 %v2085, %v2085
      %v2118 = vpack.c.bf16 %v2086, %v2086
      %v2119 = vpack.c.bf16 %v2087, %v2087
      %v2120 = vpack.c.bf16 %v2088, %v2088
      %v2121 = vpack.c.bf16 %v2089, %v2089
      %v2122 = vpack.c.bf16 %v2090, %v2090
      %v2123 = vpack.c.bf16 %v2091, %v2091
      %v2124 = vpack.c.bf16 %v2092, %v2092
      %v2125 = vpack.c.bf16 %v2093, %v2093
      %v2126 = vpack.c.bf16 %v2094, %v2094
      %v2127 = vpack.c.bf16 %v2095, %v2095
      %v2128 = vpack.c.bf16 %v2096, %v2096
      %v2129 = vpack.c.bf16 %v2097, %v2097
      %v2130 = vpack.c.bf16 %v2098, %v2098
      %v2131 = vpack.c.bf16 %v2099, %v2099
      %v2132 = vpack.c.bf16 %v2100, %v2100
      %v2133 = vpack.c.bf16 %v2101, %v2101
      %v2134 = vpack.c.bf16 %v2102, %v2102
      %v2135 = vpack.c.bf16 %v2103, %v2103
      %v2136 = vpack.c.bf16 %v2104, %v2104
      %v2137 = vpack.c.bf16 %v2105, %v2105
      %v2138 = vpack.c.bf16 %v2106, %v2106
      %v2139 = vpack.c.bf16 %v2107, %v2107
      %v2140 = vpack.c.bf16 %v2108, %v2108
      %v2141 = vpack.c.bf16 %v2109, %v2109
      %v2142 = vpack.c.bf16 %v2110, %v2110
      %v2143 = vpack.c.bf16 %v2111, %v2111
      %v2144 = vpack.c.bf16 %v2112, %v2112
      %v2177 = vunpack.c.l.b16 %v2113
      %v2178 = vunpack.c.l.b16 %v2114
      %v2179 = vunpack.c.l.b16 %v2115
      %v2180 = vunpack.c.l.b16 %v2116
      %v2181 = vunpack.c.l.b16 %v2117
      %v2182 = vunpack.c.l.b16 %v2118
      %v2183 = vunpack.c.l.b16 %v2119
      %v2184 = vunpack.c.l.b16 %v2120
      %v2185 = vunpack.c.l.b16 %v2121
      %v2186 = vunpack.c.l.b16 %v2122
      %v2187 = vunpack.c.l.b16 %v2123
      %v2188 = vunpack.c.l.b16 %v2124
      %v2189 = vunpack.c.l.b16 %v2125
      %v2190 = vunpack.c.l.b16 %v2126
      %v2191 = vunpack.c.l.b16 %v2127
      %v2192 = vunpack.c.l.b16 %v2128
      %v2193 = vunpack.c.l.b16 %v2129
      %v2194 = vunpack.c.l.b16 %v2130
      %v2195 = vunpack.c.l.b16 %v2131
      %v2196 = vunpack.c.l.b16 %v2132
      %v2197 = vunpack.c.l.b16 %v2133
      %v2198 = vunpack.c.l.b16 %v2134
      %v2199 = vunpack.c.l.b16 %v2135
      %v2200 = vunpack.c.l.b16 %v2136
      %v2201 = vunpack.c.l.b16 %v2137
      %v2202 = vunpack.c.l.b16 %v2138
      %v2203 = vunpack.c.l.b16 %v2139
      %v2204 = vunpack.c.l.b16 %v2140
      %v2205 = vunpack.c.l.b16 %v2141
      %v2206 = vunpack.c.l.b16 %v2142
      %v2207 = vunpack.c.l.b16 %v2143
      %v2208 = vunpack.c.l.b16 %v2144
      %v2209 = vpack.c.b16 %v2178, %v2177
      %v2210 = vpack.c.b16 %v2180, %v2179
      %v2211 = vpack.c.b16 %v2182, %v2181
      %v2212 = vpack.c.b16 %v2184, %v2183
      %v2213 = vpack.c.b16 %v2186, %v2185
      %v2214 = vpack.c.b16 %v2188, %v2187
      %v2215 = vpack.c.b16 %v2190, %v2189
      %v2216 = vpack.c.b16 %v2192, %v2191
      %v2217 = vpack.c.b16 %v2194, %v2193
      %v2218 = vpack.c.b16 %v2196, %v2195
      %v2219 = vpack.c.b16 %v2198, %v2197
      %v2220 = vpack.c.b16 %v2200, %v2199
      %v2221 = vpack.c.b16 %v2202, %v2201
      %v2222 = vpack.c.b16 %v2204, %v2203
      %v2223 = vpack.c.b16 %v2206, %v2205
      %v2224 = vpack.c.b16 %v2208, %v2207
      %v2226 = vshrl.u32 %v2209, 16
      %v2228 = vrot.slane %v2226, 7
      %v2229 = vshll.u32 %v2209, 16
      %v2231 = vor.u32 %v2228, %v2229
      %v2233 = vshrl.u32 %v2210, 16
      %v2235 = vrot.slane %v2233, 7
      %v2236 = vshll.u32 %v2210, 16
      %v2238 = vor.u32 %v2235, %v2236
      %v2240 = vshrl.u32 %v2211, 16
      %v2242 = vrot.slane %v2240, 7
      %v2243 = vshll.u32 %v2211, 16
      %v2245 = vor.u32 %v2242, %v2243
      %v2247 = vshrl.u32 %v2212, 16
      %v2249 = vrot.slane %v2247, 7
      %v2250 = vshll.u32 %v2212, 16
      %v2252 = vor.u32 %v2249, %v2250
      %v2254 = vshrl.u32 %v2213, 16
      %v2256 = vrot.slane %v2254, 7
      %v2257 = vshll.u32 %v2213, 16
      %v2259 = vor.u32 %v2256, %v2257
      %v2261 = vshrl.u32 %v2214, 16
      %v2263 = vrot.slane %v2261, 7
      %v2264 = vshll.u32 %v2214, 16
      %v2266 = vor.u32 %v2263, %v2264
      %v2268 = vshrl.u32 %v2215, 16
      %v2270 = vrot.slane %v2268, 7
      %v2271 = vshll.u32 %v2215, 16
      %v2273 = vor.u32 %v2270, %v2271
      %v2275 = vshrl.u32 %v2216, 16
      %v2277 = vrot.slane %v2275, 7
      %v2278 = vshll.u32 %v2216, 16
      %v2280 = vor.u32 %v2277, %v2278
      %v2282 = vshrl.u32 %v2217, 16
      %v2284 = vrot.slane %v2282, 7
      %v2285 = vshll.u32 %v2217, 16
      %v2287 = vor.u32 %v2284, %v2285
      %v2289 = vshrl.u32 %v2218, 16
      %v2291 = vrot.slane %v2289, 7
      %v2292 = vshll.u32 %v2218, 16
      %v2294 = vor.u32 %v2291, %v2292
      %v2296 = vshrl.u32 %v2219, 16
      %v2298 = vrot.slane %v2296, 7
      %v2299 = vshll.u32 %v2219, 16
      %v2301 = vor.u32 %v2298, %v2299
      %v2303 = vshrl.u32 %v2220, 16
      %v2305 = vrot.slane %v2303, 7
      %v2306 = vshll.u32 %v2220, 16
      %v2308 = vor.u32 %v2305, %v2306
      %v2310 = vshrl.u32 %v2221, 16
      %v2312 = vrot.slane %v2310, 7
      %v2313 = vshll.u32 %v2221, 16
      %v2315 = vor.u32 %v2312, %v2313
      %v2317 = vshrl.u32 %v2222, 16
      %v2319 = vrot.slane %v2317, 7
      %v2320 = vshll.u32 %v2222, 16
      %v2322 = vor.u32 %v2319, %v2320
      %v2324 = vshrl.u32 %v2223, 16
      %v2326 = vrot.slane %v2324, 7
      %v2327 = vshll.u32 %v2223, 16
      %v2329 = vor.u32 %v2326, %v2327
      %v2331 = vshrl.u32 %v2224, 16
      %v2333 = vrot.slane %v2331, 7
      %v2334 = vshll.u32 %v2224, 16
      %v2336 = vor.u32 %v2333, %v2334
      %v2369 = vsel %vm601, 0, %v2231
      %v2370 = vsel %vm601, 0, %v2238
      %v2371 = vsel %vm601, 0, %v2245
      %v2372 = vsel %vm601, 0, %v2252
      %v2373 = vsel %vm601, 0, %v2259
      %v2374 = vsel %vm601, 0, %v2266
      %v2375 = vsel %vm601, 0, %v2273
      %v2376 = vsel %vm601, 0, %v2280
      %v2377 = vsel %vm601, 0, %v2287
      %v2378 = vsel %vm601, 0, %v2294
      %v2379 = vsel %vm601, 0, %v2301
      %v2380 = vsel %vm601, 0, %v2308
      %v2381 = vsel %vm601, 0, %v2315
      %v2382 = vsel %vm601, 0, %v2322
      %v2383 = vsel %vm601, 0, %v2329
      %v2384 = vsel %vm601, 0, %v2336
      %v2385 = vsel %vm601, %v2228, 0
      %v2386 = vsel %vm601, %v2235, 0
      %v2387 = vsel %vm601, %v2242, 0
      %v2388 = vsel %vm601, %v2249, 0
      %v2389 = vsel %vm601, %v2256, 0
      %v2390 = vsel %vm601, %v2263, 0
      %v2391 = vsel %vm601, %v2270, 0
      %v2392 = vsel %vm601, %v2277, 0
      %v2393 = vsel %vm601, %v2284, 0
      %v2394 = vsel %vm601, %v2291, 0
      %v2395 = vsel %vm601, %v2298, 0
      %v2396 = vsel %vm601, %v2305, 0
      %v2397 = vsel %vm601, %v2312, 0
      %v2398 = vsel %vm601, %v2319, 0
      %v2399 = vsel %vm601, %v2326, 0
      %v2400 = vsel %vm601, %v2333, 0
      %v2402 = vshrl.u32 %v2369, 16
      %v2404 = vshll.u32 %v2369, 16
      %v2406 = vrot.slane %v2404, 1
      %v2407 = vor.u32 %v2402, %v2406
      %v2409 = vshll.u32 %v2385, 16
      %v2411 = vrot.slane %v2409, 1
      %v2412 = vsel %vm636, %v2407, %v2411
      %v2414 = vshrl.u32 %v2370, 16
      %v2416 = vshll.u32 %v2370, 16
      %v2418 = vrot.slane %v2416, 1
      %v2419 = vor.u32 %v2414, %v2418
      %v2421 = vshll.u32 %v2386, 16
      %v2423 = vrot.slane %v2421, 1
      %v2424 = vsel %vm636, %v2419, %v2423
      %v2426 = vshrl.u32 %v2371, 16
      %v2428 = vshll.u32 %v2371, 16
      %v2430 = vrot.slane %v2428, 1
      %v2431 = vor.u32 %v2426, %v2430
      %v2433 = vshll.u32 %v2387, 16
      %v2435 = vrot.slane %v2433, 1
      %v2436 = vsel %vm636, %v2431, %v2435
      %v2438 = vshrl.u32 %v2372, 16
      %v2440 = vshll.u32 %v2372, 16
      %v2442 = vrot.slane %v2440, 1
      %v2443 = vor.u32 %v2438, %v2442
      %v2445 = vshll.u32 %v2388, 16
      %v2447 = vrot.slane %v2445, 1
      %v2448 = vsel %vm636, %v2443, %v2447
      %v2450 = vshrl.u32 %v2373, 16
      %v2452 = vshll.u32 %v2373, 16
      %v2454 = vrot.slane %v2452, 1
      %v2455 = vor.u32 %v2450, %v2454
      %v2457 = vshll.u32 %v2389, 16
      %v2459 = vrot.slane %v2457, 1
      %v2460 = vsel %vm636, %v2455, %v2459
      %v2462 = vshrl.u32 %v2374, 16
      %v2464 = vshll.u32 %v2374, 16
      %v2466 = vrot.slane %v2464, 1
      %v2467 = vor.u32 %v2462, %v2466
      %v2469 = vshll.u32 %v2390, 16
      %v2471 = vrot.slane %v2469, 1
      %v2472 = vsel %vm636, %v2467, %v2471
      %v2474 = vshrl.u32 %v2375, 16
      %v2476 = vshll.u32 %v2375, 16
      %v2478 = vrot.slane %v2476, 1
      %v2479 = vor.u32 %v2474, %v2478
      %v2481 = vshll.u32 %v2391, 16
      %v2483 = vrot.slane %v2481, 1
      %v2484 = vsel %vm636, %v2479, %v2483
      %v2486 = vshrl.u32 %v2376, 16
      %v2488 = vshll.u32 %v2376, 16
      %v2490 = vrot.slane %v2488, 1
      %v2491 = vor.u32 %v2486, %v2490
      %v2493 = vshll.u32 %v2392, 16
      %v2495 = vrot.slane %v2493, 1
      %v2496 = vsel %vm636, %v2491, %v2495
      %v2498 = vshrl.u32 %v2377, 16
      %v2500 = vshll.u32 %v2377, 16
      %v2502 = vrot.slane %v2500, 1
      %v2503 = vor.u32 %v2498, %v2502
      %v2505 = vshll.u32 %v2393, 16
      %v2507 = vrot.slane %v2505, 1
      %v2508 = vsel %vm636, %v2503, %v2507
      %v2510 = vshrl.u32 %v2378, 16
      %v2512 = vshll.u32 %v2378, 16
      %v2514 = vrot.slane %v2512, 1
      %v2515 = vor.u32 %v2510, %v2514
      %v2517 = vshll.u32 %v2394, 16
      %v2519 = vrot.slane %v2517, 1
      %v2520 = vsel %vm636, %v2515, %v2519
      %v2522 = vshrl.u32 %v2379, 16
      %v2524 = vshll.u32 %v2379, 16
      %v2526 = vrot.slane %v2524, 1
      %v2527 = vor.u32 %v2522, %v2526
      %v2529 = vshll.u32 %v2395, 16
      %v2531 = vrot.slane %v2529, 1
      %v2532 = vsel %vm636, %v2527, %v2531
      %v2534 = vshrl.u32 %v2380, 16
      %v2536 = vshll.u32 %v2380, 16
      %v2538 = vrot.slane %v2536, 1
      %v2539 = vor.u32 %v2534, %v2538
      %v2541 = vshll.u32 %v2396, 16
      %v2543 = vrot.slane %v2541, 1
      %v2544 = vsel %vm636, %v2539, %v2543
      %v2546 = vshrl.u32 %v2381, 16
      %v2548 = vshll.u32 %v2381, 16
      %v2550 = vrot.slane %v2548, 1
      %v2551 = vor.u32 %v2546, %v2550
      %v2553 = vshll.u32 %v2397, 16
      %v2555 = vrot.slane %v2553, 1
      %v2556 = vsel %vm636, %v2551, %v2555
      %v2558 = vshrl.u32 %v2382, 16
      %v2560 = vshll.u32 %v2382, 16
      %v2562 = vrot.slane %v2560, 1
      %v2563 = vor.u32 %v2558, %v2562
      %v2565 = vshll.u32 %v2398, 16
      %v2567 = vrot.slane %v2565, 1
      %v2568 = vsel %vm636, %v2563, %v2567
      %v2570 = vshrl.u32 %v2383, 16
      %v2572 = vshll.u32 %v2383, 16
      %v2574 = vrot.slane %v2572, 1
      %v2575 = vor.u32 %v2570, %v2574
      %v2577 = vshll.u32 %v2399, 16
      %v2579 = vrot.slane %v2577, 1
      %v2580 = vsel %vm636, %v2575, %v2579
      %v2611 = vrot.slane %v2369, 1
      %v2612 = vrot.slane %v2385, 1
      %v2613 = vsel %vm861, %v2611, %v2612
      %v2614 = vrot.slane %v2370, 1
      %v2615 = vrot.slane %v2386, 1
      %v2616 = vsel %vm861, %v2614, %v2615
      %v2617 = vrot.slane %v2371, 1
      %v2618 = vrot.slane %v2387, 1
      %v2619 = vsel %vm861, %v2617, %v2618
      %v2620 = vrot.slane %v2372, 1
      %v2621 = vrot.slane %v2388, 1
      %v2622 = vsel %vm861, %v2620, %v2621
      %v2623 = vrot.slane %v2373, 1
      %v2624 = vrot.slane %v2389, 1
      %v2625 = vsel %vm861, %v2623, %v2624
      %v2626 = vrot.slane %v2374, 1
      %v2627 = vrot.slane %v2390, 1
      %v2628 = vsel %vm861, %v2626, %v2627
      %v2629 = vrot.slane %v2375, 1
      %v2630 = vrot.slane %v2391, 1
      %v2631 = vsel %vm861, %v2629, %v2630
      %v2632 = vrot.slane %v2376, 1
      %v2633 = vrot.slane %v2392, 1
      %v2634 = vsel %vm861, %v2632, %v2633
      %v2635 = vrot.slane %v2377, 1
      %v2636 = vrot.slane %v2393, 1
      %v2637 = vsel %vm861, %v2635, %v2636
      %v2638 = vrot.slane %v2378, 1
      %v2639 = vrot.slane %v2394, 1
      %v2640 = vsel %vm861, %v2638, %v2639
      %v2641 = vrot.slane %v2379, 1
      %v2642 = vrot.slane %v2395, 1
      %v2643 = vsel %vm861, %v2641, %v2642
      %v2644 = vrot.slane %v2380, 1
      %v2645 = vrot.slane %v2396, 1
      %v2646 = vsel %vm861, %v2644, %v2645
      %v2647 = vrot.slane %v2381, 1
      %v2648 = vrot.slane %v2397, 1
      %v2649 = vsel %vm861, %v2647, %v2648
      %v2650 = vrot.slane %v2382, 1
      %v2651 = vrot.slane %v2398, 1
      %v2652 = vsel %vm861, %v2650, %v2651
      %v2653 = vrot.slane %v2383, 1
      %v2654 = vrot.slane %v2399, 1
      %v2655 = vsel %vm861, %v2653, %v2654
      %v2657 = vshrl.u32 %v2384, 16
      %v2659 = vshll.u32 %v2384, 16
      %v2661 = vrot.slane %v2659, 1
      %v2662 = vor.u32 %v2657, %v2661
      %v2664 = vshll.u32 %v2400, 16
      %v2666 = vrot.slane %v2664, 1
      %v2667 = vsel %vm636, %v2662, %v2666
      %v2670 = vrot.slane %v2384, 1
      %v2671 = vrot.slane %v2400, 1
      %v2672 = vsel %vm861, %v2670, %v2671
      %2673 = vrot.lane.b32.xlu0 %v648, 16
      %v2674 = vpop.permute.xlu0 %2673
      %2675 = vrot.lane.b32.xlu0 %v2412, 16
      %v2676 = vpop.permute.xlu0 %2675
      %2677 = vrot.lane.b32.xlu0 %v2424, 16
      %v2678 = vpop.permute.xlu0 %2677
      %2679 = vrot.lane.b32.xlu0 %v2436, 16
      %v2680 = vpop.permute.xlu0 %2679
      %2681 = vrot.lane.b32.xlu0 %v2448, 16
      %v2682 = vpop.permute.xlu0 %2681
      %2683 = vrot.lane.b32.xlu0 %v2460, 16
      %v2684 = vpop.permute.xlu0 %2683
      %2685 = vrot.lane.b32.xlu0 %v2472, 16
      %v2686 = vpop.permute.xlu0 %2685
      %2687 = vrot.lane.b32.xlu0 %v2484, 16
      %v2688 = vpop.permute.xlu0 %2687
      %2689 = vrot.lane.b32.xlu0 %v2496, 16
      %v2690 = vpop.permute.xlu0 %2689
      %2691 = vrot.lane.b32.xlu0 %v2508, 16
      %v2692 = vpop.permute.xlu0 %2691
      %2693 = vrot.lane.b32.xlu0 %v2520, 16
      %v2694 = vpop.permute.xlu0 %2693
      %2695 = vrot.lane.b32.xlu0 %v2532, 16
      %v2696 = vpop.permute.xlu0 %2695
      %2697 = vrot.lane.b32.xlu0 %v2544, 16
      %v2698 = vpop.permute.xlu0 %2697
      %2699 = vrot.lane.b32.xlu0 %v2556, 16
      %v2700 = vpop.permute.xlu0 %2699
      %2701 = vrot.lane.b32.xlu0 %v2568, 16
      %v2702 = vpop.permute.xlu0 %2701
      %2703 = vrot.lane.b32.xlu0 %v2580, 16
      %v2704 = vpop.permute.xlu0 %2703
      %2705 = vrot.lane.b32.xlu0 %v864, 32
      %v2706 = vpop.permute.xlu0 %2705
      %2707 = vrot.lane.b32.xlu0 %v2613, 32
      %v2708 = vpop.permute.xlu0 %2707
      %2709 = vrot.lane.b32.xlu0 %v2616, 32
      %v2710 = vpop.permute.xlu0 %2709
      %2711 = vrot.lane.b32.xlu0 %v2619, 32
      %v2712 = vpop.permute.xlu0 %2711
      %2713 = vrot.lane.b32.xlu0 %v2622, 32
      %v2714 = vpop.permute.xlu0 %2713
      %2715 = vrot.lane.b32.xlu0 %v2625, 32
      %v2716 = vpop.permute.xlu0 %2715
      %2717 = vrot.lane.b32.xlu0 %v2628, 32
      %v2718 = vpop.permute.xlu0 %2717
      %2719 = vrot.lane.b32.xlu0 %v2631, 32
      %v2720 = vpop.permute.xlu0 %2719
      %2721 = vrot.lane.b32.xlu0 %v2634, 32
      %v2722 = vpop.permute.xlu0 %2721
      %2723 = vrot.lane.b32.xlu0 %v2637, 32
      %v2724 = vpop.permute.xlu0 %2723
      %2725 = vrot.lane.b32.xlu0 %v2640, 32
      %v2726 = vpop.permute.xlu0 %2725
      %2727 = vrot.lane.b32.xlu0 %v2643, 32
      %v2728 = vpop.permute.xlu0 %2727
      %2729 = vrot.lane.b32.xlu0 %v2646, 32
      %v2730 = vpop.permute.xlu0 %2729
      %2731 = vrot.lane.b32.xlu0 %v2649, 32
      %v2732 = vpop.permute.xlu0 %2731
      %2733 = vrot.lane.b32.xlu0 %v2652, 32
      %v2734 = vpop.permute.xlu0 %2733
      %2735 = vrot.lane.b32.xlu0 %v2655, 32
      %v2736 = vpop.permute.xlu0 %2735
      %2737 = vrot.lane.b32.xlu0 %v2369, 48
      %v2738 = vpop.permute.xlu0 %2737
      %2739 = vrot.lane.b32.xlu0 %v2370, 48
      %v2740 = vpop.permute.xlu0 %2739
      %2741 = vrot.lane.b32.xlu0 %v2371, 48
      %v2742 = vpop.permute.xlu0 %2741
      %2743 = vrot.lane.b32.xlu0 %v2372, 48
      %v2744 = vpop.permute.xlu0 %2743
      %2745 = vrot.lane.b32.xlu0 %v2373, 48
      %v2746 = vpop.permute.xlu0 %2745
      %2747 = vrot.lane.b32.xlu0 %v2374, 48
      %v2748 = vpop.permute.xlu0 %2747
      %2749 = vrot.lane.b32.xlu0 %v2375, 48
      %v2750 = vpop.permute.xlu0 %2749
      %2751 = vrot.lane.b32.xlu0 %v2376, 48
      %v2752 = vpop.permute.xlu0 %2751
      %2753 = vrot.lane.b32.xlu0 %v2377, 48
      %v2754 = vpop.permute.xlu0 %2753
      %2755 = vrot.lane.b32.xlu0 %v2378, 48
      %v2756 = vpop.permute.xlu0 %2755
      %2757 = vrot.lane.b32.xlu0 %v2379, 48
      %v2758 = vpop.permute.xlu0 %2757
      %2759 = vrot.lane.b32.xlu0 %v2380, 48
      %v2760 = vpop.permute.xlu0 %2759
      %2761 = vrot.lane.b32.xlu0 %v2381, 48
      %v2762 = vpop.permute.xlu0 %2761
      %2763 = vrot.lane.b32.xlu0 %v2382, 48
      %v2764 = vpop.permute.xlu0 %2763
      %2765 = vrot.lane.b32.xlu0 %v2383, 48
      %v2766 = vpop.permute.xlu0 %2765
      %2767 = vrot.lane.b32.xlu0 %v2384, 48
      %v2768 = vpop.permute.xlu0 %2767
      %2769 = vrot.lane.b32.xlu0 %v2412, 64
      %v2770 = vpop.permute.xlu0 %2769
      %2771 = vrot.lane.b32.xlu0 %v2424, 64
      %v2772 = vpop.permute.xlu0 %2771
      %2773 = vrot.lane.b32.xlu0 %v2436, 64
      %v2774 = vpop.permute.xlu0 %2773
      %2775 = vrot.lane.b32.xlu0 %v2448, 64
      %v2776 = vpop.permute.xlu0 %2775
      %2777 = vrot.lane.b32.xlu0 %v2460, 64
      %v2778 = vpop.permute.xlu0 %2777
      %2779 = vrot.lane.b32.xlu0 %v2472, 64
      %v2780 = vpop.permute.xlu0 %2779
      %2781 = vrot.lane.b32.xlu0 %v2484, 64
      %v2782 = vpop.permute.xlu0 %2781
      %2783 = vrot.lane.b32.xlu0 %v2496, 64
      %v2784 = vpop.permute.xlu0 %2783
      %2785 = vrot.lane.b32.xlu0 %v2508, 64
      %v2786 = vpop.permute.xlu0 %2785
      %2787 = vrot.lane.b32.xlu0 %v2520, 64
      %v2788 = vpop.permute.xlu0 %2787
      %2789 = vrot.lane.b32.xlu0 %v2532, 64
      %v2790 = vpop.permute.xlu0 %2789
      %2791 = vrot.lane.b32.xlu0 %v2544, 64
      %v2792 = vpop.permute.xlu0 %2791
      %2793 = vrot.lane.b32.xlu0 %v2556, 64
      %v2794 = vpop.permute.xlu0 %2793
      %2795 = vrot.lane.b32.xlu0 %v2568, 64
      %v2796 = vpop.permute.xlu0 %2795
      %2797 = vrot.lane.b32.xlu0 %v2580, 64
      %v2798 = vpop.permute.xlu0 %2797
      %2799 = vrot.lane.b32.xlu0 %v2667, 64
      %v2800 = vpop.permute.xlu0 %2799
      %2801 = vrot.lane.b32.xlu0 %v2613, 80
      %v2802 = vpop.permute.xlu0 %2801
      %2803 = vrot.lane.b32.xlu0 %v2616, 80
      %v2804 = vpop.permute.xlu0 %2803
      %2805 = vrot.lane.b32.xlu0 %v2619, 80
      %v2806 = vpop.permute.xlu0 %2805
      %2807 = vrot.lane.b32.xlu0 %v2622, 80
      %v2808 = vpop.permute.xlu0 %2807
      %2809 = vrot.lane.b32.xlu0 %v2625, 80
      %v2810 = vpop.permute.xlu0 %2809
      %2811 = vrot.lane.b32.xlu0 %v2628, 80
      %v2812 = vpop.permute.xlu0 %2811
      %2813 = vrot.lane.b32.xlu0 %v2631, 80
      %v2814 = vpop.permute.xlu0 %2813
      %2815 = vrot.lane.b32.xlu0 %v2634, 80
      %v2816 = vpop.permute.xlu0 %2815
      %2817 = vrot.lane.b32.xlu0 %v2637, 80
      %v2818 = vpop.permute.xlu0 %2817
      %2819 = vrot.lane.b32.xlu0 %v2640, 80
      %v2820 = vpop.permute.xlu0 %2819
      %2821 = vrot.lane.b32.xlu0 %v2643, 80
      %v2822 = vpop.permute.xlu0 %2821
      %2823 = vrot.lane.b32.xlu0 %v2646, 80
      %v2824 = vpop.permute.xlu0 %2823
      %2825 = vrot.lane.b32.xlu0 %v2649, 80
      %v2826 = vpop.permute.xlu0 %2825
      %2827 = vrot.lane.b32.xlu0 %v2652, 80
      %v2828 = vpop.permute.xlu0 %2827
      %2829 = vrot.lane.b32.xlu0 %v2655, 80
      %v2830 = vpop.permute.xlu0 %2829
      %2831 = vrot.lane.b32.xlu0 %v2672, 80
      %v2832 = vpop.permute.xlu0 %2831
      %2833 = vrot.lane.b32.xlu0 %v2370, 96
      %v2834 = vpop.permute.xlu0 %2833
      %2835 = vrot.lane.b32.xlu0 %v2371, 96
      %v2836 = vpop.permute.xlu0 %2835
      %2837 = vrot.lane.b32.xlu0 %v2372, 96
      %v2838 = vpop.permute.xlu0 %2837
      %2839 = vrot.lane.b32.xlu0 %v2373, 96
      %v2840 = vpop.permute.xlu0 %2839
      %2841 = vrot.lane.b32.xlu0 %v2374, 96
      %v2842 = vpop.permute.xlu0 %2841
      %2843 = vrot.lane.b32.xlu0 %v2375, 96
      %v2844 = vpop.permute.xlu0 %2843
      %2845 = vrot.lane.b32.xlu0 %v2376, 96
      %v2846 = vpop.permute.xlu0 %2845
      %2847 = vrot.lane.b32.xlu0 %v2377, 96
      %v2848 = vpop.permute.xlu0 %2847
      %2849 = vrot.lane.b32.xlu0 %v2378, 96
      %v2850 = vpop.permute.xlu0 %2849
      %2851 = vrot.lane.b32.xlu0 %v2379, 96
      %v2852 = vpop.permute.xlu0 %2851
      %2853 = vrot.lane.b32.xlu0 %v2380, 96
      %v2854 = vpop.permute.xlu0 %2853
      %2855 = vrot.lane.b32.xlu0 %v2381, 96
      %v2856 = vpop.permute.xlu0 %2855
      %2857 = vrot.lane.b32.xlu0 %v2382, 96
      %v2858 = vpop.permute.xlu0 %2857
      %2859 = vrot.lane.b32.xlu0 %v2383, 96
      %v2860 = vpop.permute.xlu0 %2859
      %2861 = vrot.lane.b32.xlu0 %v2384, 96
      %v2862 = vpop.permute.xlu0 %2861
      %2863 = vrot.lane.b32.xlu0 %v602, 96
      %v2864 = vpop.permute.xlu0 %2863
      %2865 = vrot.lane.b32.xlu0 %v2424, 112
      %v2866 = vpop.permute.xlu0 %2865
      %2867 = vrot.lane.b32.xlu0 %v2436, 112
      %v2868 = vpop.permute.xlu0 %2867
      %2869 = vrot.lane.b32.xlu0 %v2448, 112
      %v2870 = vpop.permute.xlu0 %2869
      %2871 = vrot.lane.b32.xlu0 %v2460, 112
      %v2872 = vpop.permute.xlu0 %2871
      %2873 = vrot.lane.b32.xlu0 %v2472, 112
      %v2874 = vpop.permute.xlu0 %2873
      %2875 = vrot.lane.b32.xlu0 %v2484, 112
      %v2876 = vpop.permute.xlu0 %2875
      %2877 = vrot.lane.b32.xlu0 %v2496, 112
      %v2878 = vpop.permute.xlu0 %2877
      %2879 = vrot.lane.b32.xlu0 %v2508, 112
      %v2880 = vpop.permute.xlu0 %2879
      %2881 = vrot.lane.b32.xlu0 %v2520, 112
      %v2882 = vpop.permute.xlu0 %2881
      %2883 = vrot.lane.b32.xlu0 %v2532, 112
      %v2884 = vpop.permute.xlu0 %2883
      %2885 = vrot.lane.b32.xlu0 %v2544, 112
      %v2886 = vpop.permute.xlu0 %2885
      %2887 = vrot.lane.b32.xlu0 %v2556, 112
      %v2888 = vpop.permute.xlu0 %2887
      %2889 = vrot.lane.b32.xlu0 %v2568, 112
      %v2890 = vpop.permute.xlu0 %2889
      %2891 = vrot.lane.b32.xlu0 %v2580, 112
      %v2892 = vpop.permute.xlu0 %2891
      %2893 = vrot.lane.b32.xlu0 %v2667, 112
      %v2894 = vpop.permute.xlu0 %2893
      %2895 = vrot.lane.b32.xlu0 %v648, 112
      %v2896 = vpop.permute.xlu0 %2895
      %vm2897 = vcmask 130048
      %v2899 = vsel %vm2897, %v602, %v2674
      %v2901 = vsel %vm2897, %v2369, %v2676
      %v2903 = vsel %vm2897, %v2370, %v2678
      %v2905 = vsel %vm2897, %v2371, %v2680
      %v2907 = vsel %vm2897, %v2372, %v2682
      %v2909 = vsel %vm2897, %v2373, %v2684
      %v2911 = vsel %vm2897, %v2374, %v2686
      %v2913 = vsel %vm2897, %v2375, %v2688
      %v2915 = vsel %vm2897, %v2376, %v2690
      %v2917 = vsel %vm2897, %v2377, %v2692
      %v2919 = vsel %vm2897, %v2378, %v2694
      %v2921 = vsel %vm2897, %v2379, %v2696
      %v2923 = vsel %vm2897, %v2380, %v2698
      %v2925 = vsel %vm2897, %v2381, %v2700
      %v2927 = vsel %vm2897, %v2382, %v2702
      %v2929 = vsel %vm2897, %v2383, %v2704
      %v2931 = vsel %vm1119, %v2899, %v2706
      %v2933 = vsel %vm1119, %v2901, %v2708
      %v2935 = vsel %vm1119, %v2903, %v2710
      %v2937 = vsel %vm1119, %v2905, %v2712
      %v2939 = vsel %vm1119, %v2907, %v2714
      %v2941 = vsel %vm1119, %v2909, %v2716
      %v2943 = vsel %vm1119, %v2911, %v2718
      %v2945 = vsel %vm1119, %v2913, %v2720
      %v2947 = vsel %vm1119, %v2915, %v2722
      %v2949 = vsel %vm1119, %v2917, %v2724
      %v2951 = vsel %vm1119, %v2919, %v2726
      %v2953 = vsel %vm1119, %v2921, %v2728
      %v2955 = vsel %vm1119, %v2923, %v2730
      %v2957 = vsel %vm1119, %v2925, %v2732
      %v2959 = vsel %vm1119, %v2927, %v2734
      %v2961 = vsel %vm1119, %v2929, %v2736
      %vm2962 = vcmask 392192
      %v2964 = vsel %vm2962, %v2931, %v2738
      %v2966 = vsel %vm2962, %v2933, %v2740
      %v2968 = vsel %vm2962, %v2935, %v2742
      %v2970 = vsel %vm2962, %v2937, %v2744
      %v2972 = vsel %vm2962, %v2939, %v2746
      %v2974 = vsel %vm2962, %v2941, %v2748
      %v2976 = vsel %vm2962, %v2943, %v2750
      %v2978 = vsel %vm2962, %v2945, %v2752
      %v2980 = vsel %vm2962, %v2947, %v2754
      %v2982 = vsel %vm2962, %v2949, %v2756
      %v2984 = vsel %vm2962, %v2951, %v2758
      %v2986 = vsel %vm2962, %v2953, %v2760
      %v2988 = vsel %vm2962, %v2955, %v2762
      %v2990 = vsel %vm2962, %v2957, %v2764
      %v2992 = vsel %vm2962, %v2959, %v2766
      %v2994 = vsel %vm2962, %v2961, %v2768
      %v2996 = vsel %vm1152, %v2964, %v2770
      %v2998 = vsel %vm1152, %v2966, %v2772
      %v3000 = vsel %vm1152, %v2968, %v2774
      %v3002 = vsel %vm1152, %v2970, %v2776
      %v3004 = vsel %vm1152, %v2972, %v2778
      %v3006 = vsel %vm1152, %v2974, %v2780
      %v3008 = vsel %vm1152, %v2976, %v2782
      %v3010 = vsel %vm1152, %v2978, %v2784
      %v3012 = vsel %vm1152, %v2980, %v2786
      %v3014 = vsel %vm1152, %v2982, %v2788
      %v3016 = vsel %vm1152, %v2984, %v2790
      %v3018 = vsel %vm1152, %v2986, %v2792
      %v3020 = vsel %vm1152, %v2988, %v2794
      %v3022 = vsel %vm1152, %v2990, %v2796
      %v3024 = vsel %vm1152, %v2992, %v2798
      %v3026 = vsel %vm1152, %v2994, %v2800
      %vm3027 = vcmask 654336
      %v3029 = vsel %vm3027, %v2996, %v2802
      %v3031 = vsel %vm3027, %v2998, %v2804
      %v3033 = vsel %vm3027, %v3000, %v2806
      %v3035 = vsel %vm3027, %v3002, %v2808
      %v3037 = vsel %vm3027, %v3004, %v2810
      %v3039 = vsel %vm3027, %v3006, %v2812
      %v3041 = vsel %vm3027, %v3008, %v2814
      %v3043 = vsel %vm3027, %v3010, %v2816
      %v3045 = vsel %vm3027, %v3012, %v2818
      %v3047 = vsel %vm3027, %v3014, %v2820
      %v3049 = vsel %vm3027, %v3016, %v2822
      %v3051 = vsel %vm3027, %v3018, %v2824
      %v3053 = vsel %vm3027, %v3020, %v2826
      %v3055 = vsel %vm3027, %v3022, %v2828
      %v3057 = vsel %vm3027, %v3024, %v2830
      %v3059 = vsel %vm3027, %v3026, %v2832
      %v3061 = vsel %vm1185, %v3029, %v2834
      %v3063 = vsel %vm1185, %v3031, %v2836
      %v3065 = vsel %vm1185, %v3033, %v2838
      %v3067 = vsel %vm1185, %v3035, %v2840
      %v3069 = vsel %vm1185, %v3037, %v2842
      %v3071 = vsel %vm1185, %v3039, %v2844
      %v3073 = vsel %vm1185, %v3041, %v2846
      %v3075 = vsel %vm1185, %v3043, %v2848
      %v3077 = vsel %vm1185, %v3045, %v2850
      %v3079 = vsel %vm1185, %v3047, %v2852
      %v3081 = vsel %vm1185, %v3049, %v2854
      %v3083 = vsel %vm1185, %v3051, %v2856
      %v3085 = vsel %vm1185, %v3053, %v2858
      %v3087 = vsel %vm1185, %v3055, %v2860
      %v3089 = vsel %vm1185, %v3057, %v2862
      %v3091 = vsel %vm1185, %v3059, %v2864
      %vm3092 = vcmask 916480
      %v3094 = vsel %vm3092, %v3061, %v2866
      %v3097 = vsel %vm3092, %v3063, %v2868
      %v3100 = vsel %vm3092, %v3065, %v2870
      %v3103 = vsel %vm3092, %v3067, %v2872
      %v3106 = vsel %vm3092, %v3069, %v2874
      %v3109 = vsel %vm3092, %v3071, %v2876
      %v3112 = vsel %vm3092, %v3073, %v2878
      %v3115 = vsel %vm3092, %v3075, %v2880
      %v3118 = vsel %vm3092, %v3077, %v2882
      %v3121 = vsel %vm3092, %v3079, %v2884
      %v3124 = vsel %vm3092, %v3081, %v2886
      %v3127 = vsel %vm3092, %v3083, %v2888
      %v3130 = vsel %vm3092, %v3085, %v2890
      %v3133 = vsel %vm3092, %v3087, %v2892
      %v3136 = vsel %vm3092, %v3089, %v2894
      %v3139 = vsel %vm3092, %v3091, %v2896
      %v3141 = vld [vmem:[%s3] sm:$0xf]
      %v3142 = vld [vmem:[%s3 + $0x4] sm:$0xf]
      %v3143 = vld [vmem:[%s3 + $0x8] sm:$0xf]
      %v3144 = vld [vmem:[%s3 + $0xc] sm:$0xf]
      %v3145 = vld [vmem:[%s3 + $0x10] sm:$0xf]
      %v3146 = vld [vmem:[%s3 + $0x14] sm:$0xf]
      %v3147 = vld [vmem:[%s3 + $0x18] sm:$0xf]
      %v3148 = vld [vmem:[%s3 + $0x1c] sm:$0xf]
      %v3149 = vld [vmem:[%s3 + $0x20] sm:$0xf]
      %v3150 = vld [vmem:[%s3 + $0x24] sm:$0xf]
      %v3151 = vld [vmem:[%s3 + $0x28] sm:$0xf]
      %v3152 = vld [vmem:[%s3 + $0x2c] sm:$0xf]
      %v3153 = vld [vmem:[%s3 + $0x30] sm:$0xf]
      %v3154 = vld [vmem:[%s3 + $0x34] sm:$0xf]
      %v3155 = vld [vmem:[%s3 + $0x38] sm:$0xf]
      %v3156 = vld [vmem:[%s3 + $0x3c] sm:$0xf]
      %v3157 = vld [vmem:[%s3 + $0x40] sm:$0xf]
      %v3158 = vld [vmem:[%s3 + $0x44] sm:$0xf]
      %v3159 = vld [vmem:[%s4] sm:$0x1]
      %v3161 = vperm.slane %v3159, 0
      %v3181 = vunpack.c.l.b16 %v3141
      %v3182 = vunpack.c.l.b16 %v3142
      %v3183 = vunpack.c.l.b16 %v3143
      %v3184 = vunpack.c.l.b16 %v3144
      %v3185 = vunpack.c.l.b16 %v3145
      %v3186 = vunpack.c.l.b16 %v3146
      %v3187 = vunpack.c.l.b16 %v3147
      %v3188 = vunpack.c.l.b16 %v3148
      %v3189 = vunpack.c.l.b16 %v3149
      %v3190 = vunpack.c.l.b16 %v3150
      %v3191 = vunpack.c.l.b16 %v3151
      %v3192 = vunpack.c.l.b16 %v3152
      %v3193 = vunpack.c.l.b16 %v3153
      %v3194 = vunpack.c.l.b16 %v3154
      %v3195 = vunpack.c.l.b16 %v3155
      %v3196 = vunpack.c.l.b16 %v3156
      %v3197 = vunpack.c.l.b16 %v3157
      %v3198 = vunpack.c.l.b16 %v3158
      %v3199 = vpack.c.b16 %v3182, %v3181
      %v3200 = vpack.c.b16 %v3184, %v3183
      %v3201 = vpack.c.b16 %v3186, %v3185
      %v3202 = vpack.c.b16 %v3188, %v3187
      %v3203 = vpack.c.b16 %v3190, %v3189
      %v3204 = vpack.c.b16 %v3192, %v3191
      %v3205 = vpack.c.b16 %v3194, %v3193
      %v3206 = vpack.c.b16 %v3196, %v3195
      %v3207 = vpack.c.b16 %v3198, %v3197
      %v3218 = vsel %vm2897, %v2616, 0
      %v3221 = vsel %vm2897, %v2619, 0
      %v3224 = vsel %vm2897, %v2622, 0
      %v3227 = vsel %vm2897, %v2625, 0
      %v3230 = vsel %vm2897, %v2628, 0
      %v3233 = vsel %vm2897, %v2631, 0
      %v3236 = vsel %vm2897, %v2634, 0
      %v3239 = vsel %vm2897, %v2637, 0
      %v3242 = vsel %vm2897, %v2640, 0
      %v3245 = vsel %vm2897, %v2643, 0
      %v3248 = vsel %vm2897, %v2646, 0
      %v3251 = vsel %vm2897, %v2649, 0
      %v3254 = vsel %vm2897, %v2652, 0
      %v3257 = vsel %vm2897, %v2655, 0
      %v3260 = vsel %vm2897, %v2672, 0
      %v3262 = vsel %vm2897, %v864, 0
      %3264 = vmatpush.bf16.msra.mxu0 %v3206
      %3265 = vmatpush.bf16.msra.mxu0 %v3205
      %3266 = vmatpush.bf16.msra.mxu0 %v3204
      %3267 = vmatpush.bf16.msra.mxu0 %v3203
      %3268 = vmatpush.bf16.msra.mxu0 %v3202
      %3269 = vmatpush.bf16.msra.mxu0 %v3201
      %3270 = vmatpush.bf16.msra.mxu0 %v3200
      %3271 = vmatpush.bf16.msra.mxu0 %v3199
      %3272 = vmatmul.bf16.gmra.mxu0 %v3094
      %v3273 = vpop.f32.mrf.mxu0
      %v3274 = vadd.f32 %v3161, %v3273
      %v3275 = vpop.f32.mrf.mxu0
      %v3276 = vadd.f32 %v3161, %v3275
      %3277 = vmatmul.bf16.gmra.mxu0 %v3097
      %v3278 = vpop.f32.mrf.mxu0
      %v3279 = vadd.f32 %v3161, %v3278
      %v3280 = vpop.f32.mrf.mxu0
      %v3281 = vadd.f32 %v3161, %v3280
      %3282 = vmatmul.bf16.gmra.mxu0 %v3100
      %v3283 = vpop.f32.mrf.mxu0
      %v3284 = vadd.f32 %v3161, %v3283
      %v3285 = vpop.f32.mrf.mxu0
      %v3286 = vadd.f32 %v3161, %v3285
      %3287 = vmatmul.bf16.gmra.mxu0 %v3103
      %v3288 = vpop.f32.mrf.mxu0
      %v3289 = vadd.f32 %v3161, %v3288
      %v3290 = vpop.f32.mrf.mxu0
      %v3291 = vadd.f32 %v3161, %v3290
      %3292 = vmatmul.bf16.gmra.mxu0 %v3106
      %v3293 = vpop.f32.mrf.mxu0
      %v3294 = vadd.f32 %v3161, %v3293
      %v3295 = vpop.f32.mrf.mxu0
      %v3296 = vadd.f32 %v3161, %v3295
      %3297 = vmatmul.bf16.gmra.mxu0 %v3109
      %v3298 = vpop.f32.mrf.mxu0
      %v3299 = vadd.f32 %v3161, %v3298
      %v3300 = vpop.f32.mrf.mxu0
      %v3301 = vadd.f32 %v3161, %v3300
      %3302 = vmatmul.bf16.gmra.mxu0 %v3112
      %v3303 = vpop.f32.mrf.mxu0
      %v3304 = vadd.f32 %v3161, %v3303
      %v3305 = vpop.f32.mrf.mxu0
      %v3306 = vadd.f32 %v3161, %v3305
      %3307 = vmatmul.bf16.gmra.mxu0 %v3115
      %v3308 = vpop.f32.mrf.mxu0
      %v3309 = vadd.f32 %v3161, %v3308
      %v3310 = vpop.f32.mrf.mxu0
      %v3311 = vadd.f32 %v3161, %v3310
      %3312 = vmatmul.bf16.gmra.mxu0 %v3118
      %v3313 = vpop.f32.mrf.mxu0
      %v3314 = vadd.f32 %v3161, %v3313
      %v3315 = vpop.f32.mrf.mxu0
      %v3316 = vadd.f32 %v3161, %v3315
      %3317 = vmatmul.bf16.gmra.mxu0 %v3121
      %v3318 = vpop.f32.mrf.mxu0
      %v3319 = vadd.f32 %v3161, %v3318
      %v3320 = vpop.f32.mrf.mxu0
      %v3321 = vadd.f32 %v3161, %v3320
      %3322 = vmatmul.bf16.gmra.mxu0 %v3124
      %v3323 = vpop.f32.mrf.mxu0
      %v3324 = vadd.f32 %v3161, %v3323
      %v3325 = vpop.f32.mrf.mxu0
      %v3326 = vadd.f32 %v3161, %v3325
      %3327 = vmatmul.bf16.gmra.mxu0 %v3127
      %v3328 = vpop.f32.mrf.mxu0
      %v3329 = vadd.f32 %v3161, %v3328
      %v3330 = vpop.f32.mrf.mxu0
      %v3331 = vadd.f32 %v3161, %v3330
      %3332 = vmatmul.bf16.gmra.mxu0 %v3130
      %v3333 = vpop.f32.mrf.mxu0
      %v3334 = vadd.f32 %v3161, %v3333
      %v3335 = vpop.f32.mrf.mxu0
      %v3336 = vadd.f32 %v3161, %v3335
      %3337 = vmatmul.bf16.gmra.mxu0 %v3133
      %v3338 = vpop.f32.mrf.mxu0
      %v3339 = vadd.f32 %v3161, %v3338
      %v3340 = vpop.f32.mrf.mxu0
      %v3341 = vadd.f32 %v3161, %v3340
      %3342 = vmatmul.bf16.gmra.mxu0 %v3136
      %v3343 = vpop.f32.mrf.mxu0
      %v3344 = vadd.f32 %v3161, %v3343
      %v3345 = vpop.f32.mrf.mxu0
      %v3346 = vadd.f32 %v3161, %v3345
      %3347 = vmatmul.bf16.gmra.mxu0 %v3139
      %v3348 = vpop.f32.mrf.mxu0
      %v3349 = vadd.f32 %v3161, %v3348
      %v3350 = vpop.f32.mrf.mxu0
      %v3351 = vadd.f32 %v3161, %v3350
      %3352 = vdwg.mxu0
      %3353 = vmatpush.bf16.msra.mxu0 0
      %3354 = vmatpush.bf16.msra.mxu0 0
      %3355 = vmatpush.bf16.msra.mxu0 0
      %3356 = vmatpush.bf16.msra.mxu0 0
      %3357 = vmatpush.bf16.msra.mxu0 0
      %3358 = vmatpush.bf16.msra.mxu0 0
      %3359 = vmatpush.bf16.msra.mxu0 0
      %3360 = vmatpush.bf16.msra.mxu0 %v3207
      %3361 = vmatmul.bf16.gmra.mxu0 %v3218
      %v3362 = vpop.f32.mrf.mxu0
      %v3363 = vadd.f32 %v3274, %v3362
      %v3364 = vpop.f32.mrf.mxu0
      %v3365 = vadd.f32 %v3276, %v3364
      %3366 = vmatmul.bf16.gmra.mxu0 %v3221
      %v3367 = vpop.f32.mrf.mxu0
      %v3368 = vadd.f32 %v3279, %v3367
      %v3369 = vpop.f32.mrf.mxu0
      %v3370 = vadd.f32 %v3281, %v3369
      %3371 = vmatmul.bf16.gmra.mxu0 %v3224
      %v3372 = vpop.f32.mrf.mxu0
      %v3373 = vadd.f32 %v3284, %v3372
      %v3374 = vpop.f32.mrf.mxu0
      %v3375 = vadd.f32 %v3286, %v3374
      %3376 = vmatmul.bf16.gmra.mxu0 %v3227
      %v3377 = vpop.f32.mrf.mxu0
      %v3378 = vadd.f32 %v3289, %v3377
      %v3379 = vpop.f32.mrf.mxu0
      %v3380 = vadd.f32 %v3291, %v3379
      %3381 = vmatmul.bf16.gmra.mxu0 %v3230
      %v3382 = vpop.f32.mrf.mxu0
      %v3383 = vadd.f32 %v3294, %v3382
      %v3384 = vpop.f32.mrf.mxu0
      %v3385 = vadd.f32 %v3296, %v3384
      %3386 = vmatmul.bf16.gmra.mxu0 %v3233
      %v3387 = vpop.f32.mrf.mxu0
      %v3388 = vadd.f32 %v3299, %v3387
      %v3389 = vpop.f32.mrf.mxu0
      %v3390 = vadd.f32 %v3301, %v3389
      %3391 = vmatmul.bf16.gmra.mxu0 %v3236
      %v3392 = vpop.f32.mrf.mxu0
      %v3393 = vadd.f32 %v3304, %v3392
      %v3394 = vpop.f32.mrf.mxu0
      %v3395 = vadd.f32 %v3306, %v3394
      %3396 = vmatmul.bf16.gmra.mxu0 %v3239
      %v3397 = vpop.f32.mrf.mxu0
      %v3398 = vadd.f32 %v3309, %v3397
      %v3399 = vpop.f32.mrf.mxu0
      %v3400 = vadd.f32 %v3311, %v3399
      %3401 = vmatmul.bf16.gmra.mxu0 %v3242
      %v3402 = vpop.f32.mrf.mxu0
      %v3403 = vadd.f32 %v3314, %v3402
      %v3404 = vpop.f32.mrf.mxu0
      %v3405 = vadd.f32 %v3316, %v3404
      %3406 = vmatmul.bf16.gmra.mxu0 %v3245
      %v3407 = vpop.f32.mrf.mxu0
      %v3408 = vadd.f32 %v3319, %v3407
      %v3409 = vpop.f32.mrf.mxu0
      %v3410 = vadd.f32 %v3321, %v3409
      %3411 = vmatmul.bf16.gmra.mxu0 %v3248
      %v3412 = vpop.f32.mrf.mxu0
      %v3413 = vadd.f32 %v3324, %v3412
      %v3414 = vpop.f32.mrf.mxu0
      %v3415 = vadd.f32 %v3326, %v3414
      %3416 = vmatmul.bf16.gmra.mxu0 %v3251
      %v3417 = vpop.f32.mrf.mxu0
      %v3418 = vadd.f32 %v3329, %v3417
      %v3419 = vpop.f32.mrf.mxu0
      %v3420 = vadd.f32 %v3331, %v3419
      %3421 = vmatmul.bf16.gmra.mxu0 %v3254
      %v3422 = vpop.f32.mrf.mxu0
      %v3423 = vadd.f32 %v3334, %v3422
      %v3424 = vpop.f32.mrf.mxu0
      %v3425 = vadd.f32 %v3336, %v3424
      %3426 = vmatmul.bf16.gmra.mxu0 %v3257
      %v3427 = vpop.f32.mrf.mxu0
      %v3428 = vadd.f32 %v3339, %v3427
      %v3429 = vpop.f32.mrf.mxu0
      %v3430 = vadd.f32 %v3341, %v3429
      %3431 = vmatmul.bf16.gmra.mxu0 %v3260
      %v3432 = vpop.f32.mrf.mxu0
      %v3433 = vadd.f32 %v3344, %v3432
      %v3434 = vpop.f32.mrf.mxu0
      %v3435 = vadd.f32 %v3346, %v3434
      %3436 = vmatmul.bf16.gmra.mxu0 %v3262
      %v3437 = vpop.f32.mrf.mxu0
      %v3438 = vadd.f32 %v3349, %v3437
      %v3439 = vpop.f32.mrf.mxu0
      %v3440 = vadd.f32 %v3351, %v3439
      %3441 = vdwg.mxu0
      %v3442 = vsel %vm1119, %v3363, 0.0
      %v3443 = vsel %vm1119, %v3365, 0.0
      %v3444 = vadd.f32 %v3442, %v3443
      %v3445 = vsel %vm1119, %v3368, 0.0
      %v3446 = vadd.f32 %v3444, %v3445
      %v3447 = vsel %vm1119, %v3370, 0.0
      %v3448 = vadd.f32 %v3446, %v3447
      %v3449 = vsel %vm1119, %v3373, 0.0
      %v3450 = vadd.f32 %v3448, %v3449
      %v3451 = vsel %vm1119, %v3375, 0.0
      %v3452 = vadd.f32 %v3450, %v3451
      %v3453 = vsel %vm1119, %v3378, 0.0
      %v3454 = vadd.f32 %v3452, %v3453
      %v3455 = vsel %vm1119, %v3380, 0.0
      %v3456 = vadd.f32 %v3454, %v3455
      %v3457 = vsel %vm1119, %v3383, 0.0
      %v3458 = vadd.f32 %v3456, %v3457
      %v3459 = vsel %vm1119, %v3385, 0.0
      %v3460 = vadd.f32 %v3458, %v3459
      %v3461 = vsel %vm1119, %v3388, 0.0
      %v3462 = vadd.f32 %v3460, %v3461
      %v3463 = vsel %vm1119, %v3390, 0.0
      %v3464 = vadd.f32 %v3462, %v3463
      %v3465 = vsel %vm1119, %v3393, 0.0
      %v3466 = vadd.f32 %v3464, %v3465
      %v3467 = vsel %vm1119, %v3395, 0.0
      %v3468 = vadd.f32 %v3466, %v3467
      %v3469 = vsel %vm1119, %v3398, 0.0
      %v3470 = vadd.f32 %v3468, %v3469
      %v3471 = vsel %vm1119, %v3400, 0.0
      %v3472 = vadd.f32 %v3470, %v3471
      %v3473 = vsel %vm1119, %v3403, 0.0
      %v3474 = vadd.f32 %v3472, %v3473
      %v3475 = vsel %vm1119, %v3405, 0.0
      %v3476 = vadd.f32 %v3474, %v3475
      %v3477 = vsel %vm1119, %v3408, 0.0
      %v3478 = vadd.f32 %v3476, %v3477
      %v3479 = vsel %vm1119, %v3410, 0.0
      %v3480 = vadd.f32 %v3478, %v3479
      %v3481 = vsel %vm1119, %v3413, 0.0
      %v3482 = vadd.f32 %v3480, %v3481
      %v3483 = vsel %vm1119, %v3415, 0.0
      %v3484 = vadd.f32 %v3482, %v3483
      %v3485 = vsel %vm1119, %v3418, 0.0
      %v3486 = vadd.f32 %v3484, %v3485
      %v3487 = vsel %vm1119, %v3420, 0.0
      %v3488 = vadd.f32 %v3486, %v3487
      %v3489 = vsel %vm1119, %v3423, 0.0
      %v3490 = vadd.f32 %v3488, %v3489
      %v3491 = vsel %vm1119, %v3425, 0.0
      %v3492 = vadd.f32 %v3490, %v3491
      %v3493 = vsel %vm1119, %v3428, 0.0
      %v3494 = vadd.f32 %v3492, %v3493
      %v3495 = vsel %vm1119, %v3430, 0.0
      %v3496 = vadd.f32 %v3494, %v3495
      %v3497 = vsel %vm1119, %v3433, 0.0
      %v3498 = vadd.f32 %v3496, %v3497
      %v3499 = vsel %vm1119, %v3435, 0.0
      %v3500 = vadd.f32 %v3498, %v3499
      %v3501 = vsel %vm1119, %v3438, 0.0
      %v3502 = vadd.f32 %v3500, %v3501
      %v3503 = vsel %vm1119, %v3440, 0.0
      %v3504 = vadd.f32 %v3502, %v3503
      %v3505 = vrot.slane %v3504, 4
      %v3506 = vadd.f32 %v3504, %v3505
      %v3507 = vrot.slane %v3506, 2
      %v3508 = vadd.f32 %v3506, %v3507
      %v3509 = vrot.slane %v3508, 1
      %v3510 = vadd.f32 %v3508, %v3509
      %v3511 = vrcp.pop 256.0
      %v3512 = vmul.f32 256.0, %v3511
      %v3513 = vsub.f32 1.0, %v3512
      %v3514 = vmul.f32 %v3511, %v3513
      %v3515 = vadd.f32 %v3511, %v3514
      %vm3516 = vweird.f32 %v3511
      %v3517 = vsel %vm3516, %v3511, %v3515
      %v3518 = vmul.f32 %v3510, %v3517
      %v3519 = vld [vmem:[%s5] sm:$0xff]
      %v3520 = vld [vmem:[%s5 + $0x8] sm:$0xff]
      %v3521 = vld [vmem:[%s5 + $0x10] sm:$0xff]
      %v3522 = vld [vmem:[%s5 + $0x18] sm:$0xff]
      %v3523 = vld [vmem:[%s6] sm:$0x1]
      %v3525 = vsel %vm1119, %v3518, 0
      %3527 = vmatpush.msra.mxu0 0.0
      %3528 = vmatpush.msra.mxu0 0.0
      %3529 = vmatpush.msra.mxu0 0.0
      %3530 = vmatpush.msra.mxu0 0.0
      %3531 = vmatpush.msra.mxu0 0.0
      %3532 = vmatpush.msra.mxu0 0.0
      %3533 = vmatpush.msra.mxu0 0.0
      %3534 = vmatpush.msra.mxu0 0.0
      %3535 = vmatpush.msra.mxu0 0.0
      %3536 = vmatpush.msra.mxu0 0.0
      %3537 = vmatpush.msra.mxu0 0.0
      %3538 = vmatpush.msra.mxu0 0.0
      %3539 = vmatpush.msra.mxu0 %v3522
      %3540 = vmatpush.msra.mxu0 %v3521
      %3541 = vmatpush.msra.mxu0 %v3520
      %3542 = vmatpush.msra.mxu0 %v3519
      %3543 = vmatmul.f32.gmra.mxu0 %v3525
      %v3544 = vpop.f32.mrf.mxu0
      %v3545 = vadd.f32 %v3523, %v3544
      %3546 = vdwg.mxu0
      %v3547 = vmax.f32 %v3545, 0.0
      %v3548 = vld [vmem:[%s7] sm:$0xf]
      %v3549 = vld [vmem:[%s8] sm:$0x1]
      %vm3550 = vcmask 31744
      %v3552 = vsel %vm3550, %v3547, 0
      %vm3554 = vcmask 1043456
      %v3556 = vsel %vm3554, %v3548, 0
      %3558 = vmatpush.msra.mxu0 0.0
      %3559 = vmatpush.msra.mxu0 0.0
      %3560 = vmatpush.msra.mxu0 0.0
      %3561 = vmatpush.msra.mxu0 0.0
      %3562 = vmatpush.msra.mxu0 0.0
      %3563 = vmatpush.msra.mxu0 0.0
      %3564 = vmatpush.msra.mxu0 0.0
      %3565 = vmatpush.msra.mxu0 0.0
      %3566 = vmatpush.msra.mxu0 0.0
      %3567 = vmatpush.msra.mxu0 0.0
      %3568 = vmatpush.msra.mxu0 0.0
      %3569 = vmatpush.msra.mxu0 0.0
      %3570 = vmatpush.msra.mxu0 0.0
      %3571 = vmatpush.msra.mxu0 0.0
      %3572 = vmatpush.msra.mxu0 0.0
      %3573 = vmatpush.msra.mxu0 %v3556
      %3574 = vmatmul.f32.gmra.mxu0 %v3552
      %v3575 = vpop.f32.mrf.mxu0
      %v3576 = vadd.f32 %v3549, %v3575
      %3577 = vdwg.mxu0
      %v3578 = vxor.u32 %v3576, 2147483648
      %v3579 = vmul.f32 %v3578, 1.442695
      %v3580 = vpow.pop %v3579
      %v3581 = vadd.f32 %v3580, 1.0
      %v3582 = vrcp.pop %v3581
      %v3583 = vmul.f32 %v3581, %v3582
      %v3584 = vsub.f32 1.0, %v3583
      %v3585 = vmul.f32 %v3582, %v3584
      %v3586 = vadd.f32 %v3582, %v3585
      %vm3587 = vweird.f32 %v3581
      %vm3588 = vweird.f32 %v3582
      %vm3589 = vmor %vm3587, %vm3588
      %v3590 = vsel %vm3589, %v3582, %v3586
      %v3591 = vand.u32 2147483647, %v3581
      %vm3592 = vcmp.eq.f32.partialorder %v3591, 8.507059e+37
      %v3593 = vand.u32 %v3581, 2147483648
      %v3594 = vor.u32 1.1754944e-38, %v3593
      %v3595 = vsel %vm3592, %v3594, %v3590
      %v3596 = vmul.f32 1.0, %v3595
      %v3597 = vperm.slane %v3596, 0
      %v3598 = vmul.f32 %v3363, %v3597
      %v3599 = vmul.f32 %v3365, %v3597
      %v3600 = vmul.f32 %v3368, %v3597
      %v3601 = vmul.f32 %v3370, %v3597
      %v3602 = vmul.f32 %v3373, %v3597
      %v3603 = vmul.f32 %v3375, %v3597
      %v3604 = vmul.f32 %v3378, %v3597
      %v3605 = vmul.f32 %v3380, %v3597
      %v3606 = vmul.f32 %v3383, %v3597
      %v3607 = vmul.f32 %v3385, %v3597
      %v3608 = vmul.f32 %v3388, %v3597
      %v3609 = vmul.f32 %v3390, %v3597
      %v3610 = vmul.f32 %v3393, %v3597
      %v3611 = vmul.f32 %v3395, %v3597
      %v3612 = vmul.f32 %v3398, %v3597
      %v3613 = vmul.f32 %v3400, %v3597
      %v3614 = vmul.f32 %v3403, %v3597
      %v3615 = vmul.f32 %v3405, %v3597
      %v3616 = vmul.f32 %v3408, %v3597
      %v3617 = vmul.f32 %v3410, %v3597
      %v3618 = vmul.f32 %v3413, %v3597
      %v3619 = vmul.f32 %v3415, %v3597
      %v3620 = vmul.f32 %v3418, %v3597
      %v3621 = vmul.f32 %v3420, %v3597
      %v3622 = vmul.f32 %v3423, %v3597
      %v3623 = vmul.f32 %v3425, %v3597
      %v3624 = vmul.f32 %v3428, %v3597
      %v3625 = vmul.f32 %v3430, %v3597
      %v3626 = vmul.f32 %v3433, %v3597
      %v3627 = vmul.f32 %v3435, %v3597
      %v3628 = vmul.f32 %v3438, %v3597
      %v3629 = vmul.f32 %v3440, %v3597
      %v3630 = vpack.c.bf16 %v3598, %v3598
      %v3631 = vpack.c.bf16 %v3599, %v3599
      %v3632 = vpack.c.bf16 %v3600, %v3600
      %v3633 = vpack.c.bf16 %v3601, %v3601
      %v3634 = vpack.c.bf16 %v3602, %v3602
      %v3635 = vpack.c.bf16 %v3603, %v3603
      %v3636 = vpack.c.bf16 %v3604, %v3604
      %v3637 = vpack.c.bf16 %v3605, %v3605
      %v3638 = vpack.c.bf16 %v3606, %v3606
      %v3639 = vpack.c.bf16 %v3607, %v3607
      %v3640 = vpack.c.bf16 %v3608, %v3608
      %v3641 = vpack.c.bf16 %v3609, %v3609
      %v3642 = vpack.c.bf16 %v3610, %v3610
      %v3643 = vpack.c.bf16 %v3611, %v3611
      %v3644 = vpack.c.bf16 %v3612, %v3612
      %v3645 = vpack.c.bf16 %v3613, %v3613
      %v3646 = vpack.c.bf16 %v3614, %v3614
      %v3647 = vpack.c.bf16 %v3615, %v3615
      %v3648 = vpack.c.bf16 %v3616, %v3616
      %v3649 = vpack.c.bf16 %v3617, %v3617
      %v3650 = vpack.c.bf16 %v3618, %v3618
      %v3651 = vpack.c.bf16 %v3619, %v3619
      %v3652 = vpack.c.bf16 %v3620, %v3620
      %v3653 = vpack.c.bf16 %v3621, %v3621
      %v3654 = vpack.c.bf16 %v3622, %v3622
      %v3655 = vpack.c.bf16 %v3623, %v3623
      %v3656 = vpack.c.bf16 %v3624, %v3624
      %v3657 = vpack.c.bf16 %v3625, %v3625
      %v3658 = vpack.c.bf16 %v3626, %v3626
      %v3659 = vpack.c.bf16 %v3627, %v3627
      %v3660 = vpack.c.bf16 %v3628, %v3628
      %v3661 = vpack.c.bf16 %v3629, %v3629
      %vm3662 = vcmask 257024
      %3663 = vst.msk [vmem:[%s332] sm:$0xf] %vm3662, %v3630
      %3664 = vst.msk [vmem:[%s332 + $0x4] sm:$0xf] %vm3662, %v3631
      %3665 = vst.msk [vmem:[%s332 + $0x8] sm:$0xf] %vm3662, %v3632
      %3666 = vst.msk [vmem:[%s332 + $0xc] sm:$0xf] %vm3662, %v3633
      %3667 = vst.msk [vmem:[%s332 + $0x10] sm:$0xf] %vm3662, %v3634
      %3668 = vst.msk [vmem:[%s332 + $0x14] sm:$0xf] %vm3662, %v3635
      %3669 = vst.msk [vmem:[%s332 + $0x18] sm:$0xf] %vm3662, %v3636
      %3670 = vst.msk [vmem:[%s332 + $0x1c] sm:$0xf] %vm3662, %v3637
      %3671 = vst.msk [vmem:[%s332 + $0x20] sm:$0xf] %vm3662, %v3638
      %3672 = vst.msk [vmem:[%s332 + $0x24] sm:$0xf] %vm3662, %v3639
      %3673 = vst.msk [vmem:[%s332 + $0x28] sm:$0xf] %vm3662, %v3640
      %3674 = vst.msk [vmem:[%s332 + $0x2c] sm:$0xf] %vm3662, %v3641
      %3675 = vst.msk [vmem:[%s332 + $0x30] sm:$0xf] %vm3662, %v3642
      %3676 = vst.msk [vmem:[%s332 + $0x34] sm:$0xf] %vm3662, %v3643
      %3677 = vst.msk [vmem:[%s332 + $0x38] sm:$0xf] %vm3662, %v3644
      %3678 = vst.msk [vmem:[%s332 + $0x3c] sm:$0xf] %vm3662, %v3645
      %3679 = vst.msk [vmem:[%s332 + $0x40] sm:$0xf] %vm3662, %v3646
      %3680 = vst.msk [vmem:[%s332 + $0x44] sm:$0xf] %vm3662, %v3647
      %3681 = vst.msk [vmem:[%s332 + $0x48] sm:$0xf] %vm3662, %v3648
      %3682 = vst.msk [vmem:[%s332 + $0x4c] sm:$0xf] %vm3662, %v3649
      %3683 = vst.msk [vmem:[%s332 + $0x50] sm:$0xf] %vm3662, %v3650
      %3684 = vst.msk [vmem:[%s332 + $0x54] sm:$0xf] %vm3662, %v3651
      %3685 = vst.msk [vmem:[%s332 + $0x58] sm:$0xf] %vm3662, %v3652
      %3686 = vst.msk [vmem:[%s332 + $0x5c] sm:$0xf] %vm3662, %v3653
      %3687 = vst.msk [vmem:[%s332 + $0x60] sm:$0xf] %vm3662, %v3654
      %3688 = vst.msk [vmem:[%s332 + $0x64] sm:$0xf] %vm3662, %v3655
      %3689 = vst.msk [vmem:[%s332 + $0x68] sm:$0xf] %vm3662, %v3656
      %3690 = vst.msk [vmem:[%s332 + $0x6c] sm:$0xf] %vm3662, %v3657
      %3691 = vst.msk [vmem:[%s332 + $0x70] sm:$0xf] %vm3662, %v3658
      %3692 = vst.msk [vmem:[%s332 + $0x74] sm:$0xf] %vm3662, %v3659
      %3693 = vst.msk [vmem:[%s332 + $0x78] sm:$0xf] %vm3662, %v3660
      %3694 = vst.msk [vmem:[%s332 + $0x7c] sm:$0xf] %vm3662, %v3661
      %p3695 = scmp.lt.s32.totalorder %s20, 1
      %s3696 = scalar_select %p3695, %s20, 1
      %s3697 = smul.addr %s3696, 32
      %s3698 = smul.addr %s3697, 4
      %s3699 = scalar_lea.vmem %s9, %s3698
      // Predicated region
      $region57: #{hab_forward.5} parent=55 // pred_check
        %p3700 = pneg %p232
      $region58: #{hab_forward.5} parent=55 // pred_check_branch
        %3702 = sbr.rel (%p3700) target = $region60
      $region59: #{hab_forward.5} parent=55 // pred_region
        _
      $region60: #{hab_forward.5} parent=55 // pred_fallthru
        _
    $region56: #{hab_forward.5} parent=5 // pred_fallthru
      _
    %p3703 = scmp.le.s32.totalorder 2, %s15
    // Predicated region
    $region61: #{hab_forward.5} parent=5 // pred_check
      %p3704 = pneg %p3703
    $region62: #{hab_forward.5} parent=5 // pred_check_branch
      %3706 = sbr.rel (%p3704) target = $region64
    $region63: #{hab_forward.5} parent=5 // pred_region
      %s3707 = ssub.s32 %s15, 2
      // Predicated region
      $region65: #{hab_forward.5} parent=63 // pred_check
        %p3708 = pneg %p238
      $region66: #{hab_forward.5} parent=63 // pred_check_branch
        %3710 = sbr.rel (%p3708) target = $region68
      $region67: #{hab_forward.5} parent=63 // pred_region
        %p3711 = scmp.lt.s32.totalorder %s21, 1
        %s3712 = scalar_select %p3711, %s21, 1
        %s3713 = smul.addr %s3712, 32
        %s3714 = smul.addr %s3713, 4
        %s3715 = scalar_lea.vmem %s9, %s3714
      $region68: #{hab_forward.5} parent=63 // pred_fallthru
        _
    $region64: #{hab_forward.5} parent=5 // pred_fallthru
      _
  $region6: #{hab_forward.5} parent=0 // loop_footer
    %s19 = sadd.s32 1, %s15
  $region7: #{hab_forward.5} parent=0 // loop_footer_branch
    %14 = sbr.rel target = $region3
  $region8: #{hab_forward.5} parent=0 // loop_exit
    _

</llo_original>
